<compile_context>
chip_gen: v7x
topology: tpu7x:2x2x1
jax: 0.10.0
libtpu: 0.0.40
codegen_flags: <defaults>
</compile_context>

<pallas_src>
import functools
import math

import jax
import jax.numpy as jnp
from jax import lax
from jax.experimental import pallas as pl
from jax.experimental.pallas import tpu as pltpu


def _sigmoid(x):
    # sigmoid(x) = 0.5 * (1 + tanh(x/2)): single EUP transcendental per gate
    # (vs exp + reciprocal) and mathematically exact.
    return 0.5 * (1.0 + jnp.tanh(0.5 * x))


def _fused_blstm_recurrence_kernel(gx_ref, wh_ref, wci_ref, wcf_ref, wco_ref,
                                   outf_ref, outb_ref,
                                   hpad_ref, c_ref, *, ksize, pad):
    """One grid step t advances BOTH directions (forward on x[t], backward on
    x[T-1-t]) with a single fused block-diagonal recurrent matmul.

    Channel layouts (everything stacks fwd|bwd along the minor axis):
      hpad_ref / c_ref : [h_f | h_b]                        (..., 2*Ch)
      gx_ref / acc     : [i_f,i_b,f_f,f_b,g_f,g_b,o_f,o_b]  (..., 8*Ch)
      wci/wcf/wco_ref  : [p_f | p_b]                        (H, W, 2*Ch)
    """
    t = pl.program_id(0)
    num_t = pl.num_programs(0)
    B, H, W, C2 = c_ref.shape               # C2 = 2*Ch
    Ch = outf_ref.shape[-1]
    G8 = gx_ref.shape[-1]                   # 8*Ch

    # NOTE: this init must stay ahead of the first hpad/c read below; the same
    # t == 0 step also emits the backward output (see _emit_bwd).
    @pl.when(t == 0)
    def _init():
        hpad_ref[...] = jnp.zeros_like(hpad_ref)   # border stays 0 ("same" pad)
        c_ref[...] = jnp.zeros_like(c_ref)

    # --- recurrent conv: K*K tap-accumulated MXU matmuls ---------------------
    # x contribution (+bias) was precomputed outside the recurrence and arrives
    # in gx_ref (lane-dense 8*Ch minor).  Each tap is
    # (B*H*W, 2*Ch) @ (2*Ch, 8*Ch) against the block-diagonal fused weight, so
    # one matmul serves both directions with N = 8*Ch.  No im2col patch, no
    # concat buffer.
    h_pad = hpad_ref[...].astype(wh_ref.dtype)     # single cast per step
    acc = gx_ref[0].astype(jnp.float32).reshape(B * H * W, G8)
    for k in range(ksize * ksize):                 # unrolled 3x3 = 9 taps
        dy, dx = k // ksize, k % ksize
        tap = h_pad[:, dy:dy + H, dx:dx + W, :].reshape(B * H * W, C2)
        acc = acc + jnp.dot(tap, wh_ref[k], preferred_element_type=jnp.float32)
    acc = acc.reshape(B, H, W, G8)

    # --- gates / state update (f32 elementwise, both directions at once) -----
    i_pre = acc[..., 0 * C2:1 * C2]
    f_pre = acc[..., 1 * C2:2 * C2]
    g_pre = acc[..., 2 * C2:3 * C2]
    o_pre = acc[..., 3 * C2:4 * C2]

    c_prev = c_ref[...]
    i_g = _sigmoid(i_pre + wci_ref[...][None] * c_prev)
    f_g = _sigmoid(f_pre + wcf_ref[...][None] * c_prev)
    c_new = f_g * c_prev + i_g * jnp.tanh(g_pre)
    o_g = _sigmoid(o_pre + wco_ref[...][None] * c_new)
    h_new = o_g * jnp.tanh(c_new)

    c_ref[...] = c_new
    # Single full-channel interior write (old kernel did two narrower
    # lane-masked writes into a wider concat buffer).
    hpad_ref[:, pad:pad + H, pad:pad + W, :] = h_new

    # return_sequence=False needs only:
    #   backward h after its FIRST step (= hidden at the last original t)
    #   forward  h after its LAST step.
    @pl.when(t == 0)
    def _emit_bwd():
        outb_ref[...] = h_new[..., Ch:].astype(outb_ref.dtype)

    @pl.when(t == num_t - 1)
    def _emit_fwd():
        outf_ref[...] = h_new[..., :Ch].astype(outf_ref.dtype)


def _fuse_recurrent_weights(wh_f, wh_b, ch, compute_dtype):
    """Block-diagonal fusion of the two directions' recurrent conv weights.

    wh_f, wh_b: (K, K, Ch, 4*Ch), HWIO, gate order [i, f, g, o].
    Returns (K*K, 2*Ch, 8*Ch) with output-column order
    [i_f, i_b, f_f, f_b, g_f, g_b, o_f, o_b]; forward h rows only feed forward
    gate columns and vice versa (off-diagonal blocks are zero).
    """
    ksize = wh_f.shape[0]
    gf = jnp.split(wh_f, 4, axis=-1)       # each (K, K, Ch, Ch)
    gb = jnp.split(wh_b, 4, axis=-1)
    cols = []
    for g in range(4):
        zf = jnp.zeros_like(gf[g])
        zb = jnp.zeros_like(gb[g])
        cols.append(jnp.concatenate([gf[g], zb], axis=2))   # fwd gate g column
        cols.append(jnp.concatenate([zf, gb[g]], axis=2))   # bwd gate g column
    wh = jnp.concatenate(cols, axis=-1)                      # (K, K, 2Ch, 8Ch)
    return wh.reshape(ksize * ksize, 2 * ch, 8 * ch).astype(compute_dtype)


def _x_projection(x, params_fwd, params_bwd, pad, cin, ch):
    """Hoisted input projection: conv_x(x[t]) + bias for all T, both directions,
    gate-interleaved into a lane-dense (T, B, H, W, 8*Ch) tile stream."""
    B, T, _, H, W = x.shape
    x_nhwc = jnp.transpose(x, (0, 1, 3, 4, 2)).reshape(B * T, H, W, cin)
    x_nhwc = x_nhwc.astype(jnp.float32)

    def proj(params):
        wx = params["w"][:, :, :cin, :].astype(jnp.float32)   # (K,K,Cin,4Ch)
        g = lax.conv_general_dilated(
            x_nhwc, wx, window_strides=(1, 1),
            padding=[(pad, pad), (pad, pad)],
            dimension_numbers=("NHWC", "HWIO", "NHWC"))
        g = g + params["b"].reshape(1, 1, 1, -1).astype(jnp.float32)
        return jnp.transpose(g.reshape(B, T, H, W, 4 * ch), (1, 0, 2, 3, 4))

    gx_f = proj(params_fwd)            # forward consumes x[t]        (T,B,H,W,4Ch)
    gx_b = proj(params_bwd)[::-1]      # backward consumes x[T-1-t]   (T,B,H,W,4Ch)
    gf = jnp.split(gx_f, 4, axis=-1)
    gb = jnp.split(gx_b, 4, axis=-1)
    return jnp.concatenate([gf[0], gb[0], gf[1], gb[1],
                            gf[2], gb[2], gf[3], gb[3]], axis=-1)   # (T,B,H,W,8Ch)


@functools.partial(jax.jit,
                   static_argnames=("kernel_size", "pad", "use_bf16_matmul"))
def conv_blstm(x, params_fwd, params_bwd, kernel_size=3, pad=1,
               use_bf16_matmul=True):
    """x: (B, T, C_in, H, W) -> (B, out_channels, H, W)  (return_sequence=False).

    out_channels = 2 * hidden, hidden = params_*['wci'].shape[-1].
    """
    B, T, Cin, H, W = x.shape
    Ch = params_fwd["wci"].shape[-1]
    compute_dtype = jnp.bfloat16 if use_bf16_matmul else jnp.float32

    # (1) Hoisted, T-parallel input projection (outside the recurrence).
    gx = _x_projection(x, params_fwd, params_bwd, pad, Cin, Ch)  # (T,B,H,W,8Ch) f32

    # (2) Fused block-diagonal recurrent weights and fused peepholes.
    wh = _fuse_recurrent_weights(params_fwd["w"][:, :, Cin:, :],
                                 params_bwd["w"][:, :, Cin:, :],
                                 Ch, compute_dtype)
    wci = jnp.concatenate([params_fwd["wci"], params_bwd["wci"]], -1).astype(jnp.float32)
    wcf = jnp.concatenate([params_fwd["wcf"], params_bwd["wcf"]], -1).astype(jnp.float32)
    wco = jnp.concatenate([params_fwd["wco"], params_bwd["wco"]], -1).astype(jnp.float32)

    def const_spec(shape):
        zeros = (0,) * len(shape)
        return pl.BlockSpec(shape, lambda t, _z=zeros: _z)

    kernel = functools.partial(_fused_blstm_recurrence_kernel,
                               ksize=kernel_size, pad=pad)

    out_f, out_b = pl.pallas_call(
        kernel,
        grid=(T,),
        in_specs=[
            # streamed, lane-dense gate-input tile for step t
            pl.BlockSpec((1, B, H, W, 8 * Ch), lambda t: (t, 0, 0, 0, 0)),
            const_spec(wh.shape),
            const_spec(wci.shape), const_spec(wcf.shape), const_spec(wco.shape),
        ],
        out_specs=(const_spec((B, H, W, Ch)), const_spec((B, H, W, Ch))),
        out_shape=(jax.ShapeDtypeStruct((B, H, W, Ch), x.dtype),
                   jax.ShapeDtypeStruct((B, H, W, Ch), x.dtype)),
        scratch_shapes=[
            # zero-padded fused hidden state [h_f | h_b], f32, VMEM-resident
            pltpu.VMEM((B, H + 2 * pad, W + 2 * pad, 2 * Ch), jnp.float32),
            # fused cell state [c_f | c_b], f32, VMEM-resident
            pltpu.VMEM((B, H, W, 2 * Ch), jnp.float32),
        ],
        compiler_params=pltpu.CompilerParams(
            dimension_semantics=("arbitrary",)),   # sequential recurrence
    )(gx, wh, wci, wcf, wco)

    # torch: cat([y_forward, y_reverse], dim=2)[:, -1]
    y = jnp.concatenate([out_f, out_b], axis=-1)   # (B, H, W, 2*Ch)
    return jnp.transpose(y, (0, 3, 1, 2))          # (B, 2*Ch, H, W)


def init_convlstm_params(key, in_channels, hidden, kernel_size, frame_size):
    """Deterministic parameter init matching the module's parameter shapes."""
    H, W = frame_size
    cm = in_channels + hidden
    k_w, k_b, k_ci, k_cf, k_co = jax.random.split(key, 5)

    def xavier(k, shape, fan_in, fan_out):
        a = math.sqrt(6.0 / (fan_in + fan_out))
        return jax.random.uniform(k, shape, jnp.float32, -a, a)

    kk = kernel_size * kernel_size
    return {
        # torch conv weight (4*Ch, Cm, K, K) stored here as HWIO (K, K, Cm, 4*Ch)
        "w": xavier(k_w, (kernel_size, kernel_size, cm, 4 * hidden),
                    cm * kk, 4 * hidden * kk),
        "b": jax.random.uniform(k_b, (1, 4 * hidden), jnp.float32, -0.1, 0.1),
        # torch W_ci/W_cf/W_co are (Ch, H, W); stored here as (H, W, Ch)
        "wci": xavier(k_ci, (H, W, hidden), W, H),
        "wcf": xavier(k_cf, (H, W, hidden), W, H),
        "wco": xavier(k_co, (H, W, hidden), W, H),
    }


# ---------------- pure-JAX reference (for correctness check) ----------------

def _cell_step_ref(params, x_t, h, c, pad):
    z = jnp.concatenate([x_t, h], axis=-1)
    conv = lax.conv_general_dilated(
        z, params["w"], window_strides=(1, 1),
        padding=[(pad, pad), (pad, pad)],
        dimension_numbers=("NHWC", "HWIO", "NHWC")) + params["b"]
    i_c, f_c, g_c, o_c = jnp.split(conv, 4, axis=-1)
    i = jax.nn.sigmoid(i_c + params["wci"][None] * c)
    f = jax.nn.sigmoid(f_c + params["wcf"][None] * c)
    c_new = f * c + i * jnp.tanh(g_c)
    o = jax.nn.sigmoid(o_c + params["wco"][None] * c_new)
    return o * jnp.tanh(c_new), c_new


def conv_blstm_ref(x, params_fwd, params_bwd, pad=1):
    x_tm = jnp.transpose(x, (1, 0, 3, 4, 2))

    def seq(params, xs):
        _, B, H, W, _ = xs.shape
        Ch = params["wci"].shape[-1]
        h = jnp.zeros((B, H, W, Ch), xs.dtype)
        c = jnp.zeros((B, H, W, Ch), xs.dtype)
        out = []
        for t in range(xs.shape[0]):
            h, c = _cell_step_ref(params, xs[t], h, c, pad)
            out.append(h)
        return jnp.stack(out, 0)

    y_f = seq(params_fwd, x_tm)
    y_b = seq(params_bwd, x_tm[::-1])[::-1]
    y = jnp.concatenate([y_f, y_b], axis=-1)
    y = jnp.transpose(y, (1, 0, 4, 2, 3))
    return y[:, -1]


if __name__ == "__main__":
    B, T, Cin, H, W = 2, 8, 4, 16, 16
    out_channels = 32
    hidden = out_channels // 2         # each direction uses out_channels // 2
    K, pad = 3, 1

    key = jax.random.PRNGKey(0)
    kx, kf, kb = jax.random.split(key, 3)
    x = jax.random.normal(kx, (B, T, Cin, H, W), jnp.float32)
    params_fwd = init_convlstm_params(kf, Cin, hidden, K, (H, W))
    params_bwd = init_convlstm_params(kb, Cin, hidden, K, (H, W))

    ref = conv_blstm_ref(x, params_fwd, params_bwd, pad=pad)

    # Exact f32 MXU operands: tight numerical check.
    out_f32 = conv_blstm(x, params_fwd, params_bwd, kernel_size=K, pad=pad,
                         use_bf16_matmul=False)
    out_f32 = jax.block_until_ready(out_f32)
    assert out_f32.shape == (B, out_channels, H, W), out_f32.shape
    err_f32 = float(jnp.max(jnp.abs(out_f32 - ref)))
    assert err_f32 < 1e-2, f"f32 max_err={err_f32}"

    # bf16 MXU operands (perf default for v6e/v7x, f32 accumulation/state):
    # loose sanity bound against the f32 reference.
    out_bf16 = conv_blstm(x, params_fwd, params_bwd, kernel_size=K, pad=pad,
                          use_bf16_matmul=True)
    out_bf16 = jax.block_until_ready(out_bf16)
    assert out_bf16.shape == (B, out_channels, H, W), out_bf16.shape
    err_bf16 = float(jnp.max(jnp.abs(out_bf16 - ref)))
    assert err_bf16 < 5e-2, f"bf16 max_err={err_bf16}"

    print("KERNEL_OK")
</pallas_src>

<mosaic_0001>
module attributes {stable_mosaic.version = 11 : i64} {
  func.func @_fused_blstm_recurrence_kernel(%arg0: i32, %arg1: memref<1x2x16x16x128xf32, #tpu.memory_space<vmem>>, %arg2: memref<9x32x128xf32, #tpu.memory_space<vmem>>, %arg3: memref<16x16x32xf32, #tpu.memory_space<vmem>>, %arg4: memref<16x16x32xf32, #tpu.memory_space<vmem>>, %arg5: memref<16x16x32xf32, #tpu.memory_space<vmem>>, %arg6: memref<2x16x16x16xf32, #tpu.memory_space<vmem>>, %arg7: memref<2x16x16x16xf32, #tpu.memory_space<vmem>>, %arg8: memref<2x18x18x32xf32, #tpu.memory_space<vmem>>, %arg9: memref<2x16x16x32xf32, #tpu.memory_space<vmem>>) attributes {dimension_semantics = [#tpu.dimension_semantics<arbitrary>], iteration_bounds = array<i64: 8>, scalar_prefetch = 0 : i64, scratch_operands = 2 : i64, tpu.core_type = #tpu.core_type<tc>, window_params = [{transform_indices = @transform_0, window_bounds = array<i64: 1, 2, 16, 16, 128>}, {pipeline_mode = #tpu.pipeline_mode<synchronous>, transform_indices = @transform_1, window_bounds = array<i64: 9, 32, 128>}, {pipeline_mode = #tpu.pipeline_mode<synchronous>, transform_indices = @transform_2, window_bounds = array<i64: 16, 16, 32>}, {pipeline_mode = #tpu.pipeline_mode<synchronous>, transform_indices = @transform_3, window_bounds = array<i64: 16, 16, 32>}, {pipeline_mode = #tpu.pipeline_mode<synchronous>, transform_indices = @transform_4, window_bounds = array<i64: 16, 16, 32>}, {pipeline_mode = #tpu.pipeline_mode<synchronous>, transform_indices = @transform_5, window_bounds = array<i64: 2, 16, 16, 16>}, {pipeline_mode = #tpu.pipeline_mode<synchronous>, transform_indices = @transform_6, window_bounds = array<i64: 2, 16, 16, 16>}]} {
    %c0_i32 = arith.constant 0 : i32
    %0 = arith.cmpi eq, %arg0, %c0_i32 : i32
    %1 = arith.extui %0 : i1 to i32
    %c0_i32_0 = arith.constant 0 : i32
    %2 = arith.cmpi ne, %1, %c0_i32_0 : i32
    scf.if %2 {
      %cst_69 = arith.constant 0.000000e+00 : f32
      %117 = vector.broadcast %cst_69 : f32 to vector<2x18x18x32xf32>
      %c0_70 = arith.constant 0 : index
      %c0_71 = arith.constant 0 : index
      %c0_72 = arith.constant 0 : index
      %c0_73 = arith.constant 0 : index
      %118 = vector.load %arg8[%c0_70, %c0_71, %c0_72, %c0_73] : memref<2x18x18x32xf32, #tpu.memory_space<vmem>>, vector<2x18x18x32xf32>
      tpu.vector_store %arg8[%c0_70, %c0_71, %c0_72, %c0_73], %117 {strides = array<i32>} : memref<2x18x18x32xf32, #tpu.memory_space<vmem>>, vector<2x18x18x32xf32>,
      %cst_74 = arith.constant 0.000000e+00 : f32
      %119 = vector.broadcast %cst_74 : f32 to vector<2x16x16x32xf32>
      %c0_75 = arith.constant 0 : index
      %c0_76 = arith.constant 0 : index
      %c0_77 = arith.constant 0 : index
      %c0_78 = arith.constant 0 : index
      %120 = vector.load %arg9[%c0_75, %c0_76, %c0_77, %c0_78] : memref<2x16x16x32xf32, #tpu.memory_space<vmem>>, vector<2x16x16x32xf32>
      tpu.vector_store %arg9[%c0_75, %c0_76, %c0_77, %c0_78], %119 {strides = array<i32>} : memref<2x16x16x32xf32, #tpu.memory_space<vmem>>, vector<2x16x16x32xf32>,
    } else {
    }
    %c0 = arith.constant 0 : index
    %c0_1 = arith.constant 0 : index
    %c0_2 = arith.constant 0 : index
    %c0_3 = arith.constant 0 : index
    %3 = vector.load %arg8[%c0, %c0_1, %c0_2, %c0_3] : memref<2x18x18x32xf32, #tpu.memory_space<vmem>>, vector<2x18x18x32xf32>
    %c0_4 = arith.constant 0 : index
    %c0_5 = arith.constant 0 : index
    %c0_6 = arith.constant 0 : index
    %c0_7 = arith.constant 0 : index
    %c0_8 = arith.constant 0 : index
    %4 = vector.load %arg1[%c0_4, %c0_5, %c0_6, %c0_7, %c0_8] : memref<1x2x16x16x128xf32, #tpu.memory_space<vmem>>, vector<1x2x16x16x128xf32>
    %5 = vector.shape_cast %4 : vector<1x2x16x16x128xf32> to vector<2x16x16x128xf32>
    %6 = vector.shape_cast %5 : vector<2x16x16x128xf32> to vector<512x128xf32>
    %7 = vector.extract_strided_slice %3 {offsets = [0, 0, 0, 0], sizes = [2, 16, 16, 32], strides = [1, 1, 1, 1]} : vector<2x18x18x32xf32> to vector<2x16x16x32xf32>
    %8 = vector.shape_cast %7 : vector<2x16x16x32xf32> to vector<512x32xf32>
    %c0_9 = arith.constant 0 : index
    %c0_10 = arith.constant 0 : index
    %c0_11 = arith.constant 0 : index
    %9 = vector.load %arg2[%c0_9, %c0_10, %c0_11] : memref<9x32x128xf32, #tpu.memory_space<vmem>>, vector<1x32x128xf32>
    %10 = vector.shape_cast %9 : vector<1x32x128xf32> to vector<32x128xf32>
    %cst = arith.constant dense<0.000000e+00> : vector<512x128xf32>
    %11 = tpu.matmul %8, %10, %cst {dimension_numbers = #tpu.dot_dimension_numbers<[1], [0], [0], [1], [0, 0, 1, 1], [], []>} : vector<512x32xf32>, vector<32x128xf32>, vector<512x128xf32> -> vector<512x128xf32>
    %12 = arith.addf %6, %11 : vector<512x128xf32>
    %13 = vector.extract_strided_slice %3 {offsets = [0, 0, 1, 0], sizes = [2, 16, 16, 32], strides = [1, 1, 1, 1]} : vector<2x18x18x32xf32> to vector<2x16x16x32xf32>
    %14 = vector.shape_cast %13 : vector<2x16x16x32xf32> to vector<512x32xf32>
    %c1 = arith.constant 1 : index
    %c0_12 = arith.constant 0 : index
    %c0_13 = arith.constant 0 : index
    %15 = vector.load %arg2[%c1, %c0_12, %c0_13] : memref<9x32x128xf32, #tpu.memory_space<vmem>>, vector<1x32x128xf32>
    %16 = vector.shape_cast %15 : vector<1x32x128xf32> to vector<32x128xf32>
    %cst_14 = arith.constant dense<0.000000e+00> : vector<512x128xf32>
    %17 = tpu.matmul %14, %16, %cst_14 {dimension_numbers = #tpu.dot_dimension_numbers<[1], [0], [0], [1], [0, 0, 1, 1], [], []>} : vector<512x32xf32>, vector<32x128xf32>, vector<512x128xf32> -> vector<512x128xf32>
    %18 = arith.addf %12, %17 : vector<512x128xf32>
    %19 = vector.extract_strided_slice %3 {offsets = [0, 0, 2, 0], sizes = [2, 16, 16, 32], strides = [1, 1, 1, 1]} : vector<2x18x18x32xf32> to vector<2x16x16x32xf32>
    %20 = vector.shape_cast %19 : vector<2x16x16x32xf32> to vector<512x32xf32>
    %c2 = arith.constant 2 : index
    %c0_15 = arith.constant 0 : index
    %c0_16 = arith.constant 0 : index
    %21 = vector.load %arg2[%c2, %c0_15, %c0_16] : memref<9x32x128xf32, #tpu.memory_space<vmem>>, vector<1x32x128xf32>
    %22 = vector.shape_cast %21 : vector<1x32x128xf32> to vector<32x128xf32>
    %cst_17 = arith.constant dense<0.000000e+00> : vector<512x128xf32>
    %23 = tpu.matmul %20, %22, %cst_17 {dimension_numbers = #tpu.dot_dimension_numbers<[1], [0], [0], [1], [0, 0, 1, 1], [], []>} : vector<512x32xf32>, vector<32x128xf32>, vector<512x128xf32> -> vector<512x128xf32>
    %24 = arith.addf %18, %23 : vector<512x128xf32>
    %25 = vector.extract_strided_slice %3 {offsets = [0, 1, 0, 0], sizes = [2, 16, 16, 32], strides = [1, 1, 1, 1]} : vector<2x18x18x32xf32> to vector<2x16x16x32xf32>
    %26 = vector.shape_cast %25 : vector<2x16x16x32xf32> to vector<512x32xf32>
    %c3 = arith.constant 3 : index
    %c0_18 = arith.constant 0 : index
    %c0_19 = arith.constant 0 : index
    %27 = vector.load %arg2[%c3, %c0_18, %c0_19] : memref<9x32x128xf32, #tpu.memory_space<vmem>>, vector<1x32x128xf32>
    %28 = vector.shape_cast %27 : vector<1x32x128xf32> to vector<32x128xf32>
    %cst_20 = arith.constant dense<0.000000e+00> : vector<512x128xf32>
    %29 = tpu.matmul %26, %28, %cst_20 {dimension_numbers = #tpu.dot_dimension_numbers<[1], [0], [0], [1], [0, 0, 1, 1], [], []>} : vector<512x32xf32>, vector<32x128xf32>, vector<512x128xf32> -> vector<512x128xf32>
    %30 = arith.addf %24, %29 : vector<512x128xf32>
    %31 = vector.extract_strided_slice %3 {offsets = [0, 1, 1, 0], sizes = [2, 16, 16, 32], strides = [1, 1, 1, 1]} : vector<2x18x18x32xf32> to vector<2x16x16x32xf32>
    %32 = vector.shape_cast %31 : vector<2x16x16x32xf32> to vector<512x32xf32>
    %c4 = arith.constant 4 : index
    %c0_21 = arith.constant 0 : index
    %c0_22 = arith.constant 0 : index
    %33 = vector.load %arg2[%c4, %c0_21, %c0_22] : memref<9x32x128xf32, #tpu.memory_space<vmem>>, vector<1x32x128xf32>
    %34 = vector.shape_cast %33 : vector<1x32x128xf32> to vector<32x128xf32>
    %cst_23 = arith.constant dense<0.000000e+00> : vector<512x128xf32>
    %35 = tpu.matmul %32, %34, %cst_23 {dimension_numbers = #tpu.dot_dimension_numbers<[1], [0], [0], [1], [0, 0, 1, 1], [], []>} : vector<512x32xf32>, vector<32x128xf32>, vector<512x128xf32> -> vector<512x128xf32>
    %36 = arith.addf %30, %35 : vector<512x128xf32>
    %37 = vector.extract_strided_slice %3 {offsets = [0, 1, 2, 0], sizes = [2, 16, 16, 32], strides = [1, 1, 1, 1]} : vector<2x18x18x32xf32> to vector<2x16x16x32xf32>
    %38 = vector.shape_cast %37 : vector<2x16x16x32xf32> to vector<512x32xf32>
    %c5 = arith.constant 5 : index
    %c0_24 = arith.constant 0 : index
    %c0_25 = arith.constant 0 : index
    %39 = vector.load %arg2[%c5, %c0_24, %c0_25] : memref<9x32x128xf32, #tpu.memory_space<vmem>>, vector<1x32x128xf32>
    %40 = vector.shape_cast %39 : vector<1x32x128xf32> to vector<32x128xf32>
    %cst_26 = arith.constant dense<0.000000e+00> : vector<512x128xf32>
    %41 = tpu.matmul %38, %40, %cst_26 {dimension_numbers = #tpu.dot_dimension_numbers<[1], [0], [0], [1], [0, 0, 1, 1], [], []>} : vector<512x32xf32>, vector<32x128xf32>, vector<512x128xf32> -> vector<512x128xf32>
    %42 = arith.addf %36, %41 : vector<512x128xf32>
    %43 = vector.extract_strided_slice %3 {offsets = [0, 2, 0, 0], sizes = [2, 16, 16, 32], strides = [1, 1, 1, 1]} : vector<2x18x18x32xf32> to vector<2x16x16x32xf32>
    %44 = vector.shape_cast %43 : vector<2x16x16x32xf32> to vector<512x32xf32>
    %c6 = arith.constant 6 : index
    %c0_27 = arith.constant 0 : index
    %c0_28 = arith.constant 0 : index
    %45 = vector.load %arg2[%c6, %c0_27, %c0_28] : memref<9x32x128xf32, #tpu.memory_space<vmem>>, vector<1x32x128xf32>
    %46 = vector.shape_cast %45 : vector<1x32x128xf32> to vector<32x128xf32>
    %cst_29 = arith.constant dense<0.000000e+00> : vector<512x128xf32>
    %47 = tpu.matmul %44, %46, %cst_29 {dimension_numbers = #tpu.dot_dimension_numbers<[1], [0], [0], [1], [0, 0, 1, 1], [], []>} : vector<512x32xf32>, vector<32x128xf32>, vector<512x128xf32> -> vector<512x128xf32>
    %48 = arith.addf %42, %47 : vector<512x128xf32>
    %49 = vector.extract_strided_slice %3 {offsets = [0, 2, 1, 0], sizes = [2, 16, 16, 32], strides = [1, 1, 1, 1]} : vector<2x18x18x32xf32> to vector<2x16x16x32xf32>
    %50 = vector.shape_cast %49 : vector<2x16x16x32xf32> to vector<512x32xf32>
    %c7 = arith.constant 7 : index
    %c0_30 = arith.constant 0 : index
    %c0_31 = arith.constant 0 : index
    %51 = vector.load %arg2[%c7, %c0_30, %c0_31] : memref<9x32x128xf32, #tpu.memory_space<vmem>>, vector<1x32x128xf32>
    %52 = vector.shape_cast %51 : vector<1x32x128xf32> to vector<32x128xf32>
    %cst_32 = arith.constant dense<0.000000e+00> : vector<512x128xf32>
    %53 = tpu.matmul %50, %52, %cst_32 {dimension_numbers = #tpu.dot_dimension_numbers<[1], [0], [0], [1], [0, 0, 1, 1], [], []>} : vector<512x32xf32>, vector<32x128xf32>, vector<512x128xf32> -> vector<512x128xf32>
    %54 = arith.addf %48, %53 : vector<512x128xf32>
    %55 = vector.extract_strided_slice %3 {offsets = [0, 2, 2, 0], sizes = [2, 16, 16, 32], strides = [1, 1, 1, 1]} : vector<2x18x18x32xf32> to vector<2x16x16x32xf32>
    %56 = vector.shape_cast %55 : vector<2x16x16x32xf32> to vector<512x32xf32>
    %c8 = arith.constant 8 : index
    %c0_33 = arith.constant 0 : index
    %c0_34 = arith.constant 0 : index
    %57 = vector.load %arg2[%c8, %c0_33, %c0_34] : memref<9x32x128xf32, #tpu.memory_space<vmem>>, vector<1x32x128xf32>
    %58 = vector.shape_cast %57 : vector<1x32x128xf32> to vector<32x128xf32>
    %cst_35 = arith.constant dense<0.000000e+00> : vector<512x128xf32>
    %59 = tpu.matmul %56, %58, %cst_35 {dimension_numbers = #tpu.dot_dimension_numbers<[1], [0], [0], [1], [0, 0, 1, 1], [], []>} : vector<512x32xf32>, vector<32x128xf32>, vector<512x128xf32> -> vector<512x128xf32>
    %60 = arith.addf %54, %59 : vector<512x128xf32>
    %61 = vector.shape_cast %60 : vector<512x128xf32> to vector<2x16x16x128xf32>
    %62 = vector.extract_strided_slice %61 {offsets = [0, 0, 0, 0], sizes = [2, 16, 16, 32], strides = [1, 1, 1, 1]} : vector<2x16x16x128xf32> to vector<2x16x16x32xf32>
    %63 = vector.extract_strided_slice %61 {offsets = [0, 0, 0, 32], sizes = [2, 16, 16, 32], strides = [1, 1, 1, 1]} : vector<2x16x16x128xf32> to vector<2x16x16x32xf32>
    %64 = vector.extract_strided_slice %61 {offsets = [0, 0, 0, 64], sizes = [2, 16, 16, 32], strides = [1, 1, 1, 1]} : vector<2x16x16x128xf32> to vector<2x16x16x32xf32>
    %65 = vector.extract_strided_slice %61 {offsets = [0, 0, 0, 96], sizes = [2, 16, 16, 32], strides = [1, 1, 1, 1]} : vector<2x16x16x128xf32> to vector<2x16x16x32xf32>
    %c0_36 = arith.constant 0 : index
    %c0_37 = arith.constant 0 : index
    %c0_38 = arith.constant 0 : index
    %c0_39 = arith.constant 0 : index
    %66 = vector.load %arg9[%c0_36, %c0_37, %c0_38, %c0_39] : memref<2x16x16x32xf32, #tpu.memory_space<vmem>>, vector<2x16x16x32xf32>
    %c0_40 = arith.constant 0 : index
    %c0_41 = arith.constant 0 : index
    %c0_42 = arith.constant 0 : index
    %67 = vector.load %arg3[%c0_40, %c0_41, %c0_42] : memref<16x16x32xf32, #tpu.memory_space<vmem>>, vector<16x16x32xf32>
    %68 = vector.shape_cast %67 : vector<16x16x32xf32> to vector<1x16x16x32xf32>
    %69 = vector.broadcast %68 : vector<1x16x16x32xf32> to vector<2x16x16x32xf32>
    %70 = arith.mulf %69, %66 : vector<2x16x16x32xf32>
    %71 = arith.addf %62, %70 : vector<2x16x16x32xf32>
    %cst_43 = arith.constant 5.000000e-01 : f32
    %72 = vector.broadcast %cst_43 : f32 to vector<2x16x16x32xf32>
    %73 = arith.mulf %72, %71 : vector<2x16x16x32xf32>
    %74 = math.tanh %73 : vector<2x16x16x32xf32>
    %cst_44 = arith.constant 1.000000e+00 : f32
    %75 = vector.broadcast %cst_44 : f32 to vector<2x16x16x32xf32>
    %76 = arith.addf %75, %74 : vector<2x16x16x32xf32>
    %cst_45 = arith.constant 5.000000e-01 : f32
    %77 = vector.broadcast %cst_45 : f32 to vector<2x16x16x32xf32>
    %78 = arith.mulf %77, %76 : vector<2x16x16x32xf32>
    %c0_46 = arith.constant 0 : index
    %c0_47 = arith.constant 0 : index
    %c0_48 = arith.constant 0 : index
    %79 = vector.load %arg4[%c0_46, %c0_47, %c0_48] : memref<16x16x32xf32, #tpu.memory_space<vmem>>, vector<16x16x32xf32>
    %80 = vector.shape_cast %79 : vector<16x16x32xf32> to vector<1x16x16x32xf32>
    %81 = vector.broadcast %80 : vector<1x16x16x32xf32> to vector<2x16x16x32xf32>
    %82 = arith.mulf %81, %66 : vector<2x16x16x32xf32>
    %83 = arith.addf %63, %82 : vector<2x16x16x32xf32>
    %cst_49 = arith.constant 5.000000e-01 : f32
    %84 = vector.broadcast %cst_49 : f32 to vector<2x16x16x32xf32>
    %85 = arith.mulf %84, %83 : vector<2x16x16x32xf32>
    %86 = math.tanh %85 : vector<2x16x16x32xf32>
    %cst_50 = arith.constant 1.000000e+00 : f32
    %87 = vector.broadcast %cst_50 : f32 to vector<2x16x16x32xf32>
    %88 = arith.addf %87, %86 : vector<2x16x16x32xf32>
    %cst_51 = arith.constant 5.000000e-01 : f32
    %89 = vector.broadcast %cst_51 : f32 to vector<2x16x16x32xf32>
    %90 = arith.mulf %89, %88 : vector<2x16x16x32xf32>
    %91 = arith.mulf %90, %66 : vector<2x16x16x32xf32>
    %92 = math.tanh %64 : vector<2x16x16x32xf32>
    %93 = arith.mulf %78, %92 : vector<2x16x16x32xf32>
    %94 = arith.addf %91, %93 : vector<2x16x16x32xf32>
    %c0_52 = arith.constant 0 : index
    %c0_53 = arith.constant 0 : index
    %c0_54 = arith.constant 0 : index
    %95 = vector.load %arg5[%c0_52, %c0_53, %c0_54] : memref<16x16x32xf32, #tpu.memory_space<vmem>>, vector<16x16x32xf32>
    %96 = vector.shape_cast %95 : vector<16x16x32xf32> to vector<1x16x16x32xf32>
    %97 = vector.broadcast %96 : vector<1x16x16x32xf32> to vector<2x16x16x32xf32>
    %98 = arith.mulf %97, %94 : vector<2x16x16x32xf32>
    %99 = arith.addf %65, %98 : vector<2x16x16x32xf32>
    %cst_55 = arith.constant 5.000000e-01 : f32
    %100 = vector.broadcast %cst_55 : f32 to vector<2x16x16x32xf32>
    %101 = arith.mulf %100, %99 : vector<2x16x16x32xf32>
    %102 = math.tanh %101 : vector<2x16x16x32xf32>
    %cst_56 = arith.constant 1.000000e+00 : f32
    %103 = vector.broadcast %cst_56 : f32 to vector<2x16x16x32xf32>
    %104 = arith.addf %103, %102 : vector<2x16x16x32xf32>
    %cst_57 = arith.constant 5.000000e-01 : f32
    %105 = vector.broadcast %cst_57 : f32 to vector<2x16x16x32xf32>
    %106 = arith.mulf %105, %104 : vector<2x16x16x32xf32>
    %107 = math.tanh %94 : vector<2x16x16x32xf32>
    %108 = arith.mulf %106, %107 : vector<2x16x16x32xf32>
    %c0_58 = arith.constant 0 : index
    %c0_59 = arith.constant 0 : index
    %c0_60 = arith.constant 0 : index
    %c0_61 = arith.constant 0 : index
    %109 = vector.load %arg9[%c0_58, %c0_59, %c0_60, %c0_61] : memref<2x16x16x32xf32, #tpu.memory_space<vmem>>, vector<2x16x16x32xf32>
    tpu.vector_store %arg9[%c0_58, %c0_59, %c0_60, %c0_61], %94 {strides = array<i32>} : memref<2x16x16x32xf32, #tpu.memory_space<vmem>>, vector<2x16x16x32xf32>,
    %c0_62 = arith.constant 0 : index
    %c1_63 = arith.constant 1 : index
    %c1_64 = arith.constant 1 : index
    %c0_65 = arith.constant 0 : index
    %110 = vector.load %arg8[%c0_62, %c1_63, %c1_64, %c0_65] : memref<2x18x18x32xf32, #tpu.memory_space<vmem>>, vector<2x16x16x32xf32>
    tpu.vector_store %arg8[%c0_62, %c1_63, %c1_64, %c0_65], %108 {strides = array<i32>} : memref<2x18x18x32xf32, #tpu.memory_space<vmem>>, vector<2x16x16x32xf32>,
    %c0_i32_66 = arith.constant 0 : i32
    %111 = arith.cmpi eq, %arg0, %c0_i32_66 : i32
    %112 = arith.extui %111 : i1 to i32
    %c0_i32_67 = arith.constant 0 : i32
    %113 = arith.cmpi ne, %112, %c0_i32_67 : i32
    scf.if %113 {
      %117 = vector.extract_strided_slice %108 {offsets = [0, 0, 0, 16], sizes = [2, 16, 16, 16], strides = [1, 1, 1, 1]} : vector<2x16x16x32xf32> to vector<2x16x16x16xf32>
      %c0_69 = arith.constant 0 : index
      %c0_70 = arith.constant 0 : index
      %c0_71 = arith.constant 0 : index
      %c0_72 = arith.constant 0 : index
      %118 = vector.load %arg7[%c0_69, %c0_70, %c0_71, %c0_72] : memref<2x16x16x16xf32, #tpu.memory_space<vmem>>, vector<2x16x16x16xf32>
      tpu.vector_store %arg7[%c0_69, %c0_70, %c0_71, %c0_72], %117 {strides = array<i32>} : memref<2x16x16x16xf32, #tpu.memory_space<vmem>>, vector<2x16x16x16xf32>,
    } else {
    }
    %c7_i32 = arith.constant 7 : i32
    %114 = arith.cmpi eq, %arg0, %c7_i32 : i32
    %115 = arith.extui %114 : i1 to i32
    %c0_i32_68 = arith.constant 0 : i32
    %116 = arith.cmpi ne, %115, %c0_i32_68 : i32
    scf.if %116 {
      %117 = vector.extract_strided_slice %108 {offsets = [0, 0, 0, 0], sizes = [2, 16, 16, 16], strides = [1, 1, 1, 1]} : vector<2x16x16x32xf32> to vector<2x16x16x16xf32>
      %c0_69 = arith.constant 0 : index
      %c0_70 = arith.constant 0 : index
      %c0_71 = arith.constant 0 : index
      %c0_72 = arith.constant 0 : index
      %118 = vector.load %arg6[%c0_69, %c0_70, %c0_71, %c0_72] : memref<2x16x16x16xf32, #tpu.memory_space<vmem>>, vector<2x16x16x16xf32>
      tpu.vector_store %arg6[%c0_69, %c0_70, %c0_71, %c0_72], %117 {strides = array<i32>} : memref<2x16x16x16xf32, #tpu.memory_space<vmem>>, vector<2x16x16x16xf32>,
    } else {
    }
    return
  }
  func.func @transform_0(%arg0: i32) -> (i32, i32, i32, i32, i32) {
    %c0_i32 = arith.constant 0 : i32
    %c0_i32_0 = arith.constant 0 : i32
    %c0_i32_1 = arith.constant 0 : i32
    %c0_i32_2 = arith.constant 0 : i32
    %c0_i32_3 = arith.constant 0 : i32
    return %arg0, %c0_i32, %c0_i32_0, %c0_i32_1, %c0_i32_2 : i32, i32, i32, i32, i32
  }
  func.func @transform_1(%arg0: i32) -> (i32, i32, i32) {
    %c0_i32 = arith.constant 0 : i32
    %c0_i32_0 = arith.constant 0 : i32
    %c0_i32_1 = arith.constant 0 : i32
    %c0_i32_2 = arith.constant 0 : i32
    return %c0_i32, %c0_i32_0, %c0_i32_1 : i32, i32, i32
  }
  func.func @transform_2(%arg0: i32) -> (i32, i32, i32) {
    %c0_i32 = arith.constant 0 : i32
    %c0_i32_0 = arith.constant 0 : i32
    %c0_i32_1 = arith.constant 0 : i32
    %c0_i32_2 = arith.constant 0 : i32
    return %c0_i32, %c0_i32_0, %c0_i32_1 : i32, i32, i32
  }
  func.func @transform_3(%arg0: i32) -> (i32, i32, i32) {
    %c0_i32 = arith.constant 0 : i32
    %c0_i32_0 = arith.constant 0 : i32
    %c0_i32_1 = arith.constant 0 : i32
    %c0_i32_2 = arith.constant 0 : i32
    return %c0_i32, %c0_i32_0, %c0_i32_1 : i32, i32, i32
  }
  func.func @transform_4(%arg0: i32) -> (i32, i32, i32) {
    %c0_i32 = arith.constant 0 : i32
    %c0_i32_0 = arith.constant 0 : i32
    %c0_i32_1 = arith.constant 0 : i32
    %c0_i32_2 = arith.constant 0 : i32
    return %c0_i32, %c0_i32_0, %c0_i32_1 : i32, i32, i32
  }
  func.func @transform_5(%arg0: i32) -> (i32, i32, i32, i32) {
    %c0_i32 = arith.constant 0 : i32
    %c0_i32_0 = arith.constant 0 : i32
    %c0_i32_1 = arith.constant 0 : i32
    %c0_i32_2 = arith.constant 0 : i32
    %c0_i32_3 = arith.constant 0 : i32
    return %c0_i32, %c0_i32_0, %c0_i32_1, %c0_i32_2 : i32, i32, i32, i32
  }
  func.func @transform_6(%arg0: i32) -> (i32, i32, i32, i32) {
    %c0_i32 = arith.constant 0 : i32
    %c0_i32_0 = arith.constant 0 : i32
    %c0_i32_1 = arith.constant 0 : i32
    %c0_i32_2 = arith.constant 0 : i32
    %c0_i32_3 = arith.constant 0 : i32
    return %c0_i32, %c0_i32_0, %c0_i32_1, %c0_i32_2 : i32, i32, i32, i32
  }
}

</mosaic_0001>

<llo_original>
// kernel: reverse
$region0: #{reverse}
  #allocation0 [shape = 's32[1]{0}', space=sflag, size = 0x4, scoped, tag = 'scoped memory for reverse']
  %s0 = inlined_call_operand.vmem [shape: f32[8,2,16,16,16], index: 0, kind: input, shape index: {}]
  %s1 = inlined_call_operand.vmem [shape: f32[8,2,16,16,16], index: 1, kind: output, shape index: {}]
  %s2 = scalar_lea.vmem %s0, 3584
  %v3 = vld [vmem:[%s2] sm:$0xff]
  %4 = vst [vmem:[%s1] sm:$0xff] %v3
  %s5 = scalar_lea.vmem %s0, 3072
  %v6 = vld [vmem:[%s5] sm:$0xff]
  %s7 = scalar_lea.vmem %s1, 512
  %8 = vst [vmem:[%s7] sm:$0xff] %v6
  %s9 = scalar_lea.vmem %s0, 2560
  %v10 = vld [vmem:[%s9] sm:$0xff]
  %s11 = scalar_lea.vmem %s1, 1024
  %12 = vst [vmem:[%s11] sm:$0xff] %v10
  %s13 = scalar_lea.vmem %s0, 2048
  %v14 = vld [vmem:[%s13] sm:$0xff]
  %s15 = scalar_lea.vmem %s1, 1536
  %16 = vst [vmem:[%s15] sm:$0xff] %v14
  %s17 = scalar_lea.vmem %s0, 1536
  %v18 = vld [vmem:[%s17] sm:$0xff]
  %s19 = scalar_lea.vmem %s1, 2048
  %20 = vst [vmem:[%s19] sm:$0xff] %v18
  %s21 = scalar_lea.vmem %s0, 1024
  %v22 = vld [vmem:[%s21] sm:$0xff]
  %s23 = scalar_lea.vmem %s1, 2560
  %24 = vst [vmem:[%s23] sm:$0xff] %v22
  %s25 = scalar_lea.vmem %s0, 512
  %v26 = vld [vmem:[%s25] sm:$0xff]
  %s27 = scalar_lea.vmem %s1, 3072
  %28 = vst [vmem:[%s27] sm:$0xff] %v26
  %v29 = vld [vmem:[%s0] sm:$0xff]
  %s30 = scalar_lea.vmem %s1, 3584
  %31 = vst [vmem:[%s30] sm:$0xff] %v29
  %s32 = scalar_lea.vmem %s0, 3840
  %v33 = vld [vmem:[%s32] sm:$0xff]
  %s34 = scalar_lea.vmem %s1, 256
  %35 = vst [vmem:[%s34] sm:$0xff] %v33
  %s36 = scalar_lea.vmem %s0, 3328
  %v37 = vld [vmem:[%s36] sm:$0xff]
  %s38 = scalar_lea.vmem %s1, 768
  %39 = vst [vmem:[%s38] sm:$0xff] %v37
  %s40 = scalar_lea.vmem %s0, 2816
  %v41 = vld [vmem:[%s40] sm:$0xff]
  %s42 = scalar_lea.vmem %s1, 1280
  %43 = vst [vmem:[%s42] sm:$0xff] %v41
  %s44 = scalar_lea.vmem %s0, 2304
  %v45 = vld [vmem:[%s44] sm:$0xff]
  %s46 = scalar_lea.vmem %s1, 1792
  %47 = vst [vmem:[%s46] sm:$0xff] %v45
  %s48 = scalar_lea.vmem %s0, 1792
  %v49 = vld [vmem:[%s48] sm:$0xff]
  %s50 = scalar_lea.vmem %s1, 2304
  %51 = vst [vmem:[%s50] sm:$0xff] %v49
  %s52 = scalar_lea.vmem %s0, 1280
  %v53 = vld [vmem:[%s52] sm:$0xff]
  %s54 = scalar_lea.vmem %s1, 2816
  %55 = vst [vmem:[%s54] sm:$0xff] %v53
  %s56 = scalar_lea.vmem %s0, 768
  %v57 = vld [vmem:[%s56] sm:$0xff]
  %s58 = scalar_lea.vmem %s1, 3328
  %59 = vst [vmem:[%s58] sm:$0xff] %v57
  %s60 = scalar_lea.vmem %s0, 256
  %v61 = vld [vmem:[%s60] sm:$0xff]
  %s62 = scalar_lea.vmem %s1, 3840
  %63 = vst [vmem:[%s62] sm:$0xff] %v61
  %s64 = scalar_lea.vmem %s0, 3600
  %v65 = vld [vmem:[%s64] sm:$0xff]
  %s66 = scalar_lea.vmem %s1, 16
  %67 = vst [vmem:[%s66] sm:$0xff] %v65
  %s68 = scalar_lea.vmem %s0, 3088
  %v69 = vld [vmem:[%s68] sm:$0xff]
  %s70 = scalar_lea.vmem %s1, 528
  %71 = vst [vmem:[%s70] sm:$0xff] %v69
  %s72 = scalar_lea.vmem %s0, 2576
  %v73 = vld [vmem:[%s72] sm:$0xff]
  %s74 = scalar_lea.vmem %s1, 1040
  %75 = vst [vmem:[%s74] sm:$0xff] %v73
  %s76 = scalar_lea.vmem %s0, 2064
  %v77 = vld [vmem:[%s76] sm:$0xff]
  %s78 = scalar_lea.vmem %s1, 1552
  %79 = vst [vmem:[%s78] sm:$0xff] %v77
  %s80 = scalar_lea.vmem %s0, 1552
  %v81 = vld [vmem:[%s80] sm:$0xff]
  %s82 = scalar_lea.vmem %s1, 2064
  %83 = vst [vmem:[%s82] sm:$0xff] %v81
  %s84 = scalar_lea.vmem %s0, 1040
  %v85 = vld [vmem:[%s84] sm:$0xff]
  %s86 = scalar_lea.vmem %s1, 2576
  %87 = vst [vmem:[%s86] sm:$0xff] %v85
  %s88 = scalar_lea.vmem %s0, 528
  %v89 = vld [vmem:[%s88] sm:$0xff]
  %s90 = scalar_lea.vmem %s1, 3088
  %91 = vst [vmem:[%s90] sm:$0xff] %v89
  %s92 = scalar_lea.vmem %s0, 16
  %v93 = vld [vmem:[%s92] sm:$0xff]
  %s94 = scalar_lea.vmem %s1, 3600
  %95 = vst [vmem:[%s94] sm:$0xff] %v93
  %s96 = scalar_lea.vmem %s0, 3856
  %v97 = vld [vmem:[%s96] sm:$0xff]
  %s98 = scalar_lea.vmem %s1, 272
  %99 = vst [vmem:[%s98] sm:$0xff] %v97
  %s100 = scalar_lea.vmem %s0, 3344
  %v101 = vld [vmem:[%s100] sm:$0xff]
  %s102 = scalar_lea.vmem %s1, 784
  %103 = vst [vmem:[%s102] sm:$0xff] %v101
  %s104 = scalar_lea.vmem %s0, 2832
  %v105 = vld [vmem:[%s104] sm:$0xff]
  %s106 = scalar_lea.vmem %s1, 1296
  %107 = vst [vmem:[%s106] sm:$0xff] %v105
  %s108 = scalar_lea.vmem %s0, 2320
  %v109 = vld [vmem:[%s108] sm:$0xff]
  %s110 = scalar_lea.vmem %s1, 1808
  %111 = vst [vmem:[%s110] sm:$0xff] %v109
  %s112 = scalar_lea.vmem %s0, 1808
  %v113 = vld [vmem:[%s112] sm:$0xff]
  %s114 = scalar_lea.vmem %s1, 2320
  %115 = vst [vmem:[%s114] sm:$0xff] %v113
  %s116 = scalar_lea.vmem %s0, 1296
  %v117 = vld [vmem:[%s116] sm:$0xff]
  %s118 = scalar_lea.vmem %s1, 2832
  %119 = vst [vmem:[%s118] sm:$0xff] %v117
  %s120 = scalar_lea.vmem %s0, 784
  %v121 = vld [vmem:[%s120] sm:$0xff]
  %s122 = scalar_lea.vmem %s1, 3344
  %123 = vst [vmem:[%s122] sm:$0xff] %v121
  %s124 = scalar_lea.vmem %s0, 272
  %v125 = vld [vmem:[%s124] sm:$0xff]
  %s126 = scalar_lea.vmem %s1, 3856
  %127 = vst [vmem:[%s126] sm:$0xff] %v125
  %s128 = scalar_lea.vmem %s0, 3616
  %v129 = vld [vmem:[%s128] sm:$0xff]
  %s130 = scalar_lea.vmem %s1, 32
  %131 = vst [vmem:[%s130] sm:$0xff] %v129
  %s132 = scalar_lea.vmem %s0, 3104
  %v133 = vld [vmem:[%s132] sm:$0xff]
  %s134 = scalar_lea.vmem %s1, 544
  %135 = vst [vmem:[%s134] sm:$0xff] %v133
  %s136 = scalar_lea.vmem %s0, 2592
  %v137 = vld [vmem:[%s136] sm:$0xff]
  %s138 = scalar_lea.vmem %s1, 1056
  %139 = vst [vmem:[%s138] sm:$0xff] %v137
  %s140 = scalar_lea.vmem %s0, 2080
  %v141 = vld [vmem:[%s140] sm:$0xff]
  %s142 = scalar_lea.vmem %s1, 1568
  %143 = vst [vmem:[%s142] sm:$0xff] %v141
  %s144 = scalar_lea.vmem %s0, 1568
  %v145 = vld [vmem:[%s144] sm:$0xff]
  %s146 = scalar_lea.vmem %s1, 2080
  %147 = vst [vmem:[%s146] sm:$0xff] %v145
  %s148 = scalar_lea.vmem %s0, 1056
  %v149 = vld [vmem:[%s148] sm:$0xff]
  %s150 = scalar_lea.vmem %s1, 2592
  %151 = vst [vmem:[%s150] sm:$0xff] %v149
  %s152 = scalar_lea.vmem %s0, 544
  %v153 = vld [vmem:[%s152] sm:$0xff]
  %s154 = scalar_lea.vmem %s1, 3104
  %155 = vst [vmem:[%s154] sm:$0xff] %v153
  %s156 = scalar_lea.vmem %s0, 32
  %v157 = vld [vmem:[%s156] sm:$0xff]
  %s158 = scalar_lea.vmem %s1, 3616
  %159 = vst [vmem:[%s158] sm:$0xff] %v157
  %s160 = scalar_lea.vmem %s0, 3872
  %v161 = vld [vmem:[%s160] sm:$0xff]
  %s162 = scalar_lea.vmem %s1, 288
  %163 = vst [vmem:[%s162] sm:$0xff] %v161
  %s164 = scalar_lea.vmem %s0, 3360
  %v165 = vld [vmem:[%s164] sm:$0xff]
  %s166 = scalar_lea.vmem %s1, 800
  %167 = vst [vmem:[%s166] sm:$0xff] %v165
  %s168 = scalar_lea.vmem %s0, 2848
  %v169 = vld [vmem:[%s168] sm:$0xff]
  %s170 = scalar_lea.vmem %s1, 1312
  %171 = vst [vmem:[%s170] sm:$0xff] %v169
  %s172 = scalar_lea.vmem %s0, 2336
  %v173 = vld [vmem:[%s172] sm:$0xff]
  %s174 = scalar_lea.vmem %s1, 1824
  %175 = vst [vmem:[%s174] sm:$0xff] %v173
  %s176 = scalar_lea.vmem %s0, 1824
  %v177 = vld [vmem:[%s176] sm:$0xff]
  %s178 = scalar_lea.vmem %s1, 2336
  %179 = vst [vmem:[%s178] sm:$0xff] %v177
  %s180 = scalar_lea.vmem %s0, 1312
  %v181 = vld [vmem:[%s180] sm:$0xff]
  %s182 = scalar_lea.vmem %s1, 2848
  %183 = vst [vmem:[%s182] sm:$0xff] %v181
  %s184 = scalar_lea.vmem %s0, 800
  %v185 = vld [vmem:[%s184] sm:$0xff]
  %s186 = scalar_lea.vmem %s1, 3360
  %187 = vst [vmem:[%s186] sm:$0xff] %v185
  %s188 = scalar_lea.vmem %s0, 288
  %v189 = vld [vmem:[%s188] sm:$0xff]
  %s190 = scalar_lea.vmem %s1, 3872
  %191 = vst [vmem:[%s190] sm:$0xff] %v189
  %s192 = scalar_lea.vmem %s0, 3632
  %v193 = vld [vmem:[%s192] sm:$0xff]
  %s194 = scalar_lea.vmem %s1, 48
  %195 = vst [vmem:[%s194] sm:$0xff] %v193
  %s196 = scalar_lea.vmem %s0, 3120
  %v197 = vld [vmem:[%s196] sm:$0xff]
  %s198 = scalar_lea.vmem %s1, 560
  %199 = vst [vmem:[%s198] sm:$0xff] %v197
  %s200 = scalar_lea.vmem %s0, 2608
  %v201 = vld [vmem:[%s200] sm:$0xff]
  %s202 = scalar_lea.vmem %s1, 1072
  %203 = vst [vmem:[%s202] sm:$0xff] %v201
  %s204 = scalar_lea.vmem %s0, 2096
  %v205 = vld [vmem:[%s204] sm:$0xff]
  %s206 = scalar_lea.vmem %s1, 1584
  %207 = vst [vmem:[%s206] sm:$0xff] %v205
  %s208 = scalar_lea.vmem %s0, 1584
  %v209 = vld [vmem:[%s208] sm:$0xff]
  %s210 = scalar_lea.vmem %s1, 2096
  %211 = vst [vmem:[%s210] sm:$0xff] %v209
  %s212 = scalar_lea.vmem %s0, 1072
  %v213 = vld [vmem:[%s212] sm:$0xff]
  %s214 = scalar_lea.vmem %s1, 2608
  %215 = vst [vmem:[%s214] sm:$0xff] %v213
  %s216 = scalar_lea.vmem %s0, 560
  %v217 = vld [vmem:[%s216] sm:$0xff]
  %s218 = scalar_lea.vmem %s1, 3120
  %219 = vst [vmem:[%s218] sm:$0xff] %v217
  %s220 = scalar_lea.vmem %s0, 48
  %v221 = vld [vmem:[%s220] sm:$0xff]
  %s222 = scalar_lea.vmem %s1, 3632
  %223 = vst [vmem:[%s222] sm:$0xff] %v221
  %s224 = scalar_lea.vmem %s0, 3888
  %v225 = vld [vmem:[%s224] sm:$0xff]
  %s226 = scalar_lea.vmem %s1, 304
  %227 = vst [vmem:[%s226] sm:$0xff] %v225
  %s228 = scalar_lea.vmem %s0, 3376
  %v229 = vld [vmem:[%s228] sm:$0xff]
  %s230 = scalar_lea.vmem %s1, 816
  %231 = vst [vmem:[%s230] sm:$0xff] %v229
  %s232 = scalar_lea.vmem %s0, 2864
  %v233 = vld [vmem:[%s232] sm:$0xff]
  %s234 = scalar_lea.vmem %s1, 1328
  %235 = vst [vmem:[%s234] sm:$0xff] %v233
  %s236 = scalar_lea.vmem %s0, 2352
  %v237 = vld [vmem:[%s236] sm:$0xff]
  %s238 = scalar_lea.vmem %s1, 1840
  %239 = vst [vmem:[%s238] sm:$0xff] %v237
  %s240 = scalar_lea.vmem %s0, 1840
  %v241 = vld [vmem:[%s240] sm:$0xff]
  %s242 = scalar_lea.vmem %s1, 2352
  %243 = vst [vmem:[%s242] sm:$0xff] %v241
  %s244 = scalar_lea.vmem %s0, 1328
  %v245 = vld [vmem:[%s244] sm:$0xff]
  %s246 = scalar_lea.vmem %s1, 2864
  %247 = vst [vmem:[%s246] sm:$0xff] %v245
  %s248 = scalar_lea.vmem %s0, 816
  %v249 = vld [vmem:[%s248] sm:$0xff]
  %s250 = scalar_lea.vmem %s1, 3376
  %251 = vst [vmem:[%s250] sm:$0xff] %v249
  %s252 = scalar_lea.vmem %s0, 304
  %v253 = vld [vmem:[%s252] sm:$0xff]
  %s254 = scalar_lea.vmem %s1, 3888
  %255 = vst [vmem:[%s254] sm:$0xff] %v253
  %s256 = scalar_lea.vmem %s0, 3648
  %v257 = vld [vmem:[%s256] sm:$0xff]
  %s258 = scalar_lea.vmem %s1, 64
  %259 = vst [vmem:[%s258] sm:$0xff] %v257
  %s260 = scalar_lea.vmem %s0, 3136
  %v261 = vld [vmem:[%s260] sm:$0xff]
  %s262 = scalar_lea.vmem %s1, 576
  %263 = vst [vmem:[%s262] sm:$0xff] %v261
  %s264 = scalar_lea.vmem %s0, 2624
  %v265 = vld [vmem:[%s264] sm:$0xff]
  %s266 = scalar_lea.vmem %s1, 1088
  %267 = vst [vmem:[%s266] sm:$0xff] %v265
  %s268 = scalar_lea.vmem %s0, 2112
  %v269 = vld [vmem:[%s268] sm:$0xff]
  %s270 = scalar_lea.vmem %s1, 1600
  %271 = vst [vmem:[%s270] sm:$0xff] %v269
  %s272 = scalar_lea.vmem %s0, 1600
  %v273 = vld [vmem:[%s272] sm:$0xff]
  %s274 = scalar_lea.vmem %s1, 2112
  %275 = vst [vmem:[%s274] sm:$0xff] %v273
  %s276 = scalar_lea.vmem %s0, 1088
  %v277 = vld [vmem:[%s276] sm:$0xff]
  %s278 = scalar_lea.vmem %s1, 2624
  %279 = vst [vmem:[%s278] sm:$0xff] %v277
  %s280 = scalar_lea.vmem %s0, 576
  %v281 = vld [vmem:[%s280] sm:$0xff]
  %s282 = scalar_lea.vmem %s1, 3136
  %283 = vst [vmem:[%s282] sm:$0xff] %v281
  %s284 = scalar_lea.vmem %s0, 64
  %v285 = vld [vmem:[%s284] sm:$0xff]
  %s286 = scalar_lea.vmem %s1, 3648
  %287 = vst [vmem:[%s286] sm:$0xff] %v285
  %s288 = scalar_lea.vmem %s0, 3904
  %v289 = vld [vmem:[%s288] sm:$0xff]
  %s290 = scalar_lea.vmem %s1, 320
  %291 = vst [vmem:[%s290] sm:$0xff] %v289
  %s292 = scalar_lea.vmem %s0, 3392
  %v293 = vld [vmem:[%s292] sm:$0xff]
  %s294 = scalar_lea.vmem %s1, 832
  %295 = vst [vmem:[%s294] sm:$0xff] %v293
  %s296 = scalar_lea.vmem %s0, 2880
  %v297 = vld [vmem:[%s296] sm:$0xff]
  %s298 = scalar_lea.vmem %s1, 1344
  %299 = vst [vmem:[%s298] sm:$0xff] %v297
  %s300 = scalar_lea.vmem %s0, 2368
  %v301 = vld [vmem:[%s300] sm:$0xff]
  %s302 = scalar_lea.vmem %s1, 1856
  %303 = vst [vmem:[%s302] sm:$0xff] %v301
  %s304 = scalar_lea.vmem %s0, 1856
  %v305 = vld [vmem:[%s304] sm:$0xff]
  %s306 = scalar_lea.vmem %s1, 2368
  %307 = vst [vmem:[%s306] sm:$0xff] %v305
  %s308 = scalar_lea.vmem %s0, 1344
  %v309 = vld [vmem:[%s308] sm:$0xff]
  %s310 = scalar_lea.vmem %s1, 2880
  %311 = vst [vmem:[%s310] sm:$0xff] %v309
  %s312 = scalar_lea.vmem %s0, 832
  %v313 = vld [vmem:[%s312] sm:$0xff]
  %s314 = scalar_lea.vmem %s1, 3392
  %315 = vst [vmem:[%s314] sm:$0xff] %v313
  %s316 = scalar_lea.vmem %s0, 320
  %v317 = vld [vmem:[%s316] sm:$0xff]
  %s318 = scalar_lea.vmem %s1, 3904
  %319 = vst [vmem:[%s318] sm:$0xff] %v317
  %s320 = scalar_lea.vmem %s0, 3664
  %v321 = vld [vmem:[%s320] sm:$0xff]
  %s322 = scalar_lea.vmem %s1, 80
  %323 = vst [vmem:[%s322] sm:$0xff] %v321
  %s324 = scalar_lea.vmem %s0, 3152
  %v325 = vld [vmem:[%s324] sm:$0xff]
  %s326 = scalar_lea.vmem %s1, 592
  %327 = vst [vmem:[%s326] sm:$0xff] %v325
  %s328 = scalar_lea.vmem %s0, 2640
  %v329 = vld [vmem:[%s328] sm:$0xff]
  %s330 = scalar_lea.vmem %s1, 1104
  %331 = vst [vmem:[%s330] sm:$0xff] %v329
  %s332 = scalar_lea.vmem %s0, 2128
  %v333 = vld [vmem:[%s332] sm:$0xff]
  %s334 = scalar_lea.vmem %s1, 1616
  %335 = vst [vmem:[%s334] sm:$0xff] %v333
  %s336 = scalar_lea.vmem %s0, 1616
  %v337 = vld [vmem:[%s336] sm:$0xff]
  %s338 = scalar_lea.vmem %s1, 2128
  %339 = vst [vmem:[%s338] sm:$0xff] %v337
  %s340 = scalar_lea.vmem %s0, 1104
  %v341 = vld [vmem:[%s340] sm:$0xff]
  %s342 = scalar_lea.vmem %s1, 2640
  %343 = vst [vmem:[%s342] sm:$0xff] %v341
  %s344 = scalar_lea.vmem %s0, 592
  %v345 = vld [vmem:[%s344] sm:$0xff]
  %s346 = scalar_lea.vmem %s1, 3152
  %347 = vst [vmem:[%s346] sm:$0xff] %v345
  %s348 = scalar_lea.vmem %s0, 80
  %v349 = vld [vmem:[%s348] sm:$0xff]
  %s350 = scalar_lea.vmem %s1, 3664
  %351 = vst [vmem:[%s350] sm:$0xff] %v349
  %s352 = scalar_lea.vmem %s0, 3920
  %v353 = vld [vmem:[%s352] sm:$0xff]
  %s354 = scalar_lea.vmem %s1, 336
  %355 = vst [vmem:[%s354] sm:$0xff] %v353
  %s356 = scalar_lea.vmem %s0, 3408
  %v357 = vld [vmem:[%s356] sm:$0xff]
  %s358 = scalar_lea.vmem %s1, 848
  %359 = vst [vmem:[%s358] sm:$0xff] %v357
  %s360 = scalar_lea.vmem %s0, 2896
  %v361 = vld [vmem:[%s360] sm:$0xff]
  %s362 = scalar_lea.vmem %s1, 1360
  %363 = vst [vmem:[%s362] sm:$0xff] %v361
  %s364 = scalar_lea.vmem %s0, 2384
  %v365 = vld [vmem:[%s364] sm:$0xff]
  %s366 = scalar_lea.vmem %s1, 1872
  %367 = vst [vmem:[%s366] sm:$0xff] %v365
  %s368 = scalar_lea.vmem %s0, 1872
  %v369 = vld [vmem:[%s368] sm:$0xff]
  %s370 = scalar_lea.vmem %s1, 2384
  %371 = vst [vmem:[%s370] sm:$0xff] %v369
  %s372 = scalar_lea.vmem %s0, 1360
  %v373 = vld [vmem:[%s372] sm:$0xff]
  %s374 = scalar_lea.vmem %s1, 2896
  %375 = vst [vmem:[%s374] sm:$0xff] %v373
  %s376 = scalar_lea.vmem %s0, 848
  %v377 = vld [vmem:[%s376] sm:$0xff]
  %s378 = scalar_lea.vmem %s1, 3408
  %379 = vst [vmem:[%s378] sm:$0xff] %v377
  %s380 = scalar_lea.vmem %s0, 336
  %v381 = vld [vmem:[%s380] sm:$0xff]
  %s382 = scalar_lea.vmem %s1, 3920
  %383 = vst [vmem:[%s382] sm:$0xff] %v381
  %s384 = scalar_lea.vmem %s0, 3680
  %v385 = vld [vmem:[%s384] sm:$0xff]
  %s386 = scalar_lea.vmem %s1, 96
  %387 = vst [vmem:[%s386] sm:$0xff] %v385
  %s388 = scalar_lea.vmem %s0, 3168
  %v389 = vld [vmem:[%s388] sm:$0xff]
  %s390 = scalar_lea.vmem %s1, 608
  %391 = vst [vmem:[%s390] sm:$0xff] %v389
  %s392 = scalar_lea.vmem %s0, 2656
  %v393 = vld [vmem:[%s392] sm:$0xff]
  %s394 = scalar_lea.vmem %s1, 1120
  %395 = vst [vmem:[%s394] sm:$0xff] %v393
  %s396 = scalar_lea.vmem %s0, 2144
  %v397 = vld [vmem:[%s396] sm:$0xff]
  %s398 = scalar_lea.vmem %s1, 1632
  %399 = vst [vmem:[%s398] sm:$0xff] %v397
  %s400 = scalar_lea.vmem %s0, 1632
  %v401 = vld [vmem:[%s400] sm:$0xff]
  %s402 = scalar_lea.vmem %s1, 2144
  %403 = vst [vmem:[%s402] sm:$0xff] %v401
  %s404 = scalar_lea.vmem %s0, 1120
  %v405 = vld [vmem:[%s404] sm:$0xff]
  %s406 = scalar_lea.vmem %s1, 2656
  %407 = vst [vmem:[%s406] sm:$0xff] %v405
  %s408 = scalar_lea.vmem %s0, 608
  %v409 = vld [vmem:[%s408] sm:$0xff]
  %s410 = scalar_lea.vmem %s1, 3168
  %411 = vst [vmem:[%s410] sm:$0xff] %v409
  %s412 = scalar_lea.vmem %s0, 96
  %v413 = vld [vmem:[%s412] sm:$0xff]
  %s414 = scalar_lea.vmem %s1, 3680
  %415 = vst [vmem:[%s414] sm:$0xff] %v413
  %s416 = scalar_lea.vmem %s0, 3936
  %v417 = vld [vmem:[%s416] sm:$0xff]
  %s418 = scalar_lea.vmem %s1, 352
  %419 = vst [vmem:[%s418] sm:$0xff] %v417
  %s420 = scalar_lea.vmem %s0, 3424
  %v421 = vld [vmem:[%s420] sm:$0xff]
  %s422 = scalar_lea.vmem %s1, 864
  %423 = vst [vmem:[%s422] sm:$0xff] %v421
  %s424 = scalar_lea.vmem %s0, 2912
  %v425 = vld [vmem:[%s424] sm:$0xff]
  %s426 = scalar_lea.vmem %s1, 1376
  %427 = vst [vmem:[%s426] sm:$0xff] %v425
  %s428 = scalar_lea.vmem %s0, 2400
  %v429 = vld [vmem:[%s428] sm:$0xff]
  %s430 = scalar_lea.vmem %s1, 1888
  %431 = vst [vmem:[%s430] sm:$0xff] %v429
  %s432 = scalar_lea.vmem %s0, 1888
  %v433 = vld [vmem:[%s432] sm:$0xff]
  %s434 = scalar_lea.vmem %s1, 2400
  %435 = vst [vmem:[%s434] sm:$0xff] %v433
  %s436 = scalar_lea.vmem %s0, 1376
  %v437 = vld [vmem:[%s436] sm:$0xff]
  %s438 = scalar_lea.vmem %s1, 2912
  %439 = vst [vmem:[%s438] sm:$0xff] %v437
  %s440 = scalar_lea.vmem %s0, 864
  %v441 = vld [vmem:[%s440] sm:$0xff]
  %s442 = scalar_lea.vmem %s1, 3424
  %443 = vst [vmem:[%s442] sm:$0xff] %v441
  %s444 = scalar_lea.vmem %s0, 352
  %v445 = vld [vmem:[%s444] sm:$0xff]
  %s446 = scalar_lea.vmem %s1, 3936
  %447 = vst [vmem:[%s446] sm:$0xff] %v445
  %s448 = scalar_lea.vmem %s0, 3696
  %v449 = vld [vmem:[%s448] sm:$0xff]
  %s450 = scalar_lea.vmem %s1, 112
  %451 = vst [vmem:[%s450] sm:$0xff] %v449
  %s452 = scalar_lea.vmem %s0, 3184
  %v453 = vld [vmem:[%s452] sm:$0xff]
  %s454 = scalar_lea.vmem %s1, 624
  %455 = vst [vmem:[%s454] sm:$0xff] %v453
  %s456 = scalar_lea.vmem %s0, 2672
  %v457 = vld [vmem:[%s456] sm:$0xff]
  %s458 = scalar_lea.vmem %s1, 1136
  %459 = vst [vmem:[%s458] sm:$0xff] %v457
  %s460 = scalar_lea.vmem %s0, 2160
  %v461 = vld [vmem:[%s460] sm:$0xff]
  %s462 = scalar_lea.vmem %s1, 1648
  %463 = vst [vmem:[%s462] sm:$0xff] %v461
  %s464 = scalar_lea.vmem %s0, 1648
  %v465 = vld [vmem:[%s464] sm:$0xff]
  %s466 = scalar_lea.vmem %s1, 2160
  %467 = vst [vmem:[%s466] sm:$0xff] %v465
  %s468 = scalar_lea.vmem %s0, 1136
  %v469 = vld [vmem:[%s468] sm:$0xff]
  %s470 = scalar_lea.vmem %s1, 2672
  %471 = vst [vmem:[%s470] sm:$0xff] %v469
  %s472 = scalar_lea.vmem %s0, 624
  %v473 = vld [vmem:[%s472] sm:$0xff]
  %s474 = scalar_lea.vmem %s1, 3184
  %475 = vst [vmem:[%s474] sm:$0xff] %v473
  %s476 = scalar_lea.vmem %s0, 112
  %v477 = vld [vmem:[%s476] sm:$0xff]
  %s478 = scalar_lea.vmem %s1, 3696
  %479 = vst [vmem:[%s478] sm:$0xff] %v477
  %s480 = scalar_lea.vmem %s0, 3952
  %v481 = vld [vmem:[%s480] sm:$0xff]
  %s482 = scalar_lea.vmem %s1, 368
  %483 = vst [vmem:[%s482] sm:$0xff] %v481
  %s484 = scalar_lea.vmem %s0, 3440
  %v485 = vld [vmem:[%s484] sm:$0xff]
  %s486 = scalar_lea.vmem %s1, 880
  %487 = vst [vmem:[%s486] sm:$0xff] %v485
  %s488 = scalar_lea.vmem %s0, 2928
  %v489 = vld [vmem:[%s488] sm:$0xff]
  %s490 = scalar_lea.vmem %s1, 1392
  %491 = vst [vmem:[%s490] sm:$0xff] %v489
  %s492 = scalar_lea.vmem %s0, 2416
  %v493 = vld [vmem:[%s492] sm:$0xff]
  %s494 = scalar_lea.vmem %s1, 1904
  %495 = vst [vmem:[%s494] sm:$0xff] %v493
  %s496 = scalar_lea.vmem %s0, 1904
  %v497 = vld [vmem:[%s496] sm:$0xff]
  %s498 = scalar_lea.vmem %s1, 2416
  %499 = vst [vmem:[%s498] sm:$0xff] %v497
  %s500 = scalar_lea.vmem %s0, 1392
  %v501 = vld [vmem:[%s500] sm:$0xff]
  %s502 = scalar_lea.vmem %s1, 2928
  %503 = vst [vmem:[%s502] sm:$0xff] %v501
  %s504 = scalar_lea.vmem %s0, 880
  %v505 = vld [vmem:[%s504] sm:$0xff]
  %s506 = scalar_lea.vmem %s1, 3440
  %507 = vst [vmem:[%s506] sm:$0xff] %v505
  %s508 = scalar_lea.vmem %s0, 368
  %v509 = vld [vmem:[%s508] sm:$0xff]
  %s510 = scalar_lea.vmem %s1, 3952
  %511 = vst [vmem:[%s510] sm:$0xff] %v509
  %s512 = scalar_lea.vmem %s0, 3712
  %v513 = vld [vmem:[%s512] sm:$0xff]
  %s514 = scalar_lea.vmem %s1, 128
  %515 = vst [vmem:[%s514] sm:$0xff] %v513
  %s516 = scalar_lea.vmem %s0, 3200
  %v517 = vld [vmem:[%s516] sm:$0xff]
  %s518 = scalar_lea.vmem %s1, 640
  %519 = vst [vmem:[%s518] sm:$0xff] %v517
  %s520 = scalar_lea.vmem %s0, 2688
  %v521 = vld [vmem:[%s520] sm:$0xff]
  %s522 = scalar_lea.vmem %s1, 1152
  %523 = vst [vmem:[%s522] sm:$0xff] %v521
  %s524 = scalar_lea.vmem %s0, 2176
  %v525 = vld [vmem:[%s524] sm:$0xff]
  %s526 = scalar_lea.vmem %s1, 1664
  %527 = vst [vmem:[%s526] sm:$0xff] %v525
  %s528 = scalar_lea.vmem %s0, 1664
  %v529 = vld [vmem:[%s528] sm:$0xff]
  %s530 = scalar_lea.vmem %s1, 2176
  %531 = vst [vmem:[%s530] sm:$0xff] %v529
  %s532 = scalar_lea.vmem %s0, 1152
  %v533 = vld [vmem:[%s532] sm:$0xff]
  %s534 = scalar_lea.vmem %s1, 2688
  %535 = vst [vmem:[%s534] sm:$0xff] %v533
  %s536 = scalar_lea.vmem %s0, 640
  %v537 = vld [vmem:[%s536] sm:$0xff]
  %s538 = scalar_lea.vmem %s1, 3200
  %539 = vst [vmem:[%s538] sm:$0xff] %v537
  %s540 = scalar_lea.vmem %s0, 128
  %v541 = vld [vmem:[%s540] sm:$0xff]
  %s542 = scalar_lea.vmem %s1, 3712
  %543 = vst [vmem:[%s542] sm:$0xff] %v541
  %s544 = scalar_lea.vmem %s0, 3968
  %v545 = vld [vmem:[%s544] sm:$0xff]
  %s546 = scalar_lea.vmem %s1, 384
  %547 = vst [vmem:[%s546] sm:$0xff] %v545
  %s548 = scalar_lea.vmem %s0, 3456
  %v549 = vld [vmem:[%s548] sm:$0xff]
  %s550 = scalar_lea.vmem %s1, 896
  %551 = vst [vmem:[%s550] sm:$0xff] %v549
  %s552 = scalar_lea.vmem %s0, 2944
  %v553 = vld [vmem:[%s552] sm:$0xff]
  %s554 = scalar_lea.vmem %s1, 1408
  %555 = vst [vmem:[%s554] sm:$0xff] %v553
  %s556 = scalar_lea.vmem %s0, 2432
  %v557 = vld [vmem:[%s556] sm:$0xff]
  %s558 = scalar_lea.vmem %s1, 1920
  %559 = vst [vmem:[%s558] sm:$0xff] %v557
  %s560 = scalar_lea.vmem %s0, 1920
  %v561 = vld [vmem:[%s560] sm:$0xff]
  %s562 = scalar_lea.vmem %s1, 2432
  %563 = vst [vmem:[%s562] sm:$0xff] %v561
  %s564 = scalar_lea.vmem %s0, 1408
  %v565 = vld [vmem:[%s564] sm:$0xff]
  %s566 = scalar_lea.vmem %s1, 2944
  %567 = vst [vmem:[%s566] sm:$0xff] %v565
  %s568 = scalar_lea.vmem %s0, 896
  %v569 = vld [vmem:[%s568] sm:$0xff]
  %s570 = scalar_lea.vmem %s1, 3456
  %571 = vst [vmem:[%s570] sm:$0xff] %v569
  %s572 = scalar_lea.vmem %s0, 384
  %v573 = vld [vmem:[%s572] sm:$0xff]
  %s574 = scalar_lea.vmem %s1, 3968
  %575 = vst [vmem:[%s574] sm:$0xff] %v573
  %s576 = scalar_lea.vmem %s0, 3728
  %v577 = vld [vmem:[%s576] sm:$0xff]
  %s578 = scalar_lea.vmem %s1, 144
  %579 = vst [vmem:[%s578] sm:$0xff] %v577
  %s580 = scalar_lea.vmem %s0, 3216
  %v581 = vld [vmem:[%s580] sm:$0xff]
  %s582 = scalar_lea.vmem %s1, 656
  %583 = vst [vmem:[%s582] sm:$0xff] %v581
  %s584 = scalar_lea.vmem %s0, 2704
  %v585 = vld [vmem:[%s584] sm:$0xff]
  %s586 = scalar_lea.vmem %s1, 1168
  %587 = vst [vmem:[%s586] sm:$0xff] %v585
  %s588 = scalar_lea.vmem %s0, 2192
  %v589 = vld [vmem:[%s588] sm:$0xff]
  %s590 = scalar_lea.vmem %s1, 1680
  %591 = vst [vmem:[%s590] sm:$0xff] %v589
  %s592 = scalar_lea.vmem %s0, 1680
  %v593 = vld [vmem:[%s592] sm:$0xff]
  %s594 = scalar_lea.vmem %s1, 2192
  %595 = vst [vmem:[%s594] sm:$0xff] %v593
  %s596 = scalar_lea.vmem %s0, 1168
  %v597 = vld [vmem:[%s596] sm:$0xff]
  %s598 = scalar_lea.vmem %s1, 2704
  %599 = vst [vmem:[%s598] sm:$0xff] %v597
  %s600 = scalar_lea.vmem %s0, 656
  %v601 = vld [vmem:[%s600] sm:$0xff]
  %s602 = scalar_lea.vmem %s1, 3216
  %603 = vst [vmem:[%s602] sm:$0xff] %v601
  %s604 = scalar_lea.vmem %s0, 144
  %v605 = vld [vmem:[%s604] sm:$0xff]
  %s606 = scalar_lea.vmem %s1, 3728
  %607 = vst [vmem:[%s606] sm:$0xff] %v605
  %s608 = scalar_lea.vmem %s0, 3984
  %v609 = vld [vmem:[%s608] sm:$0xff]
  %s610 = scalar_lea.vmem %s1, 400
  %611 = vst [vmem:[%s610] sm:$0xff] %v609
  %s612 = scalar_lea.vmem %s0, 3472
  %v613 = vld [vmem:[%s612] sm:$0xff]
  %s614 = scalar_lea.vmem %s1, 912
  %615 = vst [vmem:[%s614] sm:$0xff] %v613
  %s616 = scalar_lea.vmem %s0, 2960
  %v617 = vld [vmem:[%s616] sm:$0xff]
  %s618 = scalar_lea.vmem %s1, 1424
  %619 = vst [vmem:[%s618] sm:$0xff] %v617
  %s620 = scalar_lea.vmem %s0, 2448
  %v621 = vld [vmem:[%s620] sm:$0xff]
  %s622 = scalar_lea.vmem %s1, 1936
  %623 = vst [vmem:[%s622] sm:$0xff] %v621
  %s624 = scalar_lea.vmem %s0, 1936
  %v625 = vld [vmem:[%s624] sm:$0xff]
  %s626 = scalar_lea.vmem %s1, 2448
  %627 = vst [vmem:[%s626] sm:$0xff] %v625
  %s628 = scalar_lea.vmem %s0, 1424
  %v629 = vld [vmem:[%s628] sm:$0xff]
  %s630 = scalar_lea.vmem %s1, 2960
  %631 = vst [vmem:[%s630] sm:$0xff] %v629
  %s632 = scalar_lea.vmem %s0, 912
  %v633 = vld [vmem:[%s632] sm:$0xff]
  %s634 = scalar_lea.vmem %s1, 3472
  %635 = vst [vmem:[%s634] sm:$0xff] %v633
  %s636 = scalar_lea.vmem %s0, 400
  %v637 = vld [vmem:[%s636] sm:$0xff]
  %s638 = scalar_lea.vmem %s1, 3984
  %639 = vst [vmem:[%s638] sm:$0xff] %v637
  %s640 = scalar_lea.vmem %s0, 3744
  %v641 = vld [vmem:[%s640] sm:$0xff]
  %s642 = scalar_lea.vmem %s1, 160
  %643 = vst [vmem:[%s642] sm:$0xff] %v641
  %s644 = scalar_lea.vmem %s0, 3232
  %v645 = vld [vmem:[%s644] sm:$0xff]
  %s646 = scalar_lea.vmem %s1, 672
  %647 = vst [vmem:[%s646] sm:$0xff] %v645
  %s648 = scalar_lea.vmem %s0, 2720
  %v649 = vld [vmem:[%s648] sm:$0xff]
  %s650 = scalar_lea.vmem %s1, 1184
  %651 = vst [vmem:[%s650] sm:$0xff] %v649
  %s652 = scalar_lea.vmem %s0, 2208
  %v653 = vld [vmem:[%s652] sm:$0xff]
  %s654 = scalar_lea.vmem %s1, 1696
  %655 = vst [vmem:[%s654] sm:$0xff] %v653
  %s656 = scalar_lea.vmem %s0, 1696
  %v657 = vld [vmem:[%s656] sm:$0xff]
  %s658 = scalar_lea.vmem %s1, 2208
  %659 = vst [vmem:[%s658] sm:$0xff] %v657
  %s660 = scalar_lea.vmem %s0, 1184
  %v661 = vld [vmem:[%s660] sm:$0xff]
  %s662 = scalar_lea.vmem %s1, 2720
  %663 = vst [vmem:[%s662] sm:$0xff] %v661
  %s664 = scalar_lea.vmem %s0, 672
  %v665 = vld [vmem:[%s664] sm:$0xff]
  %s666 = scalar_lea.vmem %s1, 3232
  %667 = vst [vmem:[%s666] sm:$0xff] %v665
  %s668 = scalar_lea.vmem %s0, 160
  %v669 = vld [vmem:[%s668] sm:$0xff]
  %s670 = scalar_lea.vmem %s1, 3744
  %671 = vst [vmem:[%s670] sm:$0xff] %v669
  %s672 = scalar_lea.vmem %s0, 4000
  %v673 = vld [vmem:[%s672] sm:$0xff]
  %s674 = scalar_lea.vmem %s1, 416
  %675 = vst [vmem:[%s674] sm:$0xff] %v673
  %s676 = scalar_lea.vmem %s0, 3488
  %v677 = vld [vmem:[%s676] sm:$0xff]
  %s678 = scalar_lea.vmem %s1, 928
  %679 = vst [vmem:[%s678] sm:$0xff] %v677
  %s680 = scalar_lea.vmem %s0, 2976
  %v681 = vld [vmem:[%s680] sm:$0xff]
  %s682 = scalar_lea.vmem %s1, 1440
  %683 = vst [vmem:[%s682] sm:$0xff] %v681
  %s684 = scalar_lea.vmem %s0, 2464
  %v685 = vld [vmem:[%s684] sm:$0xff]
  %s686 = scalar_lea.vmem %s1, 1952
  %687 = vst [vmem:[%s686] sm:$0xff] %v685
  %s688 = scalar_lea.vmem %s0, 1952
  %v689 = vld [vmem:[%s688] sm:$0xff]
  %s690 = scalar_lea.vmem %s1, 2464
  %691 = vst [vmem:[%s690] sm:$0xff] %v689
  %s692 = scalar_lea.vmem %s0, 1440
  %v693 = vld [vmem:[%s692] sm:$0xff]
  %s694 = scalar_lea.vmem %s1, 2976
  %695 = vst [vmem:[%s694] sm:$0xff] %v693
  %s696 = scalar_lea.vmem %s0, 928
  %v697 = vld [vmem:[%s696] sm:$0xff]
  %s698 = scalar_lea.vmem %s1, 3488
  %699 = vst [vmem:[%s698] sm:$0xff] %v697
  %s700 = scalar_lea.vmem %s0, 416
  %v701 = vld [vmem:[%s700] sm:$0xff]
  %s702 = scalar_lea.vmem %s1, 4000
  %703 = vst [vmem:[%s702] sm:$0xff] %v701
  %s704 = scalar_lea.vmem %s0, 3760
  %v705 = vld [vmem:[%s704] sm:$0xff]
  %s706 = scalar_lea.vmem %s1, 176
  %707 = vst [vmem:[%s706] sm:$0xff] %v705
  %s708 = scalar_lea.vmem %s0, 3248
  %v709 = vld [vmem:[%s708] sm:$0xff]
  %s710 = scalar_lea.vmem %s1, 688
  %711 = vst [vmem:[%s710] sm:$0xff] %v709
  %s712 = scalar_lea.vmem %s0, 2736
  %v713 = vld [vmem:[%s712] sm:$0xff]
  %s714 = scalar_lea.vmem %s1, 1200
  %715 = vst [vmem:[%s714] sm:$0xff] %v713
  %s716 = scalar_lea.vmem %s0, 2224
  %v717 = vld [vmem:[%s716] sm:$0xff]
  %s718 = scalar_lea.vmem %s1, 1712
  %719 = vst [vmem:[%s718] sm:$0xff] %v717
  %s720 = scalar_lea.vmem %s0, 1712
  %v721 = vld [vmem:[%s720] sm:$0xff]
  %s722 = scalar_lea.vmem %s1, 2224
  %723 = vst [vmem:[%s722] sm:$0xff] %v721
  %s724 = scalar_lea.vmem %s0, 1200
  %v725 = vld [vmem:[%s724] sm:$0xff]
  %s726 = scalar_lea.vmem %s1, 2736
  %727 = vst [vmem:[%s726] sm:$0xff] %v725
  %s728 = scalar_lea.vmem %s0, 688
  %v729 = vld [vmem:[%s728] sm:$0xff]
  %s730 = scalar_lea.vmem %s1, 3248
  %731 = vst [vmem:[%s730] sm:$0xff] %v729
  %s732 = scalar_lea.vmem %s0, 176
  %v733 = vld [vmem:[%s732] sm:$0xff]
  %s734 = scalar_lea.vmem %s1, 3760
  %735 = vst [vmem:[%s734] sm:$0xff] %v733
  %s736 = scalar_lea.vmem %s0, 4016
  %v737 = vld [vmem:[%s736] sm:$0xff]
  %s738 = scalar_lea.vmem %s1, 432
  %739 = vst [vmem:[%s738] sm:$0xff] %v737
  %s740 = scalar_lea.vmem %s0, 3504
  %v741 = vld [vmem:[%s740] sm:$0xff]
  %s742 = scalar_lea.vmem %s1, 944
  %743 = vst [vmem:[%s742] sm:$0xff] %v741
  %s744 = scalar_lea.vmem %s0, 2992
  %v745 = vld [vmem:[%s744] sm:$0xff]
  %s746 = scalar_lea.vmem %s1, 1456
  %747 = vst [vmem:[%s746] sm:$0xff] %v745
  %s748 = scalar_lea.vmem %s0, 2480
  %v749 = vld [vmem:[%s748] sm:$0xff]
  %s750 = scalar_lea.vmem %s1, 1968
  %751 = vst [vmem:[%s750] sm:$0xff] %v749
  %s752 = scalar_lea.vmem %s0, 1968
  %v753 = vld [vmem:[%s752] sm:$0xff]
  %s754 = scalar_lea.vmem %s1, 2480
  %755 = vst [vmem:[%s754] sm:$0xff] %v753
  %s756 = scalar_lea.vmem %s0, 1456
  %v757 = vld [vmem:[%s756] sm:$0xff]
  %s758 = scalar_lea.vmem %s1, 2992
  %759 = vst [vmem:[%s758] sm:$0xff] %v757
  %s760 = scalar_lea.vmem %s0, 944
  %v761 = vld [vmem:[%s760] sm:$0xff]
  %s762 = scalar_lea.vmem %s1, 3504
  %763 = vst [vmem:[%s762] sm:$0xff] %v761
  %s764 = scalar_lea.vmem %s0, 432
  %v765 = vld [vmem:[%s764] sm:$0xff]
  %s766 = scalar_lea.vmem %s1, 4016
  %767 = vst [vmem:[%s766] sm:$0xff] %v765
  %s768 = scalar_lea.vmem %s0, 3776
  %v769 = vld [vmem:[%s768] sm:$0xff]
  %s770 = scalar_lea.vmem %s1, 192
  %771 = vst [vmem:[%s770] sm:$0xff] %v769
  %s772 = scalar_lea.vmem %s0, 3264
  %v773 = vld [vmem:[%s772] sm:$0xff]
  %s774 = scalar_lea.vmem %s1, 704
  %775 = vst [vmem:[%s774] sm:$0xff] %v773
  %s776 = scalar_lea.vmem %s0, 2752
  %v777 = vld [vmem:[%s776] sm:$0xff]
  %s778 = scalar_lea.vmem %s1, 1216
  %779 = vst [vmem:[%s778] sm:$0xff] %v777
  %s780 = scalar_lea.vmem %s0, 2240
  %v781 = vld [vmem:[%s780] sm:$0xff]
  %s782 = scalar_lea.vmem %s1, 1728
  %783 = vst [vmem:[%s782] sm:$0xff] %v781
  %s784 = scalar_lea.vmem %s0, 1728
  %v785 = vld [vmem:[%s784] sm:$0xff]
  %s786 = scalar_lea.vmem %s1, 2240
  %787 = vst [vmem:[%s786] sm:$0xff] %v785
  %s788 = scalar_lea.vmem %s0, 1216
  %v789 = vld [vmem:[%s788] sm:$0xff]
  %s790 = scalar_lea.vmem %s1, 2752
  %791 = vst [vmem:[%s790] sm:$0xff] %v789
  %s792 = scalar_lea.vmem %s0, 704
  %v793 = vld [vmem:[%s792] sm:$0xff]
  %s794 = scalar_lea.vmem %s1, 3264
  %795 = vst [vmem:[%s794] sm:$0xff] %v793
  %s796 = scalar_lea.vmem %s0, 192
  %v797 = vld [vmem:[%s796] sm:$0xff]
  %s798 = scalar_lea.vmem %s1, 3776
  %799 = vst [vmem:[%s798] sm:$0xff] %v797
  %s800 = scalar_lea.vmem %s0, 4032
  %v801 = vld [vmem:[%s800] sm:$0xff]
  %s802 = scalar_lea.vmem %s1, 448
  %803 = vst [vmem:[%s802] sm:$0xff] %v801
  %s804 = scalar_lea.vmem %s0, 3520
  %v805 = vld [vmem:[%s804] sm:$0xff]
  %s806 = scalar_lea.vmem %s1, 960
  %807 = vst [vmem:[%s806] sm:$0xff] %v805
  %s808 = scalar_lea.vmem %s0, 3008
  %v809 = vld [vmem:[%s808] sm:$0xff]
  %s810 = scalar_lea.vmem %s1, 1472
  %811 = vst [vmem:[%s810] sm:$0xff] %v809
  %s812 = scalar_lea.vmem %s0, 2496
  %v813 = vld [vmem:[%s812] sm:$0xff]
  %s814 = scalar_lea.vmem %s1, 1984
  %815 = vst [vmem:[%s814] sm:$0xff] %v813
  %s816 = scalar_lea.vmem %s0, 1984
  %v817 = vld [vmem:[%s816] sm:$0xff]
  %s818 = scalar_lea.vmem %s1, 2496
  %819 = vst [vmem:[%s818] sm:$0xff] %v817
  %s820 = scalar_lea.vmem %s0, 1472
  %v821 = vld [vmem:[%s820] sm:$0xff]
  %s822 = scalar_lea.vmem %s1, 3008
  %823 = vst [vmem:[%s822] sm:$0xff] %v821
  %s824 = scalar_lea.vmem %s0, 960
  %v825 = vld [vmem:[%s824] sm:$0xff]
  %s826 = scalar_lea.vmem %s1, 3520
  %827 = vst [vmem:[%s826] sm:$0xff] %v825
  %s828 = scalar_lea.vmem %s0, 448
  %v829 = vld [vmem:[%s828] sm:$0xff]
  %s830 = scalar_lea.vmem %s1, 4032
  %831 = vst [vmem:[%s830] sm:$0xff] %v829
  %s832 = scalar_lea.vmem %s0, 3792
  %v833 = vld [vmem:[%s832] sm:$0xff]
  %s834 = scalar_lea.vmem %s1, 208
  %835 = vst [vmem:[%s834] sm:$0xff] %v833
  %s836 = scalar_lea.vmem %s0, 3280
  %v837 = vld [vmem:[%s836] sm:$0xff]
  %s838 = scalar_lea.vmem %s1, 720
  %839 = vst [vmem:[%s838] sm:$0xff] %v837
  %s840 = scalar_lea.vmem %s0, 2768
  %v841 = vld [vmem:[%s840] sm:$0xff]
  %s842 = scalar_lea.vmem %s1, 1232
  %843 = vst [vmem:[%s842] sm:$0xff] %v841
  %s844 = scalar_lea.vmem %s0, 2256
  %v845 = vld [vmem:[%s844] sm:$0xff]
  %s846 = scalar_lea.vmem %s1, 1744
  %847 = vst [vmem:[%s846] sm:$0xff] %v845
  %s848 = scalar_lea.vmem %s0, 1744
  %v849 = vld [vmem:[%s848] sm:$0xff]
  %s850 = scalar_lea.vmem %s1, 2256
  %851 = vst [vmem:[%s850] sm:$0xff] %v849
  %s852 = scalar_lea.vmem %s0, 1232
  %v853 = vld [vmem:[%s852] sm:$0xff]
  %s854 = scalar_lea.vmem %s1, 2768
  %855 = vst [vmem:[%s854] sm:$0xff] %v853
  %s856 = scalar_lea.vmem %s0, 720
  %v857 = vld [vmem:[%s856] sm:$0xff]
  %s858 = scalar_lea.vmem %s1, 3280
  %859 = vst [vmem:[%s858] sm:$0xff] %v857
  %s860 = scalar_lea.vmem %s0, 208
  %v861 = vld [vmem:[%s860] sm:$0xff]
  %s862 = scalar_lea.vmem %s1, 3792
  %863 = vst [vmem:[%s862] sm:$0xff] %v861
  %s864 = scalar_lea.vmem %s0, 4048
  %v865 = vld [vmem:[%s864] sm:$0xff]
  %s866 = scalar_lea.vmem %s1, 464
  %867 = vst [vmem:[%s866] sm:$0xff] %v865
  %s868 = scalar_lea.vmem %s0, 3536
  %v869 = vld [vmem:[%s868] sm:$0xff]
  %s870 = scalar_lea.vmem %s1, 976
  %871 = vst [vmem:[%s870] sm:$0xff] %v869
  %s872 = scalar_lea.vmem %s0, 3024
  %v873 = vld [vmem:[%s872] sm:$0xff]
  %s874 = scalar_lea.vmem %s1, 1488
  %875 = vst [vmem:[%s874] sm:$0xff] %v873
  %s876 = scalar_lea.vmem %s0, 2512
  %v877 = vld [vmem:[%s876] sm:$0xff]
  %s878 = scalar_lea.vmem %s1, 2000
  %879 = vst [vmem:[%s878] sm:$0xff] %v877
  %s880 = scalar_lea.vmem %s0, 2000
  %v881 = vld [vmem:[%s880] sm:$0xff]
  %s882 = scalar_lea.vmem %s1, 2512
  %883 = vst [vmem:[%s882] sm:$0xff] %v881
  %s884 = scalar_lea.vmem %s0, 1488
  %v885 = vld [vmem:[%s884] sm:$0xff]
  %s886 = scalar_lea.vmem %s1, 3024
  %887 = vst [vmem:[%s886] sm:$0xff] %v885
  %s888 = scalar_lea.vmem %s0, 976
  %v889 = vld [vmem:[%s888] sm:$0xff]
  %s890 = scalar_lea.vmem %s1, 3536
  %891 = vst [vmem:[%s890] sm:$0xff] %v889
  %s892 = scalar_lea.vmem %s0, 464
  %v893 = vld [vmem:[%s892] sm:$0xff]
  %s894 = scalar_lea.vmem %s1, 4048
  %895 = vst [vmem:[%s894] sm:$0xff] %v893
  %s896 = scalar_lea.vmem %s0, 3808
  %v897 = vld [vmem:[%s896] sm:$0xff]
  %s898 = scalar_lea.vmem %s1, 224
  %899 = vst [vmem:[%s898] sm:$0xff] %v897
  %s900 = scalar_lea.vmem %s0, 3296
  %v901 = vld [vmem:[%s900] sm:$0xff]
  %s902 = scalar_lea.vmem %s1, 736
  %903 = vst [vmem:[%s902] sm:$0xff] %v901
  %s904 = scalar_lea.vmem %s0, 2784
  %v905 = vld [vmem:[%s904] sm:$0xff]
  %s906 = scalar_lea.vmem %s1, 1248
  %907 = vst [vmem:[%s906] sm:$0xff] %v905
  %s908 = scalar_lea.vmem %s0, 2272
  %v909 = vld [vmem:[%s908] sm:$0xff]
  %s910 = scalar_lea.vmem %s1, 1760
  %911 = vst [vmem:[%s910] sm:$0xff] %v909
  %s912 = scalar_lea.vmem %s0, 1760
  %v913 = vld [vmem:[%s912] sm:$0xff]
  %s914 = scalar_lea.vmem %s1, 2272
  %915 = vst [vmem:[%s914] sm:$0xff] %v913
  %s916 = scalar_lea.vmem %s0, 1248
  %v917 = vld [vmem:[%s916] sm:$0xff]
  %s918 = scalar_lea.vmem %s1, 2784
  %919 = vst [vmem:[%s918] sm:$0xff] %v917
  %s920 = scalar_lea.vmem %s0, 736
  %v921 = vld [vmem:[%s920] sm:$0xff]
  %s922 = scalar_lea.vmem %s1, 3296
  %923 = vst [vmem:[%s922] sm:$0xff] %v921
  %s924 = scalar_lea.vmem %s0, 224
  %v925 = vld [vmem:[%s924] sm:$0xff]
  %s926 = scalar_lea.vmem %s1, 3808
  %927 = vst [vmem:[%s926] sm:$0xff] %v925
  %s928 = scalar_lea.vmem %s0, 4064
  %v929 = vld [vmem:[%s928] sm:$0xff]
  %s930 = scalar_lea.vmem %s1, 480
  %931 = vst [vmem:[%s930] sm:$0xff] %v929
  %s932 = scalar_lea.vmem %s0, 3552
  %v933 = vld [vmem:[%s932] sm:$0xff]
  %s934 = scalar_lea.vmem %s1, 992
  %935 = vst [vmem:[%s934] sm:$0xff] %v933
  %s936 = scalar_lea.vmem %s0, 3040
  %v937 = vld [vmem:[%s936] sm:$0xff]
  %s938 = scalar_lea.vmem %s1, 1504
  %939 = vst [vmem:[%s938] sm:$0xff] %v937
  %s940 = scalar_lea.vmem %s0, 2528
  %v941 = vld [vmem:[%s940] sm:$0xff]
  %s942 = scalar_lea.vmem %s1, 2016
  %943 = vst [vmem:[%s942] sm:$0xff] %v941
  %s944 = scalar_lea.vmem %s0, 2016
  %v945 = vld [vmem:[%s944] sm:$0xff]
  %s946 = scalar_lea.vmem %s1, 2528
  %947 = vst [vmem:[%s946] sm:$0xff] %v945
  %s948 = scalar_lea.vmem %s0, 1504
  %v949 = vld [vmem:[%s948] sm:$0xff]
  %s950 = scalar_lea.vmem %s1, 3040
  %951 = vst [vmem:[%s950] sm:$0xff] %v949
  %s952 = scalar_lea.vmem %s0, 992
  %v953 = vld [vmem:[%s952] sm:$0xff]
  %s954 = scalar_lea.vmem %s1, 3552
  %955 = vst [vmem:[%s954] sm:$0xff] %v953
  %s956 = scalar_lea.vmem %s0, 480
  %v957 = vld [vmem:[%s956] sm:$0xff]
  %s958 = scalar_lea.vmem %s1, 4064
  %959 = vst [vmem:[%s958] sm:$0xff] %v957
  %s960 = scalar_lea.vmem %s0, 3824
  %v961 = vld [vmem:[%s960] sm:$0xff]
  %s962 = scalar_lea.vmem %s1, 240
  %963 = vst [vmem:[%s962] sm:$0xff] %v961
  %s964 = scalar_lea.vmem %s0, 3312
  %v965 = vld [vmem:[%s964] sm:$0xff]
  %s966 = scalar_lea.vmem %s1, 752
  %967 = vst [vmem:[%s966] sm:$0xff] %v965
  %s968 = scalar_lea.vmem %s0, 2800
  %v969 = vld [vmem:[%s968] sm:$0xff]
  %s970 = scalar_lea.vmem %s1, 1264
  %971 = vst [vmem:[%s970] sm:$0xff] %v969
  %s972 = scalar_lea.vmem %s0, 2288
  %v973 = vld [vmem:[%s972] sm:$0xff]
  %s974 = scalar_lea.vmem %s1, 1776
  %975 = vst [vmem:[%s974] sm:$0xff] %v973
  %s976 = scalar_lea.vmem %s0, 1776
  %v977 = vld [vmem:[%s976] sm:$0xff]
  %s978 = scalar_lea.vmem %s1, 2288
  %979 = vst [vmem:[%s978] sm:$0xff] %v977
  %s980 = scalar_lea.vmem %s0, 1264
  %v981 = vld [vmem:[%s980] sm:$0xff]
  %s982 = scalar_lea.vmem %s1, 2800
  %983 = vst [vmem:[%s982] sm:$0xff] %v981
  %s984 = scalar_lea.vmem %s0, 752
  %v985 = vld [vmem:[%s984] sm:$0xff]
  %s986 = scalar_lea.vmem %s1, 3312
  %987 = vst [vmem:[%s986] sm:$0xff] %v985
  %s988 = scalar_lea.vmem %s0, 240
  %v989 = vld [vmem:[%s988] sm:$0xff]
  %s990 = scalar_lea.vmem %s1, 3824
  %991 = vst [vmem:[%s990] sm:$0xff] %v989
  %s992 = scalar_lea.vmem %s0, 4080
  %v993 = vld [vmem:[%s992] sm:$0xff]
  %s994 = scalar_lea.vmem %s1, 496
  %995 = vst [vmem:[%s994] sm:$0xff] %v993
  %s996 = scalar_lea.vmem %s0, 3568
  %v997 = vld [vmem:[%s996] sm:$0xff]
  %s998 = scalar_lea.vmem %s1, 1008
  %999 = vst [vmem:[%s998] sm:$0xff] %v997
  %s1000 = scalar_lea.vmem %s0, 3056
  %v1001 = vld [vmem:[%s1000] sm:$0xff]
  %s1002 = scalar_lea.vmem %s1, 1520
  %1003 = vst [vmem:[%s1002] sm:$0xff] %v1001
  %s1004 = scalar_lea.vmem %s0, 2544
  %v1005 = vld [vmem:[%s1004] sm:$0xff]
  %s1006 = scalar_lea.vmem %s1, 2032
  %1007 = vst [vmem:[%s1006] sm:$0xff] %v1005
  %s1008 = scalar_lea.vmem %s0, 2032
  %v1009 = vld [vmem:[%s1008] sm:$0xff]
  %s1010 = scalar_lea.vmem %s1, 2544
  %1011 = vst [vmem:[%s1010] sm:$0xff] %v1009
  %s1012 = scalar_lea.vmem %s0, 1520
  %v1013 = vld [vmem:[%s1012] sm:$0xff]
  %s1014 = scalar_lea.vmem %s1, 3056
  %1015 = vst [vmem:[%s1014] sm:$0xff] %v1013
  %s1016 = scalar_lea.vmem %s0, 1008
  %v1017 = vld [vmem:[%s1016] sm:$0xff]
  %s1018 = scalar_lea.vmem %s1, 3568
  %1019 = vst [vmem:[%s1018] sm:$0xff] %v1017
  %s1020 = scalar_lea.vmem %s0, 496
  %v1021 = vld [vmem:[%s1020] sm:$0xff]
  %s1022 = scalar_lea.vmem %s1, 4080
  %1023 = vst [vmem:[%s1022] sm:$0xff] %v1021
  %s1024 = scalar_lea.vmem %s0, 3592
  %v1025 = vld [vmem:[%s1024] sm:$0xff]
  %s1026 = scalar_lea.vmem %s1, 8
  %1027 = vst [vmem:[%s1026] sm:$0xff] %v1025
  %s1028 = scalar_lea.vmem %s0, 3080
  %v1029 = vld [vmem:[%s1028] sm:$0xff]
  %s1030 = scalar_lea.vmem %s1, 520
  %1031 = vst [vmem:[%s1030] sm:$0xff] %v1029
  %s1032 = scalar_lea.vmem %s0, 2568
  %v1033 = vld [vmem:[%s1032] sm:$0xff]
  %s1034 = scalar_lea.vmem %s1, 1032
  %1035 = vst [vmem:[%s1034] sm:$0xff] %v1033
  %s1036 = scalar_lea.vmem %s0, 2056
  %v1037 = vld [vmem:[%s1036] sm:$0xff]
  %s1038 = scalar_lea.vmem %s1, 1544
  %1039 = vst [vmem:[%s1038] sm:$0xff] %v1037
  %s1040 = scalar_lea.vmem %s0, 1544
  %v1041 = vld [vmem:[%s1040] sm:$0xff]
  %s1042 = scalar_lea.vmem %s1, 2056
  %1043 = vst [vmem:[%s1042] sm:$0xff] %v1041
  %s1044 = scalar_lea.vmem %s0, 1032
  %v1045 = vld [vmem:[%s1044] sm:$0xff]
  %s1046 = scalar_lea.vmem %s1, 2568
  %1047 = vst [vmem:[%s1046] sm:$0xff] %v1045
  %s1048 = scalar_lea.vmem %s0, 520
  %v1049 = vld [vmem:[%s1048] sm:$0xff]
  %s1050 = scalar_lea.vmem %s1, 3080
  %1051 = vst [vmem:[%s1050] sm:$0xff] %v1049
  %s1052 = scalar_lea.vmem %s0, 8
  %v1053 = vld [vmem:[%s1052] sm:$0xff]
  %s1054 = scalar_lea.vmem %s1, 3592
  %1055 = vst [vmem:[%s1054] sm:$0xff] %v1053
  %s1056 = scalar_lea.vmem %s0, 3848
  %v1057 = vld [vmem:[%s1056] sm:$0xff]
  %s1058 = scalar_lea.vmem %s1, 264
  %1059 = vst [vmem:[%s1058] sm:$0xff] %v1057
  %s1060 = scalar_lea.vmem %s0, 3336
  %v1061 = vld [vmem:[%s1060] sm:$0xff]
  %s1062 = scalar_lea.vmem %s1, 776
  %1063 = vst [vmem:[%s1062] sm:$0xff] %v1061
  %s1064 = scalar_lea.vmem %s0, 2824
  %v1065 = vld [vmem:[%s1064] sm:$0xff]
  %s1066 = scalar_lea.vmem %s1, 1288
  %1067 = vst [vmem:[%s1066] sm:$0xff] %v1065
  %s1068 = scalar_lea.vmem %s0, 2312
  %v1069 = vld [vmem:[%s1068] sm:$0xff]
  %s1070 = scalar_lea.vmem %s1, 1800
  %1071 = vst [vmem:[%s1070] sm:$0xff] %v1069
  %s1072 = scalar_lea.vmem %s0, 1800
  %v1073 = vld [vmem:[%s1072] sm:$0xff]
  %s1074 = scalar_lea.vmem %s1, 2312
  %1075 = vst [vmem:[%s1074] sm:$0xff] %v1073
  %s1076 = scalar_lea.vmem %s0, 1288
  %v1077 = vld [vmem:[%s1076] sm:$0xff]
  %s1078 = scalar_lea.vmem %s1, 2824
  %1079 = vst [vmem:[%s1078] sm:$0xff] %v1077
  %s1080 = scalar_lea.vmem %s0, 776
  %v1081 = vld [vmem:[%s1080] sm:$0xff]
  %s1082 = scalar_lea.vmem %s1, 3336
  %1083 = vst [vmem:[%s1082] sm:$0xff] %v1081
  %s1084 = scalar_lea.vmem %s0, 264
  %v1085 = vld [vmem:[%s1084] sm:$0xff]
  %s1086 = scalar_lea.vmem %s1, 3848
  %1087 = vst [vmem:[%s1086] sm:$0xff] %v1085
  %s1088 = scalar_lea.vmem %s0, 3608
  %v1089 = vld [vmem:[%s1088] sm:$0xff]
  %s1090 = scalar_lea.vmem %s1, 24
  %1091 = vst [vmem:[%s1090] sm:$0xff] %v1089
  %s1092 = scalar_lea.vmem %s0, 3096
  %v1093 = vld [vmem:[%s1092] sm:$0xff]
  %s1094 = scalar_lea.vmem %s1, 536
  %1095 = vst [vmem:[%s1094] sm:$0xff] %v1093
  %s1096 = scalar_lea.vmem %s0, 2584
  %v1097 = vld [vmem:[%s1096] sm:$0xff]
  %s1098 = scalar_lea.vmem %s1, 1048
  %1099 = vst [vmem:[%s1098] sm:$0xff] %v1097
  %s1100 = scalar_lea.vmem %s0, 2072
  %v1101 = vld [vmem:[%s1100] sm:$0xff]
  %s1102 = scalar_lea.vmem %s1, 1560
  %1103 = vst [vmem:[%s1102] sm:$0xff] %v1101
  %s1104 = scalar_lea.vmem %s0, 1560
  %v1105 = vld [vmem:[%s1104] sm:$0xff]
  %s1106 = scalar_lea.vmem %s1, 2072
  %1107 = vst [vmem:[%s1106] sm:$0xff] %v1105
  %s1108 = scalar_lea.vmem %s0, 1048
  %v1109 = vld [vmem:[%s1108] sm:$0xff]
  %s1110 = scalar_lea.vmem %s1, 2584
  %1111 = vst [vmem:[%s1110] sm:$0xff] %v1109
  %s1112 = scalar_lea.vmem %s0, 536
  %v1113 = vld [vmem:[%s1112] sm:$0xff]
  %s1114 = scalar_lea.vmem %s1, 3096
  %1115 = vst [vmem:[%s1114] sm:$0xff] %v1113
  %s1116 = scalar_lea.vmem %s0, 24
  %v1117 = vld [vmem:[%s1116] sm:$0xff]
  %s1118 = scalar_lea.vmem %s1, 3608
  %1119 = vst [vmem:[%s1118] sm:$0xff] %v1117
  %s1120 = scalar_lea.vmem %s0, 3864
  %v1121 = vld [vmem:[%s1120] sm:$0xff]
  %s1122 = scalar_lea.vmem %s1, 280
  %1123 = vst [vmem:[%s1122] sm:$0xff] %v1121
  %s1124 = scalar_lea.vmem %s0, 3352
  %v1125 = vld [vmem:[%s1124] sm:$0xff]
  %s1126 = scalar_lea.vmem %s1, 792
  %1127 = vst [vmem:[%s1126] sm:$0xff] %v1125
  %s1128 = scalar_lea.vmem %s0, 2840
  %v1129 = vld [vmem:[%s1128] sm:$0xff]
  %s1130 = scalar_lea.vmem %s1, 1304
  %1131 = vst [vmem:[%s1130] sm:$0xff] %v1129
  %s1132 = scalar_lea.vmem %s0, 2328
  %v1133 = vld [vmem:[%s1132] sm:$0xff]
  %s1134 = scalar_lea.vmem %s1, 1816
  %1135 = vst [vmem:[%s1134] sm:$0xff] %v1133
  %s1136 = scalar_lea.vmem %s0, 1816
  %v1137 = vld [vmem:[%s1136] sm:$0xff]
  %s1138 = scalar_lea.vmem %s1, 2328
  %1139 = vst [vmem:[%s1138] sm:$0xff] %v1137
  %s1140 = scalar_lea.vmem %s0, 1304
  %v1141 = vld [vmem:[%s1140] sm:$0xff]
  %s1142 = scalar_lea.vmem %s1, 2840
  %1143 = vst [vmem:[%s1142] sm:$0xff] %v1141
  %s1144 = scalar_lea.vmem %s0, 792
  %v1145 = vld [vmem:[%s1144] sm:$0xff]
  %s1146 = scalar_lea.vmem %s1, 3352
  %1147 = vst [vmem:[%s1146] sm:$0xff] %v1145
  %s1148 = scalar_lea.vmem %s0, 280
  %v1149 = vld [vmem:[%s1148] sm:$0xff]
  %s1150 = scalar_lea.vmem %s1, 3864
  %1151 = vst [vmem:[%s1150] sm:$0xff] %v1149
  %s1152 = scalar_lea.vmem %s0, 3624
  %v1153 = vld [vmem:[%s1152] sm:$0xff]
  %s1154 = scalar_lea.vmem %s1, 40
  %1155 = vst [vmem:[%s1154] sm:$0xff] %v1153
  %s1156 = scalar_lea.vmem %s0, 3112
  %v1157 = vld [vmem:[%s1156] sm:$0xff]
  %s1158 = scalar_lea.vmem %s1, 552
  %1159 = vst [vmem:[%s1158] sm:$0xff] %v1157
  %s1160 = scalar_lea.vmem %s0, 2600
  %v1161 = vld [vmem:[%s1160] sm:$0xff]
  %s1162 = scalar_lea.vmem %s1, 1064
  %1163 = vst [vmem:[%s1162] sm:$0xff] %v1161
  %s1164 = scalar_lea.vmem %s0, 2088
  %v1165 = vld [vmem:[%s1164] sm:$0xff]
  %s1166 = scalar_lea.vmem %s1, 1576
  %1167 = vst [vmem:[%s1166] sm:$0xff] %v1165
  %s1168 = scalar_lea.vmem %s0, 1576
  %v1169 = vld [vmem:[%s1168] sm:$0xff]
  %s1170 = scalar_lea.vmem %s1, 2088
  %1171 = vst [vmem:[%s1170] sm:$0xff] %v1169
  %s1172 = scalar_lea.vmem %s0, 1064
  %v1173 = vld [vmem:[%s1172] sm:$0xff]
  %s1174 = scalar_lea.vmem %s1, 2600
  %1175 = vst [vmem:[%s1174] sm:$0xff] %v1173
  %s1176 = scalar_lea.vmem %s0, 552
  %v1177 = vld [vmem:[%s1176] sm:$0xff]
  %s1178 = scalar_lea.vmem %s1, 3112
  %1179 = vst [vmem:[%s1178] sm:$0xff] %v1177
  %s1180 = scalar_lea.vmem %s0, 40
  %v1181 = vld [vmem:[%s1180] sm:$0xff]
  %s1182 = scalar_lea.vmem %s1, 3624
  %1183 = vst [vmem:[%s1182] sm:$0xff] %v1181
  %s1184 = scalar_lea.vmem %s0, 3880
  %v1185 = vld [vmem:[%s1184] sm:$0xff]
  %s1186 = scalar_lea.vmem %s1, 296
  %1187 = vst [vmem:[%s1186] sm:$0xff] %v1185
  %s1188 = scalar_lea.vmem %s0, 3368
  %v1189 = vld [vmem:[%s1188] sm:$0xff]
  %s1190 = scalar_lea.vmem %s1, 808
  %1191 = vst [vmem:[%s1190] sm:$0xff] %v1189
  %s1192 = scalar_lea.vmem %s0, 2856
  %v1193 = vld [vmem:[%s1192] sm:$0xff]
  %s1194 = scalar_lea.vmem %s1, 1320
  %1195 = vst [vmem:[%s1194] sm:$0xff] %v1193
  %s1196 = scalar_lea.vmem %s0, 2344
  %v1197 = vld [vmem:[%s1196] sm:$0xff]
  %s1198 = scalar_lea.vmem %s1, 1832
  %1199 = vst [vmem:[%s1198] sm:$0xff] %v1197
  %s1200 = scalar_lea.vmem %s0, 1832
  %v1201 = vld [vmem:[%s1200] sm:$0xff]
  %s1202 = scalar_lea.vmem %s1, 2344
  %1203 = vst [vmem:[%s1202] sm:$0xff] %v1201
  %s1204 = scalar_lea.vmem %s0, 1320
  %v1205 = vld [vmem:[%s1204] sm:$0xff]
  %s1206 = scalar_lea.vmem %s1, 2856
  %1207 = vst [vmem:[%s1206] sm:$0xff] %v1205
  %s1208 = scalar_lea.vmem %s0, 808
  %v1209 = vld [vmem:[%s1208] sm:$0xff]
  %s1210 = scalar_lea.vmem %s1, 3368
  %1211 = vst [vmem:[%s1210] sm:$0xff] %v1209
  %s1212 = scalar_lea.vmem %s0, 296
  %v1213 = vld [vmem:[%s1212] sm:$0xff]
  %s1214 = scalar_lea.vmem %s1, 3880
  %1215 = vst [vmem:[%s1214] sm:$0xff] %v1213
  %s1216 = scalar_lea.vmem %s0, 3640
  %v1217 = vld [vmem:[%s1216] sm:$0xff]
  %s1218 = scalar_lea.vmem %s1, 56
  %1219 = vst [vmem:[%s1218] sm:$0xff] %v1217
  %s1220 = scalar_lea.vmem %s0, 3128
  %v1221 = vld [vmem:[%s1220] sm:$0xff]
  %s1222 = scalar_lea.vmem %s1, 568
  %1223 = vst [vmem:[%s1222] sm:$0xff] %v1221
  %s1224 = scalar_lea.vmem %s0, 2616
  %v1225 = vld [vmem:[%s1224] sm:$0xff]
  %s1226 = scalar_lea.vmem %s1, 1080
  %1227 = vst [vmem:[%s1226] sm:$0xff] %v1225
  %s1228 = scalar_lea.vmem %s0, 2104
  %v1229 = vld [vmem:[%s1228] sm:$0xff]
  %s1230 = scalar_lea.vmem %s1, 1592
  %1231 = vst [vmem:[%s1230] sm:$0xff] %v1229
  %s1232 = scalar_lea.vmem %s0, 1592
  %v1233 = vld [vmem:[%s1232] sm:$0xff]
  %s1234 = scalar_lea.vmem %s1, 2104
  %1235 = vst [vmem:[%s1234] sm:$0xff] %v1233
  %s1236 = scalar_lea.vmem %s0, 1080
  %v1237 = vld [vmem:[%s1236] sm:$0xff]
  %s1238 = scalar_lea.vmem %s1, 2616
  %1239 = vst [vmem:[%s1238] sm:$0xff] %v1237
  %s1240 = scalar_lea.vmem %s0, 568
  %v1241 = vld [vmem:[%s1240] sm:$0xff]
  %s1242 = scalar_lea.vmem %s1, 3128
  %1243 = vst [vmem:[%s1242] sm:$0xff] %v1241
  %s1244 = scalar_lea.vmem %s0, 56
  %v1245 = vld [vmem:[%s1244] sm:$0xff]
  %s1246 = scalar_lea.vmem %s1, 3640
  %1247 = vst [vmem:[%s1246] sm:$0xff] %v1245
  %s1248 = scalar_lea.vmem %s0, 3896
  %v1249 = vld [vmem:[%s1248] sm:$0xff]
  %s1250 = scalar_lea.vmem %s1, 312
  %1251 = vst [vmem:[%s1250] sm:$0xff] %v1249
  %s1252 = scalar_lea.vmem %s0, 3384
  %v1253 = vld [vmem:[%s1252] sm:$0xff]
  %s1254 = scalar_lea.vmem %s1, 824
  %1255 = vst [vmem:[%s1254] sm:$0xff] %v1253
  %s1256 = scalar_lea.vmem %s0, 2872
  %v1257 = vld [vmem:[%s1256] sm:$0xff]
  %s1258 = scalar_lea.vmem %s1, 1336
  %1259 = vst [vmem:[%s1258] sm:$0xff] %v1257
  %s1260 = scalar_lea.vmem %s0, 2360
  %v1261 = vld [vmem:[%s1260] sm:$0xff]
  %s1262 = scalar_lea.vmem %s1, 1848
  %1263 = vst [vmem:[%s1262] sm:$0xff] %v1261
  %s1264 = scalar_lea.vmem %s0, 1848
  %v1265 = vld [vmem:[%s1264] sm:$0xff]
  %s1266 = scalar_lea.vmem %s1, 2360
  %1267 = vst [vmem:[%s1266] sm:$0xff] %v1265
  %s1268 = scalar_lea.vmem %s0, 1336
  %v1269 = vld [vmem:[%s1268] sm:$0xff]
  %s1270 = scalar_lea.vmem %s1, 2872
  %1271 = vst [vmem:[%s1270] sm:$0xff] %v1269
  %s1272 = scalar_lea.vmem %s0, 824
  %v1273 = vld [vmem:[%s1272] sm:$0xff]
  %s1274 = scalar_lea.vmem %s1, 3384
  %1275 = vst [vmem:[%s1274] sm:$0xff] %v1273
  %s1276 = scalar_lea.vmem %s0, 312
  %v1277 = vld [vmem:[%s1276] sm:$0xff]
  %s1278 = scalar_lea.vmem %s1, 3896
  %1279 = vst [vmem:[%s1278] sm:$0xff] %v1277
  %s1280 = scalar_lea.vmem %s0, 3656
  %v1281 = vld [vmem:[%s1280] sm:$0xff]
  %s1282 = scalar_lea.vmem %s1, 72
  %1283 = vst [vmem:[%s1282] sm:$0xff] %v1281
  %s1284 = scalar_lea.vmem %s0, 3144
  %v1285 = vld [vmem:[%s1284] sm:$0xff]
  %s1286 = scalar_lea.vmem %s1, 584
  %1287 = vst [vmem:[%s1286] sm:$0xff] %v1285
  %s1288 = scalar_lea.vmem %s0, 2632
  %v1289 = vld [vmem:[%s1288] sm:$0xff]
  %s1290 = scalar_lea.vmem %s1, 1096
  %1291 = vst [vmem:[%s1290] sm:$0xff] %v1289
  %s1292 = scalar_lea.vmem %s0, 2120
  %v1293 = vld [vmem:[%s1292] sm:$0xff]
  %s1294 = scalar_lea.vmem %s1, 1608
  %1295 = vst [vmem:[%s1294] sm:$0xff] %v1293
  %s1296 = scalar_lea.vmem %s0, 1608
  %v1297 = vld [vmem:[%s1296] sm:$0xff]
  %s1298 = scalar_lea.vmem %s1, 2120
  %1299 = vst [vmem:[%s1298] sm:$0xff] %v1297
  %s1300 = scalar_lea.vmem %s0, 1096
  %v1301 = vld [vmem:[%s1300] sm:$0xff]
  %s1302 = scalar_lea.vmem %s1, 2632
  %1303 = vst [vmem:[%s1302] sm:$0xff] %v1301
  %s1304 = scalar_lea.vmem %s0, 584
  %v1305 = vld [vmem:[%s1304] sm:$0xff]
  %s1306 = scalar_lea.vmem %s1, 3144
  %1307 = vst [vmem:[%s1306] sm:$0xff] %v1305
  %s1308 = scalar_lea.vmem %s0, 72
  %v1309 = vld [vmem:[%s1308] sm:$0xff]
  %s1310 = scalar_lea.vmem %s1, 3656
  %1311 = vst [vmem:[%s1310] sm:$0xff] %v1309
  %s1312 = scalar_lea.vmem %s0, 3912
  %v1313 = vld [vmem:[%s1312] sm:$0xff]
  %s1314 = scalar_lea.vmem %s1, 328
  %1315 = vst [vmem:[%s1314] sm:$0xff] %v1313
  %s1316 = scalar_lea.vmem %s0, 3400
  %v1317 = vld [vmem:[%s1316] sm:$0xff]
  %s1318 = scalar_lea.vmem %s1, 840
  %1319 = vst [vmem:[%s1318] sm:$0xff] %v1317
  %s1320 = scalar_lea.vmem %s0, 2888
  %v1321 = vld [vmem:[%s1320] sm:$0xff]
  %s1322 = scalar_lea.vmem %s1, 1352
  %1323 = vst [vmem:[%s1322] sm:$0xff] %v1321
  %s1324 = scalar_lea.vmem %s0, 2376
  %v1325 = vld [vmem:[%s1324] sm:$0xff]
  %s1326 = scalar_lea.vmem %s1, 1864
  %1327 = vst [vmem:[%s1326] sm:$0xff] %v1325
  %s1328 = scalar_lea.vmem %s0, 1864
  %v1329 = vld [vmem:[%s1328] sm:$0xff]
  %s1330 = scalar_lea.vmem %s1, 2376
  %1331 = vst [vmem:[%s1330] sm:$0xff] %v1329
  %s1332 = scalar_lea.vmem %s0, 1352
  %v1333 = vld [vmem:[%s1332] sm:$0xff]
  %s1334 = scalar_lea.vmem %s1, 2888
  %1335 = vst [vmem:[%s1334] sm:$0xff] %v1333
  %s1336 = scalar_lea.vmem %s0, 840
  %v1337 = vld [vmem:[%s1336] sm:$0xff]
  %s1338 = scalar_lea.vmem %s1, 3400
  %1339 = vst [vmem:[%s1338] sm:$0xff] %v1337
  %s1340 = scalar_lea.vmem %s0, 328
  %v1341 = vld [vmem:[%s1340] sm:$0xff]
  %s1342 = scalar_lea.vmem %s1, 3912
  %1343 = vst [vmem:[%s1342] sm:$0xff] %v1341
  %s1344 = scalar_lea.vmem %s0, 3672
  %v1345 = vld [vmem:[%s1344] sm:$0xff]
  %s1346 = scalar_lea.vmem %s1, 88
  %1347 = vst [vmem:[%s1346] sm:$0xff] %v1345
  %s1348 = scalar_lea.vmem %s0, 3160
  %v1349 = vld [vmem:[%s1348] sm:$0xff]
  %s1350 = scalar_lea.vmem %s1, 600
  %1351 = vst [vmem:[%s1350] sm:$0xff] %v1349
  %s1352 = scalar_lea.vmem %s0, 2648
  %v1353 = vld [vmem:[%s1352] sm:$0xff]
  %s1354 = scalar_lea.vmem %s1, 1112
  %1355 = vst [vmem:[%s1354] sm:$0xff] %v1353
  %s1356 = scalar_lea.vmem %s0, 2136
  %v1357 = vld [vmem:[%s1356] sm:$0xff]
  %s1358 = scalar_lea.vmem %s1, 1624
  %1359 = vst [vmem:[%s1358] sm:$0xff] %v1357
  %s1360 = scalar_lea.vmem %s0, 1624
  %v1361 = vld [vmem:[%s1360] sm:$0xff]
  %s1362 = scalar_lea.vmem %s1, 2136
  %1363 = vst [vmem:[%s1362] sm:$0xff] %v1361
  %s1364 = scalar_lea.vmem %s0, 1112
  %v1365 = vld [vmem:[%s1364] sm:$0xff]
  %s1366 = scalar_lea.vmem %s1, 2648
  %1367 = vst [vmem:[%s1366] sm:$0xff] %v1365
  %s1368 = scalar_lea.vmem %s0, 600
  %v1369 = vld [vmem:[%s1368] sm:$0xff]
  %s1370 = scalar_lea.vmem %s1, 3160
  %1371 = vst [vmem:[%s1370] sm:$0xff] %v1369
  %s1372 = scalar_lea.vmem %s0, 88
  %v1373 = vld [vmem:[%s1372] sm:$0xff]
  %s1374 = scalar_lea.vmem %s1, 3672
  %1375 = vst [vmem:[%s1374] sm:$0xff] %v1373
  %s1376 = scalar_lea.vmem %s0, 3928
  %v1377 = vld [vmem:[%s1376] sm:$0xff]
  %s1378 = scalar_lea.vmem %s1, 344
  %1379 = vst [vmem:[%s1378] sm:$0xff] %v1377
  %s1380 = scalar_lea.vmem %s0, 3416
  %v1381 = vld [vmem:[%s1380] sm:$0xff]
  %s1382 = scalar_lea.vmem %s1, 856
  %1383 = vst [vmem:[%s1382] sm:$0xff] %v1381
  %s1384 = scalar_lea.vmem %s0, 2904
  %v1385 = vld [vmem:[%s1384] sm:$0xff]
  %s1386 = scalar_lea.vmem %s1, 1368
  %1387 = vst [vmem:[%s1386] sm:$0xff] %v1385
  %s1388 = scalar_lea.vmem %s0, 2392
  %v1389 = vld [vmem:[%s1388] sm:$0xff]
  %s1390 = scalar_lea.vmem %s1, 1880
  %1391 = vst [vmem:[%s1390] sm:$0xff] %v1389
  %s1392 = scalar_lea.vmem %s0, 1880
  %v1393 = vld [vmem:[%s1392] sm:$0xff]
  %s1394 = scalar_lea.vmem %s1, 2392
  %1395 = vst [vmem:[%s1394] sm:$0xff] %v1393
  %s1396 = scalar_lea.vmem %s0, 1368
  %v1397 = vld [vmem:[%s1396] sm:$0xff]
  %s1398 = scalar_lea.vmem %s1, 2904
  %1399 = vst [vmem:[%s1398] sm:$0xff] %v1397
  %s1400 = scalar_lea.vmem %s0, 856
  %v1401 = vld [vmem:[%s1400] sm:$0xff]
  %s1402 = scalar_lea.vmem %s1, 3416
  %1403 = vst [vmem:[%s1402] sm:$0xff] %v1401
  %s1404 = scalar_lea.vmem %s0, 344
  %v1405 = vld [vmem:[%s1404] sm:$0xff]
  %s1406 = scalar_lea.vmem %s1, 3928
  %1407 = vst [vmem:[%s1406] sm:$0xff] %v1405
  %s1408 = scalar_lea.vmem %s0, 3688
  %v1409 = vld [vmem:[%s1408] sm:$0xff]
  %s1410 = scalar_lea.vmem %s1, 104
  %1411 = vst [vmem:[%s1410] sm:$0xff] %v1409
  %s1412 = scalar_lea.vmem %s0, 3176
  %v1413 = vld [vmem:[%s1412] sm:$0xff]
  %s1414 = scalar_lea.vmem %s1, 616
  %1415 = vst [vmem:[%s1414] sm:$0xff] %v1413
  %s1416 = scalar_lea.vmem %s0, 2664
  %v1417 = vld [vmem:[%s1416] sm:$0xff]
  %s1418 = scalar_lea.vmem %s1, 1128
  %1419 = vst [vmem:[%s1418] sm:$0xff] %v1417
  %s1420 = scalar_lea.vmem %s0, 2152
  %v1421 = vld [vmem:[%s1420] sm:$0xff]
  %s1422 = scalar_lea.vmem %s1, 1640
  %1423 = vst [vmem:[%s1422] sm:$0xff] %v1421
  %s1424 = scalar_lea.vmem %s0, 1640
  %v1425 = vld [vmem:[%s1424] sm:$0xff]
  %s1426 = scalar_lea.vmem %s1, 2152
  %1427 = vst [vmem:[%s1426] sm:$0xff] %v1425
  %s1428 = scalar_lea.vmem %s0, 1128
  %v1429 = vld [vmem:[%s1428] sm:$0xff]
  %s1430 = scalar_lea.vmem %s1, 2664
  %1431 = vst [vmem:[%s1430] sm:$0xff] %v1429
  %s1432 = scalar_lea.vmem %s0, 616
  %v1433 = vld [vmem:[%s1432] sm:$0xff]
  %s1434 = scalar_lea.vmem %s1, 3176
  %1435 = vst [vmem:[%s1434] sm:$0xff] %v1433
  %s1436 = scalar_lea.vmem %s0, 104
  %v1437 = vld [vmem:[%s1436] sm:$0xff]
  %s1438 = scalar_lea.vmem %s1, 3688
  %1439 = vst [vmem:[%s1438] sm:$0xff] %v1437
  %s1440 = scalar_lea.vmem %s0, 3944
  %v1441 = vld [vmem:[%s1440] sm:$0xff]
  %s1442 = scalar_lea.vmem %s1, 360
  %1443 = vst [vmem:[%s1442] sm:$0xff] %v1441
  %s1444 = scalar_lea.vmem %s0, 3432
  %v1445 = vld [vmem:[%s1444] sm:$0xff]
  %s1446 = scalar_lea.vmem %s1, 872
  %1447 = vst [vmem:[%s1446] sm:$0xff] %v1445
  %s1448 = scalar_lea.vmem %s0, 2920
  %v1449 = vld [vmem:[%s1448] sm:$0xff]
  %s1450 = scalar_lea.vmem %s1, 1384
  %1451 = vst [vmem:[%s1450] sm:$0xff] %v1449
  %s1452 = scalar_lea.vmem %s0, 2408
  %v1453 = vld [vmem:[%s1452] sm:$0xff]
  %s1454 = scalar_lea.vmem %s1, 1896
  %1455 = vst [vmem:[%s1454] sm:$0xff] %v1453
  %s1456 = scalar_lea.vmem %s0, 1896
  %v1457 = vld [vmem:[%s1456] sm:$0xff]
  %s1458 = scalar_lea.vmem %s1, 2408
  %1459 = vst [vmem:[%s1458] sm:$0xff] %v1457
  %s1460 = scalar_lea.vmem %s0, 1384
  %v1461 = vld [vmem:[%s1460] sm:$0xff]
  %s1462 = scalar_lea.vmem %s1, 2920
  %1463 = vst [vmem:[%s1462] sm:$0xff] %v1461
  %s1464 = scalar_lea.vmem %s0, 872
  %v1465 = vld [vmem:[%s1464] sm:$0xff]
  %s1466 = scalar_lea.vmem %s1, 3432
  %1467 = vst [vmem:[%s1466] sm:$0xff] %v1465
  %s1468 = scalar_lea.vmem %s0, 360
  %v1469 = vld [vmem:[%s1468] sm:$0xff]
  %s1470 = scalar_lea.vmem %s1, 3944
  %1471 = vst [vmem:[%s1470] sm:$0xff] %v1469
  %s1472 = scalar_lea.vmem %s0, 3704
  %v1473 = vld [vmem:[%s1472] sm:$0xff]
  %s1474 = scalar_lea.vmem %s1, 120
  %1475 = vst [vmem:[%s1474] sm:$0xff] %v1473
  %s1476 = scalar_lea.vmem %s0, 3192
  %v1477 = vld [vmem:[%s1476] sm:$0xff]
  %s1478 = scalar_lea.vmem %s1, 632
  %1479 = vst [vmem:[%s1478] sm:$0xff] %v1477
  %s1480 = scalar_lea.vmem %s0, 2680
  %v1481 = vld [vmem:[%s1480] sm:$0xff]
  %s1482 = scalar_lea.vmem %s1, 1144
  %1483 = vst [vmem:[%s1482] sm:$0xff] %v1481
  %s1484 = scalar_lea.vmem %s0, 2168
  %v1485 = vld [vmem:[%s1484] sm:$0xff]
  %s1486 = scalar_lea.vmem %s1, 1656
  %1487 = vst [vmem:[%s1486] sm:$0xff] %v1485
  %s1488 = scalar_lea.vmem %s0, 1656
  %v1489 = vld [vmem:[%s1488] sm:$0xff]
  %s1490 = scalar_lea.vmem %s1, 2168
  %1491 = vst [vmem:[%s1490] sm:$0xff] %v1489
  %s1492 = scalar_lea.vmem %s0, 1144
  %v1493 = vld [vmem:[%s1492] sm:$0xff]
  %s1494 = scalar_lea.vmem %s1, 2680
  %1495 = vst [vmem:[%s1494] sm:$0xff] %v1493
  %s1496 = scalar_lea.vmem %s0, 632
  %v1497 = vld [vmem:[%s1496] sm:$0xff]
  %s1498 = scalar_lea.vmem %s1, 3192
  %1499 = vst [vmem:[%s1498] sm:$0xff] %v1497
  %s1500 = scalar_lea.vmem %s0, 120
  %v1501 = vld [vmem:[%s1500] sm:$0xff]
  %s1502 = scalar_lea.vmem %s1, 3704
  %1503 = vst [vmem:[%s1502] sm:$0xff] %v1501
  %s1504 = scalar_lea.vmem %s0, 3960
  %v1505 = vld [vmem:[%s1504] sm:$0xff]
  %s1506 = scalar_lea.vmem %s1, 376
  %1507 = vst [vmem:[%s1506] sm:$0xff] %v1505
  %s1508 = scalar_lea.vmem %s0, 3448
  %v1509 = vld [vmem:[%s1508] sm:$0xff]
  %s1510 = scalar_lea.vmem %s1, 888
  %1511 = vst [vmem:[%s1510] sm:$0xff] %v1509
  %s1512 = scalar_lea.vmem %s0, 2936
  %v1513 = vld [vmem:[%s1512] sm:$0xff]
  %s1514 = scalar_lea.vmem %s1, 1400
  %1515 = vst [vmem:[%s1514] sm:$0xff] %v1513
  %s1516 = scalar_lea.vmem %s0, 2424
  %v1517 = vld [vmem:[%s1516] sm:$0xff]
  %s1518 = scalar_lea.vmem %s1, 1912
  %1519 = vst [vmem:[%s1518] sm:$0xff] %v1517
  %s1520 = scalar_lea.vmem %s0, 1912
  %v1521 = vld [vmem:[%s1520] sm:$0xff]
  %s1522 = scalar_lea.vmem %s1, 2424
  %1523 = vst [vmem:[%s1522] sm:$0xff] %v1521
  %s1524 = scalar_lea.vmem %s0, 1400
  %v1525 = vld [vmem:[%s1524] sm:$0xff]
  %s1526 = scalar_lea.vmem %s1, 2936
  %1527 = vst [vmem:[%s1526] sm:$0xff] %v1525
  %s1528 = scalar_lea.vmem %s0, 888
  %v1529 = vld [vmem:[%s1528] sm:$0xff]
  %s1530 = scalar_lea.vmem %s1, 3448
  %1531 = vst [vmem:[%s1530] sm:$0xff] %v1529
  %s1532 = scalar_lea.vmem %s0, 376
  %v1533 = vld [vmem:[%s1532] sm:$0xff]
  %s1534 = scalar_lea.vmem %s1, 3960
  %1535 = vst [vmem:[%s1534] sm:$0xff] %v1533
  %s1536 = scalar_lea.vmem %s0, 3720
  %v1537 = vld [vmem:[%s1536] sm:$0xff]
  %s1538 = scalar_lea.vmem %s1, 136
  %1539 = vst [vmem:[%s1538] sm:$0xff] %v1537
  %s1540 = scalar_lea.vmem %s0, 3208
  %v1541 = vld [vmem:[%s1540] sm:$0xff]
  %s1542 = scalar_lea.vmem %s1, 648
  %1543 = vst [vmem:[%s1542] sm:$0xff] %v1541
  %s1544 = scalar_lea.vmem %s0, 2696
  %v1545 = vld [vmem:[%s1544] sm:$0xff]
  %s1546 = scalar_lea.vmem %s1, 1160
  %1547 = vst [vmem:[%s1546] sm:$0xff] %v1545
  %s1548 = scalar_lea.vmem %s0, 2184
  %v1549 = vld [vmem:[%s1548] sm:$0xff]
  %s1550 = scalar_lea.vmem %s1, 1672
  %1551 = vst [vmem:[%s1550] sm:$0xff] %v1549
  %s1552 = scalar_lea.vmem %s0, 1672
  %v1553 = vld [vmem:[%s1552] sm:$0xff]
  %s1554 = scalar_lea.vmem %s1, 2184
  %1555 = vst [vmem:[%s1554] sm:$0xff] %v1553
  %s1556 = scalar_lea.vmem %s0, 1160
  %v1557 = vld [vmem:[%s1556] sm:$0xff]
  %s1558 = scalar_lea.vmem %s1, 2696
  %1559 = vst [vmem:[%s1558] sm:$0xff] %v1557
  %s1560 = scalar_lea.vmem %s0, 648
  %v1561 = vld [vmem:[%s1560] sm:$0xff]
  %s1562 = scalar_lea.vmem %s1, 3208
  %1563 = vst [vmem:[%s1562] sm:$0xff] %v1561
  %s1564 = scalar_lea.vmem %s0, 136
  %v1565 = vld [vmem:[%s1564] sm:$0xff]
  %s1566 = scalar_lea.vmem %s1, 3720
  %1567 = vst [vmem:[%s1566] sm:$0xff] %v1565
  %s1568 = scalar_lea.vmem %s0, 3976
  %v1569 = vld [vmem:[%s1568] sm:$0xff]
  %s1570 = scalar_lea.vmem %s1, 392
  %1571 = vst [vmem:[%s1570] sm:$0xff] %v1569
  %s1572 = scalar_lea.vmem %s0, 3464
  %v1573 = vld [vmem:[%s1572] sm:$0xff]
  %s1574 = scalar_lea.vmem %s1, 904
  %1575 = vst [vmem:[%s1574] sm:$0xff] %v1573
  %s1576 = scalar_lea.vmem %s0, 2952
  %v1577 = vld [vmem:[%s1576] sm:$0xff]
  %s1578 = scalar_lea.vmem %s1, 1416
  %1579 = vst [vmem:[%s1578] sm:$0xff] %v1577
  %s1580 = scalar_lea.vmem %s0, 2440
  %v1581 = vld [vmem:[%s1580] sm:$0xff]
  %s1582 = scalar_lea.vmem %s1, 1928
  %1583 = vst [vmem:[%s1582] sm:$0xff] %v1581
  %s1584 = scalar_lea.vmem %s0, 1928
  %v1585 = vld [vmem:[%s1584] sm:$0xff]
  %s1586 = scalar_lea.vmem %s1, 2440
  %1587 = vst [vmem:[%s1586] sm:$0xff] %v1585
  %s1588 = scalar_lea.vmem %s0, 1416
  %v1589 = vld [vmem:[%s1588] sm:$0xff]
  %s1590 = scalar_lea.vmem %s1, 2952
  %1591 = vst [vmem:[%s1590] sm:$0xff] %v1589
  %s1592 = scalar_lea.vmem %s0, 904
  %v1593 = vld [vmem:[%s1592] sm:$0xff]
  %s1594 = scalar_lea.vmem %s1, 3464
  %1595 = vst [vmem:[%s1594] sm:$0xff] %v1593
  %s1596 = scalar_lea.vmem %s0, 392
  %v1597 = vld [vmem:[%s1596] sm:$0xff]
  %s1598 = scalar_lea.vmem %s1, 3976
  %1599 = vst [vmem:[%s1598] sm:$0xff] %v1597
  %s1600 = scalar_lea.vmem %s0, 3736
  %v1601 = vld [vmem:[%s1600] sm:$0xff]
  %s1602 = scalar_lea.vmem %s1, 152
  %1603 = vst [vmem:[%s1602] sm:$0xff] %v1601
  %s1604 = scalar_lea.vmem %s0, 3224
  %v1605 = vld [vmem:[%s1604] sm:$0xff]
  %s1606 = scalar_lea.vmem %s1, 664
  %1607 = vst [vmem:[%s1606] sm:$0xff] %v1605
  %s1608 = scalar_lea.vmem %s0, 2712
  %v1609 = vld [vmem:[%s1608] sm:$0xff]
  %s1610 = scalar_lea.vmem %s1, 1176
  %1611 = vst [vmem:[%s1610] sm:$0xff] %v1609
  %s1612 = scalar_lea.vmem %s0, 2200
  %v1613 = vld [vmem:[%s1612] sm:$0xff]
  %s1614 = scalar_lea.vmem %s1, 1688
  %1615 = vst [vmem:[%s1614] sm:$0xff] %v1613
  %s1616 = scalar_lea.vmem %s0, 1688
  %v1617 = vld [vmem:[%s1616] sm:$0xff]
  %s1618 = scalar_lea.vmem %s1, 2200
  %1619 = vst [vmem:[%s1618] sm:$0xff] %v1617
  %s1620 = scalar_lea.vmem %s0, 1176
  %v1621 = vld [vmem:[%s1620] sm:$0xff]
  %s1622 = scalar_lea.vmem %s1, 2712
  %1623 = vst [vmem:[%s1622] sm:$0xff] %v1621
  %s1624 = scalar_lea.vmem %s0, 664
  %v1625 = vld [vmem:[%s1624] sm:$0xff]
  %s1626 = scalar_lea.vmem %s1, 3224
  %1627 = vst [vmem:[%s1626] sm:$0xff] %v1625
  %s1628 = scalar_lea.vmem %s0, 152
  %v1629 = vld [vmem:[%s1628] sm:$0xff]
  %s1630 = scalar_lea.vmem %s1, 3736
  %1631 = vst [vmem:[%s1630] sm:$0xff] %v1629
  %s1632 = scalar_lea.vmem %s0, 3992
  %v1633 = vld [vmem:[%s1632] sm:$0xff]
  %s1634 = scalar_lea.vmem %s1, 408
  %1635 = vst [vmem:[%s1634] sm:$0xff] %v1633
  %s1636 = scalar_lea.vmem %s0, 3480
  %v1637 = vld [vmem:[%s1636] sm:$0xff]
  %s1638 = scalar_lea.vmem %s1, 920
  %1639 = vst [vmem:[%s1638] sm:$0xff] %v1637
  %s1640 = scalar_lea.vmem %s0, 2968
  %v1641 = vld [vmem:[%s1640] sm:$0xff]
  %s1642 = scalar_lea.vmem %s1, 1432
  %1643 = vst [vmem:[%s1642] sm:$0xff] %v1641
  %s1644 = scalar_lea.vmem %s0, 2456
  %v1645 = vld [vmem:[%s1644] sm:$0xff]
  %s1646 = scalar_lea.vmem %s1, 1944
  %1647 = vst [vmem:[%s1646] sm:$0xff] %v1645
  %s1648 = scalar_lea.vmem %s0, 1944
  %v1649 = vld [vmem:[%s1648] sm:$0xff]
  %s1650 = scalar_lea.vmem %s1, 2456
  %1651 = vst [vmem:[%s1650] sm:$0xff] %v1649
  %s1652 = scalar_lea.vmem %s0, 1432
  %v1653 = vld [vmem:[%s1652] sm:$0xff]
  %s1654 = scalar_lea.vmem %s1, 2968
  %1655 = vst [vmem:[%s1654] sm:$0xff] %v1653
  %s1656 = scalar_lea.vmem %s0, 920
  %v1657 = vld [vmem:[%s1656] sm:$0xff]
  %s1658 = scalar_lea.vmem %s1, 3480
  %1659 = vst [vmem:[%s1658] sm:$0xff] %v1657
  %s1660 = scalar_lea.vmem %s0, 408
  %v1661 = vld [vmem:[%s1660] sm:$0xff]
  %s1662 = scalar_lea.vmem %s1, 3992
  %1663 = vst [vmem:[%s1662] sm:$0xff] %v1661
  %s1664 = scalar_lea.vmem %s0, 3752
  %v1665 = vld [vmem:[%s1664] sm:$0xff]
  %s1666 = scalar_lea.vmem %s1, 168
  %1667 = vst [vmem:[%s1666] sm:$0xff] %v1665
  %s1668 = scalar_lea.vmem %s0, 3240
  %v1669 = vld [vmem:[%s1668] sm:$0xff]
  %s1670 = scalar_lea.vmem %s1, 680
  %1671 = vst [vmem:[%s1670] sm:$0xff] %v1669
  %s1672 = scalar_lea.vmem %s0, 2728
  %v1673 = vld [vmem:[%s1672] sm:$0xff]
  %s1674 = scalar_lea.vmem %s1, 1192
  %1675 = vst [vmem:[%s1674] sm:$0xff] %v1673
  %s1676 = scalar_lea.vmem %s0, 2216
  %v1677 = vld [vmem:[%s1676] sm:$0xff]
  %s1678 = scalar_lea.vmem %s1, 1704
  %1679 = vst [vmem:[%s1678] sm:$0xff] %v1677
  %s1680 = scalar_lea.vmem %s0, 1704
  %v1681 = vld [vmem:[%s1680] sm:$0xff]
  %s1682 = scalar_lea.vmem %s1, 2216
  %1683 = vst [vmem:[%s1682] sm:$0xff] %v1681
  %s1684 = scalar_lea.vmem %s0, 1192
  %v1685 = vld [vmem:[%s1684] sm:$0xff]
  %s1686 = scalar_lea.vmem %s1, 2728
  %1687 = vst [vmem:[%s1686] sm:$0xff] %v1685
  %s1688 = scalar_lea.vmem %s0, 680
  %v1689 = vld [vmem:[%s1688] sm:$0xff]
  %s1690 = scalar_lea.vmem %s1, 3240
  %1691 = vst [vmem:[%s1690] sm:$0xff] %v1689
  %s1692 = scalar_lea.vmem %s0, 168
  %v1693 = vld [vmem:[%s1692] sm:$0xff]
  %s1694 = scalar_lea.vmem %s1, 3752
  %1695 = vst [vmem:[%s1694] sm:$0xff] %v1693
  %s1696 = scalar_lea.vmem %s0, 4008
  %v1697 = vld [vmem:[%s1696] sm:$0xff]
  %s1698 = scalar_lea.vmem %s1, 424
  %1699 = vst [vmem:[%s1698] sm:$0xff] %v1697
  %s1700 = scalar_lea.vmem %s0, 3496
  %v1701 = vld [vmem:[%s1700] sm:$0xff]
  %s1702 = scalar_lea.vmem %s1, 936
  %1703 = vst [vmem:[%s1702] sm:$0xff] %v1701
  %s1704 = scalar_lea.vmem %s0, 2984
  %v1705 = vld [vmem:[%s1704] sm:$0xff]
  %s1706 = scalar_lea.vmem %s1, 1448
  %1707 = vst [vmem:[%s1706] sm:$0xff] %v1705
  %s1708 = scalar_lea.vmem %s0, 2472
  %v1709 = vld [vmem:[%s1708] sm:$0xff]
  %s1710 = scalar_lea.vmem %s1, 1960
  %1711 = vst [vmem:[%s1710] sm:$0xff] %v1709
  %s1712 = scalar_lea.vmem %s0, 1960
  %v1713 = vld [vmem:[%s1712] sm:$0xff]
  %s1714 = scalar_lea.vmem %s1, 2472
  %1715 = vst [vmem:[%s1714] sm:$0xff] %v1713
  %s1716 = scalar_lea.vmem %s0, 1448
  %v1717 = vld [vmem:[%s1716] sm:$0xff]
  %s1718 = scalar_lea.vmem %s1, 2984
  %1719 = vst [vmem:[%s1718] sm:$0xff] %v1717
  %s1720 = scalar_lea.vmem %s0, 936
  %v1721 = vld [vmem:[%s1720] sm:$0xff]
  %s1722 = scalar_lea.vmem %s1, 3496
  %1723 = vst [vmem:[%s1722] sm:$0xff] %v1721
  %s1724 = scalar_lea.vmem %s0, 424
  %v1725 = vld [vmem:[%s1724] sm:$0xff]
  %s1726 = scalar_lea.vmem %s1, 4008
  %1727 = vst [vmem:[%s1726] sm:$0xff] %v1725
  %s1728 = scalar_lea.vmem %s0, 3768
  %v1729 = vld [vmem:[%s1728] sm:$0xff]
  %s1730 = scalar_lea.vmem %s1, 184
  %1731 = vst [vmem:[%s1730] sm:$0xff] %v1729
  %s1732 = scalar_lea.vmem %s0, 3256
  %v1733 = vld [vmem:[%s1732] sm:$0xff]
  %s1734 = scalar_lea.vmem %s1, 696
  %1735 = vst [vmem:[%s1734] sm:$0xff] %v1733
  %s1736 = scalar_lea.vmem %s0, 2744
  %v1737 = vld [vmem:[%s1736] sm:$0xff]
  %s1738 = scalar_lea.vmem %s1, 1208
  %1739 = vst [vmem:[%s1738] sm:$0xff] %v1737
  %s1740 = scalar_lea.vmem %s0, 2232
  %v1741 = vld [vmem:[%s1740] sm:$0xff]
  %s1742 = scalar_lea.vmem %s1, 1720
  %1743 = vst [vmem:[%s1742] sm:$0xff] %v1741
  %s1744 = scalar_lea.vmem %s0, 1720
  %v1745 = vld [vmem:[%s1744] sm:$0xff]
  %s1746 = scalar_lea.vmem %s1, 2232
  %1747 = vst [vmem:[%s1746] sm:$0xff] %v1745
  %s1748 = scalar_lea.vmem %s0, 1208
  %v1749 = vld [vmem:[%s1748] sm:$0xff]
  %s1750 = scalar_lea.vmem %s1, 2744
  %1751 = vst [vmem:[%s1750] sm:$0xff] %v1749
  %s1752 = scalar_lea.vmem %s0, 696
  %v1753 = vld [vmem:[%s1752] sm:$0xff]
  %s1754 = scalar_lea.vmem %s1, 3256
  %1755 = vst [vmem:[%s1754] sm:$0xff] %v1753
  %s1756 = scalar_lea.vmem %s0, 184
  %v1757 = vld [vmem:[%s1756] sm:$0xff]
  %s1758 = scalar_lea.vmem %s1, 3768
  %1759 = vst [vmem:[%s1758] sm:$0xff] %v1757
  %s1760 = scalar_lea.vmem %s0, 4024
  %v1761 = vld [vmem:[%s1760] sm:$0xff]
  %s1762 = scalar_lea.vmem %s1, 440
  %1763 = vst [vmem:[%s1762] sm:$0xff] %v1761
  %s1764 = scalar_lea.vmem %s0, 3512
  %v1765 = vld [vmem:[%s1764] sm:$0xff]
  %s1766 = scalar_lea.vmem %s1, 952
  %1767 = vst [vmem:[%s1766] sm:$0xff] %v1765
  %s1768 = scalar_lea.vmem %s0, 3000
  %v1769 = vld [vmem:[%s1768] sm:$0xff]
  %s1770 = scalar_lea.vmem %s1, 1464
  %1771 = vst [vmem:[%s1770] sm:$0xff] %v1769
  %s1772 = scalar_lea.vmem %s0, 2488
  %v1773 = vld [vmem:[%s1772] sm:$0xff]
  %s1774 = scalar_lea.vmem %s1, 1976
  %1775 = vst [vmem:[%s1774] sm:$0xff] %v1773
  %s1776 = scalar_lea.vmem %s0, 1976
  %v1777 = vld [vmem:[%s1776] sm:$0xff]
  %s1778 = scalar_lea.vmem %s1, 2488
  %1779 = vst [vmem:[%s1778] sm:$0xff] %v1777
  %s1780 = scalar_lea.vmem %s0, 1464
  %v1781 = vld [vmem:[%s1780] sm:$0xff]
  %s1782 = scalar_lea.vmem %s1, 3000
  %1783 = vst [vmem:[%s1782] sm:$0xff] %v1781
  %s1784 = scalar_lea.vmem %s0, 952
  %v1785 = vld [vmem:[%s1784] sm:$0xff]
  %s1786 = scalar_lea.vmem %s1, 3512
  %1787 = vst [vmem:[%s1786] sm:$0xff] %v1785
  %s1788 = scalar_lea.vmem %s0, 440
  %v1789 = vld [vmem:[%s1788] sm:$0xff]
  %s1790 = scalar_lea.vmem %s1, 4024
  %1791 = vst [vmem:[%s1790] sm:$0xff] %v1789
  %s1792 = scalar_lea.vmem %s0, 3784
  %v1793 = vld [vmem:[%s1792] sm:$0xff]
  %s1794 = scalar_lea.vmem %s1, 200
  %1795 = vst [vmem:[%s1794] sm:$0xff] %v1793
  %s1796 = scalar_lea.vmem %s0, 3272
  %v1797 = vld [vmem:[%s1796] sm:$0xff]
  %s1798 = scalar_lea.vmem %s1, 712
  %1799 = vst [vmem:[%s1798] sm:$0xff] %v1797
  %s1800 = scalar_lea.vmem %s0, 2760
  %v1801 = vld [vmem:[%s1800] sm:$0xff]
  %s1802 = scalar_lea.vmem %s1, 1224
  %1803 = vst [vmem:[%s1802] sm:$0xff] %v1801
  %s1804 = scalar_lea.vmem %s0, 2248
  %v1805 = vld [vmem:[%s1804] sm:$0xff]
  %s1806 = scalar_lea.vmem %s1, 1736
  %1807 = vst [vmem:[%s1806] sm:$0xff] %v1805
  %s1808 = scalar_lea.vmem %s0, 1736
  %v1809 = vld [vmem:[%s1808] sm:$0xff]
  %s1810 = scalar_lea.vmem %s1, 2248
  %1811 = vst [vmem:[%s1810] sm:$0xff] %v1809
  %s1812 = scalar_lea.vmem %s0, 1224
  %v1813 = vld [vmem:[%s1812] sm:$0xff]
  %s1814 = scalar_lea.vmem %s1, 2760
  %1815 = vst [vmem:[%s1814] sm:$0xff] %v1813
  %s1816 = scalar_lea.vmem %s0, 712
  %v1817 = vld [vmem:[%s1816] sm:$0xff]
  %s1818 = scalar_lea.vmem %s1, 3272
  %1819 = vst [vmem:[%s1818] sm:$0xff] %v1817
  %s1820 = scalar_lea.vmem %s0, 200
  %v1821 = vld [vmem:[%s1820] sm:$0xff]
  %s1822 = scalar_lea.vmem %s1, 3784
  %1823 = vst [vmem:[%s1822] sm:$0xff] %v1821
  %s1824 = scalar_lea.vmem %s0, 4040
  %v1825 = vld [vmem:[%s1824] sm:$0xff]
  %s1826 = scalar_lea.vmem %s1, 456
  %1827 = vst [vmem:[%s1826] sm:$0xff] %v1825
  %s1828 = scalar_lea.vmem %s0, 3528
  %v1829 = vld [vmem:[%s1828] sm:$0xff]
  %s1830 = scalar_lea.vmem %s1, 968
  %1831 = vst [vmem:[%s1830] sm:$0xff] %v1829
  %s1832 = scalar_lea.vmem %s0, 3016
  %v1833 = vld [vmem:[%s1832] sm:$0xff]
  %s1834 = scalar_lea.vmem %s1, 1480
  %1835 = vst [vmem:[%s1834] sm:$0xff] %v1833
  %s1836 = scalar_lea.vmem %s0, 2504
  %v1837 = vld [vmem:[%s1836] sm:$0xff]
  %s1838 = scalar_lea.vmem %s1, 1992
  %1839 = vst [vmem:[%s1838] sm:$0xff] %v1837
  %s1840 = scalar_lea.vmem %s0, 1992
  %v1841 = vld [vmem:[%s1840] sm:$0xff]
  %s1842 = scalar_lea.vmem %s1, 2504
  %1843 = vst [vmem:[%s1842] sm:$0xff] %v1841
  %s1844 = scalar_lea.vmem %s0, 1480
  %v1845 = vld [vmem:[%s1844] sm:$0xff]
  %s1846 = scalar_lea.vmem %s1, 3016
  %1847 = vst [vmem:[%s1846] sm:$0xff] %v1845
  %s1848 = scalar_lea.vmem %s0, 968
  %v1849 = vld [vmem:[%s1848] sm:$0xff]
  %s1850 = scalar_lea.vmem %s1, 3528
  %1851 = vst [vmem:[%s1850] sm:$0xff] %v1849
  %s1852 = scalar_lea.vmem %s0, 456
  %v1853 = vld [vmem:[%s1852] sm:$0xff]
  %s1854 = scalar_lea.vmem %s1, 4040
  %1855 = vst [vmem:[%s1854] sm:$0xff] %v1853
  %s1856 = scalar_lea.vmem %s0, 3800
  %v1857 = vld [vmem:[%s1856] sm:$0xff]
  %s1858 = scalar_lea.vmem %s1, 216
  %1859 = vst [vmem:[%s1858] sm:$0xff] %v1857
  %s1860 = scalar_lea.vmem %s0, 3288
  %v1861 = vld [vmem:[%s1860] sm:$0xff]
  %s1862 = scalar_lea.vmem %s1, 728
  %1863 = vst [vmem:[%s1862] sm:$0xff] %v1861
  %s1864 = scalar_lea.vmem %s0, 2776
  %v1865 = vld [vmem:[%s1864] sm:$0xff]
  %s1866 = scalar_lea.vmem %s1, 1240
  %1867 = vst [vmem:[%s1866] sm:$0xff] %v1865
  %s1868 = scalar_lea.vmem %s0, 2264
  %v1869 = vld [vmem:[%s1868] sm:$0xff]
  %s1870 = scalar_lea.vmem %s1, 1752
  %1871 = vst [vmem:[%s1870] sm:$0xff] %v1869
  %s1872 = scalar_lea.vmem %s0, 1752
  %v1873 = vld [vmem:[%s1872] sm:$0xff]
  %s1874 = scalar_lea.vmem %s1, 2264
  %1875 = vst [vmem:[%s1874] sm:$0xff] %v1873
  %s1876 = scalar_lea.vmem %s0, 1240
  %v1877 = vld [vmem:[%s1876] sm:$0xff]
  %s1878 = scalar_lea.vmem %s1, 2776
  %1879 = vst [vmem:[%s1878] sm:$0xff] %v1877
  %s1880 = scalar_lea.vmem %s0, 728
  %v1881 = vld [vmem:[%s1880] sm:$0xff]
  %s1882 = scalar_lea.vmem %s1, 3288
  %1883 = vst [vmem:[%s1882] sm:$0xff] %v1881
  %s1884 = scalar_lea.vmem %s0, 216
  %v1885 = vld [vmem:[%s1884] sm:$0xff]
  %s1886 = scalar_lea.vmem %s1, 3800
  %1887 = vst [vmem:[%s1886] sm:$0xff] %v1885
  %s1888 = scalar_lea.vmem %s0, 4056
  %v1889 = vld [vmem:[%s1888] sm:$0xff]
  %s1890 = scalar_lea.vmem %s1, 472
  %1891 = vst [vmem:[%s1890] sm:$0xff] %v1889
  %s1892 = scalar_lea.vmem %s0, 3544
  %v1893 = vld [vmem:[%s1892] sm:$0xff]
  %s1894 = scalar_lea.vmem %s1, 984
  %1895 = vst [vmem:[%s1894] sm:$0xff] %v1893
  %s1896 = scalar_lea.vmem %s0, 3032
  %v1897 = vld [vmem:[%s1896] sm:$0xff]
  %s1898 = scalar_lea.vmem %s1, 1496
  %1899 = vst [vmem:[%s1898] sm:$0xff] %v1897
  %s1900 = scalar_lea.vmem %s0, 2520
  %v1901 = vld [vmem:[%s1900] sm:$0xff]
  %s1902 = scalar_lea.vmem %s1, 2008
  %1903 = vst [vmem:[%s1902] sm:$0xff] %v1901
  %s1904 = scalar_lea.vmem %s0, 2008
  %v1905 = vld [vmem:[%s1904] sm:$0xff]
  %s1906 = scalar_lea.vmem %s1, 2520
  %1907 = vst [vmem:[%s1906] sm:$0xff] %v1905
  %s1908 = scalar_lea.vmem %s0, 1496
  %v1909 = vld [vmem:[%s1908] sm:$0xff]
  %s1910 = scalar_lea.vmem %s1, 3032
  %1911 = vst [vmem:[%s1910] sm:$0xff] %v1909
  %s1912 = scalar_lea.vmem %s0, 984
  %v1913 = vld [vmem:[%s1912] sm:$0xff]
  %s1914 = scalar_lea.vmem %s1, 3544
  %1915 = vst [vmem:[%s1914] sm:$0xff] %v1913
  %s1916 = scalar_lea.vmem %s0, 472
  %v1917 = vld [vmem:[%s1916] sm:$0xff]
  %s1918 = scalar_lea.vmem %s1, 4056
  %1919 = vst [vmem:[%s1918] sm:$0xff] %v1917
  %s1920 = scalar_lea.vmem %s0, 3816
  %v1921 = vld [vmem:[%s1920] sm:$0xff]
  %s1922 = scalar_lea.vmem %s1, 232
  %1923 = vst [vmem:[%s1922] sm:$0xff] %v1921
  %s1924 = scalar_lea.vmem %s0, 3304
  %v1925 = vld [vmem:[%s1924] sm:$0xff]
  %s1926 = scalar_lea.vmem %s1, 744
  %1927 = vst [vmem:[%s1926] sm:$0xff] %v1925
  %s1928 = scalar_lea.vmem %s0, 2792
  %v1929 = vld [vmem:[%s1928] sm:$0xff]
  %s1930 = scalar_lea.vmem %s1, 1256
  %1931 = vst [vmem:[%s1930] sm:$0xff] %v1929
  %s1932 = scalar_lea.vmem %s0, 2280
  %v1933 = vld [vmem:[%s1932] sm:$0xff]
  %s1934 = scalar_lea.vmem %s1, 1768
  %1935 = vst [vmem:[%s1934] sm:$0xff] %v1933
  %s1936 = scalar_lea.vmem %s0, 1768
  %v1937 = vld [vmem:[%s1936] sm:$0xff]
  %s1938 = scalar_lea.vmem %s1, 2280
  %1939 = vst [vmem:[%s1938] sm:$0xff] %v1937
  %s1940 = scalar_lea.vmem %s0, 1256
  %v1941 = vld [vmem:[%s1940] sm:$0xff]
  %s1942 = scalar_lea.vmem %s1, 2792
  %1943 = vst [vmem:[%s1942] sm:$0xff] %v1941
  %s1944 = scalar_lea.vmem %s0, 744
  %v1945 = vld [vmem:[%s1944] sm:$0xff]
  %s1946 = scalar_lea.vmem %s1, 3304
  %1947 = vst [vmem:[%s1946] sm:$0xff] %v1945
  %s1948 = scalar_lea.vmem %s0, 232
  %v1949 = vld [vmem:[%s1948] sm:$0xff]
  %s1950 = scalar_lea.vmem %s1, 3816
  %1951 = vst [vmem:[%s1950] sm:$0xff] %v1949
  %s1952 = scalar_lea.vmem %s0, 4072
  %v1953 = vld [vmem:[%s1952] sm:$0xff]
  %s1954 = scalar_lea.vmem %s1, 488
  %1955 = vst [vmem:[%s1954] sm:$0xff] %v1953
  %s1956 = scalar_lea.vmem %s0, 3560
  %v1957 = vld [vmem:[%s1956] sm:$0xff]
  %s1958 = scalar_lea.vmem %s1, 1000
  %1959 = vst [vmem:[%s1958] sm:$0xff] %v1957
  %s1960 = scalar_lea.vmem %s0, 3048
  %v1961 = vld [vmem:[%s1960] sm:$0xff]
  %s1962 = scalar_lea.vmem %s1, 1512
  %1963 = vst [vmem:[%s1962] sm:$0xff] %v1961
  %s1964 = scalar_lea.vmem %s0, 2536
  %v1965 = vld [vmem:[%s1964] sm:$0xff]
  %s1966 = scalar_lea.vmem %s1, 2024
  %1967 = vst [vmem:[%s1966] sm:$0xff] %v1965
  %s1968 = scalar_lea.vmem %s0, 2024
  %v1969 = vld [vmem:[%s1968] sm:$0xff]
  %s1970 = scalar_lea.vmem %s1, 2536
  %1971 = vst [vmem:[%s1970] sm:$0xff] %v1969
  %s1972 = scalar_lea.vmem %s0, 1512
  %v1973 = vld [vmem:[%s1972] sm:$0xff]
  %s1974 = scalar_lea.vmem %s1, 3048
  %1975 = vst [vmem:[%s1974] sm:$0xff] %v1973
  %s1976 = scalar_lea.vmem %s0, 1000
  %v1977 = vld [vmem:[%s1976] sm:$0xff]
  %s1978 = scalar_lea.vmem %s1, 3560
  %1979 = vst [vmem:[%s1978] sm:$0xff] %v1977
  %s1980 = scalar_lea.vmem %s0, 488
  %v1981 = vld [vmem:[%s1980] sm:$0xff]
  %s1982 = scalar_lea.vmem %s1, 4072
  %1983 = vst [vmem:[%s1982] sm:$0xff] %v1981
  %s1984 = scalar_lea.vmem %s0, 3832
  %v1985 = vld [vmem:[%s1984] sm:$0xff]
  %s1986 = scalar_lea.vmem %s1, 248
  %1987 = vst [vmem:[%s1986] sm:$0xff] %v1985
  %s1988 = scalar_lea.vmem %s0, 3320
  %v1989 = vld [vmem:[%s1988] sm:$0xff]
  %s1990 = scalar_lea.vmem %s1, 760
  %1991 = vst [vmem:[%s1990] sm:$0xff] %v1989
  %s1992 = scalar_lea.vmem %s0, 2808
  %v1993 = vld [vmem:[%s1992] sm:$0xff]
  %s1994 = scalar_lea.vmem %s1, 1272
  %1995 = vst [vmem:[%s1994] sm:$0xff] %v1993
  %s1996 = scalar_lea.vmem %s0, 2296
  %v1997 = vld [vmem:[%s1996] sm:$0xff]
  %s1998 = scalar_lea.vmem %s1, 1784
  %1999 = vst [vmem:[%s1998] sm:$0xff] %v1997
  %s2000 = scalar_lea.vmem %s0, 1784
  %v2001 = vld [vmem:[%s2000] sm:$0xff]
  %s2002 = scalar_lea.vmem %s1, 2296
  %2003 = vst [vmem:[%s2002] sm:$0xff] %v2001
  %s2004 = scalar_lea.vmem %s0, 1272
  %v2005 = vld [vmem:[%s2004] sm:$0xff]
  %s2006 = scalar_lea.vmem %s1, 2808
  %2007 = vst [vmem:[%s2006] sm:$0xff] %v2005
  %s2008 = scalar_lea.vmem %s0, 760
  %v2009 = vld [vmem:[%s2008] sm:$0xff]
  %s2010 = scalar_lea.vmem %s1, 3320
  %2011 = vst [vmem:[%s2010] sm:$0xff] %v2009
  %s2012 = scalar_lea.vmem %s0, 248
  %v2013 = vld [vmem:[%s2012] sm:$0xff]
  %s2014 = scalar_lea.vmem %s1, 3832
  %2015 = vst [vmem:[%s2014] sm:$0xff] %v2013
  %s2016 = scalar_lea.vmem %s0, 4088
  %v2017 = vld [vmem:[%s2016] sm:$0xff]
  %s2018 = scalar_lea.vmem %s1, 504
  %2019 = vst [vmem:[%s2018] sm:$0xff] %v2017
  %s2020 = scalar_lea.vmem %s0, 3576
  %v2021 = vld [vmem:[%s2020] sm:$0xff]
  %s2022 = scalar_lea.vmem %s1, 1016
  %2023 = vst [vmem:[%s2022] sm:$0xff] %v2021
  %s2024 = scalar_lea.vmem %s0, 3064
  %v2025 = vld [vmem:[%s2024] sm:$0xff]
  %s2026 = scalar_lea.vmem %s1, 1528
  %2027 = vst [vmem:[%s2026] sm:$0xff] %v2025
  %s2028 = scalar_lea.vmem %s0, 2552
  %v2029 = vld [vmem:[%s2028] sm:$0xff]
  %s2030 = scalar_lea.vmem %s1, 2040
  %2031 = vst [vmem:[%s2030] sm:$0xff] %v2029
  %s2032 = scalar_lea.vmem %s0, 2040
  %v2033 = vld [vmem:[%s2032] sm:$0xff]
  %s2034 = scalar_lea.vmem %s1, 2552
  %2035 = vst [vmem:[%s2034] sm:$0xff] %v2033
  %s2036 = scalar_lea.vmem %s0, 1528
  %v2037 = vld [vmem:[%s2036] sm:$0xff]
  %s2038 = scalar_lea.vmem %s1, 3064
  %2039 = vst [vmem:[%s2038] sm:$0xff] %v2037
  %s2040 = scalar_lea.vmem %s0, 1016
  %v2041 = vld [vmem:[%s2040] sm:$0xff]
  %s2042 = scalar_lea.vmem %s1, 3576
  %2043 = vst [vmem:[%s2042] sm:$0xff] %v2041
  %s2044 = scalar_lea.vmem %s0, 504
  %v2045 = vld [vmem:[%s2044] sm:$0xff]
  %s2046 = scalar_lea.vmem %s1, 4088
  %2047 = vst [vmem:[%s2046] sm:$0xff] %v2045

// kernel: conv_blstm.1
$region0: #{conv_blstm.1}
  #allocation0 [shape = 'u32[]', space=smem, size = 0x4, offset = 0x4, fixed_abs, tag = 'smem constant byte address 0x4 - core index']
  #allocation1 [shape = 'u32[144,128]{1,0:T(1,128)}', space=vmem, size = 0x12000, scoped, tag = 'internal scratch']
  #allocation2 [shape = 'f32[2,18,18,32]{3,2,1,0:T(8,128)}', space=vmem, size = 0x6c000, scoped, tag = 'scratch operand']
  #allocation3 [shape = 'f32[2,16,16,32]{3,2,1,0:T(8,128)}', space=vmem, size = 0x40000, scoped, tag = 'scratch operand']
  %s0 = inlined_call_operand.vmem [shape: f32[8,2,16,16,128], index: 0, kind: input, shape index: {}]
  %s1 = inlined_call_operand.vmem [shape: f32[9,32,128], index: 1, kind: input, shape index: {}]
  %s2 = inlined_call_operand.vmem [shape: f32[16,16,32], index: 2, kind: input, shape index: {}]
  %s3 = inlined_call_operand.vmem [shape: f32[16,16,32], index: 3, kind: input, shape index: {}]
  %s4 = inlined_call_operand.vmem [shape: f32[16,16,32], index: 4, kind: input, shape index: {}]
  %s5 = inlined_call_operand.vmem [shape: f32[2,16,16,16], index: 5, kind: output, shape index: {0}]
  %s6 = inlined_call_operand.vmem [shape: f32[2,16,16,16], index: 6, kind: output, shape index: {1}]
  %7 = xla_tuple %s5, %s6
  %s8 = sld [smem:[#allocation0]]
  $region73: #{conv_blstm.1} parent=0
    _
  %s10 = ssub.s32 1, %s8
  %s11 = scalar_select 0, %s10, %s8
  loop: start=0, step=1, limit=10
  $region2: #{conv_blstm.1} parent=0 // loop_pre_header
    _
  $region3: #{conv_blstm.1} parent=0 // loop_header
    %s13 = sphi 0, %s17
    %p14 = scmp.ge.s32.totalorder %s13, 10
    %s23 = sphi 0, %s25
    %s26 = sphi 0, %s23
    %s27 = sphi 0, %s26
    %s43 = sphi 0, %s27
    %s47 = sphi 0, %s47
    %s49 = sphi 0, %s47
    %s50 = sphi 0, %s49
    %s64 = sphi 0, %s50
    %s68 = sphi 0, %s68
    %s70 = sphi 0, %s68
    %s71 = sphi 0, %s70
    %s85 = sphi 0, %s71
    %s89 = sphi 0, %s89
    %s91 = sphi 0, %s89
    %s92 = sphi 0, %s91
    %s106 = sphi 0, %s92
    %s110 = sphi 0, %s110
    %s112 = sphi 0, %s110
    %s113 = sphi 0, %s112
    %s127 = sphi 0, %s113
    %s131 = sphi 0, %s131
    %s133 = sphi 0, %s131
    %s134 = sphi 0, %s133
    %s148 = sphi 0, %s134
    %s152 = sphi 0, %s152
    %s154 = sphi 0, %s152
    %s155 = sphi 0, %s154
    %s169 = sphi 0, %s155
  $region4: #{conv_blstm.1} parent=0 // loop_header_branch
    %16 = sbr.rel (%p14) target = $region8
  $region5: #{conv_blstm.1} parent=0 // loop_body
    %s18 = ssub.s32 %s13, 1
    %s19 = ssub.s32 %s13, 2
    %s20 = sadd.s32 %s13, 1
    %s21 = ssub.s32 %s13, %s20
    %p22 = scmp.eq.s32.totalorder %s21, 0
    %s24 = sadd.s32 %s23, 1
    %s25 = scalar_select %p22, %s23, %s24
    %p28 = pneg %p22
    %p29 = scmp.eq.s32.totalorder %s13, 7
    %p30 = por %p28, %p29
    %p31 = scmp.ne.s32.totalorder %s23, %s26
    %p32 = scmp.eq.s32.totalorder %s13, 0
    %p33 = por %p31, %p32
    %p34 = scmp.ne.s32.totalorder %s23, %s26
    %p35 = scmp.eq.s32.totalorder %s18, 7
    %p36 = por %p34, %p35
    %p37 = scmp.ne.s32.totalorder %s26, %s27
    %p38 = scmp.eq.s32.totalorder %s18, 0
    %p39 = por %p37, %p38
    %p40 = scmp.ne.s32.totalorder %s26, %s27
    %p41 = scmp.eq.s32.totalorder %s19, 7
    %p42 = por %p40, %p41
    %p44 = scmp.ne.s32.totalorder %s27, %s43
    %p45 = scmp.eq.s32.totalorder %s19, 0
    %p46 = por %p44, %p45
    %s48 = sadd.s32 %s47, 1
    %p51 = scmp.eq.s32.totalorder %s13, 7
    %p52 = scmp.ne.s32.totalorder %s47, %s49
    %p53 = scmp.eq.s32.totalorder %s13, 0
    %p54 = por %p52, %p53
    %p55 = scmp.ne.s32.totalorder %s47, %s49
    %p56 = scmp.eq.s32.totalorder %s18, 7
    %p57 = por %p55, %p56
    %p58 = scmp.ne.s32.totalorder %s49, %s50
    %p59 = scmp.eq.s32.totalorder %s18, 0
    %p60 = por %p58, %p59
    %p61 = scmp.ne.s32.totalorder %s49, %s50
    %p62 = scmp.eq.s32.totalorder %s19, 7
    %p63 = por %p61, %p62
    %p65 = scmp.ne.s32.totalorder %s50, %s64
    %p66 = scmp.eq.s32.totalorder %s19, 0
    %p67 = por %p65, %p66
    %s69 = sadd.s32 %s68, 1
    %p72 = scmp.eq.s32.totalorder %s13, 7
    %p73 = scmp.ne.s32.totalorder %s68, %s70
    %p74 = scmp.eq.s32.totalorder %s13, 0
    %p75 = por %p73, %p74
    %p76 = scmp.ne.s32.totalorder %s68, %s70
    %p77 = scmp.eq.s32.totalorder %s18, 7
    %p78 = por %p76, %p77
    %p79 = scmp.ne.s32.totalorder %s70, %s71
    %p80 = scmp.eq.s32.totalorder %s18, 0
    %p81 = por %p79, %p80
    %p82 = scmp.ne.s32.totalorder %s70, %s71
    %p83 = scmp.eq.s32.totalorder %s19, 7
    %p84 = por %p82, %p83
    %p86 = scmp.ne.s32.totalorder %s71, %s85
    %p87 = scmp.eq.s32.totalorder %s19, 0
    %p88 = por %p86, %p87
    %s90 = sadd.s32 %s89, 1
    %p93 = scmp.eq.s32.totalorder %s13, 7
    %p94 = scmp.ne.s32.totalorder %s89, %s91
    %p95 = scmp.eq.s32.totalorder %s13, 0
    %p96 = por %p94, %p95
    %p97 = scmp.ne.s32.totalorder %s89, %s91
    %p98 = scmp.eq.s32.totalorder %s18, 7
    %p99 = por %p97, %p98
    %p100 = scmp.ne.s32.totalorder %s91, %s92
    %p101 = scmp.eq.s32.totalorder %s18, 0
    %p102 = por %p100, %p101
    %p103 = scmp.ne.s32.totalorder %s91, %s92
    %p104 = scmp.eq.s32.totalorder %s19, 7
    %p105 = por %p103, %p104
    %p107 = scmp.ne.s32.totalorder %s92, %s106
    %p108 = scmp.eq.s32.totalorder %s19, 0
    %p109 = por %p107, %p108
    %s111 = sadd.s32 %s110, 1
    %p114 = scmp.eq.s32.totalorder %s13, 7
    %p115 = scmp.ne.s32.totalorder %s110, %s112
    %p116 = scmp.eq.s32.totalorder %s13, 0
    %p117 = por %p115, %p116
    %p118 = scmp.ne.s32.totalorder %s110, %s112
    %p119 = scmp.eq.s32.totalorder %s18, 7
    %p120 = por %p118, %p119
    %p121 = scmp.ne.s32.totalorder %s112, %s113
    %p122 = scmp.eq.s32.totalorder %s18, 0
    %p123 = por %p121, %p122
    %p124 = scmp.ne.s32.totalorder %s112, %s113
    %p125 = scmp.eq.s32.totalorder %s19, 7
    %p126 = por %p124, %p125
    %p128 = scmp.ne.s32.totalorder %s113, %s127
    %p129 = scmp.eq.s32.totalorder %s19, 0
    %p130 = por %p128, %p129
    %s132 = sadd.s32 %s131, 1
    %p135 = scmp.eq.s32.totalorder %s13, 7
    %p136 = scmp.ne.s32.totalorder %s131, %s133
    %p137 = scmp.eq.s32.totalorder %s13, 0
    %p138 = por %p136, %p137
    %p139 = scmp.ne.s32.totalorder %s131, %s133
    %p140 = scmp.eq.s32.totalorder %s18, 7
    %p141 = por %p139, %p140
    %p142 = scmp.ne.s32.totalorder %s133, %s134
    %p143 = scmp.eq.s32.totalorder %s18, 0
    %p144 = por %p142, %p143
    %p145 = scmp.ne.s32.totalorder %s133, %s134
    %p146 = scmp.eq.s32.totalorder %s19, 7
    %p147 = por %p145, %p146
    %p149 = scmp.ne.s32.totalorder %s134, %s148
    %p150 = scmp.eq.s32.totalorder %s19, 0
    %p151 = por %p149, %p150
    %s153 = sadd.s32 %s152, 1
    %p156 = scmp.eq.s32.totalorder %s13, 7
    %p157 = scmp.ne.s32.totalorder %s152, %s154
    %p158 = scmp.eq.s32.totalorder %s13, 0
    %p159 = por %p157, %p158
    %p160 = scmp.ne.s32.totalorder %s152, %s154
    %p161 = scmp.eq.s32.totalorder %s18, 7
    %p162 = por %p160, %p161
    %p163 = scmp.ne.s32.totalorder %s154, %s155
    %p164 = scmp.eq.s32.totalorder %s18, 0
    %p165 = por %p163, %p164
    %p166 = scmp.ne.s32.totalorder %s154, %s155
    %p167 = scmp.eq.s32.totalorder %s19, 7
    %p168 = por %p166, %p167
    %p170 = scmp.ne.s32.totalorder %s155, %s169
    %p171 = scmp.eq.s32.totalorder %s19, 0
    %p172 = por %p170, %p171
    %p173 = scmp.le.s32.totalorder 1, %s13
    %p174 = scmp.lt.s32.totalorder %s13, 9
    %p175 = pnand %p173, %p174
    %p176 = pneg %p175
    // Predicated region
    $region9: #{conv_blstm.1} parent=5 // pred_check
      _
    $region10: #{conv_blstm.1} parent=5 // pred_check_branch
      %178 = sbr.rel (%p175) target = $region12
    $region11: #{conv_blstm.1} parent=5 // pred_region
      %s179 = ssub.s32 %s13, 1
      // Predicated region
      $region13: #{conv_blstm.1} parent=11 // pred_check
        %p180 = pneg %p60
      $region14: #{conv_blstm.1} parent=11 // pred_check_branch
        %182 = sbr.rel (%p180) target = $region16
      $region15: #{conv_blstm.1} parent=11 // pred_region
        _
      $region16: #{conv_blstm.1} parent=11 // pred_fallthru
        _
      // Predicated region
      $region17: #{conv_blstm.1} parent=11 // pred_check
        %p183 = pneg %p81
      $region18: #{conv_blstm.1} parent=11 // pred_check_branch
        %185 = sbr.rel (%p183) target = $region20
      $region19: #{conv_blstm.1} parent=11 // pred_region
        _
      $region20: #{conv_blstm.1} parent=11 // pred_fallthru
        _
      // Predicated region
      $region21: #{conv_blstm.1} parent=11 // pred_check
        %p186 = pneg %p102
      $region22: #{conv_blstm.1} parent=11 // pred_check_branch
        %188 = sbr.rel (%p186) target = $region24
      $region23: #{conv_blstm.1} parent=11 // pred_region
        _
      $region24: #{conv_blstm.1} parent=11 // pred_fallthru
        _
      // Predicated region
      $region25: #{conv_blstm.1} parent=11 // pred_check
        %p189 = pneg %p123
      $region26: #{conv_blstm.1} parent=11 // pred_check_branch
        %191 = sbr.rel (%p189) target = $region28
      $region27: #{conv_blstm.1} parent=11 // pred_region
        _
      $region28: #{conv_blstm.1} parent=11 // pred_fallthru
        _
    $region12: #{conv_blstm.1} parent=5 // pred_fallthru
      _
    %p192 = scmp.lt.s32.totalorder %s13, 8
    // Predicated region
    $region29: #{conv_blstm.1} parent=5 // pred_check
      %p193 = pneg %p192
    $region30: #{conv_blstm.1} parent=5 // pred_check_branch
      %195 = sbr.rel (%p193) target = $region32
    $region31: #{conv_blstm.1} parent=5 // pred_region
      // Predicated region
      $region33: #{conv_blstm.1} parent=31 // pred_check
        %p196 = pneg %p33
      $region34: #{conv_blstm.1} parent=31 // pred_check_branch
        %198 = sbr.rel (%p196) target = $region36
      $region35: #{conv_blstm.1} parent=31 // pred_region
        %p199 = scmp.lt.s32.totalorder %s13, 7
        %s200 = scalar_select %p199, %s13, 7
        %s201 = smul.addr %s200, 64
        %s202 = smul.addr %s201, 8
        %s203 = scalar_lea.vmem %s0, %s202
      $region36: #{conv_blstm.1} parent=31 // pred_fallthru
        _
    $region32: #{conv_blstm.1} parent=5 // pred_fallthru
      _
    %p204 = scmp.le.s32.totalorder 1, %s13
    %p205 = scmp.lt.s32.totalorder %s13, 9
    %p206 = pnand %p204, %p205
    %p207 = pneg %p206
    // Predicated region
    $region37: #{conv_blstm.1} parent=5 // pred_check
      _
    $region38: #{conv_blstm.1} parent=5 // pred_check_branch
      %209 = sbr.rel (%p206) target = $region40
    $region39: #{conv_blstm.1} parent=5 // pred_region
      %s210 = ssub.s32 %s13, 1
      %p211 = scmp.lt.s32.totalorder %s18, 7
      %s212 = scalar_select %p211, %s18, 7
      %s213 = smul.addr %s212, 64
      %s214 = smul.addr %s213, 8
      %s215 = scalar_lea.vmem %s0, %s214
      %p216 = pneg %p39
      %p217 = pneg %p36
      %p218 = pneg %p60
      %p219 = pneg %p57
      %p220 = pneg %p81
      %p221 = pneg %p78
      %p222 = pneg %p102
      %p223 = pneg %p99
      %p224 = pneg %p123
      %p225 = pneg %p120
      %p226 = pneg %p144
      %p227 = pneg %p141
      %p228 = pneg %p165
      %p229 = pneg %p162
      %p230 = scmp.lt.s32.totalorder %s18, 7
      %s231 = scalar_select %p230, %s18, 7
      %s232 = smul.addr %s231, 64
      %s233 = smul.addr %s232, 8
      %s234 = scalar_lea.vmem %s0, %s233
      %p235 = scmp.eq.s32.totalorder %s18, 0
      // Predicated region
      $region41: #{conv_blstm.1} parent=39 // pred_check
        %p236 = pneg %p235
      $region42: #{conv_blstm.1} parent=39 // pred_check_branch
        %238 = sbr.rel (%p236) target = $region44
      $region43: #{conv_blstm.1} parent=39 // pred_region
        %vm239 = vcmask 261120
        %240 = vst.msk [vmem:[#allocation2] sm:$0xff] %vm239, 0.0
        %241 = vst.msk [vmem:[#allocation2 + $0x8] sm:$0xff] %vm239, 0.0
        %vm242 = vcmask 254976
        %243 = vst.msk [vmem:[#allocation2 + $0x10] sm:$0x3] %vm242, 0.0
        %244 = vst.msk [vmem:[#allocation2 + $0x18] sm:$0xff] %vm239, 0.0
        %245 = vst.msk [vmem:[#allocation2 + $0x20] sm:$0xff] %vm239, 0.0
        %246 = vst.msk [vmem:[#allocation2 + $0x28] sm:$0x3] %vm242, 0.0
        %247 = vst.msk [vmem:[#allocation2 + $0x30] sm:$0xff] %vm239, 0.0
        %248 = vst.msk [vmem:[#allocation2 + $0x38] sm:$0xff] %vm239, 0.0
        %249 = vst.msk [vmem:[#allocation2 + $0x40] sm:$0x3] %vm242, 0.0
        %250 = vst.msk [vmem:[#allocation2 + $0x48] sm:$0xff] %vm239, 0.0
        %251 = vst.msk [vmem:[#allocation2 + $0x50] sm:$0xff] %vm239, 0.0
        %252 = vst.msk [vmem:[#allocation2 + $0x58] sm:$0x3] %vm242, 0.0
        %253 = vst.msk [vmem:[#allocation2 + $0x60] sm:$0xff] %vm239, 0.0
        %254 = vst.msk [vmem:[#allocation2 + $0x68] sm:$0xff] %vm239, 0.0
        %255 = vst.msk [vmem:[#allocation2 + $0x70] sm:$0x3] %vm242, 0.0
        %256 = vst.msk [vmem:[#allocation2 + $0x78] sm:$0xff] %vm239, 0.0
        %257 = vst.msk [vmem:[#allocation2 + $0x80] sm:$0xff] %vm239, 0.0
        %258 = vst.msk [vmem:[#allocation2 + $0x88] sm:$0x3] %vm242, 0.0
        %259 = vst.msk [vmem:[#allocation2 + $0x90] sm:$0xff] %vm239, 0.0
        %260 = vst.msk [vmem:[#allocation2 + $0x98] sm:$0xff] %vm239, 0.0
        %261 = vst.msk [vmem:[#allocation2 + $0xa0] sm:$0x3] %vm242, 0.0
        %262 = vst.msk [vmem:[#allocation2 + $0xa8] sm:$0xff] %vm239, 0.0
        %263 = vst.msk [vmem:[#allocation2 + $0xb0] sm:$0xff] %vm239, 0.0
        %264 = vst.msk [vmem:[#allocation2 + $0xb8] sm:$0x3] %vm242, 0.0
        %265 = vst.msk [vmem:[#allocation2 + $0xc0] sm:$0xff] %vm239, 0.0
        %266 = vst.msk [vmem:[#allocation2 + $0xc8] sm:$0xff] %vm239, 0.0
        %267 = vst.msk [vmem:[#allocation2 + $0xd0] sm:$0x3] %vm242, 0.0
        %268 = vst.msk [vmem:[#allocation2 + $0xd8] sm:$0xff] %vm239, 0.0
        %269 = vst.msk [vmem:[#allocation2 + $0xe0] sm:$0xff] %vm239, 0.0
        %270 = vst.msk [vmem:[#allocation2 + $0xe8] sm:$0x3] %vm242, 0.0
        %271 = vst.msk [vmem:[#allocation2 + $0xf0] sm:$0xff] %vm239, 0.0
        %272 = vst.msk [vmem:[#allocation2 + $0xf8] sm:$0xff] %vm239, 0.0
        %273 = vst.msk [vmem:[#allocation2 + $0x100] sm:$0x3] %vm242, 0.0
        %274 = vst.msk [vmem:[#allocation2 + $0x108] sm:$0xff] %vm239, 0.0
        %275 = vst.msk [vmem:[#allocation2 + $0x110] sm:$0xff] %vm239, 0.0
        %276 = vst.msk [vmem:[#allocation2 + $0x118] sm:$0x3] %vm242, 0.0
        %277 = vst.msk [vmem:[#allocation2 + $0x120] sm:$0xff] %vm239, 0.0
        %278 = vst.msk [vmem:[#allocation2 + $0x128] sm:$0xff] %vm239, 0.0
        %279 = vst.msk [vmem:[#allocation2 + $0x130] sm:$0x3] %vm242, 0.0
        %280 = vst.msk [vmem:[#allocation2 + $0x138] sm:$0xff] %vm239, 0.0
        %281 = vst.msk [vmem:[#allocation2 + $0x140] sm:$0xff] %vm239, 0.0
        %282 = vst.msk [vmem:[#allocation2 + $0x148] sm:$0x3] %vm242, 0.0
        %283 = vst.msk [vmem:[#allocation2 + $0x150] sm:$0xff] %vm239, 0.0
        %284 = vst.msk [vmem:[#allocation2 + $0x158] sm:$0xff] %vm239, 0.0
        %285 = vst.msk [vmem:[#allocation2 + $0x160] sm:$0x3] %vm242, 0.0
        %286 = vst.msk [vmem:[#allocation2 + $0x168] sm:$0xff] %vm239, 0.0
        %287 = vst.msk [vmem:[#allocation2 + $0x170] sm:$0xff] %vm239, 0.0
        %288 = vst.msk [vmem:[#allocation2 + $0x178] sm:$0x3] %vm242, 0.0
        %289 = vst.msk [vmem:[#allocation2 + $0x180] sm:$0xff] %vm239, 0.0
        %290 = vst.msk [vmem:[#allocation2 + $0x188] sm:$0xff] %vm239, 0.0
        %291 = vst.msk [vmem:[#allocation2 + $0x190] sm:$0x3] %vm242, 0.0
        %292 = vst.msk [vmem:[#allocation2 + $0x198] sm:$0xff] %vm239, 0.0
        %293 = vst.msk [vmem:[#allocation2 + $0x1a0] sm:$0xff] %vm239, 0.0
        %294 = vst.msk [vmem:[#allocation2 + $0x1a8] sm:$0x3] %vm242, 0.0
        %295 = vst.msk [vmem:[#allocation2 + $0x1b0] sm:$0xff] %vm239, 0.0
        %296 = vst.msk [vmem:[#allocation2 + $0x1b8] sm:$0xff] %vm239, 0.0
        %297 = vst.msk [vmem:[#allocation2 + $0x1c0] sm:$0x3] %vm242, 0.0
        %298 = vst.msk [vmem:[#allocation2 + $0x1c8] sm:$0xff] %vm239, 0.0
        %299 = vst.msk [vmem:[#allocation2 + $0x1d0] sm:$0xff] %vm239, 0.0
        %300 = vst.msk [vmem:[#allocation2 + $0x1d8] sm:$0x3] %vm242, 0.0
        %301 = vst.msk [vmem:[#allocation2 + $0x1e0] sm:$0xff] %vm239, 0.0
        %302 = vst.msk [vmem:[#allocation2 + $0x1e8] sm:$0xff] %vm239, 0.0
        %303 = vst.msk [vmem:[#allocation2 + $0x1f0] sm:$0x3] %vm242, 0.0
        %304 = vst.msk [vmem:[#allocation2 + $0x1f8] sm:$0xff] %vm239, 0.0
        %305 = vst.msk [vmem:[#allocation2 + $0x200] sm:$0xff] %vm239, 0.0
        %306 = vst.msk [vmem:[#allocation2 + $0x208] sm:$0x3] %vm242, 0.0
        %307 = vst.msk [vmem:[#allocation2 + $0x210] sm:$0xff] %vm239, 0.0
        %308 = vst.msk [vmem:[#allocation2 + $0x218] sm:$0xff] %vm239, 0.0
        %309 = vst.msk [vmem:[#allocation2 + $0x220] sm:$0x3] %vm242, 0.0
        %310 = vst.msk [vmem:[#allocation2 + $0x228] sm:$0xff] %vm239, 0.0
        %311 = vst.msk [vmem:[#allocation2 + $0x230] sm:$0xff] %vm239, 0.0
        %312 = vst.msk [vmem:[#allocation2 + $0x238] sm:$0x3] %vm242, 0.0
        %313 = vst.msk [vmem:[#allocation2 + $0x240] sm:$0xff] %vm239, 0.0
        %314 = vst.msk [vmem:[#allocation2 + $0x248] sm:$0xff] %vm239, 0.0
        %315 = vst.msk [vmem:[#allocation2 + $0x250] sm:$0x3] %vm242, 0.0
        %316 = vst.msk [vmem:[#allocation2 + $0x258] sm:$0xff] %vm239, 0.0
        %317 = vst.msk [vmem:[#allocation2 + $0x260] sm:$0xff] %vm239, 0.0
        %318 = vst.msk [vmem:[#allocation2 + $0x268] sm:$0x3] %vm242, 0.0
        %319 = vst.msk [vmem:[#allocation2 + $0x270] sm:$0xff] %vm239, 0.0
        %320 = vst.msk [vmem:[#allocation2 + $0x278] sm:$0xff] %vm239, 0.0
        %321 = vst.msk [vmem:[#allocation2 + $0x280] sm:$0x3] %vm242, 0.0
        %322 = vst.msk [vmem:[#allocation2 + $0x288] sm:$0xff] %vm239, 0.0
        %323 = vst.msk [vmem:[#allocation2 + $0x290] sm:$0xff] %vm239, 0.0
        %324 = vst.msk [vmem:[#allocation2 + $0x298] sm:$0x3] %vm242, 0.0
        %325 = vst.msk [vmem:[#allocation2 + $0x2a0] sm:$0xff] %vm239, 0.0
        %326 = vst.msk [vmem:[#allocation2 + $0x2a8] sm:$0xff] %vm239, 0.0
        %327 = vst.msk [vmem:[#allocation2 + $0x2b0] sm:$0x3] %vm242, 0.0
        %328 = vst.msk [vmem:[#allocation2 + $0x2b8] sm:$0xff] %vm239, 0.0
        %329 = vst.msk [vmem:[#allocation2 + $0x2c0] sm:$0xff] %vm239, 0.0
        %330 = vst.msk [vmem:[#allocation2 + $0x2c8] sm:$0x3] %vm242, 0.0
        %331 = vst.msk [vmem:[#allocation2 + $0x2d0] sm:$0xff] %vm239, 0.0
        %332 = vst.msk [vmem:[#allocation2 + $0x2d8] sm:$0xff] %vm239, 0.0
        %333 = vst.msk [vmem:[#allocation2 + $0x2e0] sm:$0x3] %vm242, 0.0
        %334 = vst.msk [vmem:[#allocation2 + $0x2e8] sm:$0xff] %vm239, 0.0
        %335 = vst.msk [vmem:[#allocation2 + $0x2f0] sm:$0xff] %vm239, 0.0
        %336 = vst.msk [vmem:[#allocation2 + $0x2f8] sm:$0x3] %vm242, 0.0
        %337 = vst.msk [vmem:[#allocation2 + $0x300] sm:$0xff] %vm239, 0.0
        %338 = vst.msk [vmem:[#allocation2 + $0x308] sm:$0xff] %vm239, 0.0
        %339 = vst.msk [vmem:[#allocation2 + $0x310] sm:$0x3] %vm242, 0.0
        %340 = vst.msk [vmem:[#allocation2 + $0x318] sm:$0xff] %vm239, 0.0
        %341 = vst.msk [vmem:[#allocation2 + $0x320] sm:$0xff] %vm239, 0.0
        %342 = vst.msk [vmem:[#allocation2 + $0x328] sm:$0x3] %vm242, 0.0
        %343 = vst.msk [vmem:[#allocation2 + $0x330] sm:$0xff] %vm239, 0.0
        %344 = vst.msk [vmem:[#allocation2 + $0x338] sm:$0xff] %vm239, 0.0
        %345 = vst.msk [vmem:[#allocation2 + $0x340] sm:$0x3] %vm242, 0.0
        %346 = vst.msk [vmem:[#allocation2 + $0x348] sm:$0xff] %vm239, 0.0
        %347 = vst.msk [vmem:[#allocation2 + $0x350] sm:$0xff] %vm239, 0.0
        %348 = vst.msk [vmem:[#allocation2 + $0x358] sm:$0x3] %vm242, 0.0
        %349 = vst.msk [vmem:[#allocation3] sm:$0xff] %vm239, 0.0
        %350 = vst.msk [vmem:[#allocation3 + $0x8] sm:$0xff] %vm239, 0.0
        %351 = vst.msk [vmem:[#allocation3 + $0x10] sm:$0xff] %vm239, 0.0
        %352 = vst.msk [vmem:[#allocation3 + $0x18] sm:$0xff] %vm239, 0.0
        %353 = vst.msk [vmem:[#allocation3 + $0x20] sm:$0xff] %vm239, 0.0
        %354 = vst.msk [vmem:[#allocation3 + $0x28] sm:$0xff] %vm239, 0.0
        %355 = vst.msk [vmem:[#allocation3 + $0x30] sm:$0xff] %vm239, 0.0
        %356 = vst.msk [vmem:[#allocation3 + $0x38] sm:$0xff] %vm239, 0.0
        %357 = vst.msk [vmem:[#allocation3 + $0x40] sm:$0xff] %vm239, 0.0
        %358 = vst.msk [vmem:[#allocation3 + $0x48] sm:$0xff] %vm239, 0.0
        %359 = vst.msk [vmem:[#allocation3 + $0x50] sm:$0xff] %vm239, 0.0
        %360 = vst.msk [vmem:[#allocation3 + $0x58] sm:$0xff] %vm239, 0.0
        %361 = vst.msk [vmem:[#allocation3 + $0x60] sm:$0xff] %vm239, 0.0
        %362 = vst.msk [vmem:[#allocation3 + $0x68] sm:$0xff] %vm239, 0.0
        %363 = vst.msk [vmem:[#allocation3 + $0x70] sm:$0xff] %vm239, 0.0
        %364 = vst.msk [vmem:[#allocation3 + $0x78] sm:$0xff] %vm239, 0.0
        %365 = vst.msk [vmem:[#allocation3 + $0x80] sm:$0xff] %vm239, 0.0
        %366 = vst.msk [vmem:[#allocation3 + $0x88] sm:$0xff] %vm239, 0.0
        %367 = vst.msk [vmem:[#allocation3 + $0x90] sm:$0xff] %vm239, 0.0
        %368 = vst.msk [vmem:[#allocation3 + $0x98] sm:$0xff] %vm239, 0.0
        %369 = vst.msk [vmem:[#allocation3 + $0xa0] sm:$0xff] %vm239, 0.0
        %370 = vst.msk [vmem:[#allocation3 + $0xa8] sm:$0xff] %vm239, 0.0
        %371 = vst.msk [vmem:[#allocation3 + $0xb0] sm:$0xff] %vm239, 0.0
        %372 = vst.msk [vmem:[#allocation3 + $0xb8] sm:$0xff] %vm239, 0.0
        %373 = vst.msk [vmem:[#allocation3 + $0xc0] sm:$0xff] %vm239, 0.0
        %374 = vst.msk [vmem:[#allocation3 + $0xc8] sm:$0xff] %vm239, 0.0
        %375 = vst.msk [vmem:[#allocation3 + $0xd0] sm:$0xff] %vm239, 0.0
        %376 = vst.msk [vmem:[#allocation3 + $0xd8] sm:$0xff] %vm239, 0.0
        %377 = vst.msk [vmem:[#allocation3 + $0xe0] sm:$0xff] %vm239, 0.0
        %378 = vst.msk [vmem:[#allocation3 + $0xe8] sm:$0xff] %vm239, 0.0
        %379 = vst.msk [vmem:[#allocation3 + $0xf0] sm:$0xff] %vm239, 0.0
        %380 = vst.msk [vmem:[#allocation3 + $0xf8] sm:$0xff] %vm239, 0.0
        %381 = vst.msk [vmem:[#allocation3 + $0x100] sm:$0xff] %vm239, 0.0
        %382 = vst.msk [vmem:[#allocation3 + $0x108] sm:$0xff] %vm239, 0.0
        %383 = vst.msk [vmem:[#allocation3 + $0x110] sm:$0xff] %vm239, 0.0
        %384 = vst.msk [vmem:[#allocation3 + $0x118] sm:$0xff] %vm239, 0.0
        %385 = vst.msk [vmem:[#allocation3 + $0x120] sm:$0xff] %vm239, 0.0
        %386 = vst.msk [vmem:[#allocation3 + $0x128] sm:$0xff] %vm239, 0.0
        %387 = vst.msk [vmem:[#allocation3 + $0x130] sm:$0xff] %vm239, 0.0
        %388 = vst.msk [vmem:[#allocation3 + $0x138] sm:$0xff] %vm239, 0.0
        %389 = vst.msk [vmem:[#allocation3 + $0x140] sm:$0xff] %vm239, 0.0
        %390 = vst.msk [vmem:[#allocation3 + $0x148] sm:$0xff] %vm239, 0.0
        %391 = vst.msk [vmem:[#allocation3 + $0x150] sm:$0xff] %vm239, 0.0
        %392 = vst.msk [vmem:[#allocation3 + $0x158] sm:$0xff] %vm239, 0.0
        %393 = vst.msk [vmem:[#allocation3 + $0x160] sm:$0xff] %vm239, 0.0
        %394 = vst.msk [vmem:[#allocation3 + $0x168] sm:$0xff] %vm239, 0.0
        %395 = vst.msk [vmem:[#allocation3 + $0x170] sm:$0xff] %vm239, 0.0
        %396 = vst.msk [vmem:[#allocation3 + $0x178] sm:$0xff] %vm239, 0.0
        %397 = vst.msk [vmem:[#allocation3 + $0x180] sm:$0xff] %vm239, 0.0
        %398 = vst.msk [vmem:[#allocation3 + $0x188] sm:$0xff] %vm239, 0.0
        %399 = vst.msk [vmem:[#allocation3 + $0x190] sm:$0xff] %vm239, 0.0
        %400 = vst.msk [vmem:[#allocation3 + $0x198] sm:$0xff] %vm239, 0.0
        %401 = vst.msk [vmem:[#allocation3 + $0x1a0] sm:$0xff] %vm239, 0.0
        %402 = vst.msk [vmem:[#allocation3 + $0x1a8] sm:$0xff] %vm239, 0.0
        %403 = vst.msk [vmem:[#allocation3 + $0x1b0] sm:$0xff] %vm239, 0.0
        %404 = vst.msk [vmem:[#allocation3 + $0x1b8] sm:$0xff] %vm239, 0.0
        %405 = vst.msk [vmem:[#allocation3 + $0x1c0] sm:$0xff] %vm239, 0.0
        %406 = vst.msk [vmem:[#allocation3 + $0x1c8] sm:$0xff] %vm239, 0.0
        %407 = vst.msk [vmem:[#allocation3 + $0x1d0] sm:$0xff] %vm239, 0.0
        %408 = vst.msk [vmem:[#allocation3 + $0x1d8] sm:$0xff] %vm239, 0.0
        %409 = vst.msk [vmem:[#allocation3 + $0x1e0] sm:$0xff] %vm239, 0.0
        %410 = vst.msk [vmem:[#allocation3 + $0x1e8] sm:$0xff] %vm239, 0.0
        %411 = vst.msk [vmem:[#allocation3 + $0x1f0] sm:$0xff] %vm239, 0.0
        %412 = vst.msk [vmem:[#allocation3 + $0x1f8] sm:$0xff] %vm239, 0.0
      $region44: #{conv_blstm.1} parent=39 // pred_fallthru
        _
      %v413 = vld [vmem:[#allocation2] sm:$0xff]
      %v414 = vld [vmem:[#allocation2 + $0x8] sm:$0xff]
      %v415 = vld [vmem:[#allocation2 + $0x10] sm:$0x3]
      %v416 = vld [vmem:[#allocation2 + $0x18] sm:$0xff]
      %v417 = vld [vmem:[#allocation2 + $0x20] sm:$0xff]
      %v418 = vld [vmem:[#allocation2 + $0x28] sm:$0x3]
      %v419 = vld [vmem:[#allocation2 + $0x30] sm:$0xff]
      %v420 = vld [vmem:[#allocation2 + $0x38] sm:$0xff]
      %v421 = vld [vmem:[#allocation2 + $0x40] sm:$0x3]
      %v422 = vld [vmem:[#allocation2 + $0x48] sm:$0xff]
      %v423 = vld [vmem:[#allocation2 + $0x50] sm:$0xff]
      %v424 = vld [vmem:[#allocation2 + $0x58] sm:$0x3]
      %v425 = vld [vmem:[#allocation2 + $0x60] sm:$0xff]
      %v426 = vld [vmem:[#allocation2 + $0x68] sm:$0xff]
      %v427 = vld [vmem:[#allocation2 + $0x70] sm:$0x3]
      %v428 = vld [vmem:[#allocation2 + $0x78] sm:$0xff]
      %v429 = vld [vmem:[#allocation2 + $0x80] sm:$0xff]
      %v430 = vld [vmem:[#allocation2 + $0x88] sm:$0x3]
      %v431 = vld [vmem:[#allocation2 + $0x90] sm:$0xff]
      %v432 = vld [vmem:[#allocation2 + $0x98] sm:$0xff]
      %v433 = vld [vmem:[#allocation2 + $0xa0] sm:$0x3]
      %v434 = vld [vmem:[#allocation2 + $0xa8] sm:$0xff]
      %v435 = vld [vmem:[#allocation2 + $0xb0] sm:$0xff]
      %v436 = vld [vmem:[#allocation2 + $0xb8] sm:$0x3]
      %v437 = vld [vmem:[#allocation2 + $0xc0] sm:$0xff]
      %v438 = vld [vmem:[#allocation2 + $0xc8] sm:$0xff]
      %v439 = vld [vmem:[#allocation2 + $0xd0] sm:$0x3]
      %v440 = vld [vmem:[#allocation2 + $0xd8] sm:$0xff]
      %v441 = vld [vmem:[#allocation2 + $0xe0] sm:$0xff]
      %v442 = vld [vmem:[#allocation2 + $0xe8] sm:$0x3]
      %v443 = vld [vmem:[#allocation2 + $0xf0] sm:$0xff]
      %v444 = vld [vmem:[#allocation2 + $0xf8] sm:$0xff]
      %v445 = vld [vmem:[#allocation2 + $0x100] sm:$0x3]
      %v446 = vld [vmem:[#allocation2 + $0x108] sm:$0xff]
      %v447 = vld [vmem:[#allocation2 + $0x110] sm:$0xff]
      %v448 = vld [vmem:[#allocation2 + $0x118] sm:$0x3]
      %v449 = vld [vmem:[#allocation2 + $0x120] sm:$0xff]
      %v450 = vld [vmem:[#allocation2 + $0x128] sm:$0xff]
      %v451 = vld [vmem:[#allocation2 + $0x130] sm:$0x3]
      %v452 = vld [vmem:[#allocation2 + $0x138] sm:$0xff]
      %v453 = vld [vmem:[#allocation2 + $0x140] sm:$0xff]
      %v454 = vld [vmem:[#allocation2 + $0x148] sm:$0x3]
      %v455 = vld [vmem:[#allocation2 + $0x150] sm:$0xff]
      %v456 = vld [vmem:[#allocation2 + $0x158] sm:$0xff]
      %v457 = vld [vmem:[#allocation2 + $0x160] sm:$0x3]
      %v458 = vld [vmem:[#allocation2 + $0x168] sm:$0xff]
      %v459 = vld [vmem:[#allocation2 + $0x170] sm:$0xff]
      %v460 = vld [vmem:[#allocation2 + $0x178] sm:$0x3]
      %v461 = vld [vmem:[#allocation2 + $0x180] sm:$0xff]
      %v462 = vld [vmem:[#allocation2 + $0x188] sm:$0xff]
      %v463 = vld [vmem:[#allocation2 + $0x190] sm:$0x3]
      %v464 = vld [vmem:[#allocation2 + $0x198] sm:$0xff]
      %v465 = vld [vmem:[#allocation2 + $0x1a0] sm:$0xff]
      %v466 = vld [vmem:[#allocation2 + $0x1a8] sm:$0x3]
      %v467 = vld [vmem:[#allocation2 + $0x1b0] sm:$0xff]
      %v468 = vld [vmem:[#allocation2 + $0x1b8] sm:$0xff]
      %v469 = vld [vmem:[#allocation2 + $0x1c0] sm:$0x3]
      %v470 = vld [vmem:[#allocation2 + $0x1c8] sm:$0xff]
      %v471 = vld [vmem:[#allocation2 + $0x1d0] sm:$0xff]
      %v472 = vld [vmem:[#allocation2 + $0x1d8] sm:$0x3]
      %v473 = vld [vmem:[#allocation2 + $0x1e0] sm:$0xff]
      %v474 = vld [vmem:[#allocation2 + $0x1e8] sm:$0xff]
      %v475 = vld [vmem:[#allocation2 + $0x1f0] sm:$0x3]
      %v476 = vld [vmem:[#allocation2 + $0x1f8] sm:$0xff]
      %v477 = vld [vmem:[#allocation2 + $0x200] sm:$0xff]
      %v478 = vld [vmem:[#allocation2 + $0x208] sm:$0x3]
      %v479 = vld [vmem:[#allocation2 + $0x210] sm:$0xff]
      %v480 = vld [vmem:[#allocation2 + $0x218] sm:$0xff]
      %v481 = vld [vmem:[#allocation2 + $0x220] sm:$0x3]
      %v482 = vld [vmem:[#allocation2 + $0x228] sm:$0xff]
      %v483 = vld [vmem:[#allocation2 + $0x230] sm:$0xff]
      %v484 = vld [vmem:[#allocation2 + $0x238] sm:$0x3]
      %v485 = vld [vmem:[#allocation2 + $0x240] sm:$0xff]
      %v486 = vld [vmem:[#allocation2 + $0x248] sm:$0xff]
      %v487 = vld [vmem:[#allocation2 + $0x250] sm:$0x3]
      %v488 = vld [vmem:[#allocation2 + $0x258] sm:$0xff]
      %v489 = vld [vmem:[#allocation2 + $0x260] sm:$0xff]
      %v490 = vld [vmem:[#allocation2 + $0x268] sm:$0x3]
      %v491 = vld [vmem:[#allocation2 + $0x270] sm:$0xff]
      %v492 = vld [vmem:[#allocation2 + $0x278] sm:$0xff]
      %v493 = vld [vmem:[#allocation2 + $0x280] sm:$0x3]
      %v494 = vld [vmem:[#allocation2 + $0x288] sm:$0xff]
      %v495 = vld [vmem:[#allocation2 + $0x290] sm:$0xff]
      %v496 = vld [vmem:[#allocation2 + $0x298] sm:$0x3]
      %v497 = vld [vmem:[#allocation2 + $0x2a0] sm:$0xff]
      %v498 = vld [vmem:[#allocation2 + $0x2a8] sm:$0xff]
      %v499 = vld [vmem:[#allocation2 + $0x2b0] sm:$0x3]
      %v500 = vld [vmem:[#allocation2 + $0x2b8] sm:$0xff]
      %v501 = vld [vmem:[#allocation2 + $0x2c0] sm:$0xff]
      %v502 = vld [vmem:[#allocation2 + $0x2c8] sm:$0x3]
      %v503 = vld [vmem:[#allocation2 + $0x2d0] sm:$0xff]
      %v504 = vld [vmem:[#allocation2 + $0x2d8] sm:$0xff]
      %v505 = vld [vmem:[#allocation2 + $0x2e0] sm:$0x3]
      %v506 = vld [vmem:[#allocation2 + $0x2e8] sm:$0xff]
      %v507 = vld [vmem:[#allocation2 + $0x2f0] sm:$0xff]
      %v508 = vld [vmem:[#allocation2 + $0x2f8] sm:$0x3]
      %v509 = vld [vmem:[#allocation2 + $0x300] sm:$0xff]
      %v510 = vld [vmem:[#allocation2 + $0x308] sm:$0xff]
      %v511 = vld [vmem:[#allocation2 + $0x310] sm:$0x3]
      %v512 = vld [vmem:[#allocation2 + $0x318] sm:$0xff]
      %v513 = vld [vmem:[#allocation2 + $0x320] sm:$0xff]
      %v514 = vld [vmem:[#allocation2 + $0x328] sm:$0x3]
      %v515 = vld [vmem:[#allocation2 + $0x330] sm:$0xff]
      %v516 = vld [vmem:[#allocation2 + $0x338] sm:$0xff]
      %v517 = vld [vmem:[#allocation2 + $0x340] sm:$0x3]
      %v518 = vld [vmem:[#allocation2 + $0x348] sm:$0xff]
      %v519 = vld [vmem:[#allocation2 + $0x350] sm:$0xff]
      %v520 = vld [vmem:[#allocation2 + $0x358] sm:$0x3]
      %v521 = vld [vmem:[%s234] sm:$0xff]
      %v522 = vld [vmem:[%s234 + $0x8] sm:$0xff]
      %v523 = vld [vmem:[%s234 + $0x10] sm:$0xff]
      %v524 = vld [vmem:[%s234 + $0x18] sm:$0xff]
      %v525 = vld [vmem:[%s234 + $0x20] sm:$0xff]
      %v526 = vld [vmem:[%s234 + $0x28] sm:$0xff]
      %v527 = vld [vmem:[%s234 + $0x30] sm:$0xff]
      %v528 = vld [vmem:[%s234 + $0x38] sm:$0xff]
      %v529 = vld [vmem:[%s234 + $0x40] sm:$0xff]
      %v530 = vld [vmem:[%s234 + $0x48] sm:$0xff]
      %v531 = vld [vmem:[%s234 + $0x50] sm:$0xff]
      %v532 = vld [vmem:[%s234 + $0x58] sm:$0xff]
      %v533 = vld [vmem:[%s234 + $0x60] sm:$0xff]
      %v534 = vld [vmem:[%s234 + $0x68] sm:$0xff]
      %v535 = vld [vmem:[%s234 + $0x70] sm:$0xff]
      %v536 = vld [vmem:[%s234 + $0x78] sm:$0xff]
      %v537 = vld [vmem:[%s234 + $0x80] sm:$0xff]
      %v538 = vld [vmem:[%s234 + $0x88] sm:$0xff]
      %v539 = vld [vmem:[%s234 + $0x90] sm:$0xff]
      %v540 = vld [vmem:[%s234 + $0x98] sm:$0xff]
      %v541 = vld [vmem:[%s234 + $0xa0] sm:$0xff]
      %v542 = vld [vmem:[%s234 + $0xa8] sm:$0xff]
      %v543 = vld [vmem:[%s234 + $0xb0] sm:$0xff]
      %v544 = vld [vmem:[%s234 + $0xb8] sm:$0xff]
      %v545 = vld [vmem:[%s234 + $0xc0] sm:$0xff]
      %v546 = vld [vmem:[%s234 + $0xc8] sm:$0xff]
      %v547 = vld [vmem:[%s234 + $0xd0] sm:$0xff]
      %v548 = vld [vmem:[%s234 + $0xd8] sm:$0xff]
      %v549 = vld [vmem:[%s234 + $0xe0] sm:$0xff]
      %v550 = vld [vmem:[%s234 + $0xe8] sm:$0xff]
      %v551 = vld [vmem:[%s234 + $0xf0] sm:$0xff]
      %v552 = vld [vmem:[%s234 + $0xf8] sm:$0xff]
      %v553 = vld [vmem:[%s234 + $0x100] sm:$0xff]
      %v554 = vld [vmem:[%s234 + $0x108] sm:$0xff]
      %v555 = vld [vmem:[%s234 + $0x110] sm:$0xff]
      %v556 = vld [vmem:[%s234 + $0x118] sm:$0xff]
      %v557 = vld [vmem:[%s234 + $0x120] sm:$0xff]
      %v558 = vld [vmem:[%s234 + $0x128] sm:$0xff]
      %v559 = vld [vmem:[%s234 + $0x130] sm:$0xff]
      %v560 = vld [vmem:[%s234 + $0x138] sm:$0xff]
      %v561 = vld [vmem:[%s234 + $0x140] sm:$0xff]
      %v562 = vld [vmem:[%s234 + $0x148] sm:$0xff]
      %v563 = vld [vmem:[%s234 + $0x150] sm:$0xff]
      %v564 = vld [vmem:[%s234 + $0x158] sm:$0xff]
      %v565 = vld [vmem:[%s234 + $0x160] sm:$0xff]
      %v566 = vld [vmem:[%s234 + $0x168] sm:$0xff]
      %v567 = vld [vmem:[%s234 + $0x170] sm:$0xff]
      %v568 = vld [vmem:[%s234 + $0x178] sm:$0xff]
      %v569 = vld [vmem:[%s234 + $0x180] sm:$0xff]
      %v570 = vld [vmem:[%s234 + $0x188] sm:$0xff]
      %v571 = vld [vmem:[%s234 + $0x190] sm:$0xff]
      %v572 = vld [vmem:[%s234 + $0x198] sm:$0xff]
      %v573 = vld [vmem:[%s234 + $0x1a0] sm:$0xff]
      %v574 = vld [vmem:[%s234 + $0x1a8] sm:$0xff]
      %v575 = vld [vmem:[%s234 + $0x1b0] sm:$0xff]
      %v576 = vld [vmem:[%s234 + $0x1b8] sm:$0xff]
      %v577 = vld [vmem:[%s234 + $0x1c0] sm:$0xff]
      %v578 = vld [vmem:[%s234 + $0x1c8] sm:$0xff]
      %v579 = vld [vmem:[%s234 + $0x1d0] sm:$0xff]
      %v580 = vld [vmem:[%s234 + $0x1d8] sm:$0xff]
      %v581 = vld [vmem:[%s234 + $0x1e0] sm:$0xff]
      %v582 = vld [vmem:[%s234 + $0x1e8] sm:$0xff]
      %v583 = vld [vmem:[%s234 + $0x1f0] sm:$0xff]
      %v584 = vld [vmem:[%s234 + $0x1f8] sm:$0xff]
      %v585 = vld [vmem:[%s1] sm:$0xff]
      %v586 = vld [vmem:[%s1 + $0x8] sm:$0xff]
      %v587 = vld [vmem:[%s1 + $0x10] sm:$0xff]
      %v588 = vld [vmem:[%s1 + $0x18] sm:$0xff]
      %vm589 = vcmask 261120
      %v591 = vsel %vm589, %v413, 0
      %v594 = vsel %vm589, %v414, 0
      %v597 = vsel %vm589, %v416, 0
      %v600 = vsel %vm589, %v417, 0
      %v603 = vsel %vm589, %v419, 0
      %v606 = vsel %vm589, %v420, 0
      %v609 = vsel %vm589, %v422, 0
      %v612 = vsel %vm589, %v423, 0
      %v615 = vsel %vm589, %v425, 0
      %v618 = vsel %vm589, %v426, 0
      %v621 = vsel %vm589, %v428, 0
      %v624 = vsel %vm589, %v429, 0
      %v627 = vsel %vm589, %v431, 0
      %v630 = vsel %vm589, %v432, 0
      %v633 = vsel %vm589, %v434, 0
      %v636 = vsel %vm589, %v435, 0
      %v639 = vsel %vm589, %v437, 0
      %v642 = vsel %vm589, %v438, 0
      %v645 = vsel %vm589, %v440, 0
      %v648 = vsel %vm589, %v441, 0
      %v651 = vsel %vm589, %v443, 0
      %v654 = vsel %vm589, %v444, 0
      %v657 = vsel %vm589, %v446, 0
      %v660 = vsel %vm589, %v447, 0
      %v663 = vsel %vm589, %v449, 0
      %v666 = vsel %vm589, %v450, 0
      %v669 = vsel %vm589, %v452, 0
      %v672 = vsel %vm589, %v453, 0
      %v675 = vsel %vm589, %v455, 0
      %v678 = vsel %vm589, %v456, 0
      %v681 = vsel %vm589, %v458, 0
      %v684 = vsel %vm589, %v459, 0
      %v687 = vsel %vm589, %v467, 0
      %v690 = vsel %vm589, %v468, 0
      %v693 = vsel %vm589, %v470, 0
      %v696 = vsel %vm589, %v471, 0
      %v699 = vsel %vm589, %v473, 0
      %v702 = vsel %vm589, %v474, 0
      %v705 = vsel %vm589, %v476, 0
      %v708 = vsel %vm589, %v477, 0
      %v711 = vsel %vm589, %v479, 0
      %v714 = vsel %vm589, %v480, 0
      %v717 = vsel %vm589, %v482, 0
      %v720 = vsel %vm589, %v483, 0
      %v723 = vsel %vm589, %v485, 0
      %v726 = vsel %vm589, %v486, 0
      %v729 = vsel %vm589, %v488, 0
      %v732 = vsel %vm589, %v489, 0
      %v735 = vsel %vm589, %v491, 0
      %v738 = vsel %vm589, %v492, 0
      %v741 = vsel %vm589, %v494, 0
      %v744 = vsel %vm589, %v495, 0
      %v747 = vsel %vm589, %v497, 0
      %v750 = vsel %vm589, %v498, 0
      %v753 = vsel %vm589, %v500, 0
      %v756 = vsel %vm589, %v501, 0
      %v759 = vsel %vm589, %v503, 0
      %v762 = vsel %vm589, %v504, 0
      %v765 = vsel %vm589, %v506, 0
      %v768 = vsel %vm589, %v507, 0
      %v771 = vsel %vm589, %v509, 0
      %v774 = vsel %vm589, %v510, 0
      %v777 = vsel %vm589, %v512, 0
      %v780 = vsel %vm589, %v513, 0
      %782 = vmatprep.subr.mxu0 0.0
      %783 = vmatpush1.msra.mxu0 %v585
      %784 = vmatprep.subr.mxu0 0.0
      %785 = vmatpush1.msra.mxu0 %v586
      %786 = vmatprep.subr.mxu0 0.0
      %787 = vmatpush1.msra.mxu0 %v587
      %788 = vmatprep.subr.mxu0 0.0
      %789 = vmatpush1.msra.mxu0 %v588
      %790 = vmatprep.subr.mxu0 0.0
      %791 = vmatpush1.msra.mxu0 0.0
      %792 = vmatprep.subr.mxu0 0.0
      %793 = vmatpush1.msra.mxu0 0.0
      %794 = vmatprep.subr.mxu0 0.0
      %795 = vmatpush1.msra.mxu0 0.0
      %796 = vmatprep.subr.mxu0 0.0
      %797 = vmatpush1.msra.mxu0 0.0
      %798 = vmatprep.subr.mxu0 0.0
      %799 = vmatpush1.msra.mxu0 0.0
      %800 = vmatprep.subr.mxu0 0.0
      %801 = vmatpush1.msra.mxu0 0.0
      %802 = vmatprep.subr.mxu0 0.0
      %803 = vmatpush1.msra.mxu0 0.0
      %804 = vmatprep.subr.mxu0 0.0
      %805 = vmatpush1.msra.mxu0 0.0
      %806 = vmatprep.subr.mxu0 0.0
      %807 = vmatpush1.msra.mxu0 0.0
      %808 = vmatprep.subr.mxu0 0.0
      %809 = vmatpush1.msra.mxu0 0.0
      %810 = vmatprep.subr.mxu0 0.0
      %811 = vmatpush1.msra.mxu0 0.0
      %812 = vmatprep.subr.mxu0 0.0
      %813 = vmatpush1.msra.mxu0 0.0
      %814 = vmatprep.subr.mxu0 0.0
      %815 = vmatpush1.msra.mxu0 0.0
      %816 = vmatprep.subr.mxu0 0.0
      %817 = vmatpush1.msra.mxu0 0.0
      %818 = vmatprep.subr.mxu0 0.0
      %819 = vmatpush1.msra.mxu0 0.0
      %820 = vmatprep.subr.mxu0 0.0
      %821 = vmatpush1.msra.mxu0 0.0
      %822 = vmatprep.subr.mxu0 0.0
      %823 = vmatpush1.msra.mxu0 0.0
      %824 = vmatprep.subr.mxu0 0.0
      %825 = vmatpush1.msra.mxu0 0.0
      %826 = vmatprep.subr.mxu0 0.0
      %827 = vmatpush1.msra.mxu0 0.0
      %828 = vmatprep.subr.mxu0 0.0
      %829 = vmatpush1.msra.mxu0 0.0
      %830 = vmatprep.subr.mxu0 0.0
      %831 = vmatpush1.msra.mxu0 0.0
      %832 = vmatprep.subr.mxu0 0.0
      %833 = vmatpush1.msra.mxu0 0.0
      %834 = vmatprep.subr.mxu0 0.0
      %835 = vmatpush1.msra.mxu0 0.0
      %836 = vmatprep.subr.mxu0 0.0
      %837 = vmatpush1.msra.mxu0 0.0
      %838 = vmatprep.subr.mxu0 0.0
      %839 = vmatpush1.msra.mxu0 0.0
      %840 = vmatprep.subr.mxu0 0.0
      %841 = vmatpush1.msra.mxu0 0.0
      %842 = vmatprep.subr.mxu0 0.0
      %843 = vmatpush1.msra.mxu0 0.0
      %844 = vmatprep.subr.mxu0 0.0
      %845 = vmatpush1.msra.mxu0 0.0
      %846 = vmatprep.mubr.f32.mxu0 0.0
      %847 = vmatmul.mubr.f32.gmra.mrb[0].mxu0 %v591
      %v848 = vpop.f32.mrb[0].mxu0
      %v849 = vadd.f32 0.0, %v848
      %v850 = vpop.f32.mrb[0].mxu0
      %851 = vmatprep.mubr.f32.mxu0 0.0
      %852 = vmatmul.mubr.f32.gmra.mrb[0].mxu0 %v594
      %v853 = vpop.f32.mrb[0].mxu0
      %v854 = vadd.f32 0.0, %v853
      %v855 = vpop.f32.mrb[0].mxu0
      %856 = vmatprep.mubr.f32.mxu0 0.0
      %857 = vmatmul.mubr.f32.gmra.mrb[0].mxu0 %v597
      %v858 = vpop.f32.mrb[0].mxu0
      %v859 = vadd.f32 0.0, %v858
      %v860 = vpop.f32.mrb[0].mxu0
      %861 = vmatprep.mubr.f32.mxu0 0.0
      %862 = vmatmul.mubr.f32.gmra.mrb[0].mxu0 %v600
      %v863 = vpop.f32.mrb[0].mxu0
      %v864 = vadd.f32 0.0, %v863
      %v865 = vpop.f32.mrb[0].mxu0
      %866 = vmatprep.mubr.f32.mxu0 0.0
      %867 = vmatmul.mubr.f32.gmra.mrb[0].mxu0 %v603
      %v868 = vpop.f32.mrb[0].mxu0
      %v869 = vadd.f32 0.0, %v868
      %v870 = vpop.f32.mrb[0].mxu0
      %871 = vmatprep.mubr.f32.mxu0 0.0
      %872 = vmatmul.mubr.f32.gmra.mrb[0].mxu0 %v606
      %v873 = vpop.f32.mrb[0].mxu0
      %v874 = vadd.f32 0.0, %v873
      %v875 = vpop.f32.mrb[0].mxu0
      %876 = vmatprep.mubr.f32.mxu0 0.0
      %877 = vmatmul.mubr.f32.gmra.mrb[0].mxu0 %v609
      %v878 = vpop.f32.mrb[0].mxu0
      %v879 = vadd.f32 0.0, %v878
      %v880 = vpop.f32.mrb[0].mxu0
      %881 = vmatprep.mubr.f32.mxu0 0.0
      %882 = vmatmul.mubr.f32.gmra.mrb[0].mxu0 %v612
      %v883 = vpop.f32.mrb[0].mxu0
      %v884 = vadd.f32 0.0, %v883
      %v885 = vpop.f32.mrb[0].mxu0
      %886 = vmatprep.mubr.f32.mxu0 0.0
      %887 = vmatmul.mubr.f32.gmra.mrb[0].mxu0 %v615
      %v888 = vpop.f32.mrb[0].mxu0
      %v889 = vadd.f32 0.0, %v888
      %v890 = vpop.f32.mrb[0].mxu0
      %891 = vmatprep.mubr.f32.mxu0 0.0
      %892 = vmatmul.mubr.f32.gmra.mrb[0].mxu0 %v618
      %v893 = vpop.f32.mrb[0].mxu0
      %v894 = vadd.f32 0.0, %v893
      %v895 = vpop.f32.mrb[0].mxu0
      %896 = vmatprep.mubr.f32.mxu0 0.0
      %897 = vmatmul.mubr.f32.gmra.mrb[0].mxu0 %v621
      %v898 = vpop.f32.mrb[0].mxu0
      %v899 = vadd.f32 0.0, %v898
      %v900 = vpop.f32.mrb[0].mxu0
      %901 = vmatprep.mubr.f32.mxu0 0.0
      %902 = vmatmul.mubr.f32.gmra.mrb[0].mxu0 %v624
      %v903 = vpop.f32.mrb[0].mxu0
      %v904 = vadd.f32 0.0, %v903
      %v905 = vpop.f32.mrb[0].mxu0
      %906 = vmatprep.mubr.f32.mxu0 0.0
      %907 = vmatmul.mubr.f32.gmra.mrb[0].mxu0 %v627
      %v908 = vpop.f32.mrb[0].mxu0
      %v909 = vadd.f32 0.0, %v908
      %v910 = vpop.f32.mrb[0].mxu0
      %911 = vmatprep.mubr.f32.mxu0 0.0
      %912 = vmatmul.mubr.f32.gmra.mrb[0].mxu0 %v630
      %v913 = vpop.f32.mrb[0].mxu0
      %v914 = vadd.f32 0.0, %v913
      %v915 = vpop.f32.mrb[0].mxu0
      %916 = vmatprep.mubr.f32.mxu0 0.0
      %917 = vmatmul.mubr.f32.gmra.mrb[0].mxu0 %v633
      %v918 = vpop.f32.mrb[0].mxu0
      %v919 = vadd.f32 0.0, %v918
      %v920 = vpop.f32.mrb[0].mxu0
      %921 = vmatprep.mubr.f32.mxu0 0.0
      %922 = vmatmul.mubr.f32.gmra.mrb[0].mxu0 %v636
      %v923 = vpop.f32.mrb[0].mxu0
      %v924 = vadd.f32 0.0, %v923
      %v925 = vpop.f32.mrb[0].mxu0
      %926 = vmatprep.mubr.f32.mxu0 0.0
      %927 = vmatmul.mubr.f32.gmra.mrb[0].mxu0 %v639
      %v928 = vpop.f32.mrb[0].mxu0
      %v929 = vadd.f32 0.0, %v928
      %v930 = vpop.f32.mrb[0].mxu0
      %931 = vmatprep.mubr.f32.mxu0 0.0
      %932 = vmatmul.mubr.f32.gmra.mrb[0].mxu0 %v642
      %v933 = vpop.f32.mrb[0].mxu0
      %v934 = vadd.f32 0.0, %v933
      %v935 = vpop.f32.mrb[0].mxu0
      %936 = vmatprep.mubr.f32.mxu0 0.0
      %937 = vmatmul.mubr.f32.gmra.mrb[0].mxu0 %v645
      %v938 = vpop.f32.mrb[0].mxu0
      %v939 = vadd.f32 0.0, %v938
      %v940 = vpop.f32.mrb[0].mxu0
      %941 = vmatprep.mubr.f32.mxu0 0.0
      %942 = vmatmul.mubr.f32.gmra.mrb[0].mxu0 %v648
      %v943 = vpop.f32.mrb[0].mxu0
      %v944 = vadd.f32 0.0, %v943
      %v945 = vpop.f32.mrb[0].mxu0
      %946 = vmatprep.mubr.f32.mxu0 0.0
      %947 = vmatmul.mubr.f32.gmra.mrb[0].mxu0 %v651
      %v948 = vpop.f32.mrb[0].mxu0
      %v949 = vadd.f32 0.0, %v948
      %v950 = vpop.f32.mrb[0].mxu0
      %951 = vmatprep.mubr.f32.mxu0 0.0
      %952 = vmatmul.mubr.f32.gmra.mrb[0].mxu0 %v654
      %v953 = vpop.f32.mrb[0].mxu0
      %v954 = vadd.f32 0.0, %v953
      %v955 = vpop.f32.mrb[0].mxu0
      %956 = vmatprep.mubr.f32.mxu0 0.0
      %957 = vmatmul.mubr.f32.gmra.mrb[0].mxu0 %v657
      %v958 = vpop.f32.mrb[0].mxu0
      %v959 = vadd.f32 0.0, %v958
      %v960 = vpop.f32.mrb[0].mxu0
      %961 = vmatprep.mubr.f32.mxu0 0.0
      %962 = vmatmul.mubr.f32.gmra.mrb[0].mxu0 %v660
      %v963 = vpop.f32.mrb[0].mxu0
      %v964 = vadd.f32 0.0, %v963
      %v965 = vpop.f32.mrb[0].mxu0
      %966 = vmatprep.mubr.f32.mxu0 0.0
      %967 = vmatmul.mubr.f32.gmra.mrb[0].mxu0 %v663
      %v968 = vpop.f32.mrb[0].mxu0
      %v969 = vadd.f32 0.0, %v968
      %v970 = vpop.f32.mrb[0].mxu0
      %971 = vmatprep.mubr.f32.mxu0 0.0
      %972 = vmatmul.mubr.f32.gmra.mrb[0].mxu0 %v666
      %v973 = vpop.f32.mrb[0].mxu0
      %v974 = vadd.f32 0.0, %v973
      %v975 = vpop.f32.mrb[0].mxu0
      %976 = vmatprep.mubr.f32.mxu0 0.0
      %977 = vmatmul.mubr.f32.gmra.mrb[0].mxu0 %v669
      %v978 = vpop.f32.mrb[0].mxu0
      %v979 = vadd.f32 0.0, %v978
      %v980 = vpop.f32.mrb[0].mxu0
      %981 = vmatprep.mubr.f32.mxu0 0.0
      %982 = vmatmul.mubr.f32.gmra.mrb[0].mxu0 %v672
      %v983 = vpop.f32.mrb[0].mxu0
      %v984 = vadd.f32 0.0, %v983
      %v985 = vpop.f32.mrb[0].mxu0
      %986 = vmatprep.mubr.f32.mxu0 0.0
      %987 = vmatmul.mubr.f32.gmra.mrb[0].mxu0 %v675
      %v988 = vpop.f32.mrb[0].mxu0
      %v989 = vadd.f32 0.0, %v988
      %v990 = vpop.f32.mrb[0].mxu0
      %991 = vmatprep.mubr.f32.mxu0 0.0
      %992 = vmatmul.mubr.f32.gmra.mrb[0].mxu0 %v678
      %v993 = vpop.f32.mrb[0].mxu0
      %v994 = vadd.f32 0.0, %v993
      %v995 = vpop.f32.mrb[0].mxu0
      %996 = vmatprep.mubr.f32.mxu0 0.0
      %997 = vmatmul.mubr.f32.gmra.mrb[0].mxu0 %v681
      %v998 = vpop.f32.mrb[0].mxu0
      %v999 = vadd.f32 0.0, %v998
      %v1000 = vpop.f32.mrb[0].mxu0
      %1001 = vmatprep.mubr.f32.mxu0 0.0
      %1002 = vmatmul.mubr.f32.gmra.mrb[0].mxu0 %v684
      %v1003 = vpop.f32.mrb[0].mxu0
      %v1004 = vadd.f32 0.0, %v1003
      %v1005 = vpop.f32.mrb[0].mxu0
      %1006 = vmatprep.mubr.f32.mxu0 0.0
      %1007 = vmatmul.mubr.f32.gmra.mrb[0].mxu0 %v687
      %v1008 = vpop.f32.mrb[0].mxu0
      %v1009 = vadd.f32 0.0, %v1008
      %v1010 = vpop.f32.mrb[0].mxu0
      %1011 = vmatprep.mubr.f32.mxu0 0.0
      %1012 = vmatmul.mubr.f32.gmra.mrb[0].mxu0 %v690
      %v1013 = vpop.f32.mrb[0].mxu0
      %v1014 = vadd.f32 0.0, %v1013
      %v1015 = vpop.f32.mrb[0].mxu0
      %1016 = vmatprep.mubr.f32.mxu0 0.0
      %1017 = vmatmul.mubr.f32.gmra.mrb[0].mxu0 %v693
      %v1018 = vpop.f32.mrb[0].mxu0
      %v1019 = vadd.f32 0.0, %v1018
      %v1020 = vpop.f32.mrb[0].mxu0
      %1021 = vmatprep.mubr.f32.mxu0 0.0
      %1022 = vmatmul.mubr.f32.gmra.mrb[0].mxu0 %v696
      %v1023 = vpop.f32.mrb[0].mxu0
      %v1024 = vadd.f32 0.0, %v1023
      %v1025 = vpop.f32.mrb[0].mxu0
      %1026 = vmatprep.mubr.f32.mxu0 0.0
      %1027 = vmatmul.mubr.f32.gmra.mrb[0].mxu0 %v699
      %v1028 = vpop.f32.mrb[0].mxu0
      %v1029 = vadd.f32 0.0, %v1028
      %v1030 = vpop.f32.mrb[0].mxu0
      %1031 = vmatprep.mubr.f32.mxu0 0.0
      %1032 = vmatmul.mubr.f32.gmra.mrb[0].mxu0 %v702
      %v1033 = vpop.f32.mrb[0].mxu0
      %v1034 = vadd.f32 0.0, %v1033
      %v1035 = vpop.f32.mrb[0].mxu0
      %1036 = vmatprep.mubr.f32.mxu0 0.0
      %1037 = vmatmul.mubr.f32.gmra.mrb[0].mxu0 %v705
      %v1038 = vpop.f32.mrb[0].mxu0
      %v1039 = vadd.f32 0.0, %v1038
      %v1040 = vpop.f32.mrb[0].mxu0
      %1041 = vmatprep.mubr.f32.mxu0 0.0
      %1042 = vmatmul.mubr.f32.gmra.mrb[0].mxu0 %v708
      %v1043 = vpop.f32.mrb[0].mxu0
      %v1044 = vadd.f32 0.0, %v1043
      %v1045 = vpop.f32.mrb[0].mxu0
      %1046 = vmatprep.mubr.f32.mxu0 0.0
      %1047 = vmatmul.mubr.f32.gmra.mrb[0].mxu0 %v711
      %v1048 = vpop.f32.mrb[0].mxu0
      %v1049 = vadd.f32 0.0, %v1048
      %v1050 = vpop.f32.mrb[0].mxu0
      %1051 = vmatprep.mubr.f32.mxu0 0.0
      %1052 = vmatmul.mubr.f32.gmra.mrb[0].mxu0 %v714
      %v1053 = vpop.f32.mrb[0].mxu0
      %v1054 = vadd.f32 0.0, %v1053
      %v1055 = vpop.f32.mrb[0].mxu0
      %1056 = vmatprep.mubr.f32.mxu0 0.0
      %1057 = vmatmul.mubr.f32.gmra.mrb[0].mxu0 %v717
      %v1058 = vpop.f32.mrb[0].mxu0
      %v1059 = vadd.f32 0.0, %v1058
      %v1060 = vpop.f32.mrb[0].mxu0
      %1061 = vmatprep.mubr.f32.mxu0 0.0
      %1062 = vmatmul.mubr.f32.gmra.mrb[0].mxu0 %v720
      %v1063 = vpop.f32.mrb[0].mxu0
      %v1064 = vadd.f32 0.0, %v1063
      %v1065 = vpop.f32.mrb[0].mxu0
      %1066 = vmatprep.mubr.f32.mxu0 0.0
      %1067 = vmatmul.mubr.f32.gmra.mrb[0].mxu0 %v723
      %v1068 = vpop.f32.mrb[0].mxu0
      %v1069 = vadd.f32 0.0, %v1068
      %v1070 = vpop.f32.mrb[0].mxu0
      %1071 = vmatprep.mubr.f32.mxu0 0.0
      %1072 = vmatmul.mubr.f32.gmra.mrb[0].mxu0 %v726
      %v1073 = vpop.f32.mrb[0].mxu0
      %v1074 = vadd.f32 0.0, %v1073
      %v1075 = vpop.f32.mrb[0].mxu0
      %1076 = vmatprep.mubr.f32.mxu0 0.0
      %1077 = vmatmul.mubr.f32.gmra.mrb[0].mxu0 %v729
      %v1078 = vpop.f32.mrb[0].mxu0
      %v1079 = vadd.f32 0.0, %v1078
      %v1080 = vpop.f32.mrb[0].mxu0
      %1081 = vmatprep.mubr.f32.mxu0 0.0
      %1082 = vmatmul.mubr.f32.gmra.mrb[0].mxu0 %v732
      %v1083 = vpop.f32.mrb[0].mxu0
      %v1084 = vadd.f32 0.0, %v1083
      %v1085 = vpop.f32.mrb[0].mxu0
      %1086 = vmatprep.mubr.f32.mxu0 0.0
      %1087 = vmatmul.mubr.f32.gmra.mrb[0].mxu0 %v735
      %v1088 = vpop.f32.mrb[0].mxu0
      %v1089 = vadd.f32 0.0, %v1088
      %v1090 = vpop.f32.mrb[0].mxu0
      %1091 = vmatprep.mubr.f32.mxu0 0.0
      %1092 = vmatmul.mubr.f32.gmra.mrb[0].mxu0 %v738
      %v1093 = vpop.f32.mrb[0].mxu0
      %v1094 = vadd.f32 0.0, %v1093
      %v1095 = vpop.f32.mrb[0].mxu0
      %1096 = vmatprep.mubr.f32.mxu0 0.0
      %1097 = vmatmul.mubr.f32.gmra.mrb[0].mxu0 %v741
      %v1098 = vpop.f32.mrb[0].mxu0
      %v1099 = vadd.f32 0.0, %v1098
      %v1100 = vpop.f32.mrb[0].mxu0
      %1101 = vmatprep.mubr.f32.mxu0 0.0
      %1102 = vmatmul.mubr.f32.gmra.mrb[0].mxu0 %v744
      %v1103 = vpop.f32.mrb[0].mxu0
      %v1104 = vadd.f32 0.0, %v1103
      %v1105 = vpop.f32.mrb[0].mxu0
      %1106 = vmatprep.mubr.f32.mxu0 0.0
      %1107 = vmatmul.mubr.f32.gmra.mrb[0].mxu0 %v747
      %v1108 = vpop.f32.mrb[0].mxu0
      %v1109 = vadd.f32 0.0, %v1108
      %v1110 = vpop.f32.mrb[0].mxu0
      %1111 = vmatprep.mubr.f32.mxu0 0.0
      %1112 = vmatmul.mubr.f32.gmra.mrb[0].mxu0 %v750
      %v1113 = vpop.f32.mrb[0].mxu0
      %v1114 = vadd.f32 0.0, %v1113
      %v1115 = vpop.f32.mrb[0].mxu0
      %1116 = vmatprep.mubr.f32.mxu0 0.0
      %1117 = vmatmul.mubr.f32.gmra.mrb[0].mxu0 %v753
      %v1118 = vpop.f32.mrb[0].mxu0
      %v1119 = vadd.f32 0.0, %v1118
      %v1120 = vpop.f32.mrb[0].mxu0
      %1121 = vmatprep.mubr.f32.mxu0 0.0
      %1122 = vmatmul.mubr.f32.gmra.mrb[0].mxu0 %v756
      %v1123 = vpop.f32.mrb[0].mxu0
      %v1124 = vadd.f32 0.0, %v1123
      %v1125 = vpop.f32.mrb[0].mxu0
      %1126 = vmatprep.mubr.f32.mxu0 0.0
      %1127 = vmatmul.mubr.f32.gmra.mrb[0].mxu0 %v759
      %v1128 = vpop.f32.mrb[0].mxu0
      %v1129 = vadd.f32 0.0, %v1128
      %v1130 = vpop.f32.mrb[0].mxu0
      %1131 = vmatprep.mubr.f32.mxu0 0.0
      %1132 = vmatmul.mubr.f32.gmra.mrb[0].mxu0 %v762
      %v1133 = vpop.f32.mrb[0].mxu0
      %v1134 = vadd.f32 0.0, %v1133
      %v1135 = vpop.f32.mrb[0].mxu0
      %1136 = vmatprep.mubr.f32.mxu0 0.0
      %1137 = vmatmul.mubr.f32.gmra.mrb[0].mxu0 %v765
      %v1138 = vpop.f32.mrb[0].mxu0
      %v1139 = vadd.f32 0.0, %v1138
      %v1140 = vpop.f32.mrb[0].mxu0
      %1141 = vmatprep.mubr.f32.mxu0 0.0
      %1142 = vmatmul.mubr.f32.gmra.mrb[0].mxu0 %v768
      %v1143 = vpop.f32.mrb[0].mxu0
      %v1144 = vadd.f32 0.0, %v1143
      %v1145 = vpop.f32.mrb[0].mxu0
      %1146 = vmatprep.mubr.f32.mxu0 0.0
      %1147 = vmatmul.mubr.f32.gmra.mrb[0].mxu0 %v771
      %v1148 = vpop.f32.mrb[0].mxu0
      %v1149 = vadd.f32 0.0, %v1148
      %v1150 = vpop.f32.mrb[0].mxu0
      %1151 = vmatprep.mubr.f32.mxu0 0.0
      %1152 = vmatmul.mubr.f32.gmra.mrb[0].mxu0 %v774
      %v1153 = vpop.f32.mrb[0].mxu0
      %v1154 = vadd.f32 0.0, %v1153
      %v1155 = vpop.f32.mrb[0].mxu0
      %1156 = vmatprep.mubr.f32.mxu0 0.0
      %1157 = vmatmul.mubr.f32.gmra.mrb[0].mxu0 %v777
      %v1158 = vpop.f32.mrb[0].mxu0
      %v1159 = vadd.f32 0.0, %v1158
      %v1160 = vpop.f32.mrb[0].mxu0
      %1161 = vmatprep.mubr.f32.mxu0 0.0
      %1162 = vmatmul.mubr.f32.gmra.mrb[0].mxu0 %v780
      %v1163 = vpop.f32.mrb[0].mxu0
      %v1164 = vadd.f32 0.0, %v1163
      %v1165 = vpop.f32.mrb[0].mxu0
      %1166 = vdwg.mxu0
      %v1167 = vadd.f32 %v521, %v849
      %v1168 = vadd.f32 %v522, %v854
      %v1169 = vadd.f32 %v523, %v859
      %v1170 = vadd.f32 %v524, %v864
      %v1171 = vadd.f32 %v525, %v869
      %v1172 = vadd.f32 %v526, %v874
      %v1173 = vadd.f32 %v527, %v879
      %v1174 = vadd.f32 %v528, %v884
      %v1175 = vadd.f32 %v529, %v889
      %v1176 = vadd.f32 %v530, %v894
      %v1177 = vadd.f32 %v531, %v899
      %v1178 = vadd.f32 %v532, %v904
      %v1179 = vadd.f32 %v533, %v909
      %v1180 = vadd.f32 %v534, %v914
      %v1181 = vadd.f32 %v535, %v919
      %v1182 = vadd.f32 %v536, %v924
      %v1183 = vadd.f32 %v537, %v929
      %v1184 = vadd.f32 %v538, %v934
      %v1185 = vadd.f32 %v539, %v939
      %v1186 = vadd.f32 %v540, %v944
      %v1187 = vadd.f32 %v541, %v949
      %v1188 = vadd.f32 %v542, %v954
      %v1189 = vadd.f32 %v543, %v959
      %v1190 = vadd.f32 %v544, %v964
      %v1191 = vadd.f32 %v545, %v969
      %v1192 = vadd.f32 %v546, %v974
      %v1193 = vadd.f32 %v547, %v979
      %v1194 = vadd.f32 %v548, %v984
      %v1195 = vadd.f32 %v549, %v989
      %v1196 = vadd.f32 %v550, %v994
      %v1197 = vadd.f32 %v551, %v999
      %v1198 = vadd.f32 %v552, %v1004
      %v1199 = vadd.f32 %v553, %v1009
      %v1200 = vadd.f32 %v554, %v1014
      %v1201 = vadd.f32 %v555, %v1019
      %v1202 = vadd.f32 %v556, %v1024
      %v1203 = vadd.f32 %v557, %v1029
      %v1204 = vadd.f32 %v558, %v1034
      %v1205 = vadd.f32 %v559, %v1039
      %v1206 = vadd.f32 %v560, %v1044
      %v1207 = vadd.f32 %v561, %v1049
      %v1208 = vadd.f32 %v562, %v1054
      %v1209 = vadd.f32 %v563, %v1059
      %v1210 = vadd.f32 %v564, %v1064
      %v1211 = vadd.f32 %v565, %v1069
      %v1212 = vadd.f32 %v566, %v1074
      %v1213 = vadd.f32 %v567, %v1079
      %v1214 = vadd.f32 %v568, %v1084
      %v1215 = vadd.f32 %v569, %v1089
      %v1216 = vadd.f32 %v570, %v1094
      %v1217 = vadd.f32 %v571, %v1099
      %v1218 = vadd.f32 %v572, %v1104
      %v1219 = vadd.f32 %v573, %v1109
      %v1220 = vadd.f32 %v574, %v1114
      %v1221 = vadd.f32 %v575, %v1119
      %v1222 = vadd.f32 %v576, %v1124
      %v1223 = vadd.f32 %v577, %v1129
      %v1224 = vadd.f32 %v578, %v1134
      %v1225 = vadd.f32 %v579, %v1139
      %v1226 = vadd.f32 %v580, %v1144
      %v1227 = vadd.f32 %v581, %v1149
      %v1228 = vadd.f32 %v582, %v1154
      %v1229 = vadd.f32 %v583, %v1159
      %v1230 = vadd.f32 %v584, %v1164
      %vm1263 = vcmask 1046528
      %v1264 = vrot.slane %v413, 1
      %v1265 = vrot.slane %v414, 1
      %v1266 = vsel %vm1263, %v1264, %v1265
      %v1267 = vrot.slane %v415, 1
      %v1268 = vsel %vm1263, %v1265, %v1267
      %v1269 = vrot.slane %v416, 1
      %v1270 = vrot.slane %v417, 1
      %v1271 = vsel %vm1263, %v1269, %v1270
      %v1272 = vrot.slane %v418, 1
      %v1273 = vsel %vm1263, %v1270, %v1272
      %v1274 = vrot.slane %v419, 1
      %v1275 = vrot.slane %v420, 1
      %v1276 = vsel %vm1263, %v1274, %v1275
      %v1277 = vrot.slane %v421, 1
      %v1278 = vsel %vm1263, %v1275, %v1277
      %v1279 = vrot.slane %v422, 1
      %v1280 = vrot.slane %v423, 1
      %v1281 = vsel %vm1263, %v1279, %v1280
      %v1282 = vrot.slane %v424, 1
      %v1283 = vsel %vm1263, %v1280, %v1282
      %v1284 = vrot.slane %v425, 1
      %v1285 = vrot.slane %v426, 1
      %v1286 = vsel %vm1263, %v1284, %v1285
      %v1287 = vrot.slane %v427, 1
      %v1288 = vsel %vm1263, %v1285, %v1287
      %v1289 = vrot.slane %v428, 1
      %v1290 = vrot.slane %v429, 1
      %v1291 = vsel %vm1263, %v1289, %v1290
      %v1292 = vrot.slane %v430, 1
      %v1293 = vsel %vm1263, %v1290, %v1292
      %v1294 = vrot.slane %v431, 1
      %v1295 = vrot.slane %v432, 1
      %v1296 = vsel %vm1263, %v1294, %v1295
      %v1297 = vrot.slane %v433, 1
      %v1298 = vsel %vm1263, %v1295, %v1297
      %v1299 = vrot.slane %v434, 1
      %v1300 = vrot.slane %v435, 1
      %v1301 = vsel %vm1263, %v1299, %v1300
      %v1302 = vrot.slane %v436, 1
      %v1303 = vsel %vm1263, %v1300, %v1302
      %v1304 = vrot.slane %v437, 1
      %v1305 = vrot.slane %v438, 1
      %v1306 = vsel %vm1263, %v1304, %v1305
      %v1307 = vrot.slane %v439, 1
      %v1308 = vsel %vm1263, %v1305, %v1307
      %v1309 = vrot.slane %v440, 1
      %v1310 = vrot.slane %v441, 1
      %v1311 = vsel %vm1263, %v1309, %v1310
      %v1312 = vrot.slane %v442, 1
      %v1313 = vsel %vm1263, %v1310, %v1312
      %v1314 = vrot.slane %v443, 1
      %v1315 = vrot.slane %v444, 1
      %v1316 = vsel %vm1263, %v1314, %v1315
      %v1317 = vrot.slane %v445, 1
      %v1318 = vsel %vm1263, %v1315, %v1317
      %v1319 = vrot.slane %v446, 1
      %v1320 = vrot.slane %v447, 1
      %v1321 = vsel %vm1263, %v1319, %v1320
      %v1322 = vrot.slane %v448, 1
      %v1323 = vsel %vm1263, %v1320, %v1322
      %v1324 = vrot.slane %v449, 1
      %v1325 = vrot.slane %v450, 1
      %v1326 = vsel %vm1263, %v1324, %v1325
      %v1327 = vrot.slane %v451, 1
      %v1328 = vsel %vm1263, %v1325, %v1327
      %v1329 = vrot.slane %v452, 1
      %v1330 = vrot.slane %v453, 1
      %v1331 = vsel %vm1263, %v1329, %v1330
      %v1332 = vrot.slane %v454, 1
      %v1333 = vsel %vm1263, %v1330, %v1332
      %v1334 = vrot.slane %v455, 1
      %v1335 = vrot.slane %v456, 1
      %v1336 = vsel %vm1263, %v1334, %v1335
      %v1337 = vrot.slane %v457, 1
      %v1338 = vsel %vm1263, %v1335, %v1337
      %v1339 = vrot.slane %v458, 1
      %v1340 = vrot.slane %v459, 1
      %v1341 = vsel %vm1263, %v1339, %v1340
      %v1342 = vrot.slane %v460, 1
      %v1343 = vsel %vm1263, %v1340, %v1342
      %v1344 = vrot.slane %v467, 1
      %v1345 = vrot.slane %v468, 1
      %v1346 = vsel %vm1263, %v1344, %v1345
      %v1347 = vrot.slane %v469, 1
      %v1348 = vsel %vm1263, %v1345, %v1347
      %v1349 = vrot.slane %v470, 1
      %v1350 = vrot.slane %v471, 1
      %v1351 = vsel %vm1263, %v1349, %v1350
      %v1352 = vrot.slane %v472, 1
      %v1353 = vsel %vm1263, %v1350, %v1352
      %v1354 = vrot.slane %v473, 1
      %v1355 = vrot.slane %v474, 1
      %v1356 = vsel %vm1263, %v1354, %v1355
      %v1357 = vrot.slane %v475, 1
      %v1358 = vsel %vm1263, %v1355, %v1357
      %v1359 = vrot.slane %v476, 1
      %v1360 = vrot.slane %v477, 1
      %v1361 = vsel %vm1263, %v1359, %v1360
      %v1362 = vrot.slane %v478, 1
      %v1363 = vsel %vm1263, %v1360, %v1362
      %v1364 = vrot.slane %v479, 1
      %v1365 = vrot.slane %v480, 1
      %v1366 = vsel %vm1263, %v1364, %v1365
      %v1367 = vrot.slane %v481, 1
      %v1368 = vsel %vm1263, %v1365, %v1367
      %v1369 = vrot.slane %v482, 1
      %v1370 = vrot.slane %v483, 1
      %v1371 = vsel %vm1263, %v1369, %v1370
      %v1372 = vrot.slane %v484, 1
      %v1373 = vsel %vm1263, %v1370, %v1372
      %v1374 = vrot.slane %v485, 1
      %v1375 = vrot.slane %v486, 1
      %v1376 = vsel %vm1263, %v1374, %v1375
      %v1377 = vrot.slane %v487, 1
      %v1378 = vsel %vm1263, %v1375, %v1377
      %v1379 = vrot.slane %v488, 1
      %v1380 = vrot.slane %v489, 1
      %v1381 = vsel %vm1263, %v1379, %v1380
      %v1382 = vrot.slane %v490, 1
      %v1383 = vsel %vm1263, %v1380, %v1382
      %v1384 = vrot.slane %v491, 1
      %v1385 = vrot.slane %v492, 1
      %v1386 = vsel %vm1263, %v1384, %v1385
      %v1387 = vrot.slane %v493, 1
      %v1388 = vsel %vm1263, %v1385, %v1387
      %v1389 = vrot.slane %v494, 1
      %v1390 = vrot.slane %v495, 1
      %v1391 = vsel %vm1263, %v1389, %v1390
      %v1392 = vrot.slane %v496, 1
      %v1393 = vsel %vm1263, %v1390, %v1392
      %v1394 = vrot.slane %v497, 1
      %v1395 = vrot.slane %v498, 1
      %v1396 = vsel %vm1263, %v1394, %v1395
      %v1397 = vrot.slane %v499, 1
      %v1398 = vsel %vm1263, %v1395, %v1397
      %v1399 = vrot.slane %v500, 1
      %v1400 = vrot.slane %v501, 1
      %v1401 = vsel %vm1263, %v1399, %v1400
      %v1402 = vrot.slane %v502, 1
      %v1403 = vsel %vm1263, %v1400, %v1402
      %v1404 = vrot.slane %v503, 1
      %v1405 = vrot.slane %v504, 1
      %v1406 = vsel %vm1263, %v1404, %v1405
      %v1407 = vrot.slane %v505, 1
      %v1408 = vsel %vm1263, %v1405, %v1407
      %v1409 = vrot.slane %v506, 1
      %v1410 = vrot.slane %v507, 1
      %v1411 = vsel %vm1263, %v1409, %v1410
      %v1412 = vrot.slane %v508, 1
      %v1413 = vsel %vm1263, %v1410, %v1412
      %v1414 = vrot.slane %v509, 1
      %v1415 = vrot.slane %v510, 1
      %v1416 = vsel %vm1263, %v1414, %v1415
      %v1417 = vrot.slane %v511, 1
      %v1418 = vsel %vm1263, %v1415, %v1417
      %v1419 = vrot.slane %v512, 1
      %v1420 = vrot.slane %v513, 1
      %v1421 = vsel %vm1263, %v1419, %v1420
      %v1422 = vrot.slane %v514, 1
      %v1423 = vsel %vm1263, %v1420, %v1422
      %s1424 = scalar_lea.vmem %s1, 32
      %v1425 = vld [vmem:[%s1424] sm:$0xff]
      %v1426 = vld [vmem:[%s1424 + $0x8] sm:$0xff]
      %v1427 = vld [vmem:[%s1424 + $0x10] sm:$0xff]
      %v1428 = vld [vmem:[%s1424 + $0x18] sm:$0xff]
      %v1429 = vsel %vm589, %v1266, 0
      %v1431 = vsel %vm589, %v1268, 0
      %v1433 = vsel %vm589, %v1271, 0
      %v1435 = vsel %vm589, %v1273, 0
      %v1437 = vsel %vm589, %v1276, 0
      %v1439 = vsel %vm589, %v1278, 0
      %v1441 = vsel %vm589, %v1281, 0
      %v1443 = vsel %vm589, %v1283, 0
      %v1445 = vsel %vm589, %v1286, 0
      %v1447 = vsel %vm589, %v1288, 0
      %v1449 = vsel %vm589, %v1291, 0
      %v1451 = vsel %vm589, %v1293, 0
      %v1453 = vsel %vm589, %v1296, 0
      %v1455 = vsel %vm589, %v1298, 0
      %v1457 = vsel %vm589, %v1301, 0
      %v1459 = vsel %vm589, %v1303, 0
      %v1461 = vsel %vm589, %v1306, 0
      %v1463 = vsel %vm589, %v1308, 0
      %v1465 = vsel %vm589, %v1311, 0
      %v1467 = vsel %vm589, %v1313, 0
      %v1469 = vsel %vm589, %v1316, 0
      %v1471 = vsel %vm589, %v1318, 0
      %v1473 = vsel %vm589, %v1321, 0
      %v1475 = vsel %vm589, %v1323, 0
      %v1477 = vsel %vm589, %v1326, 0
      %v1479 = vsel %vm589, %v1328, 0
      %v1481 = vsel %vm589, %v1331, 0
      %v1483 = vsel %vm589, %v1333, 0
      %v1485 = vsel %vm589, %v1336, 0
      %v1487 = vsel %vm589, %v1338, 0
      %v1489 = vsel %vm589, %v1341, 0
      %v1491 = vsel %vm589, %v1343, 0
      %v1493 = vsel %vm589, %v1346, 0
      %v1495 = vsel %vm589, %v1348, 0
      %v1497 = vsel %vm589, %v1351, 0
      %v1499 = vsel %vm589, %v1353, 0
      %v1501 = vsel %vm589, %v1356, 0
      %v1503 = vsel %vm589, %v1358, 0
      %v1505 = vsel %vm589, %v1361, 0
      %v1507 = vsel %vm589, %v1363, 0
      %v1509 = vsel %vm589, %v1366, 0
      %v1511 = vsel %vm589, %v1368, 0
      %v1513 = vsel %vm589, %v1371, 0
      %v1515 = vsel %vm589, %v1373, 0
      %v1517 = vsel %vm589, %v1376, 0
      %v1519 = vsel %vm589, %v1378, 0
      %v1521 = vsel %vm589, %v1381, 0
      %v1523 = vsel %vm589, %v1383, 0
      %v1525 = vsel %vm589, %v1386, 0
      %v1527 = vsel %vm589, %v1388, 0
      %v1529 = vsel %vm589, %v1391, 0
      %v1531 = vsel %vm589, %v1393, 0
      %v1533 = vsel %vm589, %v1396, 0
      %v1535 = vsel %vm589, %v1398, 0
      %v1537 = vsel %vm589, %v1401, 0
      %v1539 = vsel %vm589, %v1403, 0
      %v1541 = vsel %vm589, %v1406, 0
      %v1543 = vsel %vm589, %v1408, 0
      %v1545 = vsel %vm589, %v1411, 0
      %v1547 = vsel %vm589, %v1413, 0
      %v1549 = vsel %vm589, %v1416, 0
      %v1551 = vsel %vm589, %v1418, 0
      %v1553 = vsel %vm589, %v1421, 0
      %v1555 = vsel %vm589, %v1423, 0
      %1557 = vmatprep.subr.mxu0 0.0
      %1558 = vmatpush1.msra.mxu0 %v1425
      %1559 = vmatprep.subr.mxu0 0.0
      %1560 = vmatpush1.msra.mxu0 %v1426
      %1561 = vmatprep.subr.mxu0 0.0
      %1562 = vmatpush1.msra.mxu0 %v1427
      %1563 = vmatprep.subr.mxu0 0.0
      %1564 = vmatpush1.msra.mxu0 %v1428
      %1565 = vmatprep.subr.mxu0 0.0
      %1566 = vmatpush1.msra.mxu0 0.0
      %1567 = vmatprep.subr.mxu0 0.0
      %1568 = vmatpush1.msra.mxu0 0.0
      %1569 = vmatprep.subr.mxu0 0.0
      %1570 = vmatpush1.msra.mxu0 0.0
      %1571 = vmatprep.subr.mxu0 0.0
      %1572 = vmatpush1.msra.mxu0 0.0
      %1573 = vmatprep.subr.mxu0 0.0
      %1574 = vmatpush1.msra.mxu0 0.0
      %1575 = vmatprep.subr.mxu0 0.0
      %1576 = vmatpush1.msra.mxu0 0.0
      %1577 = vmatprep.subr.mxu0 0.0
      %1578 = vmatpush1.msra.mxu0 0.0
      %1579 = vmatprep.subr.mxu0 0.0
      %1580 = vmatpush1.msra.mxu0 0.0
      %1581 = vmatprep.subr.mxu0 0.0
      %1582 = vmatpush1.msra.mxu0 0.0
      %1583 = vmatprep.subr.mxu0 0.0
      %1584 = vmatpush1.msra.mxu0 0.0
      %1585 = vmatprep.subr.mxu0 0.0
      %1586 = vmatpush1.msra.mxu0 0.0
      %1587 = vmatprep.subr.mxu0 0.0
      %1588 = vmatpush1.msra.mxu0 0.0
      %1589 = vmatprep.subr.mxu0 0.0
      %1590 = vmatpush1.msra.mxu0 0.0
      %1591 = vmatprep.subr.mxu0 0.0
      %1592 = vmatpush1.msra.mxu0 0.0
      %1593 = vmatprep.subr.mxu0 0.0
      %1594 = vmatpush1.msra.mxu0 0.0
      %1595 = vmatprep.subr.mxu0 0.0
      %1596 = vmatpush1.msra.mxu0 0.0
      %1597 = vmatprep.subr.mxu0 0.0
      %1598 = vmatpush1.msra.mxu0 0.0
      %1599 = vmatprep.subr.mxu0 0.0
      %1600 = vmatpush1.msra.mxu0 0.0
      %1601 = vmatprep.subr.mxu0 0.0
      %1602 = vmatpush1.msra.mxu0 0.0
      %1603 = vmatprep.subr.mxu0 0.0
      %1604 = vmatpush1.msra.mxu0 0.0
      %1605 = vmatprep.subr.mxu0 0.0
      %1606 = vmatpush1.msra.mxu0 0.0
      %1607 = vmatprep.subr.mxu0 0.0
      %1608 = vmatpush1.msra.mxu0 0.0
      %1609 = vmatprep.subr.mxu0 0.0
      %1610 = vmatpush1.msra.mxu0 0.0
      %1611 = vmatprep.subr.mxu0 0.0
      %1612 = vmatpush1.msra.mxu0 0.0
      %1613 = vmatprep.subr.mxu0 0.0
      %1614 = vmatpush1.msra.mxu0 0.0
      %1615 = vmatprep.subr.mxu0 0.0
      %1616 = vmatpush1.msra.mxu0 0.0
      %1617 = vmatprep.subr.mxu0 0.0
      %1618 = vmatpush1.msra.mxu0 0.0
      %1619 = vmatprep.subr.mxu0 0.0
      %1620 = vmatpush1.msra.mxu0 0.0
      %1621 = vmatprep.mubr.f32.mxu0 0.0
      %1622 = vmatmul.mubr.f32.gmra.mrb[0].mxu0 %v1429
      %v1623 = vpop.f32.mrb[0].mxu0
      %v1624 = vadd.f32 0.0, %v1623
      %v1625 = vpop.f32.mrb[0].mxu0
      %1626 = vmatprep.mubr.f32.mxu0 0.0
      %1627 = vmatmul.mubr.f32.gmra.mrb[0].mxu0 %v1431
      %v1628 = vpop.f32.mrb[0].mxu0
      %v1629 = vadd.f32 0.0, %v1628
      %v1630 = vpop.f32.mrb[0].mxu0
      %1631 = vmatprep.mubr.f32.mxu0 0.0
      %1632 = vmatmul.mubr.f32.gmra.mrb[0].mxu0 %v1433
      %v1633 = vpop.f32.mrb[0].mxu0
      %v1634 = vadd.f32 0.0, %v1633
      %v1635 = vpop.f32.mrb[0].mxu0
      %1636 = vmatprep.mubr.f32.mxu0 0.0
      %1637 = vmatmul.mubr.f32.gmra.mrb[0].mxu0 %v1435
      %v1638 = vpop.f32.mrb[0].mxu0
      %v1639 = vadd.f32 0.0, %v1638
      %v1640 = vpop.f32.mrb[0].mxu0
      %1641 = vmatprep.mubr.f32.mxu0 0.0
      %1642 = vmatmul.mubr.f32.gmra.mrb[0].mxu0 %v1437
      %v1643 = vpop.f32.mrb[0].mxu0
      %v1644 = vadd.f32 0.0, %v1643
      %v1645 = vpop.f32.mrb[0].mxu0
      %1646 = vmatprep.mubr.f32.mxu0 0.0
      %1647 = vmatmul.mubr.f32.gmra.mrb[0].mxu0 %v1439
      %v1648 = vpop.f32.mrb[0].mxu0
      %v1649 = vadd.f32 0.0, %v1648
      %v1650 = vpop.f32.mrb[0].mxu0
      %1651 = vmatprep.mubr.f32.mxu0 0.0
      %1652 = vmatmul.mubr.f32.gmra.mrb[0].mxu0 %v1441
      %v1653 = vpop.f32.mrb[0].mxu0
      %v1654 = vadd.f32 0.0, %v1653
      %v1655 = vpop.f32.mrb[0].mxu0
      %1656 = vmatprep.mubr.f32.mxu0 0.0
      %1657 = vmatmul.mubr.f32.gmra.mrb[0].mxu0 %v1443
      %v1658 = vpop.f32.mrb[0].mxu0
      %v1659 = vadd.f32 0.0, %v1658
      %v1660 = vpop.f32.mrb[0].mxu0
      %1661 = vmatprep.mubr.f32.mxu0 0.0
      %1662 = vmatmul.mubr.f32.gmra.mrb[0].mxu0 %v1445
      %v1663 = vpop.f32.mrb[0].mxu0
      %v1664 = vadd.f32 0.0, %v1663
      %v1665 = vpop.f32.mrb[0].mxu0
      %1666 = vmatprep.mubr.f32.mxu0 0.0
      %1667 = vmatmul.mubr.f32.gmra.mrb[0].mxu0 %v1447
      %v1668 = vpop.f32.mrb[0].mxu0
      %v1669 = vadd.f32 0.0, %v1668
      %v1670 = vpop.f32.mrb[0].mxu0
      %1671 = vmatprep.mubr.f32.mxu0 0.0
      %1672 = vmatmul.mubr.f32.gmra.mrb[0].mxu0 %v1449
      %v1673 = vpop.f32.mrb[0].mxu0
      %v1674 = vadd.f32 0.0, %v1673
      %v1675 = vpop.f32.mrb[0].mxu0
      %1676 = vmatprep.mubr.f32.mxu0 0.0
      %1677 = vmatmul.mubr.f32.gmra.mrb[0].mxu0 %v1451
      %v1678 = vpop.f32.mrb[0].mxu0
      %v1679 = vadd.f32 0.0, %v1678
      %v1680 = vpop.f32.mrb[0].mxu0
      %1681 = vmatprep.mubr.f32.mxu0 0.0
      %1682 = vmatmul.mubr.f32.gmra.mrb[0].mxu0 %v1453
      %v1683 = vpop.f32.mrb[0].mxu0
      %v1684 = vadd.f32 0.0, %v1683
      %v1685 = vpop.f32.mrb[0].mxu0
      %1686 = vmatprep.mubr.f32.mxu0 0.0
      %1687 = vmatmul.mubr.f32.gmra.mrb[0].mxu0 %v1455
      %v1688 = vpop.f32.mrb[0].mxu0
      %v1689 = vadd.f32 0.0, %v1688
      %v1690 = vpop.f32.mrb[0].mxu0
      %1691 = vmatprep.mubr.f32.mxu0 0.0
      %1692 = vmatmul.mubr.f32.gmra.mrb[0].mxu0 %v1457
      %v1693 = vpop.f32.mrb[0].mxu0
      %v1694 = vadd.f32 0.0, %v1693
      %v1695 = vpop.f32.mrb[0].mxu0
      %1696 = vmatprep.mubr.f32.mxu0 0.0
      %1697 = vmatmul.mubr.f32.gmra.mrb[0].mxu0 %v1459
      %v1698 = vpop.f32.mrb[0].mxu0
      %v1699 = vadd.f32 0.0, %v1698
      %v1700 = vpop.f32.mrb[0].mxu0
      %1701 = vmatprep.mubr.f32.mxu0 0.0
      %1702 = vmatmul.mubr.f32.gmra.mrb[0].mxu0 %v1461
      %v1703 = vpop.f32.mrb[0].mxu0
      %v1704 = vadd.f32 0.0, %v1703
      %v1705 = vpop.f32.mrb[0].mxu0
      %1706 = vmatprep.mubr.f32.mxu0 0.0
      %1707 = vmatmul.mubr.f32.gmra.mrb[0].mxu0 %v1463
      %v1708 = vpop.f32.mrb[0].mxu0
      %v1709 = vadd.f32 0.0, %v1708
      %v1710 = vpop.f32.mrb[0].mxu0
      %1711 = vmatprep.mubr.f32.mxu0 0.0
      %1712 = vmatmul.mubr.f32.gmra.mrb[0].mxu0 %v1465
      %v1713 = vpop.f32.mrb[0].mxu0
      %v1714 = vadd.f32 0.0, %v1713
      %v1715 = vpop.f32.mrb[0].mxu0
      %1716 = vmatprep.mubr.f32.mxu0 0.0
      %1717 = vmatmul.mubr.f32.gmra.mrb[0].mxu0 %v1467
      %v1718 = vpop.f32.mrb[0].mxu0
      %v1719 = vadd.f32 0.0, %v1718
      %v1720 = vpop.f32.mrb[0].mxu0
      %1721 = vmatprep.mubr.f32.mxu0 0.0
      %1722 = vmatmul.mubr.f32.gmra.mrb[0].mxu0 %v1469
      %v1723 = vpop.f32.mrb[0].mxu0
      %v1724 = vadd.f32 0.0, %v1723
      %v1725 = vpop.f32.mrb[0].mxu0
      %1726 = vmatprep.mubr.f32.mxu0 0.0
      %1727 = vmatmul.mubr.f32.gmra.mrb[0].mxu0 %v1471
      %v1728 = vpop.f32.mrb[0].mxu0
      %v1729 = vadd.f32 0.0, %v1728
      %v1730 = vpop.f32.mrb[0].mxu0
      %1731 = vmatprep.mubr.f32.mxu0 0.0
      %1732 = vmatmul.mubr.f32.gmra.mrb[0].mxu0 %v1473
      %v1733 = vpop.f32.mrb[0].mxu0
      %v1734 = vadd.f32 0.0, %v1733
      %v1735 = vpop.f32.mrb[0].mxu0
      %1736 = vmatprep.mubr.f32.mxu0 0.0
      %1737 = vmatmul.mubr.f32.gmra.mrb[0].mxu0 %v1475
      %v1738 = vpop.f32.mrb[0].mxu0
      %v1739 = vadd.f32 0.0, %v1738
      %v1740 = vpop.f32.mrb[0].mxu0
      %1741 = vmatprep.mubr.f32.mxu0 0.0
      %1742 = vmatmul.mubr.f32.gmra.mrb[0].mxu0 %v1477
      %v1743 = vpop.f32.mrb[0].mxu0
      %v1744 = vadd.f32 0.0, %v1743
      %v1745 = vpop.f32.mrb[0].mxu0
      %1746 = vmatprep.mubr.f32.mxu0 0.0
      %1747 = vmatmul.mubr.f32.gmra.mrb[0].mxu0 %v1479
      %v1748 = vpop.f32.mrb[0].mxu0
      %v1749 = vadd.f32 0.0, %v1748
      %v1750 = vpop.f32.mrb[0].mxu0
      %1751 = vmatprep.mubr.f32.mxu0 0.0
      %1752 = vmatmul.mubr.f32.gmra.mrb[0].mxu0 %v1481
      %v1753 = vpop.f32.mrb[0].mxu0
      %v1754 = vadd.f32 0.0, %v1753
      %v1755 = vpop.f32.mrb[0].mxu0
      %1756 = vmatprep.mubr.f32.mxu0 0.0
      %1757 = vmatmul.mubr.f32.gmra.mrb[0].mxu0 %v1483
      %v1758 = vpop.f32.mrb[0].mxu0
      %v1759 = vadd.f32 0.0, %v1758
      %v1760 = vpop.f32.mrb[0].mxu0
      %1761 = vmatprep.mubr.f32.mxu0 0.0
      %1762 = vmatmul.mubr.f32.gmra.mrb[0].mxu0 %v1485
      %v1763 = vpop.f32.mrb[0].mxu0
      %v1764 = vadd.f32 0.0, %v1763
      %v1765 = vpop.f32.mrb[0].mxu0
      %1766 = vmatprep.mubr.f32.mxu0 0.0
      %1767 = vmatmul.mubr.f32.gmra.mrb[0].mxu0 %v1487
      %v1768 = vpop.f32.mrb[0].mxu0
      %v1769 = vadd.f32 0.0, %v1768
      %v1770 = vpop.f32.mrb[0].mxu0
      %1771 = vmatprep.mubr.f32.mxu0 0.0
      %1772 = vmatmul.mubr.f32.gmra.mrb[0].mxu0 %v1489
      %v1773 = vpop.f32.mrb[0].mxu0
      %v1774 = vadd.f32 0.0, %v1773
      %v1775 = vpop.f32.mrb[0].mxu0
      %1776 = vmatprep.mubr.f32.mxu0 0.0
      %1777 = vmatmul.mubr.f32.gmra.mrb[0].mxu0 %v1491
      %v1778 = vpop.f32.mrb[0].mxu0
      %v1779 = vadd.f32 0.0, %v1778
      %v1780 = vpop.f32.mrb[0].mxu0
      %1781 = vmatprep.mubr.f32.mxu0 0.0
      %1782 = vmatmul.mubr.f32.gmra.mrb[0].mxu0 %v1493
      %v1783 = vpop.f32.mrb[0].mxu0
      %v1784 = vadd.f32 0.0, %v1783
      %v1785 = vpop.f32.mrb[0].mxu0
      %1786 = vmatprep.mubr.f32.mxu0 0.0
      %1787 = vmatmul.mubr.f32.gmra.mrb[0].mxu0 %v1495
      %v1788 = vpop.f32.mrb[0].mxu0
      %v1789 = vadd.f32 0.0, %v1788
      %v1790 = vpop.f32.mrb[0].mxu0
      %1791 = vmatprep.mubr.f32.mxu0 0.0
      %1792 = vmatmul.mubr.f32.gmra.mrb[0].mxu0 %v1497
      %v1793 = vpop.f32.mrb[0].mxu0
      %v1794 = vadd.f32 0.0, %v1793
      %v1795 = vpop.f32.mrb[0].mxu0
      %1796 = vmatprep.mubr.f32.mxu0 0.0
      %1797 = vmatmul.mubr.f32.gmra.mrb[0].mxu0 %v1499
      %v1798 = vpop.f32.mrb[0].mxu0
      %v1799 = vadd.f32 0.0, %v1798
      %v1800 = vpop.f32.mrb[0].mxu0
      %1801 = vmatprep.mubr.f32.mxu0 0.0
      %1802 = vmatmul.mubr.f32.gmra.mrb[0].mxu0 %v1501
      %v1803 = vpop.f32.mrb[0].mxu0
      %v1804 = vadd.f32 0.0, %v1803
      %v1805 = vpop.f32.mrb[0].mxu0
      %1806 = vmatprep.mubr.f32.mxu0 0.0
      %1807 = vmatmul.mubr.f32.gmra.mrb[0].mxu0 %v1503
      %v1808 = vpop.f32.mrb[0].mxu0
      %v1809 = vadd.f32 0.0, %v1808
      %v1810 = vpop.f32.mrb[0].mxu0
      %1811 = vmatprep.mubr.f32.mxu0 0.0
      %1812 = vmatmul.mubr.f32.gmra.mrb[0].mxu0 %v1505
      %v1813 = vpop.f32.mrb[0].mxu0
      %v1814 = vadd.f32 0.0, %v1813
      %v1815 = vpop.f32.mrb[0].mxu0
      %1816 = vmatprep.mubr.f32.mxu0 0.0
      %1817 = vmatmul.mubr.f32.gmra.mrb[0].mxu0 %v1507
      %v1818 = vpop.f32.mrb[0].mxu0
      %v1819 = vadd.f32 0.0, %v1818
      %v1820 = vpop.f32.mrb[0].mxu0
      %1821 = vmatprep.mubr.f32.mxu0 0.0
      %1822 = vmatmul.mubr.f32.gmra.mrb[0].mxu0 %v1509
      %v1823 = vpop.f32.mrb[0].mxu0
      %v1824 = vadd.f32 0.0, %v1823
      %v1825 = vpop.f32.mrb[0].mxu0
      %1826 = vmatprep.mubr.f32.mxu0 0.0
      %1827 = vmatmul.mubr.f32.gmra.mrb[0].mxu0 %v1511
      %v1828 = vpop.f32.mrb[0].mxu0
      %v1829 = vadd.f32 0.0, %v1828
      %v1830 = vpop.f32.mrb[0].mxu0
      %1831 = vmatprep.mubr.f32.mxu0 0.0
      %1832 = vmatmul.mubr.f32.gmra.mrb[0].mxu0 %v1513
      %v1833 = vpop.f32.mrb[0].mxu0
      %v1834 = vadd.f32 0.0, %v1833
      %v1835 = vpop.f32.mrb[0].mxu0
      %1836 = vmatprep.mubr.f32.mxu0 0.0
      %1837 = vmatmul.mubr.f32.gmra.mrb[0].mxu0 %v1515
      %v1838 = vpop.f32.mrb[0].mxu0
      %v1839 = vadd.f32 0.0, %v1838
      %v1840 = vpop.f32.mrb[0].mxu0
      %1841 = vmatprep.mubr.f32.mxu0 0.0
      %1842 = vmatmul.mubr.f32.gmra.mrb[0].mxu0 %v1517
      %v1843 = vpop.f32.mrb[0].mxu0
      %v1844 = vadd.f32 0.0, %v1843
      %v1845 = vpop.f32.mrb[0].mxu0
      %1846 = vmatprep.mubr.f32.mxu0 0.0
      %1847 = vmatmul.mubr.f32.gmra.mrb[0].mxu0 %v1519
      %v1848 = vpop.f32.mrb[0].mxu0
      %v1849 = vadd.f32 0.0, %v1848
      %v1850 = vpop.f32.mrb[0].mxu0
      %1851 = vmatprep.mubr.f32.mxu0 0.0
      %1852 = vmatmul.mubr.f32.gmra.mrb[0].mxu0 %v1521
      %v1853 = vpop.f32.mrb[0].mxu0
      %v1854 = vadd.f32 0.0, %v1853
      %v1855 = vpop.f32.mrb[0].mxu0
      %1856 = vmatprep.mubr.f32.mxu0 0.0
      %1857 = vmatmul.mubr.f32.gmra.mrb[0].mxu0 %v1523
      %v1858 = vpop.f32.mrb[0].mxu0
      %v1859 = vadd.f32 0.0, %v1858
      %v1860 = vpop.f32.mrb[0].mxu0
      %1861 = vmatprep.mubr.f32.mxu0 0.0
      %1862 = vmatmul.mubr.f32.gmra.mrb[0].mxu0 %v1525
      %v1863 = vpop.f32.mrb[0].mxu0
      %v1864 = vadd.f32 0.0, %v1863
      %v1865 = vpop.f32.mrb[0].mxu0
      %1866 = vmatprep.mubr.f32.mxu0 0.0
      %1867 = vmatmul.mubr.f32.gmra.mrb[0].mxu0 %v1527
      %v1868 = vpop.f32.mrb[0].mxu0
      %v1869 = vadd.f32 0.0, %v1868
      %v1870 = vpop.f32.mrb[0].mxu0
      %1871 = vmatprep.mubr.f32.mxu0 0.0
      %1872 = vmatmul.mubr.f32.gmra.mrb[0].mxu0 %v1529
      %v1873 = vpop.f32.mrb[0].mxu0
      %v1874 = vadd.f32 0.0, %v1873
      %v1875 = vpop.f32.mrb[0].mxu0
      %1876 = vmatprep.mubr.f32.mxu0 0.0
      %1877 = vmatmul.mubr.f32.gmra.mrb[0].mxu0 %v1531
      %v1878 = vpop.f32.mrb[0].mxu0
      %v1879 = vadd.f32 0.0, %v1878
      %v1880 = vpop.f32.mrb[0].mxu0
      %1881 = vmatprep.mubr.f32.mxu0 0.0
      %1882 = vmatmul.mubr.f32.gmra.mrb[0].mxu0 %v1533
      %v1883 = vpop.f32.mrb[0].mxu0
      %v1884 = vadd.f32 0.0, %v1883
      %v1885 = vpop.f32.mrb[0].mxu0
      %1886 = vmatprep.mubr.f32.mxu0 0.0
      %1887 = vmatmul.mubr.f32.gmra.mrb[0].mxu0 %v1535
      %v1888 = vpop.f32.mrb[0].mxu0
      %v1889 = vadd.f32 0.0, %v1888
      %v1890 = vpop.f32.mrb[0].mxu0
      %1891 = vmatprep.mubr.f32.mxu0 0.0
      %1892 = vmatmul.mubr.f32.gmra.mrb[0].mxu0 %v1537
      %v1893 = vpop.f32.mrb[0].mxu0
      %v1894 = vadd.f32 0.0, %v1893
      %v1895 = vpop.f32.mrb[0].mxu0
      %1896 = vmatprep.mubr.f32.mxu0 0.0
      %1897 = vmatmul.mubr.f32.gmra.mrb[0].mxu0 %v1539
      %v1898 = vpop.f32.mrb[0].mxu0
      %v1899 = vadd.f32 0.0, %v1898
      %v1900 = vpop.f32.mrb[0].mxu0
      %1901 = vmatprep.mubr.f32.mxu0 0.0
      %1902 = vmatmul.mubr.f32.gmra.mrb[0].mxu0 %v1541
      %v1903 = vpop.f32.mrb[0].mxu0
      %v1904 = vadd.f32 0.0, %v1903
      %v1905 = vpop.f32.mrb[0].mxu0
      %1906 = vmatprep.mubr.f32.mxu0 0.0
      %1907 = vmatmul.mubr.f32.gmra.mrb[0].mxu0 %v1543
      %v1908 = vpop.f32.mrb[0].mxu0
      %v1909 = vadd.f32 0.0, %v1908
      %v1910 = vpop.f32.mrb[0].mxu0
      %1911 = vmatprep.mubr.f32.mxu0 0.0
      %1912 = vmatmul.mubr.f32.gmra.mrb[0].mxu0 %v1545
      %v1913 = vpop.f32.mrb[0].mxu0
      %v1914 = vadd.f32 0.0, %v1913
      %v1915 = vpop.f32.mrb[0].mxu0
      %1916 = vmatprep.mubr.f32.mxu0 0.0
      %1917 = vmatmul.mubr.f32.gmra.mrb[0].mxu0 %v1547
      %v1918 = vpop.f32.mrb[0].mxu0
      %v1919 = vadd.f32 0.0, %v1918
      %v1920 = vpop.f32.mrb[0].mxu0
      %1921 = vmatprep.mubr.f32.mxu0 0.0
      %1922 = vmatmul.mubr.f32.gmra.mrb[0].mxu0 %v1549
      %v1923 = vpop.f32.mrb[0].mxu0
      %v1924 = vadd.f32 0.0, %v1923
      %v1925 = vpop.f32.mrb[0].mxu0
      %1926 = vmatprep.mubr.f32.mxu0 0.0
      %1927 = vmatmul.mubr.f32.gmra.mrb[0].mxu0 %v1551
      %v1928 = vpop.f32.mrb[0].mxu0
      %v1929 = vadd.f32 0.0, %v1928
      %v1930 = vpop.f32.mrb[0].mxu0
      %1931 = vmatprep.mubr.f32.mxu0 0.0
      %1932 = vmatmul.mubr.f32.gmra.mrb[0].mxu0 %v1553
      %v1933 = vpop.f32.mrb[0].mxu0
      %v1934 = vadd.f32 0.0, %v1933
      %v1935 = vpop.f32.mrb[0].mxu0
      %1936 = vmatprep.mubr.f32.mxu0 0.0
      %1937 = vmatmul.mubr.f32.gmra.mrb[0].mxu0 %v1555
      %v1938 = vpop.f32.mrb[0].mxu0
      %v1939 = vadd.f32 0.0, %v1938
      %v1940 = vpop.f32.mrb[0].mxu0
      %1941 = vdwg.mxu0
      %v1942 = vadd.f32 %v1167, %v1624
      %v1943 = vadd.f32 %v1168, %v1629
      %v1944 = vadd.f32 %v1169, %v1634
      %v1945 = vadd.f32 %v1170, %v1639
      %v1946 = vadd.f32 %v1171, %v1644
      %v1947 = vadd.f32 %v1172, %v1649
      %v1948 = vadd.f32 %v1173, %v1654
      %v1949 = vadd.f32 %v1174, %v1659
      %v1950 = vadd.f32 %v1175, %v1664
      %v1951 = vadd.f32 %v1176, %v1669
      %v1952 = vadd.f32 %v1177, %v1674
      %v1953 = vadd.f32 %v1178, %v1679
      %v1954 = vadd.f32 %v1179, %v1684
      %v1955 = vadd.f32 %v1180, %v1689
      %v1956 = vadd.f32 %v1181, %v1694
      %v1957 = vadd.f32 %v1182, %v1699
      %v1958 = vadd.f32 %v1183, %v1704
      %v1959 = vadd.f32 %v1184, %v1709
      %v1960 = vadd.f32 %v1185, %v1714
      %v1961 = vadd.f32 %v1186, %v1719
      %v1962 = vadd.f32 %v1187, %v1724
      %v1963 = vadd.f32 %v1188, %v1729
      %v1964 = vadd.f32 %v1189, %v1734
      %v1965 = vadd.f32 %v1190, %v1739
      %v1966 = vadd.f32 %v1191, %v1744
      %v1967 = vadd.f32 %v1192, %v1749
      %v1968 = vadd.f32 %v1193, %v1754
      %v1969 = vadd.f32 %v1194, %v1759
      %v1970 = vadd.f32 %v1195, %v1764
      %v1971 = vadd.f32 %v1196, %v1769
      %v1972 = vadd.f32 %v1197, %v1774
      %v1973 = vadd.f32 %v1198, %v1779
      %v1974 = vadd.f32 %v1199, %v1784
      %v1975 = vadd.f32 %v1200, %v1789
      %v1976 = vadd.f32 %v1201, %v1794
      %v1977 = vadd.f32 %v1202, %v1799
      %v1978 = vadd.f32 %v1203, %v1804
      %v1979 = vadd.f32 %v1204, %v1809
      %v1980 = vadd.f32 %v1205, %v1814
      %v1981 = vadd.f32 %v1206, %v1819
      %v1982 = vadd.f32 %v1207, %v1824
      %v1983 = vadd.f32 %v1208, %v1829
      %v1984 = vadd.f32 %v1209, %v1834
      %v1985 = vadd.f32 %v1210, %v1839
      %v1986 = vadd.f32 %v1211, %v1844
      %v1987 = vadd.f32 %v1212, %v1849
      %v1988 = vadd.f32 %v1213, %v1854
      %v1989 = vadd.f32 %v1214, %v1859
      %v1990 = vadd.f32 %v1215, %v1864
      %v1991 = vadd.f32 %v1216, %v1869
      %v1992 = vadd.f32 %v1217, %v1874
      %v1993 = vadd.f32 %v1218, %v1879
      %v1994 = vadd.f32 %v1219, %v1884
      %v1995 = vadd.f32 %v1220, %v1889
      %v1996 = vadd.f32 %v1221, %v1894
      %v1997 = vadd.f32 %v1222, %v1899
      %v1998 = vadd.f32 %v1223, %v1904
      %v1999 = vadd.f32 %v1224, %v1909
      %v2000 = vadd.f32 %v1225, %v1914
      %v2001 = vadd.f32 %v1226, %v1919
      %v2002 = vadd.f32 %v1227, %v1924
      %v2003 = vadd.f32 %v1228, %v1929
      %v2004 = vadd.f32 %v1229, %v1934
      %v2005 = vadd.f32 %v1230, %v1939
      %vm2006 = vcmask 1045504
      %v2007 = vrot.slane %v413, 2
      %v2008 = vrot.slane %v414, 2
      %v2009 = vsel %vm2006, %v2007, %v2008
      %v2010 = vrot.slane %v415, 2
      %v2011 = vsel %vm2006, %v2008, %v2010
      %v2012 = vrot.slane %v416, 2
      %v2013 = vrot.slane %v417, 2
      %v2014 = vsel %vm2006, %v2012, %v2013
      %v2015 = vrot.slane %v418, 2
      %v2016 = vsel %vm2006, %v2013, %v2015
      %v2017 = vrot.slane %v419, 2
      %v2018 = vrot.slane %v420, 2
      %v2019 = vsel %vm2006, %v2017, %v2018
      %v2020 = vrot.slane %v421, 2
      %v2021 = vsel %vm2006, %v2018, %v2020
      %v2022 = vrot.slane %v422, 2
      %v2023 = vrot.slane %v423, 2
      %v2024 = vsel %vm2006, %v2022, %v2023
      %v2025 = vrot.slane %v424, 2
      %v2026 = vsel %vm2006, %v2023, %v2025
      %v2027 = vrot.slane %v425, 2
      %v2028 = vrot.slane %v426, 2
      %v2029 = vsel %vm2006, %v2027, %v2028
      %v2030 = vrot.slane %v427, 2
      %v2031 = vsel %vm2006, %v2028, %v2030
      %v2032 = vrot.slane %v428, 2
      %v2033 = vrot.slane %v429, 2
      %v2034 = vsel %vm2006, %v2032, %v2033
      %v2035 = vrot.slane %v430, 2
      %v2036 = vsel %vm2006, %v2033, %v2035
      %v2037 = vrot.slane %v431, 2
      %v2038 = vrot.slane %v432, 2
      %v2039 = vsel %vm2006, %v2037, %v2038
      %v2040 = vrot.slane %v433, 2
      %v2041 = vsel %vm2006, %v2038, %v2040
      %v2042 = vrot.slane %v434, 2
      %v2043 = vrot.slane %v435, 2
      %v2044 = vsel %vm2006, %v2042, %v2043
      %v2045 = vrot.slane %v436, 2
      %v2046 = vsel %vm2006, %v2043, %v2045
      %v2047 = vrot.slane %v437, 2
      %v2048 = vrot.slane %v438, 2
      %v2049 = vsel %vm2006, %v2047, %v2048
      %v2050 = vrot.slane %v439, 2
      %v2051 = vsel %vm2006, %v2048, %v2050
      %v2052 = vrot.slane %v440, 2
      %v2053 = vrot.slane %v441, 2
      %v2054 = vsel %vm2006, %v2052, %v2053
      %v2055 = vrot.slane %v442, 2
      %v2056 = vsel %vm2006, %v2053, %v2055
      %v2057 = vrot.slane %v443, 2
      %v2058 = vrot.slane %v444, 2
      %v2059 = vsel %vm2006, %v2057, %v2058
      %v2060 = vrot.slane %v445, 2
      %v2061 = vsel %vm2006, %v2058, %v2060
      %v2062 = vrot.slane %v446, 2
      %v2063 = vrot.slane %v447, 2
      %v2064 = vsel %vm2006, %v2062, %v2063
      %v2065 = vrot.slane %v448, 2
      %v2066 = vsel %vm2006, %v2063, %v2065
      %v2067 = vrot.slane %v449, 2
      %v2068 = vrot.slane %v450, 2
      %v2069 = vsel %vm2006, %v2067, %v2068
      %v2070 = vrot.slane %v451, 2
      %v2071 = vsel %vm2006, %v2068, %v2070
      %v2072 = vrot.slane %v452, 2
      %v2073 = vrot.slane %v453, 2
      %v2074 = vsel %vm2006, %v2072, %v2073
      %v2075 = vrot.slane %v454, 2
      %v2076 = vsel %vm2006, %v2073, %v2075
      %v2077 = vrot.slane %v455, 2
      %v2078 = vrot.slane %v456, 2
      %v2079 = vsel %vm2006, %v2077, %v2078
      %v2080 = vrot.slane %v457, 2
      %v2081 = vsel %vm2006, %v2078, %v2080
      %v2082 = vrot.slane %v458, 2
      %v2083 = vrot.slane %v459, 2
      %v2084 = vsel %vm2006, %v2082, %v2083
      %v2085 = vrot.slane %v460, 2
      %v2086 = vsel %vm2006, %v2083, %v2085
      %v2087 = vrot.slane %v467, 2
      %v2088 = vrot.slane %v468, 2
      %v2089 = vsel %vm2006, %v2087, %v2088
      %v2090 = vrot.slane %v469, 2
      %v2091 = vsel %vm2006, %v2088, %v2090
      %v2092 = vrot.slane %v470, 2
      %v2093 = vrot.slane %v471, 2
      %v2094 = vsel %vm2006, %v2092, %v2093
      %v2095 = vrot.slane %v472, 2
      %v2096 = vsel %vm2006, %v2093, %v2095
      %v2097 = vrot.slane %v473, 2
      %v2098 = vrot.slane %v474, 2
      %v2099 = vsel %vm2006, %v2097, %v2098
      %v2100 = vrot.slane %v475, 2
      %v2101 = vsel %vm2006, %v2098, %v2100
      %v2102 = vrot.slane %v476, 2
      %v2103 = vrot.slane %v477, 2
      %v2104 = vsel %vm2006, %v2102, %v2103
      %v2105 = vrot.slane %v478, 2
      %v2106 = vsel %vm2006, %v2103, %v2105
      %v2107 = vrot.slane %v479, 2
      %v2108 = vrot.slane %v480, 2
      %v2109 = vsel %vm2006, %v2107, %v2108
      %v2110 = vrot.slane %v481, 2
      %v2111 = vsel %vm2006, %v2108, %v2110
      %v2112 = vrot.slane %v482, 2
      %v2113 = vrot.slane %v483, 2
      %v2114 = vsel %vm2006, %v2112, %v2113
      %v2115 = vrot.slane %v484, 2
      %v2116 = vsel %vm2006, %v2113, %v2115
      %v2117 = vrot.slane %v485, 2
      %v2118 = vrot.slane %v486, 2
      %v2119 = vsel %vm2006, %v2117, %v2118
      %v2120 = vrot.slane %v487, 2
      %v2121 = vsel %vm2006, %v2118, %v2120
      %v2122 = vrot.slane %v488, 2
      %v2123 = vrot.slane %v489, 2
      %v2124 = vsel %vm2006, %v2122, %v2123
      %v2125 = vrot.slane %v490, 2
      %v2126 = vsel %vm2006, %v2123, %v2125
      %v2127 = vrot.slane %v491, 2
      %v2128 = vrot.slane %v492, 2
      %v2129 = vsel %vm2006, %v2127, %v2128
      %v2130 = vrot.slane %v493, 2
      %v2131 = vsel %vm2006, %v2128, %v2130
      %v2132 = vrot.slane %v494, 2
      %v2133 = vrot.slane %v495, 2
      %v2134 = vsel %vm2006, %v2132, %v2133
      %v2135 = vrot.slane %v496, 2
      %v2136 = vsel %vm2006, %v2133, %v2135
      %v2137 = vrot.slane %v497, 2
      %v2138 = vrot.slane %v498, 2
      %v2139 = vsel %vm2006, %v2137, %v2138
      %v2140 = vrot.slane %v499, 2
      %v2141 = vsel %vm2006, %v2138, %v2140
      %v2142 = vrot.slane %v500, 2
      %v2143 = vrot.slane %v501, 2
      %v2144 = vsel %vm2006, %v2142, %v2143
      %v2145 = vrot.slane %v502, 2
      %v2146 = vsel %vm2006, %v2143, %v2145
      %v2147 = vrot.slane %v503, 2
      %v2148 = vrot.slane %v504, 2
      %v2149 = vsel %vm2006, %v2147, %v2148
      %v2150 = vrot.slane %v505, 2
      %v2151 = vsel %vm2006, %v2148, %v2150
      %v2152 = vrot.slane %v506, 2
      %v2153 = vrot.slane %v507, 2
      %v2154 = vsel %vm2006, %v2152, %v2153
      %v2155 = vrot.slane %v508, 2
      %v2156 = vsel %vm2006, %v2153, %v2155
      %v2157 = vrot.slane %v509, 2
      %v2158 = vrot.slane %v510, 2
      %v2159 = vsel %vm2006, %v2157, %v2158
      %v2160 = vrot.slane %v511, 2
      %v2161 = vsel %vm2006, %v2158, %v2160
      %v2162 = vrot.slane %v512, 2
      %v2163 = vrot.slane %v513, 2
      %v2164 = vsel %vm2006, %v2162, %v2163
      %v2165 = vrot.slane %v514, 2
      %v2166 = vsel %vm2006, %v2163, %v2165
      %s2167 = scalar_lea.vmem %s1, 64
      %v2168 = vld [vmem:[%s2167] sm:$0xff]
      %v2169 = vld [vmem:[%s2167 + $0x8] sm:$0xff]
      %v2170 = vld [vmem:[%s2167 + $0x10] sm:$0xff]
      %v2171 = vld [vmem:[%s2167 + $0x18] sm:$0xff]
      %v2172 = vsel %vm589, %v2009, 0
      %v2174 = vsel %vm589, %v2011, 0
      %v2176 = vsel %vm589, %v2014, 0
      %v2178 = vsel %vm589, %v2016, 0
      %v2180 = vsel %vm589, %v2019, 0
      %v2182 = vsel %vm589, %v2021, 0
      %v2184 = vsel %vm589, %v2024, 0
      %v2186 = vsel %vm589, %v2026, 0
      %v2188 = vsel %vm589, %v2029, 0
      %v2190 = vsel %vm589, %v2031, 0
      %v2192 = vsel %vm589, %v2034, 0
      %v2194 = vsel %vm589, %v2036, 0
      %v2196 = vsel %vm589, %v2039, 0
      %v2198 = vsel %vm589, %v2041, 0
      %v2200 = vsel %vm589, %v2044, 0
      %v2202 = vsel %vm589, %v2046, 0
      %v2204 = vsel %vm589, %v2049, 0
      %v2206 = vsel %vm589, %v2051, 0
      %v2208 = vsel %vm589, %v2054, 0
      %v2210 = vsel %vm589, %v2056, 0
      %v2212 = vsel %vm589, %v2059, 0
      %v2214 = vsel %vm589, %v2061, 0
      %v2216 = vsel %vm589, %v2064, 0
      %v2218 = vsel %vm589, %v2066, 0
      %v2220 = vsel %vm589, %v2069, 0
      %v2222 = vsel %vm589, %v2071, 0
      %v2224 = vsel %vm589, %v2074, 0
      %v2226 = vsel %vm589, %v2076, 0
      %v2228 = vsel %vm589, %v2079, 0
      %v2230 = vsel %vm589, %v2081, 0
      %v2232 = vsel %vm589, %v2084, 0
      %v2234 = vsel %vm589, %v2086, 0
      %v2236 = vsel %vm589, %v2089, 0
      %v2238 = vsel %vm589, %v2091, 0
      %v2240 = vsel %vm589, %v2094, 0
      %v2242 = vsel %vm589, %v2096, 0
      %v2244 = vsel %vm589, %v2099, 0
      %v2246 = vsel %vm589, %v2101, 0
      %v2248 = vsel %vm589, %v2104, 0
      %v2250 = vsel %vm589, %v2106, 0
      %v2252 = vsel %vm589, %v2109, 0
      %v2254 = vsel %vm589, %v2111, 0
      %v2256 = vsel %vm589, %v2114, 0
      %v2258 = vsel %vm589, %v2116, 0
      %v2260 = vsel %vm589, %v2119, 0
      %v2262 = vsel %vm589, %v2121, 0
      %v2264 = vsel %vm589, %v2124, 0
      %v2266 = vsel %vm589, %v2126, 0
      %v2268 = vsel %vm589, %v2129, 0
      %v2270 = vsel %vm589, %v2131, 0
      %v2272 = vsel %vm589, %v2134, 0
      %v2274 = vsel %vm589, %v2136, 0
      %v2276 = vsel %vm589, %v2139, 0
      %v2278 = vsel %vm589, %v2141, 0
      %v2280 = vsel %vm589, %v2144, 0
      %v2282 = vsel %vm589, %v2146, 0
      %v2284 = vsel %vm589, %v2149, 0
      %v2286 = vsel %vm589, %v2151, 0
      %v2288 = vsel %vm589, %v2154, 0
      %v2290 = vsel %vm589, %v2156, 0
      %v2292 = vsel %vm589, %v2159, 0
      %v2294 = vsel %vm589, %v2161, 0
      %v2296 = vsel %vm589, %v2164, 0
      %v2298 = vsel %vm589, %v2166, 0
      %2300 = vmatprep.subr.mxu0 0.0
      %2301 = vmatpush1.msra.mxu0 %v2168
      %2302 = vmatprep.subr.mxu0 0.0
      %2303 = vmatpush1.msra.mxu0 %v2169
      %2304 = vmatprep.subr.mxu0 0.0
      %2305 = vmatpush1.msra.mxu0 %v2170
      %2306 = vmatprep.subr.mxu0 0.0
      %2307 = vmatpush1.msra.mxu0 %v2171
      %2308 = vmatprep.subr.mxu0 0.0
      %2309 = vmatpush1.msra.mxu0 0.0
      %2310 = vmatprep.subr.mxu0 0.0
      %2311 = vmatpush1.msra.mxu0 0.0
      %2312 = vmatprep.subr.mxu0 0.0
      %2313 = vmatpush1.msra.mxu0 0.0
      %2314 = vmatprep.subr.mxu0 0.0
      %2315 = vmatpush1.msra.mxu0 0.0
      %2316 = vmatprep.subr.mxu0 0.0
      %2317 = vmatpush1.msra.mxu0 0.0
      %2318 = vmatprep.subr.mxu0 0.0
      %2319 = vmatpush1.msra.mxu0 0.0
      %2320 = vmatprep.subr.mxu0 0.0
      %2321 = vmatpush1.msra.mxu0 0.0
      %2322 = vmatprep.subr.mxu0 0.0
      %2323 = vmatpush1.msra.mxu0 0.0
      %2324 = vmatprep.subr.mxu0 0.0
      %2325 = vmatpush1.msra.mxu0 0.0
      %2326 = vmatprep.subr.mxu0 0.0
      %2327 = vmatpush1.msra.mxu0 0.0
      %2328 = vmatprep.subr.mxu0 0.0
      %2329 = vmatpush1.msra.mxu0 0.0
      %2330 = vmatprep.subr.mxu0 0.0
      %2331 = vmatpush1.msra.mxu0 0.0
      %2332 = vmatprep.subr.mxu0 0.0
      %2333 = vmatpush1.msra.mxu0 0.0
      %2334 = vmatprep.subr.mxu0 0.0
      %2335 = vmatpush1.msra.mxu0 0.0
      %2336 = vmatprep.subr.mxu0 0.0
      %2337 = vmatpush1.msra.mxu0 0.0
      %2338 = vmatprep.subr.mxu0 0.0
      %2339 = vmatpush1.msra.mxu0 0.0
      %2340 = vmatprep.subr.mxu0 0.0
      %2341 = vmatpush1.msra.mxu0 0.0
      %2342 = vmatprep.subr.mxu0 0.0
      %2343 = vmatpush1.msra.mxu0 0.0
      %2344 = vmatprep.subr.mxu0 0.0
      %2345 = vmatpush1.msra.mxu0 0.0
      %2346 = vmatprep.subr.mxu0 0.0
      %2347 = vmatpush1.msra.mxu0 0.0
      %2348 = vmatprep.subr.mxu0 0.0
      %2349 = vmatpush1.msra.mxu0 0.0
      %2350 = vmatprep.subr.mxu0 0.0
      %2351 = vmatpush1.msra.mxu0 0.0
      %2352 = vmatprep.subr.mxu0 0.0
      %2353 = vmatpush1.msra.mxu0 0.0
      %2354 = vmatprep.subr.mxu0 0.0
      %2355 = vmatpush1.msra.mxu0 0.0
      %2356 = vmatprep.subr.mxu0 0.0
      %2357 = vmatpush1.msra.mxu0 0.0
      %2358 = vmatprep.subr.mxu0 0.0
      %2359 = vmatpush1.msra.mxu0 0.0
      %2360 = vmatprep.subr.mxu0 0.0
      %2361 = vmatpush1.msra.mxu0 0.0
      %2362 = vmatprep.subr.mxu0 0.0
      %2363 = vmatpush1.msra.mxu0 0.0
      %2364 = vmatprep.mubr.f32.mxu0 0.0
      %2365 = vmatmul.mubr.f32.gmra.mrb[0].mxu0 %v2172
      %v2366 = vpop.f32.mrb[0].mxu0
      %v2367 = vadd.f32 0.0, %v2366
      %v2368 = vpop.f32.mrb[0].mxu0
      %2369 = vmatprep.mubr.f32.mxu0 0.0
      %2370 = vmatmul.mubr.f32.gmra.mrb[0].mxu0 %v2174
      %v2371 = vpop.f32.mrb[0].mxu0
      %v2372 = vadd.f32 0.0, %v2371
      %v2373 = vpop.f32.mrb[0].mxu0
      %2374 = vmatprep.mubr.f32.mxu0 0.0
      %2375 = vmatmul.mubr.f32.gmra.mrb[0].mxu0 %v2176
      %v2376 = vpop.f32.mrb[0].mxu0
      %v2377 = vadd.f32 0.0, %v2376
      %v2378 = vpop.f32.mrb[0].mxu0
      %2379 = vmatprep.mubr.f32.mxu0 0.0
      %2380 = vmatmul.mubr.f32.gmra.mrb[0].mxu0 %v2178
      %v2381 = vpop.f32.mrb[0].mxu0
      %v2382 = vadd.f32 0.0, %v2381
      %v2383 = vpop.f32.mrb[0].mxu0
      %2384 = vmatprep.mubr.f32.mxu0 0.0
      %2385 = vmatmul.mubr.f32.gmra.mrb[0].mxu0 %v2180
      %v2386 = vpop.f32.mrb[0].mxu0
      %v2387 = vadd.f32 0.0, %v2386
      %v2388 = vpop.f32.mrb[0].mxu0
      %2389 = vmatprep.mubr.f32.mxu0 0.0
      %2390 = vmatmul.mubr.f32.gmra.mrb[0].mxu0 %v2182
      %v2391 = vpop.f32.mrb[0].mxu0
      %v2392 = vadd.f32 0.0, %v2391
      %v2393 = vpop.f32.mrb[0].mxu0
      %2394 = vmatprep.mubr.f32.mxu0 0.0
      %2395 = vmatmul.mubr.f32.gmra.mrb[0].mxu0 %v2184
      %v2396 = vpop.f32.mrb[0].mxu0
      %v2397 = vadd.f32 0.0, %v2396
      %v2398 = vpop.f32.mrb[0].mxu0
      %2399 = vmatprep.mubr.f32.mxu0 0.0
      %2400 = vmatmul.mubr.f32.gmra.mrb[0].mxu0 %v2186
      %v2401 = vpop.f32.mrb[0].mxu0
      %v2402 = vadd.f32 0.0, %v2401
      %v2403 = vpop.f32.mrb[0].mxu0
      %2404 = vmatprep.mubr.f32.mxu0 0.0
      %2405 = vmatmul.mubr.f32.gmra.mrb[0].mxu0 %v2188
      %v2406 = vpop.f32.mrb[0].mxu0
      %v2407 = vadd.f32 0.0, %v2406
      %v2408 = vpop.f32.mrb[0].mxu0
      %2409 = vmatprep.mubr.f32.mxu0 0.0
      %2410 = vmatmul.mubr.f32.gmra.mrb[0].mxu0 %v2190
      %v2411 = vpop.f32.mrb[0].mxu0
      %v2412 = vadd.f32 0.0, %v2411
      %v2413 = vpop.f32.mrb[0].mxu0
      %2414 = vmatprep.mubr.f32.mxu0 0.0
      %2415 = vmatmul.mubr.f32.gmra.mrb[0].mxu0 %v2192
      %v2416 = vpop.f32.mrb[0].mxu0
      %v2417 = vadd.f32 0.0, %v2416
      %v2418 = vpop.f32.mrb[0].mxu0
      %2419 = vmatprep.mubr.f32.mxu0 0.0
      %2420 = vmatmul.mubr.f32.gmra.mrb[0].mxu0 %v2194
      %v2421 = vpop.f32.mrb[0].mxu0
      %v2422 = vadd.f32 0.0, %v2421
      %v2423 = vpop.f32.mrb[0].mxu0
      %2424 = vmatprep.mubr.f32.mxu0 0.0
      %2425 = vmatmul.mubr.f32.gmra.mrb[0].mxu0 %v2196
      %v2426 = vpop.f32.mrb[0].mxu0
      %v2427 = vadd.f32 0.0, %v2426
      %v2428 = vpop.f32.mrb[0].mxu0
      %2429 = vmatprep.mubr.f32.mxu0 0.0
      %2430 = vmatmul.mubr.f32.gmra.mrb[0].mxu0 %v2198
      %v2431 = vpop.f32.mrb[0].mxu0
      %v2432 = vadd.f32 0.0, %v2431
      %v2433 = vpop.f32.mrb[0].mxu0
      %2434 = vmatprep.mubr.f32.mxu0 0.0
      %2435 = vmatmul.mubr.f32.gmra.mrb[0].mxu0 %v2200
      %v2436 = vpop.f32.mrb[0].mxu0
      %v2437 = vadd.f32 0.0, %v2436
      %v2438 = vpop.f32.mrb[0].mxu0
      %2439 = vmatprep.mubr.f32.mxu0 0.0
      %2440 = vmatmul.mubr.f32.gmra.mrb[0].mxu0 %v2202
      %v2441 = vpop.f32.mrb[0].mxu0
      %v2442 = vadd.f32 0.0, %v2441
      %v2443 = vpop.f32.mrb[0].mxu0
      %2444 = vmatprep.mubr.f32.mxu0 0.0
      %2445 = vmatmul.mubr.f32.gmra.mrb[0].mxu0 %v2204
      %v2446 = vpop.f32.mrb[0].mxu0
      %v2447 = vadd.f32 0.0, %v2446
      %v2448 = vpop.f32.mrb[0].mxu0
      %2449 = vmatprep.mubr.f32.mxu0 0.0
      %2450 = vmatmul.mubr.f32.gmra.mrb[0].mxu0 %v2206
      %v2451 = vpop.f32.mrb[0].mxu0
      %v2452 = vadd.f32 0.0, %v2451
      %v2453 = vpop.f32.mrb[0].mxu0
      %2454 = vmatprep.mubr.f32.mxu0 0.0
      %2455 = vmatmul.mubr.f32.gmra.mrb[0].mxu0 %v2208
      %v2456 = vpop.f32.mrb[0].mxu0
      %v2457 = vadd.f32 0.0, %v2456
      %v2458 = vpop.f32.mrb[0].mxu0
      %2459 = vmatprep.mubr.f32.mxu0 0.0
      %2460 = vmatmul.mubr.f32.gmra.mrb[0].mxu0 %v2210
      %v2461 = vpop.f32.mrb[0].mxu0
      %v2462 = vadd.f32 0.0, %v2461
      %v2463 = vpop.f32.mrb[0].mxu0
      %2464 = vmatprep.mubr.f32.mxu0 0.0
      %2465 = vmatmul.mubr.f32.gmra.mrb[0].mxu0 %v2212
      %v2466 = vpop.f32.mrb[0].mxu0
      %v2467 = vadd.f32 0.0, %v2466
      %v2468 = vpop.f32.mrb[0].mxu0
      %2469 = vmatprep.mubr.f32.mxu0 0.0
      %2470 = vmatmul.mubr.f32.gmra.mrb[0].mxu0 %v2214
      %v2471 = vpop.f32.mrb[0].mxu0
      %v2472 = vadd.f32 0.0, %v2471
      %v2473 = vpop.f32.mrb[0].mxu0
      %2474 = vmatprep.mubr.f32.mxu0 0.0
      %2475 = vmatmul.mubr.f32.gmra.mrb[0].mxu0 %v2216
      %v2476 = vpop.f32.mrb[0].mxu0
      %v2477 = vadd.f32 0.0, %v2476
      %v2478 = vpop.f32.mrb[0].mxu0
      %2479 = vmatprep.mubr.f32.mxu0 0.0
      %2480 = vmatmul.mubr.f32.gmra.mrb[0].mxu0 %v2218
      %v2481 = vpop.f32.mrb[0].mxu0
      %v2482 = vadd.f32 0.0, %v2481
      %v2483 = vpop.f32.mrb[0].mxu0
      %2484 = vmatprep.mubr.f32.mxu0 0.0
      %2485 = vmatmul.mubr.f32.gmra.mrb[0].mxu0 %v2220
      %v2486 = vpop.f32.mrb[0].mxu0
      %v2487 = vadd.f32 0.0, %v2486
      %v2488 = vpop.f32.mrb[0].mxu0
      %2489 = vmatprep.mubr.f32.mxu0 0.0
      %2490 = vmatmul.mubr.f32.gmra.mrb[0].mxu0 %v2222
      %v2491 = vpop.f32.mrb[0].mxu0
      %v2492 = vadd.f32 0.0, %v2491
      %v2493 = vpop.f32.mrb[0].mxu0
      %2494 = vmatprep.mubr.f32.mxu0 0.0
      %2495 = vmatmul.mubr.f32.gmra.mrb[0].mxu0 %v2224
      %v2496 = vpop.f32.mrb[0].mxu0
      %v2497 = vadd.f32 0.0, %v2496
      %v2498 = vpop.f32.mrb[0].mxu0
      %2499 = vmatprep.mubr.f32.mxu0 0.0
      %2500 = vmatmul.mubr.f32.gmra.mrb[0].mxu0 %v2226
      %v2501 = vpop.f32.mrb[0].mxu0
      %v2502 = vadd.f32 0.0, %v2501
      %v2503 = vpop.f32.mrb[0].mxu0
      %2504 = vmatprep.mubr.f32.mxu0 0.0
      %2505 = vmatmul.mubr.f32.gmra.mrb[0].mxu0 %v2228
      %v2506 = vpop.f32.mrb[0].mxu0
      %v2507 = vadd.f32 0.0, %v2506
      %v2508 = vpop.f32.mrb[0].mxu0
      %2509 = vmatprep.mubr.f32.mxu0 0.0
      %2510 = vmatmul.mubr.f32.gmra.mrb[0].mxu0 %v2230
      %v2511 = vpop.f32.mrb[0].mxu0
      %v2512 = vadd.f32 0.0, %v2511
      %v2513 = vpop.f32.mrb[0].mxu0
      %2514 = vmatprep.mubr.f32.mxu0 0.0
      %2515 = vmatmul.mubr.f32.gmra.mrb[0].mxu0 %v2232
      %v2516 = vpop.f32.mrb[0].mxu0
      %v2517 = vadd.f32 0.0, %v2516
      %v2518 = vpop.f32.mrb[0].mxu0
      %2519 = vmatprep.mubr.f32.mxu0 0.0
      %2520 = vmatmul.mubr.f32.gmra.mrb[0].mxu0 %v2234
      %v2521 = vpop.f32.mrb[0].mxu0
      %v2522 = vadd.f32 0.0, %v2521
      %v2523 = vpop.f32.mrb[0].mxu0
      %2524 = vmatprep.mubr.f32.mxu0 0.0
      %2525 = vmatmul.mubr.f32.gmra.mrb[0].mxu0 %v2236
      %v2526 = vpop.f32.mrb[0].mxu0
      %v2527 = vadd.f32 0.0, %v2526
      %v2528 = vpop.f32.mrb[0].mxu0
      %2529 = vmatprep.mubr.f32.mxu0 0.0
      %2530 = vmatmul.mubr.f32.gmra.mrb[0].mxu0 %v2238
      %v2531 = vpop.f32.mrb[0].mxu0
      %v2532 = vadd.f32 0.0, %v2531
      %v2533 = vpop.f32.mrb[0].mxu0
      %2534 = vmatprep.mubr.f32.mxu0 0.0
      %2535 = vmatmul.mubr.f32.gmra.mrb[0].mxu0 %v2240
      %v2536 = vpop.f32.mrb[0].mxu0
      %v2537 = vadd.f32 0.0, %v2536
      %v2538 = vpop.f32.mrb[0].mxu0
      %2539 = vmatprep.mubr.f32.mxu0 0.0
      %2540 = vmatmul.mubr.f32.gmra.mrb[0].mxu0 %v2242
      %v2541 = vpop.f32.mrb[0].mxu0
      %v2542 = vadd.f32 0.0, %v2541
      %v2543 = vpop.f32.mrb[0].mxu0
      %2544 = vmatprep.mubr.f32.mxu0 0.0
      %2545 = vmatmul.mubr.f32.gmra.mrb[0].mxu0 %v2244
      %v2546 = vpop.f32.mrb[0].mxu0
      %v2547 = vadd.f32 0.0, %v2546
      %v2548 = vpop.f32.mrb[0].mxu0
      %2549 = vmatprep.mubr.f32.mxu0 0.0
      %2550 = vmatmul.mubr.f32.gmra.mrb[0].mxu0 %v2246
      %v2551 = vpop.f32.mrb[0].mxu0
      %v2552 = vadd.f32 0.0, %v2551
      %v2553 = vpop.f32.mrb[0].mxu0
      %2554 = vmatprep.mubr.f32.mxu0 0.0
      %2555 = vmatmul.mubr.f32.gmra.mrb[0].mxu0 %v2248
      %v2556 = vpop.f32.mrb[0].mxu0
      %v2557 = vadd.f32 0.0, %v2556
      %v2558 = vpop.f32.mrb[0].mxu0
      %2559 = vmatprep.mubr.f32.mxu0 0.0
      %2560 = vmatmul.mubr.f32.gmra.mrb[0].mxu0 %v2250
      %v2561 = vpop.f32.mrb[0].mxu0
      %v2562 = vadd.f32 0.0, %v2561
      %v2563 = vpop.f32.mrb[0].mxu0
      %2564 = vmatprep.mubr.f32.mxu0 0.0
      %2565 = vmatmul.mubr.f32.gmra.mrb[0].mxu0 %v2252
      %v2566 = vpop.f32.mrb[0].mxu0
      %v2567 = vadd.f32 0.0, %v2566
      %v2568 = vpop.f32.mrb[0].mxu0
      %2569 = vmatprep.mubr.f32.mxu0 0.0
      %2570 = vmatmul.mubr.f32.gmra.mrb[0].mxu0 %v2254
      %v2571 = vpop.f32.mrb[0].mxu0
      %v2572 = vadd.f32 0.0, %v2571
      %v2573 = vpop.f32.mrb[0].mxu0
      %2574 = vmatprep.mubr.f32.mxu0 0.0
      %2575 = vmatmul.mubr.f32.gmra.mrb[0].mxu0 %v2256
      %v2576 = vpop.f32.mrb[0].mxu0
      %v2577 = vadd.f32 0.0, %v2576
      %v2578 = vpop.f32.mrb[0].mxu0
      %2579 = vmatprep.mubr.f32.mxu0 0.0
      %2580 = vmatmul.mubr.f32.gmra.mrb[0].mxu0 %v2258
      %v2581 = vpop.f32.mrb[0].mxu0
      %v2582 = vadd.f32 0.0, %v2581
      %v2583 = vpop.f32.mrb[0].mxu0
      %2584 = vmatprep.mubr.f32.mxu0 0.0
      %2585 = vmatmul.mubr.f32.gmra.mrb[0].mxu0 %v2260
      %v2586 = vpop.f32.mrb[0].mxu0
      %v2587 = vadd.f32 0.0, %v2586
      %v2588 = vpop.f32.mrb[0].mxu0
      %2589 = vmatprep.mubr.f32.mxu0 0.0
      %2590 = vmatmul.mubr.f32.gmra.mrb[0].mxu0 %v2262
      %v2591 = vpop.f32.mrb[0].mxu0
      %v2592 = vadd.f32 0.0, %v2591
      %v2593 = vpop.f32.mrb[0].mxu0
      %2594 = vmatprep.mubr.f32.mxu0 0.0
      %2595 = vmatmul.mubr.f32.gmra.mrb[0].mxu0 %v2264
      %v2596 = vpop.f32.mrb[0].mxu0
      %v2597 = vadd.f32 0.0, %v2596
      %v2598 = vpop.f32.mrb[0].mxu0
      %2599 = vmatprep.mubr.f32.mxu0 0.0
      %2600 = vmatmul.mubr.f32.gmra.mrb[0].mxu0 %v2266
      %v2601 = vpop.f32.mrb[0].mxu0
      %v2602 = vadd.f32 0.0, %v2601
      %v2603 = vpop.f32.mrb[0].mxu0
      %2604 = vmatprep.mubr.f32.mxu0 0.0
      %2605 = vmatmul.mubr.f32.gmra.mrb[0].mxu0 %v2268
      %v2606 = vpop.f32.mrb[0].mxu0
      %v2607 = vadd.f32 0.0, %v2606
      %v2608 = vpop.f32.mrb[0].mxu0
      %2609 = vmatprep.mubr.f32.mxu0 0.0
      %2610 = vmatmul.mubr.f32.gmra.mrb[0].mxu0 %v2270
      %v2611 = vpop.f32.mrb[0].mxu0
      %v2612 = vadd.f32 0.0, %v2611
      %v2613 = vpop.f32.mrb[0].mxu0
      %2614 = vmatprep.mubr.f32.mxu0 0.0
      %2615 = vmatmul.mubr.f32.gmra.mrb[0].mxu0 %v2272
      %v2616 = vpop.f32.mrb[0].mxu0
      %v2617 = vadd.f32 0.0, %v2616
      %v2618 = vpop.f32.mrb[0].mxu0
      %2619 = vmatprep.mubr.f32.mxu0 0.0
      %2620 = vmatmul.mubr.f32.gmra.mrb[0].mxu0 %v2274
      %v2621 = vpop.f32.mrb[0].mxu0
      %v2622 = vadd.f32 0.0, %v2621
      %v2623 = vpop.f32.mrb[0].mxu0
      %2624 = vmatprep.mubr.f32.mxu0 0.0
      %2625 = vmatmul.mubr.f32.gmra.mrb[0].mxu0 %v2276
      %v2626 = vpop.f32.mrb[0].mxu0
      %v2627 = vadd.f32 0.0, %v2626
      %v2628 = vpop.f32.mrb[0].mxu0
      %2629 = vmatprep.mubr.f32.mxu0 0.0
      %2630 = vmatmul.mubr.f32.gmra.mrb[0].mxu0 %v2278
      %v2631 = vpop.f32.mrb[0].mxu0
      %v2632 = vadd.f32 0.0, %v2631
      %v2633 = vpop.f32.mrb[0].mxu0
      %2634 = vmatprep.mubr.f32.mxu0 0.0
      %2635 = vmatmul.mubr.f32.gmra.mrb[0].mxu0 %v2280
      %v2636 = vpop.f32.mrb[0].mxu0
      %v2637 = vadd.f32 0.0, %v2636
      %v2638 = vpop.f32.mrb[0].mxu0
      %2639 = vmatprep.mubr.f32.mxu0 0.0
      %2640 = vmatmul.mubr.f32.gmra.mrb[0].mxu0 %v2282
      %v2641 = vpop.f32.mrb[0].mxu0
      %v2642 = vadd.f32 0.0, %v2641
      %v2643 = vpop.f32.mrb[0].mxu0
      %2644 = vmatprep.mubr.f32.mxu0 0.0
      %2645 = vmatmul.mubr.f32.gmra.mrb[0].mxu0 %v2284
      %v2646 = vpop.f32.mrb[0].mxu0
      %v2647 = vadd.f32 0.0, %v2646
      %v2648 = vpop.f32.mrb[0].mxu0
      %2649 = vmatprep.mubr.f32.mxu0 0.0
      %2650 = vmatmul.mubr.f32.gmra.mrb[0].mxu0 %v2286
      %v2651 = vpop.f32.mrb[0].mxu0
      %v2652 = vadd.f32 0.0, %v2651
      %v2653 = vpop.f32.mrb[0].mxu0
      %2654 = vmatprep.mubr.f32.mxu0 0.0
      %2655 = vmatmul.mubr.f32.gmra.mrb[0].mxu0 %v2288
      %v2656 = vpop.f32.mrb[0].mxu0
      %v2657 = vadd.f32 0.0, %v2656
      %v2658 = vpop.f32.mrb[0].mxu0
      %2659 = vmatprep.mubr.f32.mxu0 0.0
      %2660 = vmatmul.mubr.f32.gmra.mrb[0].mxu0 %v2290
      %v2661 = vpop.f32.mrb[0].mxu0
      %v2662 = vadd.f32 0.0, %v2661
      %v2663 = vpop.f32.mrb[0].mxu0
      %2664 = vmatprep.mubr.f32.mxu0 0.0
      %2665 = vmatmul.mubr.f32.gmra.mrb[0].mxu0 %v2292
      %v2666 = vpop.f32.mrb[0].mxu0
      %v2667 = vadd.f32 0.0, %v2666
      %v2668 = vpop.f32.mrb[0].mxu0
      %2669 = vmatprep.mubr.f32.mxu0 0.0
      %2670 = vmatmul.mubr.f32.gmra.mrb[0].mxu0 %v2294
      %v2671 = vpop.f32.mrb[0].mxu0
      %v2672 = vadd.f32 0.0, %v2671
      %v2673 = vpop.f32.mrb[0].mxu0
      %2674 = vmatprep.mubr.f32.mxu0 0.0
      %2675 = vmatmul.mubr.f32.gmra.mrb[0].mxu0 %v2296
      %v2676 = vpop.f32.mrb[0].mxu0
      %v2677 = vadd.f32 0.0, %v2676
      %v2678 = vpop.f32.mrb[0].mxu0
      %2679 = vmatprep.mubr.f32.mxu0 0.0
      %2680 = vmatmul.mubr.f32.gmra.mrb[0].mxu0 %v2298
      %v2681 = vpop.f32.mrb[0].mxu0
      %v2682 = vadd.f32 0.0, %v2681
      %v2683 = vpop.f32.mrb[0].mxu0
      %2684 = vdwg.mxu0
      %v2685 = vadd.f32 %v1942, %v2367
      %v2686 = vadd.f32 %v1943, %v2372
      %v2687 = vadd.f32 %v1944, %v2377
      %v2688 = vadd.f32 %v1945, %v2382
      %v2689 = vadd.f32 %v1946, %v2387
      %v2690 = vadd.f32 %v1947, %v2392
      %v2691 = vadd.f32 %v1948, %v2397
      %v2692 = vadd.f32 %v1949, %v2402
      %v2693 = vadd.f32 %v1950, %v2407
      %v2694 = vadd.f32 %v1951, %v2412
      %v2695 = vadd.f32 %v1952, %v2417
      %v2696 = vadd.f32 %v1953, %v2422
      %v2697 = vadd.f32 %v1954, %v2427
      %v2698 = vadd.f32 %v1955, %v2432
      %v2699 = vadd.f32 %v1956, %v2437
      %v2700 = vadd.f32 %v1957, %v2442
      %v2701 = vadd.f32 %v1958, %v2447
      %v2702 = vadd.f32 %v1959, %v2452
      %v2703 = vadd.f32 %v1960, %v2457
      %v2704 = vadd.f32 %v1961, %v2462
      %v2705 = vadd.f32 %v1962, %v2467
      %v2706 = vadd.f32 %v1963, %v2472
      %v2707 = vadd.f32 %v1964, %v2477
      %v2708 = vadd.f32 %v1965, %v2482
      %v2709 = vadd.f32 %v1966, %v2487
      %v2710 = vadd.f32 %v1967, %v2492
      %v2711 = vadd.f32 %v1968, %v2497
      %v2712 = vadd.f32 %v1969, %v2502
      %v2713 = vadd.f32 %v1970, %v2507
      %v2714 = vadd.f32 %v1971, %v2512
      %v2715 = vadd.f32 %v1972, %v2517
      %v2716 = vadd.f32 %v1973, %v2522
      %v2717 = vadd.f32 %v1974, %v2527
      %v2718 = vadd.f32 %v1975, %v2532
      %v2719 = vadd.f32 %v1976, %v2537
      %v2720 = vadd.f32 %v1977, %v2542
      %v2721 = vadd.f32 %v1978, %v2547
      %v2722 = vadd.f32 %v1979, %v2552
      %v2723 = vadd.f32 %v1980, %v2557
      %v2724 = vadd.f32 %v1981, %v2562
      %v2725 = vadd.f32 %v1982, %v2567
      %v2726 = vadd.f32 %v1983, %v2572
      %v2727 = vadd.f32 %v1984, %v2577
      %v2728 = vadd.f32 %v1985, %v2582
      %v2729 = vadd.f32 %v1986, %v2587
      %v2730 = vadd.f32 %v1987, %v2592
      %v2731 = vadd.f32 %v1988, %v2597
      %v2732 = vadd.f32 %v1989, %v2602
      %v2733 = vadd.f32 %v1990, %v2607
      %v2734 = vadd.f32 %v1991, %v2612
      %v2735 = vadd.f32 %v1992, %v2617
      %v2736 = vadd.f32 %v1993, %v2622
      %v2737 = vadd.f32 %v1994, %v2627
      %v2738 = vadd.f32 %v1995, %v2632
      %v2739 = vadd.f32 %v1996, %v2637
      %v2740 = vadd.f32 %v1997, %v2642
      %v2741 = vadd.f32 %v1998, %v2647
      %v2742 = vadd.f32 %v1999, %v2652
      %v2743 = vadd.f32 %v2000, %v2657
      %v2744 = vadd.f32 %v2001, %v2662
      %v2745 = vadd.f32 %v2002, %v2667
      %v2746 = vadd.f32 %v2003, %v2672
      %v2747 = vadd.f32 %v2004, %v2677
      %v2748 = vadd.f32 %v2005, %v2682
      %s2749 = scalar_lea.vmem %s1, 96
      %v2750 = vld [vmem:[%s2749] sm:$0xff]
      %v2751 = vld [vmem:[%s2749 + $0x8] sm:$0xff]
      %v2752 = vld [vmem:[%s2749 + $0x10] sm:$0xff]
      %v2753 = vld [vmem:[%s2749 + $0x18] sm:$0xff]
      %v2755 = vsel %vm589, %v461, 0
      %v2758 = vsel %vm589, %v462, 0
      %v2761 = vsel %vm589, %v515, 0
      %v2764 = vsel %vm589, %v516, 0
      %2766 = vmatprep.subr.mxu0 0.0
      %2767 = vmatpush1.msra.mxu0 %v2750
      %2768 = vmatprep.subr.mxu0 0.0
      %2769 = vmatpush1.msra.mxu0 %v2751
      %2770 = vmatprep.subr.mxu0 0.0
      %2771 = vmatpush1.msra.mxu0 %v2752
      %2772 = vmatprep.subr.mxu0 0.0
      %2773 = vmatpush1.msra.mxu0 %v2753
      %2774 = vmatprep.subr.mxu0 0.0
      %2775 = vmatpush1.msra.mxu0 0.0
      %2776 = vmatprep.subr.mxu0 0.0
      %2777 = vmatpush1.msra.mxu0 0.0
      %2778 = vmatprep.subr.mxu0 0.0
      %2779 = vmatpush1.msra.mxu0 0.0
      %2780 = vmatprep.subr.mxu0 0.0
      %2781 = vmatpush1.msra.mxu0 0.0
      %2782 = vmatprep.subr.mxu0 0.0
      %2783 = vmatpush1.msra.mxu0 0.0
      %2784 = vmatprep.subr.mxu0 0.0
      %2785 = vmatpush1.msra.mxu0 0.0
      %2786 = vmatprep.subr.mxu0 0.0
      %2787 = vmatpush1.msra.mxu0 0.0
      %2788 = vmatprep.subr.mxu0 0.0
      %2789 = vmatpush1.msra.mxu0 0.0
      %2790 = vmatprep.subr.mxu0 0.0
      %2791 = vmatpush1.msra.mxu0 0.0
      %2792 = vmatprep.subr.mxu0 0.0
      %2793 = vmatpush1.msra.mxu0 0.0
      %2794 = vmatprep.subr.mxu0 0.0
      %2795 = vmatpush1.msra.mxu0 0.0
      %2796 = vmatprep.subr.mxu0 0.0
      %2797 = vmatpush1.msra.mxu0 0.0
      %2798 = vmatprep.subr.mxu0 0.0
      %2799 = vmatpush1.msra.mxu0 0.0
      %2800 = vmatprep.subr.mxu0 0.0
      %2801 = vmatpush1.msra.mxu0 0.0
      %2802 = vmatprep.subr.mxu0 0.0
      %2803 = vmatpush1.msra.mxu0 0.0
      %2804 = vmatprep.subr.mxu0 0.0
      %2805 = vmatpush1.msra.mxu0 0.0
      %2806 = vmatprep.subr.mxu0 0.0
      %2807 = vmatpush1.msra.mxu0 0.0
      %2808 = vmatprep.subr.mxu0 0.0
      %2809 = vmatpush1.msra.mxu0 0.0
      %2810 = vmatprep.subr.mxu0 0.0
      %2811 = vmatpush1.msra.mxu0 0.0
      %2812 = vmatprep.subr.mxu0 0.0
      %2813 = vmatpush1.msra.mxu0 0.0
      %2814 = vmatprep.subr.mxu0 0.0
      %2815 = vmatpush1.msra.mxu0 0.0
      %2816 = vmatprep.subr.mxu0 0.0
      %2817 = vmatpush1.msra.mxu0 0.0
      %2818 = vmatprep.subr.mxu0 0.0
      %2819 = vmatpush1.msra.mxu0 0.0
      %2820 = vmatprep.subr.mxu0 0.0
      %2821 = vmatpush1.msra.mxu0 0.0
      %2822 = vmatprep.subr.mxu0 0.0
      %2823 = vmatpush1.msra.mxu0 0.0
      %2824 = vmatprep.subr.mxu0 0.0
      %2825 = vmatpush1.msra.mxu0 0.0
      %2826 = vmatprep.subr.mxu0 0.0
      %2827 = vmatpush1.msra.mxu0 0.0
      %2828 = vmatprep.subr.mxu0 0.0
      %2829 = vmatpush1.msra.mxu0 0.0
      %2830 = vmatprep.mubr.f32.mxu0 0.0
      %2831 = vmatmul.mubr.f32.gmra.mrb[0].mxu0 %v597
      %v2832 = vpop.f32.mrb[0].mxu0
      %v2833 = vadd.f32 0.0, %v2832
      %v2834 = vpop.f32.mrb[0].mxu0
      %2835 = vmatprep.mubr.f32.mxu0 0.0
      %2836 = vmatmul.mubr.f32.gmra.mrb[0].mxu0 %v600
      %v2837 = vpop.f32.mrb[0].mxu0
      %v2838 = vadd.f32 0.0, %v2837
      %v2839 = vpop.f32.mrb[0].mxu0
      %2840 = vmatprep.mubr.f32.mxu0 0.0
      %2841 = vmatmul.mubr.f32.gmra.mrb[0].mxu0 %v603
      %v2842 = vpop.f32.mrb[0].mxu0
      %v2843 = vadd.f32 0.0, %v2842
      %v2844 = vpop.f32.mrb[0].mxu0
      %2845 = vmatprep.mubr.f32.mxu0 0.0
      %2846 = vmatmul.mubr.f32.gmra.mrb[0].mxu0 %v606
      %v2847 = vpop.f32.mrb[0].mxu0
      %v2848 = vadd.f32 0.0, %v2847
      %v2849 = vpop.f32.mrb[0].mxu0
      %2850 = vmatprep.mubr.f32.mxu0 0.0
      %2851 = vmatmul.mubr.f32.gmra.mrb[0].mxu0 %v609
      %v2852 = vpop.f32.mrb[0].mxu0
      %v2853 = vadd.f32 0.0, %v2852
      %v2854 = vpop.f32.mrb[0].mxu0
      %2855 = vmatprep.mubr.f32.mxu0 0.0
      %2856 = vmatmul.mubr.f32.gmra.mrb[0].mxu0 %v612
      %v2857 = vpop.f32.mrb[0].mxu0
      %v2858 = vadd.f32 0.0, %v2857
      %v2859 = vpop.f32.mrb[0].mxu0
      %2860 = vmatprep.mubr.f32.mxu0 0.0
      %2861 = vmatmul.mubr.f32.gmra.mrb[0].mxu0 %v615
      %v2862 = vpop.f32.mrb[0].mxu0
      %v2863 = vadd.f32 0.0, %v2862
      %v2864 = vpop.f32.mrb[0].mxu0
      %2865 = vmatprep.mubr.f32.mxu0 0.0
      %2866 = vmatmul.mubr.f32.gmra.mrb[0].mxu0 %v618
      %v2867 = vpop.f32.mrb[0].mxu0
      %v2868 = vadd.f32 0.0, %v2867
      %v2869 = vpop.f32.mrb[0].mxu0
      %2870 = vmatprep.mubr.f32.mxu0 0.0
      %2871 = vmatmul.mubr.f32.gmra.mrb[0].mxu0 %v621
      %v2872 = vpop.f32.mrb[0].mxu0
      %v2873 = vadd.f32 0.0, %v2872
      %v2874 = vpop.f32.mrb[0].mxu0
      %2875 = vmatprep.mubr.f32.mxu0 0.0
      %2876 = vmatmul.mubr.f32.gmra.mrb[0].mxu0 %v624
      %v2877 = vpop.f32.mrb[0].mxu0
      %v2878 = vadd.f32 0.0, %v2877
      %v2879 = vpop.f32.mrb[0].mxu0
      %2880 = vmatprep.mubr.f32.mxu0 0.0
      %2881 = vmatmul.mubr.f32.gmra.mrb[0].mxu0 %v627
      %v2882 = vpop.f32.mrb[0].mxu0
      %v2883 = vadd.f32 0.0, %v2882
      %v2884 = vpop.f32.mrb[0].mxu0
      %2885 = vmatprep.mubr.f32.mxu0 0.0
      %2886 = vmatmul.mubr.f32.gmra.mrb[0].mxu0 %v630
      %v2887 = vpop.f32.mrb[0].mxu0
      %v2888 = vadd.f32 0.0, %v2887
      %v2889 = vpop.f32.mrb[0].mxu0
      %2890 = vmatprep.mubr.f32.mxu0 0.0
      %2891 = vmatmul.mubr.f32.gmra.mrb[0].mxu0 %v633
      %v2892 = vpop.f32.mrb[0].mxu0
      %v2893 = vadd.f32 0.0, %v2892
      %v2894 = vpop.f32.mrb[0].mxu0
      %2895 = vmatprep.mubr.f32.mxu0 0.0
      %2896 = vmatmul.mubr.f32.gmra.mrb[0].mxu0 %v636
      %v2897 = vpop.f32.mrb[0].mxu0
      %v2898 = vadd.f32 0.0, %v2897
      %v2899 = vpop.f32.mrb[0].mxu0
      %2900 = vmatprep.mubr.f32.mxu0 0.0
      %2901 = vmatmul.mubr.f32.gmra.mrb[0].mxu0 %v639
      %v2902 = vpop.f32.mrb[0].mxu0
      %v2903 = vadd.f32 0.0, %v2902
      %v2904 = vpop.f32.mrb[0].mxu0
      %2905 = vmatprep.mubr.f32.mxu0 0.0
      %2906 = vmatmul.mubr.f32.gmra.mrb[0].mxu0 %v642
      %v2907 = vpop.f32.mrb[0].mxu0
      %v2908 = vadd.f32 0.0, %v2907
      %v2909 = vpop.f32.mrb[0].mxu0
      %2910 = vmatprep.mubr.f32.mxu0 0.0
      %2911 = vmatmul.mubr.f32.gmra.mrb[0].mxu0 %v645
      %v2912 = vpop.f32.mrb[0].mxu0
      %v2913 = vadd.f32 0.0, %v2912
      %v2914 = vpop.f32.mrb[0].mxu0
      %2915 = vmatprep.mubr.f32.mxu0 0.0
      %2916 = vmatmul.mubr.f32.gmra.mrb[0].mxu0 %v648
      %v2917 = vpop.f32.mrb[0].mxu0
      %v2918 = vadd.f32 0.0, %v2917
      %v2919 = vpop.f32.mrb[0].mxu0
      %2920 = vmatprep.mubr.f32.mxu0 0.0
      %2921 = vmatmul.mubr.f32.gmra.mrb[0].mxu0 %v651
      %v2922 = vpop.f32.mrb[0].mxu0
      %v2923 = vadd.f32 0.0, %v2922
      %v2924 = vpop.f32.mrb[0].mxu0
      %2925 = vmatprep.mubr.f32.mxu0 0.0
      %2926 = vmatmul.mubr.f32.gmra.mrb[0].mxu0 %v654
      %v2927 = vpop.f32.mrb[0].mxu0
      %v2928 = vadd.f32 0.0, %v2927
      %v2929 = vpop.f32.mrb[0].mxu0
      %2930 = vmatprep.mubr.f32.mxu0 0.0
      %2931 = vmatmul.mubr.f32.gmra.mrb[0].mxu0 %v657
      %v2932 = vpop.f32.mrb[0].mxu0
      %v2933 = vadd.f32 0.0, %v2932
      %v2934 = vpop.f32.mrb[0].mxu0
      %2935 = vmatprep.mubr.f32.mxu0 0.0
      %2936 = vmatmul.mubr.f32.gmra.mrb[0].mxu0 %v660
      %v2937 = vpop.f32.mrb[0].mxu0
      %v2938 = vadd.f32 0.0, %v2937
      %v2939 = vpop.f32.mrb[0].mxu0
      %2940 = vmatprep.mubr.f32.mxu0 0.0
      %2941 = vmatmul.mubr.f32.gmra.mrb[0].mxu0 %v663
      %v2942 = vpop.f32.mrb[0].mxu0
      %v2943 = vadd.f32 0.0, %v2942
      %v2944 = vpop.f32.mrb[0].mxu0
      %2945 = vmatprep.mubr.f32.mxu0 0.0
      %2946 = vmatmul.mubr.f32.gmra.mrb[0].mxu0 %v666
      %v2947 = vpop.f32.mrb[0].mxu0
      %v2948 = vadd.f32 0.0, %v2947
      %v2949 = vpop.f32.mrb[0].mxu0
      %2950 = vmatprep.mubr.f32.mxu0 0.0
      %2951 = vmatmul.mubr.f32.gmra.mrb[0].mxu0 %v669
      %v2952 = vpop.f32.mrb[0].mxu0
      %v2953 = vadd.f32 0.0, %v2952
      %v2954 = vpop.f32.mrb[0].mxu0
      %2955 = vmatprep.mubr.f32.mxu0 0.0
      %2956 = vmatmul.mubr.f32.gmra.mrb[0].mxu0 %v672
      %v2957 = vpop.f32.mrb[0].mxu0
      %v2958 = vadd.f32 0.0, %v2957
      %v2959 = vpop.f32.mrb[0].mxu0
      %2960 = vmatprep.mubr.f32.mxu0 0.0
      %2961 = vmatmul.mubr.f32.gmra.mrb[0].mxu0 %v675
      %v2962 = vpop.f32.mrb[0].mxu0
      %v2963 = vadd.f32 0.0, %v2962
      %v2964 = vpop.f32.mrb[0].mxu0
      %2965 = vmatprep.mubr.f32.mxu0 0.0
      %2966 = vmatmul.mubr.f32.gmra.mrb[0].mxu0 %v678
      %v2967 = vpop.f32.mrb[0].mxu0
      %v2968 = vadd.f32 0.0, %v2967
      %v2969 = vpop.f32.mrb[0].mxu0
      %2970 = vmatprep.mubr.f32.mxu0 0.0
      %2971 = vmatmul.mubr.f32.gmra.mrb[0].mxu0 %v681
      %v2972 = vpop.f32.mrb[0].mxu0
      %v2973 = vadd.f32 0.0, %v2972
      %v2974 = vpop.f32.mrb[0].mxu0
      %2975 = vmatprep.mubr.f32.mxu0 0.0
      %2976 = vmatmul.mubr.f32.gmra.mrb[0].mxu0 %v684
      %v2977 = vpop.f32.mrb[0].mxu0
      %v2978 = vadd.f32 0.0, %v2977
      %v2979 = vpop.f32.mrb[0].mxu0
      %2980 = vmatprep.mubr.f32.mxu0 0.0
      %2981 = vmatmul.mubr.f32.gmra.mrb[0].mxu0 %v2755
      %v2982 = vpop.f32.mrb[0].mxu0
      %v2983 = vadd.f32 0.0, %v2982
      %v2984 = vpop.f32.mrb[0].mxu0
      %2985 = vmatprep.mubr.f32.mxu0 0.0
      %2986 = vmatmul.mubr.f32.gmra.mrb[0].mxu0 %v2758
      %v2987 = vpop.f32.mrb[0].mxu0
      %v2988 = vadd.f32 0.0, %v2987
      %v2989 = vpop.f32.mrb[0].mxu0
      %2990 = vmatprep.mubr.f32.mxu0 0.0
      %2991 = vmatmul.mubr.f32.gmra.mrb[0].mxu0 %v693
      %v2992 = vpop.f32.mrb[0].mxu0
      %v2993 = vadd.f32 0.0, %v2992
      %v2994 = vpop.f32.mrb[0].mxu0
      %2995 = vmatprep.mubr.f32.mxu0 0.0
      %2996 = vmatmul.mubr.f32.gmra.mrb[0].mxu0 %v696
      %v2997 = vpop.f32.mrb[0].mxu0
      %v2998 = vadd.f32 0.0, %v2997
      %v2999 = vpop.f32.mrb[0].mxu0
      %3000 = vmatprep.mubr.f32.mxu0 0.0
      %3001 = vmatmul.mubr.f32.gmra.mrb[0].mxu0 %v699
      %v3002 = vpop.f32.mrb[0].mxu0
      %v3003 = vadd.f32 0.0, %v3002
      %v3004 = vpop.f32.mrb[0].mxu0
      %3005 = vmatprep.mubr.f32.mxu0 0.0
      %3006 = vmatmul.mubr.f32.gmra.mrb[0].mxu0 %v702
      %v3007 = vpop.f32.mrb[0].mxu0
      %v3008 = vadd.f32 0.0, %v3007
      %v3009 = vpop.f32.mrb[0].mxu0
      %3010 = vmatprep.mubr.f32.mxu0 0.0
      %3011 = vmatmul.mubr.f32.gmra.mrb[0].mxu0 %v705
      %v3012 = vpop.f32.mrb[0].mxu0
      %v3013 = vadd.f32 0.0, %v3012
      %v3014 = vpop.f32.mrb[0].mxu0
      %3015 = vmatprep.mubr.f32.mxu0 0.0
      %3016 = vmatmul.mubr.f32.gmra.mrb[0].mxu0 %v708
      %v3017 = vpop.f32.mrb[0].mxu0
      %v3018 = vadd.f32 0.0, %v3017
      %v3019 = vpop.f32.mrb[0].mxu0
      %3020 = vmatprep.mubr.f32.mxu0 0.0
      %3021 = vmatmul.mubr.f32.gmra.mrb[0].mxu0 %v711
      %v3022 = vpop.f32.mrb[0].mxu0
      %v3023 = vadd.f32 0.0, %v3022
      %v3024 = vpop.f32.mrb[0].mxu0
      %3025 = vmatprep.mubr.f32.mxu0 0.0
      %3026 = vmatmul.mubr.f32.gmra.mrb[0].mxu0 %v714
      %v3027 = vpop.f32.mrb[0].mxu0
      %v3028 = vadd.f32 0.0, %v3027
      %v3029 = vpop.f32.mrb[0].mxu0
      %3030 = vmatprep.mubr.f32.mxu0 0.0
      %3031 = vmatmul.mubr.f32.gmra.mrb[0].mxu0 %v717
      %v3032 = vpop.f32.mrb[0].mxu0
      %v3033 = vadd.f32 0.0, %v3032
      %v3034 = vpop.f32.mrb[0].mxu0
      %3035 = vmatprep.mubr.f32.mxu0 0.0
      %3036 = vmatmul.mubr.f32.gmra.mrb[0].mxu0 %v720
      %v3037 = vpop.f32.mrb[0].mxu0
      %v3038 = vadd.f32 0.0, %v3037
      %v3039 = vpop.f32.mrb[0].mxu0
      %3040 = vmatprep.mubr.f32.mxu0 0.0
      %3041 = vmatmul.mubr.f32.gmra.mrb[0].mxu0 %v723
      %v3042 = vpop.f32.mrb[0].mxu0
      %v3043 = vadd.f32 0.0, %v3042
      %v3044 = vpop.f32.mrb[0].mxu0
      %3045 = vmatprep.mubr.f32.mxu0 0.0
      %3046 = vmatmul.mubr.f32.gmra.mrb[0].mxu0 %v726
      %v3047 = vpop.f32.mrb[0].mxu0
      %v3048 = vadd.f32 0.0, %v3047
      %v3049 = vpop.f32.mrb[0].mxu0
      %3050 = vmatprep.mubr.f32.mxu0 0.0
      %3051 = vmatmul.mubr.f32.gmra.mrb[0].mxu0 %v729
      %v3052 = vpop.f32.mrb[0].mxu0
      %v3053 = vadd.f32 0.0, %v3052
      %v3054 = vpop.f32.mrb[0].mxu0
      %3055 = vmatprep.mubr.f32.mxu0 0.0
      %3056 = vmatmul.mubr.f32.gmra.mrb[0].mxu0 %v732
      %v3057 = vpop.f32.mrb[0].mxu0
      %v3058 = vadd.f32 0.0, %v3057
      %v3059 = vpop.f32.mrb[0].mxu0
      %3060 = vmatprep.mubr.f32.mxu0 0.0
      %3061 = vmatmul.mubr.f32.gmra.mrb[0].mxu0 %v735
      %v3062 = vpop.f32.mrb[0].mxu0
      %v3063 = vadd.f32 0.0, %v3062
      %v3064 = vpop.f32.mrb[0].mxu0
      %3065 = vmatprep.mubr.f32.mxu0 0.0
      %3066 = vmatmul.mubr.f32.gmra.mrb[0].mxu0 %v738
      %v3067 = vpop.f32.mrb[0].mxu0
      %v3068 = vadd.f32 0.0, %v3067
      %v3069 = vpop.f32.mrb[0].mxu0
      %3070 = vmatprep.mubr.f32.mxu0 0.0
      %3071 = vmatmul.mubr.f32.gmra.mrb[0].mxu0 %v741
      %v3072 = vpop.f32.mrb[0].mxu0
      %v3073 = vadd.f32 0.0, %v3072
      %v3074 = vpop.f32.mrb[0].mxu0
      %3075 = vmatprep.mubr.f32.mxu0 0.0
      %3076 = vmatmul.mubr.f32.gmra.mrb[0].mxu0 %v744
      %v3077 = vpop.f32.mrb[0].mxu0
      %v3078 = vadd.f32 0.0, %v3077
      %v3079 = vpop.f32.mrb[0].mxu0
      %3080 = vmatprep.mubr.f32.mxu0 0.0
      %3081 = vmatmul.mubr.f32.gmra.mrb[0].mxu0 %v747
      %v3082 = vpop.f32.mrb[0].mxu0
      %v3083 = vadd.f32 0.0, %v3082
      %v3084 = vpop.f32.mrb[0].mxu0
      %3085 = vmatprep.mubr.f32.mxu0 0.0
      %3086 = vmatmul.mubr.f32.gmra.mrb[0].mxu0 %v750
      %v3087 = vpop.f32.mrb[0].mxu0
      %v3088 = vadd.f32 0.0, %v3087
      %v3089 = vpop.f32.mrb[0].mxu0
      %3090 = vmatprep.mubr.f32.mxu0 0.0
      %3091 = vmatmul.mubr.f32.gmra.mrb[0].mxu0 %v753
      %v3092 = vpop.f32.mrb[0].mxu0
      %v3093 = vadd.f32 0.0, %v3092
      %v3094 = vpop.f32.mrb[0].mxu0
      %3095 = vmatprep.mubr.f32.mxu0 0.0
      %3096 = vmatmul.mubr.f32.gmra.mrb[0].mxu0 %v756
      %v3097 = vpop.f32.mrb[0].mxu0
      %v3098 = vadd.f32 0.0, %v3097
      %v3099 = vpop.f32.mrb[0].mxu0
      %3100 = vmatprep.mubr.f32.mxu0 0.0
      %3101 = vmatmul.mubr.f32.gmra.mrb[0].mxu0 %v759
      %v3102 = vpop.f32.mrb[0].mxu0
      %v3103 = vadd.f32 0.0, %v3102
      %v3104 = vpop.f32.mrb[0].mxu0
      %3105 = vmatprep.mubr.f32.mxu0 0.0
      %3106 = vmatmul.mubr.f32.gmra.mrb[0].mxu0 %v762
      %v3107 = vpop.f32.mrb[0].mxu0
      %v3108 = vadd.f32 0.0, %v3107
      %v3109 = vpop.f32.mrb[0].mxu0
      %3110 = vmatprep.mubr.f32.mxu0 0.0
      %3111 = vmatmul.mubr.f32.gmra.mrb[0].mxu0 %v765
      %v3112 = vpop.f32.mrb[0].mxu0
      %v3113 = vadd.f32 0.0, %v3112
      %v3114 = vpop.f32.mrb[0].mxu0
      %3115 = vmatprep.mubr.f32.mxu0 0.0
      %3116 = vmatmul.mubr.f32.gmra.mrb[0].mxu0 %v768
      %v3117 = vpop.f32.mrb[0].mxu0
      %v3118 = vadd.f32 0.0, %v3117
      %v3119 = vpop.f32.mrb[0].mxu0
      %3120 = vmatprep.mubr.f32.mxu0 0.0
      %3121 = vmatmul.mubr.f32.gmra.mrb[0].mxu0 %v771
      %v3122 = vpop.f32.mrb[0].mxu0
      %v3123 = vadd.f32 0.0, %v3122
      %v3124 = vpop.f32.mrb[0].mxu0
      %3125 = vmatprep.mubr.f32.mxu0 0.0
      %3126 = vmatmul.mubr.f32.gmra.mrb[0].mxu0 %v774
      %v3127 = vpop.f32.mrb[0].mxu0
      %v3128 = vadd.f32 0.0, %v3127
      %v3129 = vpop.f32.mrb[0].mxu0
      %3130 = vmatprep.mubr.f32.mxu0 0.0
      %3131 = vmatmul.mubr.f32.gmra.mrb[0].mxu0 %v777
      %v3132 = vpop.f32.mrb[0].mxu0
      %v3133 = vadd.f32 0.0, %v3132
      %v3134 = vpop.f32.mrb[0].mxu0
      %3135 = vmatprep.mubr.f32.mxu0 0.0
      %3136 = vmatmul.mubr.f32.gmra.mrb[0].mxu0 %v780
      %v3137 = vpop.f32.mrb[0].mxu0
      %v3138 = vadd.f32 0.0, %v3137
      %v3139 = vpop.f32.mrb[0].mxu0
      %3140 = vmatprep.mubr.f32.mxu0 0.0
      %3141 = vmatmul.mubr.f32.gmra.mrb[0].mxu0 %v2761
      %v3142 = vpop.f32.mrb[0].mxu0
      %v3143 = vadd.f32 0.0, %v3142
      %v3144 = vpop.f32.mrb[0].mxu0
      %3145 = vmatprep.mubr.f32.mxu0 0.0
      %3146 = vmatmul.mubr.f32.gmra.mrb[0].mxu0 %v2764
      %v3147 = vpop.f32.mrb[0].mxu0
      %v3148 = vadd.f32 0.0, %v3147
      %v3149 = vpop.f32.mrb[0].mxu0
      %3150 = vdwg.mxu0
      %v3151 = vadd.f32 %v2685, %v2833
      %v3152 = vadd.f32 %v2686, %v2838
      %v3153 = vadd.f32 %v2687, %v2843
      %v3154 = vadd.f32 %v2688, %v2848
      %v3155 = vadd.f32 %v2689, %v2853
      %v3156 = vadd.f32 %v2690, %v2858
      %v3157 = vadd.f32 %v2691, %v2863
      %v3158 = vadd.f32 %v2692, %v2868
      %v3159 = vadd.f32 %v2693, %v2873
      %v3160 = vadd.f32 %v2694, %v2878
      %v3161 = vadd.f32 %v2695, %v2883
      %v3162 = vadd.f32 %v2696, %v2888
      %v3163 = vadd.f32 %v2697, %v2893
      %v3164 = vadd.f32 %v2698, %v2898
      %v3165 = vadd.f32 %v2699, %v2903
      %v3166 = vadd.f32 %v2700, %v2908
      %v3167 = vadd.f32 %v2701, %v2913
      %v3168 = vadd.f32 %v2702, %v2918
      %v3169 = vadd.f32 %v2703, %v2923
      %v3170 = vadd.f32 %v2704, %v2928
      %v3171 = vadd.f32 %v2705, %v2933
      %v3172 = vadd.f32 %v2706, %v2938
      %v3173 = vadd.f32 %v2707, %v2943
      %v3174 = vadd.f32 %v2708, %v2948
      %v3175 = vadd.f32 %v2709, %v2953
      %v3176 = vadd.f32 %v2710, %v2958
      %v3177 = vadd.f32 %v2711, %v2963
      %v3178 = vadd.f32 %v2712, %v2968
      %v3179 = vadd.f32 %v2713, %v2973
      %v3180 = vadd.f32 %v2714, %v2978
      %v3181 = vadd.f32 %v2715, %v2983
      %v3182 = vadd.f32 %v2716, %v2988
      %v3183 = vadd.f32 %v2717, %v2993
      %v3184 = vadd.f32 %v2718, %v2998
      %v3185 = vadd.f32 %v2719, %v3003
      %v3186 = vadd.f32 %v2720, %v3008
      %v3187 = vadd.f32 %v2721, %v3013
      %v3188 = vadd.f32 %v2722, %v3018
      %v3189 = vadd.f32 %v2723, %v3023
      %v3190 = vadd.f32 %v2724, %v3028
      %v3191 = vadd.f32 %v2725, %v3033
      %v3192 = vadd.f32 %v2726, %v3038
      %v3193 = vadd.f32 %v2727, %v3043
      %v3194 = vadd.f32 %v2728, %v3048
      %v3195 = vadd.f32 %v2729, %v3053
      %v3196 = vadd.f32 %v2730, %v3058
      %v3197 = vadd.f32 %v2731, %v3063
      %v3198 = vadd.f32 %v2732, %v3068
      %v3199 = vadd.f32 %v2733, %v3073
      %v3200 = vadd.f32 %v2734, %v3078
      %v3201 = vadd.f32 %v2735, %v3083
      %v3202 = vadd.f32 %v2736, %v3088
      %v3203 = vadd.f32 %v2737, %v3093
      %v3204 = vadd.f32 %v2738, %v3098
      %v3205 = vadd.f32 %v2739, %v3103
      %v3206 = vadd.f32 %v2740, %v3108
      %v3207 = vadd.f32 %v2741, %v3113
      %v3208 = vadd.f32 %v2742, %v3118
      %v3209 = vadd.f32 %v2743, %v3123
      %v3210 = vadd.f32 %v2744, %v3128
      %v3211 = vadd.f32 %v2745, %v3133
      %v3212 = vadd.f32 %v2746, %v3138
      %v3213 = vadd.f32 %v2747, %v3143
      %v3214 = vadd.f32 %v2748, %v3148
      %v3217 = vrot.slane %v461, 1
      %v3218 = vrot.slane %v462, 1
      %v3219 = vsel %vm1263, %v3217, %v3218
      %v3220 = vrot.slane %v463, 1
      %v3221 = vsel %vm1263, %v3218, %v3220
      %v3222 = vrot.slane %v515, 1
      %v3223 = vrot.slane %v516, 1
      %v3224 = vsel %vm1263, %v3222, %v3223
      %v3225 = vrot.slane %v517, 1
      %v3226 = vsel %vm1263, %v3223, %v3225
      %s3227 = scalar_lea.vmem %s1, 128
      %v3228 = vld [vmem:[%s3227] sm:$0xff]
      %v3229 = vld [vmem:[%s3227 + $0x8] sm:$0xff]
      %v3230 = vld [vmem:[%s3227 + $0x10] sm:$0xff]
      %v3231 = vld [vmem:[%s3227 + $0x18] sm:$0xff]
      %v3232 = vsel %vm589, %v3219, 0
      %v3234 = vsel %vm589, %v3221, 0
      %v3236 = vsel %vm589, %v3224, 0
      %v3238 = vsel %vm589, %v3226, 0
      %3240 = vmatprep.subr.mxu0 0.0
      %3241 = vmatpush1.msra.mxu0 %v3228
      %3242 = vmatprep.subr.mxu0 0.0
      %3243 = vmatpush1.msra.mxu0 %v3229
      %3244 = vmatprep.subr.mxu0 0.0
      %3245 = vmatpush1.msra.mxu0 %v3230
      %3246 = vmatprep.subr.mxu0 0.0
      %3247 = vmatpush1.msra.mxu0 %v3231
      %3248 = vmatprep.subr.mxu0 0.0
      %3249 = vmatpush1.msra.mxu0 0.0
      %3250 = vmatprep.subr.mxu0 0.0
      %3251 = vmatpush1.msra.mxu0 0.0
      %3252 = vmatprep.subr.mxu0 0.0
      %3253 = vmatpush1.msra.mxu0 0.0
      %3254 = vmatprep.subr.mxu0 0.0
      %3255 = vmatpush1.msra.mxu0 0.0
      %3256 = vmatprep.subr.mxu0 0.0
      %3257 = vmatpush1.msra.mxu0 0.0
      %3258 = vmatprep.subr.mxu0 0.0
      %3259 = vmatpush1.msra.mxu0 0.0
      %3260 = vmatprep.subr.mxu0 0.0
      %3261 = vmatpush1.msra.mxu0 0.0
      %3262 = vmatprep.subr.mxu0 0.0
      %3263 = vmatpush1.msra.mxu0 0.0
      %3264 = vmatprep.subr.mxu0 0.0
      %3265 = vmatpush1.msra.mxu0 0.0
      %3266 = vmatprep.subr.mxu0 0.0
      %3267 = vmatpush1.msra.mxu0 0.0
      %3268 = vmatprep.subr.mxu0 0.0
      %3269 = vmatpush1.msra.mxu0 0.0
      %3270 = vmatprep.subr.mxu0 0.0
      %3271 = vmatpush1.msra.mxu0 0.0
      %3272 = vmatprep.subr.mxu0 0.0
      %3273 = vmatpush1.msra.mxu0 0.0
      %3274 = vmatprep.subr.mxu0 0.0
      %3275 = vmatpush1.msra.mxu0 0.0
      %3276 = vmatprep.subr.mxu0 0.0
      %3277 = vmatpush1.msra.mxu0 0.0
      %3278 = vmatprep.subr.mxu0 0.0
      %3279 = vmatpush1.msra.mxu0 0.0
      %3280 = vmatprep.subr.mxu0 0.0
      %3281 = vmatpush1.msra.mxu0 0.0
      %3282 = vmatprep.subr.mxu0 0.0
      %3283 = vmatpush1.msra.mxu0 0.0
      %3284 = vmatprep.subr.mxu0 0.0
      %3285 = vmatpush1.msra.mxu0 0.0
      %3286 = vmatprep.subr.mxu0 0.0
      %3287 = vmatpush1.msra.mxu0 0.0
      %3288 = vmatprep.subr.mxu0 0.0
      %3289 = vmatpush1.msra.mxu0 0.0
      %3290 = vmatprep.subr.mxu0 0.0
      %3291 = vmatpush1.msra.mxu0 0.0
      %3292 = vmatprep.subr.mxu0 0.0
      %3293 = vmatpush1.msra.mxu0 0.0
      %3294 = vmatprep.subr.mxu0 0.0
      %3295 = vmatpush1.msra.mxu0 0.0
      %3296 = vmatprep.subr.mxu0 0.0
      %3297 = vmatpush1.msra.mxu0 0.0
      %3298 = vmatprep.subr.mxu0 0.0
      %3299 = vmatpush1.msra.mxu0 0.0
      %3300 = vmatprep.subr.mxu0 0.0
      %3301 = vmatpush1.msra.mxu0 0.0
      %3302 = vmatprep.subr.mxu0 0.0
      %3303 = vmatpush1.msra.mxu0 0.0
      %3304 = vmatprep.mubr.f32.mxu0 0.0
      %3305 = vmatmul.mubr.f32.gmra.mrb[0].mxu0 %v1433
      %v3306 = vpop.f32.mrb[0].mxu0
      %v3307 = vadd.f32 0.0, %v3306
      %v3308 = vpop.f32.mrb[0].mxu0
      %3309 = vmatprep.mubr.f32.mxu0 0.0
      %3310 = vmatmul.mubr.f32.gmra.mrb[0].mxu0 %v1435
      %v3311 = vpop.f32.mrb[0].mxu0
      %v3312 = vadd.f32 0.0, %v3311
      %v3313 = vpop.f32.mrb[0].mxu0
      %3314 = vmatprep.mubr.f32.mxu0 0.0
      %3315 = vmatmul.mubr.f32.gmra.mrb[0].mxu0 %v1437
      %v3316 = vpop.f32.mrb[0].mxu0
      %v3317 = vadd.f32 0.0, %v3316
      %v3318 = vpop.f32.mrb[0].mxu0
      %3319 = vmatprep.mubr.f32.mxu0 0.0
      %3320 = vmatmul.mubr.f32.gmra.mrb[0].mxu0 %v1439
      %v3321 = vpop.f32.mrb[0].mxu0
      %v3322 = vadd.f32 0.0, %v3321
      %v3323 = vpop.f32.mrb[0].mxu0
      %3324 = vmatprep.mubr.f32.mxu0 0.0
      %3325 = vmatmul.mubr.f32.gmra.mrb[0].mxu0 %v1441
      %v3326 = vpop.f32.mrb[0].mxu0
      %v3327 = vadd.f32 0.0, %v3326
      %v3328 = vpop.f32.mrb[0].mxu0
      %3329 = vmatprep.mubr.f32.mxu0 0.0
      %3330 = vmatmul.mubr.f32.gmra.mrb[0].mxu0 %v1443
      %v3331 = vpop.f32.mrb[0].mxu0
      %v3332 = vadd.f32 0.0, %v3331
      %v3333 = vpop.f32.mrb[0].mxu0
      %3334 = vmatprep.mubr.f32.mxu0 0.0
      %3335 = vmatmul.mubr.f32.gmra.mrb[0].mxu0 %v1445
      %v3336 = vpop.f32.mrb[0].mxu0
      %v3337 = vadd.f32 0.0, %v3336
      %v3338 = vpop.f32.mrb[0].mxu0
      %3339 = vmatprep.mubr.f32.mxu0 0.0
      %3340 = vmatmul.mubr.f32.gmra.mrb[0].mxu0 %v1447
      %v3341 = vpop.f32.mrb[0].mxu0
      %v3342 = vadd.f32 0.0, %v3341
      %v3343 = vpop.f32.mrb[0].mxu0
      %3344 = vmatprep.mubr.f32.mxu0 0.0
      %3345 = vmatmul.mubr.f32.gmra.mrb[0].mxu0 %v1449
      %v3346 = vpop.f32.mrb[0].mxu0
      %v3347 = vadd.f32 0.0, %v3346
      %v3348 = vpop.f32.mrb[0].mxu0
      %3349 = vmatprep.mubr.f32.mxu0 0.0
      %3350 = vmatmul.mubr.f32.gmra.mrb[0].mxu0 %v1451
      %v3351 = vpop.f32.mrb[0].mxu0
      %v3352 = vadd.f32 0.0, %v3351
      %v3353 = vpop.f32.mrb[0].mxu0
      %3354 = vmatprep.mubr.f32.mxu0 0.0
      %3355 = vmatmul.mubr.f32.gmra.mrb[0].mxu0 %v1453
      %v3356 = vpop.f32.mrb[0].mxu0
      %v3357 = vadd.f32 0.0, %v3356
      %v3358 = vpop.f32.mrb[0].mxu0
      %3359 = vmatprep.mubr.f32.mxu0 0.0
      %3360 = vmatmul.mubr.f32.gmra.mrb[0].mxu0 %v1455
      %v3361 = vpop.f32.mrb[0].mxu0
      %v3362 = vadd.f32 0.0, %v3361
      %v3363 = vpop.f32.mrb[0].mxu0
      %3364 = vmatprep.mubr.f32.mxu0 0.0
      %3365 = vmatmul.mubr.f32.gmra.mrb[0].mxu0 %v1457
      %v3366 = vpop.f32.mrb[0].mxu0
      %v3367 = vadd.f32 0.0, %v3366
      %v3368 = vpop.f32.mrb[0].mxu0
      %3369 = vmatprep.mubr.f32.mxu0 0.0
      %3370 = vmatmul.mubr.f32.gmra.mrb[0].mxu0 %v1459
      %v3371 = vpop.f32.mrb[0].mxu0
      %v3372 = vadd.f32 0.0, %v3371
      %v3373 = vpop.f32.mrb[0].mxu0
      %3374 = vmatprep.mubr.f32.mxu0 0.0
      %3375 = vmatmul.mubr.f32.gmra.mrb[0].mxu0 %v1461
      %v3376 = vpop.f32.mrb[0].mxu0
      %v3377 = vadd.f32 0.0, %v3376
      %v3378 = vpop.f32.mrb[0].mxu0
      %3379 = vmatprep.mubr.f32.mxu0 0.0
      %3380 = vmatmul.mubr.f32.gmra.mrb[0].mxu0 %v1463
      %v3381 = vpop.f32.mrb[0].mxu0
      %v3382 = vadd.f32 0.0, %v3381
      %v3383 = vpop.f32.mrb[0].mxu0
      %3384 = vmatprep.mubr.f32.mxu0 0.0
      %3385 = vmatmul.mubr.f32.gmra.mrb[0].mxu0 %v1465
      %v3386 = vpop.f32.mrb[0].mxu0
      %v3387 = vadd.f32 0.0, %v3386
      %v3388 = vpop.f32.mrb[0].mxu0
      %3389 = vmatprep.mubr.f32.mxu0 0.0
      %3390 = vmatmul.mubr.f32.gmra.mrb[0].mxu0 %v1467
      %v3391 = vpop.f32.mrb[0].mxu0
      %v3392 = vadd.f32 0.0, %v3391
      %v3393 = vpop.f32.mrb[0].mxu0
      %3394 = vmatprep.mubr.f32.mxu0 0.0
      %3395 = vmatmul.mubr.f32.gmra.mrb[0].mxu0 %v1469
      %v3396 = vpop.f32.mrb[0].mxu0
      %v3397 = vadd.f32 0.0, %v3396
      %v3398 = vpop.f32.mrb[0].mxu0
      %3399 = vmatprep.mubr.f32.mxu0 0.0
      %3400 = vmatmul.mubr.f32.gmra.mrb[0].mxu0 %v1471
      %v3401 = vpop.f32.mrb[0].mxu0
      %v3402 = vadd.f32 0.0, %v3401
      %v3403 = vpop.f32.mrb[0].mxu0
      %3404 = vmatprep.mubr.f32.mxu0 0.0
      %3405 = vmatmul.mubr.f32.gmra.mrb[0].mxu0 %v1473
      %v3406 = vpop.f32.mrb[0].mxu0
      %v3407 = vadd.f32 0.0, %v3406
      %v3408 = vpop.f32.mrb[0].mxu0
      %3409 = vmatprep.mubr.f32.mxu0 0.0
      %3410 = vmatmul.mubr.f32.gmra.mrb[0].mxu0 %v1475
      %v3411 = vpop.f32.mrb[0].mxu0
      %v3412 = vadd.f32 0.0, %v3411
      %v3413 = vpop.f32.mrb[0].mxu0
      %3414 = vmatprep.mubr.f32.mxu0 0.0
      %3415 = vmatmul.mubr.f32.gmra.mrb[0].mxu0 %v1477
      %v3416 = vpop.f32.mrb[0].mxu0
      %v3417 = vadd.f32 0.0, %v3416
      %v3418 = vpop.f32.mrb[0].mxu0
      %3419 = vmatprep.mubr.f32.mxu0 0.0
      %3420 = vmatmul.mubr.f32.gmra.mrb[0].mxu0 %v1479
      %v3421 = vpop.f32.mrb[0].mxu0
      %v3422 = vadd.f32 0.0, %v3421
      %v3423 = vpop.f32.mrb[0].mxu0
      %3424 = vmatprep.mubr.f32.mxu0 0.0
      %3425 = vmatmul.mubr.f32.gmra.mrb[0].mxu0 %v1481
      %v3426 = vpop.f32.mrb[0].mxu0
      %v3427 = vadd.f32 0.0, %v3426
      %v3428 = vpop.f32.mrb[0].mxu0
      %3429 = vmatprep.mubr.f32.mxu0 0.0
      %3430 = vmatmul.mubr.f32.gmra.mrb[0].mxu0 %v1483
      %v3431 = vpop.f32.mrb[0].mxu0
      %v3432 = vadd.f32 0.0, %v3431
      %v3433 = vpop.f32.mrb[0].mxu0
      %3434 = vmatprep.mubr.f32.mxu0 0.0
      %3435 = vmatmul.mubr.f32.gmra.mrb[0].mxu0 %v1485
      %v3436 = vpop.f32.mrb[0].mxu0
      %v3437 = vadd.f32 0.0, %v3436
      %v3438 = vpop.f32.mrb[0].mxu0
      %3439 = vmatprep.mubr.f32.mxu0 0.0
      %3440 = vmatmul.mubr.f32.gmra.mrb[0].mxu0 %v1487
      %v3441 = vpop.f32.mrb[0].mxu0
      %v3442 = vadd.f32 0.0, %v3441
      %v3443 = vpop.f32.mrb[0].mxu0
      %3444 = vmatprep.mubr.f32.mxu0 0.0
      %3445 = vmatmul.mubr.f32.gmra.mrb[0].mxu0 %v1489
      %v3446 = vpop.f32.mrb[0].mxu0
      %v3447 = vadd.f32 0.0, %v3446
      %v3448 = vpop.f32.mrb[0].mxu0
      %3449 = vmatprep.mubr.f32.mxu0 0.0
      %3450 = vmatmul.mubr.f32.gmra.mrb[0].mxu0 %v1491
      %v3451 = vpop.f32.mrb[0].mxu0
      %v3452 = vadd.f32 0.0, %v3451
      %v3453 = vpop.f32.mrb[0].mxu0
      %3454 = vmatprep.mubr.f32.mxu0 0.0
      %3455 = vmatmul.mubr.f32.gmra.mrb[0].mxu0 %v3232
      %v3456 = vpop.f32.mrb[0].mxu0
      %v3457 = vadd.f32 0.0, %v3456
      %v3458 = vpop.f32.mrb[0].mxu0
      %3459 = vmatprep.mubr.f32.mxu0 0.0
      %3460 = vmatmul.mubr.f32.gmra.mrb[0].mxu0 %v3234
      %v3461 = vpop.f32.mrb[0].mxu0
      %v3462 = vadd.f32 0.0, %v3461
      %v3463 = vpop.f32.mrb[0].mxu0
      %3464 = vmatprep.mubr.f32.mxu0 0.0
      %3465 = vmatmul.mubr.f32.gmra.mrb[0].mxu0 %v1497
      %v3466 = vpop.f32.mrb[0].mxu0
      %v3467 = vadd.f32 0.0, %v3466
      %v3468 = vpop.f32.mrb[0].mxu0
      %3469 = vmatprep.mubr.f32.mxu0 0.0
      %3470 = vmatmul.mubr.f32.gmra.mrb[0].mxu0 %v1499
      %v3471 = vpop.f32.mrb[0].mxu0
      %v3472 = vadd.f32 0.0, %v3471
      %v3473 = vpop.f32.mrb[0].mxu0
      %3474 = vmatprep.mubr.f32.mxu0 0.0
      %3475 = vmatmul.mubr.f32.gmra.mrb[0].mxu0 %v1501
      %v3476 = vpop.f32.mrb[0].mxu0
      %v3477 = vadd.f32 0.0, %v3476
      %v3478 = vpop.f32.mrb[0].mxu0
      %3479 = vmatprep.mubr.f32.mxu0 0.0
      %3480 = vmatmul.mubr.f32.gmra.mrb[0].mxu0 %v1503
      %v3481 = vpop.f32.mrb[0].mxu0
      %v3482 = vadd.f32 0.0, %v3481
      %v3483 = vpop.f32.mrb[0].mxu0
      %3484 = vmatprep.mubr.f32.mxu0 0.0
      %3485 = vmatmul.mubr.f32.gmra.mrb[0].mxu0 %v1505
      %v3486 = vpop.f32.mrb[0].mxu0
      %v3487 = vadd.f32 0.0, %v3486
      %v3488 = vpop.f32.mrb[0].mxu0
      %3489 = vmatprep.mubr.f32.mxu0 0.0
      %3490 = vmatmul.mubr.f32.gmra.mrb[0].mxu0 %v1507
      %v3491 = vpop.f32.mrb[0].mxu0
      %v3492 = vadd.f32 0.0, %v3491
      %v3493 = vpop.f32.mrb[0].mxu0
      %3494 = vmatprep.mubr.f32.mxu0 0.0
      %3495 = vmatmul.mubr.f32.gmra.mrb[0].mxu0 %v1509
      %v3496 = vpop.f32.mrb[0].mxu0
      %v3497 = vadd.f32 0.0, %v3496
      %v3498 = vpop.f32.mrb[0].mxu0
      %3499 = vmatprep.mubr.f32.mxu0 0.0
      %3500 = vmatmul.mubr.f32.gmra.mrb[0].mxu0 %v1511
      %v3501 = vpop.f32.mrb[0].mxu0
      %v3502 = vadd.f32 0.0, %v3501
      %v3503 = vpop.f32.mrb[0].mxu0
      %3504 = vmatprep.mubr.f32.mxu0 0.0
      %3505 = vmatmul.mubr.f32.gmra.mrb[0].mxu0 %v1513
      %v3506 = vpop.f32.mrb[0].mxu0
      %v3507 = vadd.f32 0.0, %v3506
      %v3508 = vpop.f32.mrb[0].mxu0
      %3509 = vmatprep.mubr.f32.mxu0 0.0
      %3510 = vmatmul.mubr.f32.gmra.mrb[0].mxu0 %v1515
      %v3511 = vpop.f32.mrb[0].mxu0
      %v3512 = vadd.f32 0.0, %v3511
      %v3513 = vpop.f32.mrb[0].mxu0
      %3514 = vmatprep.mubr.f32.mxu0 0.0
      %3515 = vmatmul.mubr.f32.gmra.mrb[0].mxu0 %v1517
      %v3516 = vpop.f32.mrb[0].mxu0
      %v3517 = vadd.f32 0.0, %v3516
      %v3518 = vpop.f32.mrb[0].mxu0
      %3519 = vmatprep.mubr.f32.mxu0 0.0
      %3520 = vmatmul.mubr.f32.gmra.mrb[0].mxu0 %v1519
      %v3521 = vpop.f32.mrb[0].mxu0
      %v3522 = vadd.f32 0.0, %v3521
      %v3523 = vpop.f32.mrb[0].mxu0
      %3524 = vmatprep.mubr.f32.mxu0 0.0
      %3525 = vmatmul.mubr.f32.gmra.mrb[0].mxu0 %v1521
      %v3526 = vpop.f32.mrb[0].mxu0
      %v3527 = vadd.f32 0.0, %v3526
      %v3528 = vpop.f32.mrb[0].mxu0
      %3529 = vmatprep.mubr.f32.mxu0 0.0
      %3530 = vmatmul.mubr.f32.gmra.mrb[0].mxu0 %v1523
      %v3531 = vpop.f32.mrb[0].mxu0
      %v3532 = vadd.f32 0.0, %v3531
      %v3533 = vpop.f32.mrb[0].mxu0
      %3534 = vmatprep.mubr.f32.mxu0 0.0
      %3535 = vmatmul.mubr.f32.gmra.mrb[0].mxu0 %v1525
      %v3536 = vpop.f32.mrb[0].mxu0
      %v3537 = vadd.f32 0.0, %v3536
      %v3538 = vpop.f32.mrb[0].mxu0
      %3539 = vmatprep.mubr.f32.mxu0 0.0
      %3540 = vmatmul.mubr.f32.gmra.mrb[0].mxu0 %v1527
      %v3541 = vpop.f32.mrb[0].mxu0
      %v3542 = vadd.f32 0.0, %v3541
      %v3543 = vpop.f32.mrb[0].mxu0
      %3544 = vmatprep.mubr.f32.mxu0 0.0
      %3545 = vmatmul.mubr.f32.gmra.mrb[0].mxu0 %v1529
      %v3546 = vpop.f32.mrb[0].mxu0
      %v3547 = vadd.f32 0.0, %v3546
      %v3548 = vpop.f32.mrb[0].mxu0
      %3549 = vmatprep.mubr.f32.mxu0 0.0
      %3550 = vmatmul.mubr.f32.gmra.mrb[0].mxu0 %v1531
      %v3551 = vpop.f32.mrb[0].mxu0
      %v3552 = vadd.f32 0.0, %v3551
      %v3553 = vpop.f32.mrb[0].mxu0
      %3554 = vmatprep.mubr.f32.mxu0 0.0
      %3555 = vmatmul.mubr.f32.gmra.mrb[0].mxu0 %v1533
      %v3556 = vpop.f32.mrb[0].mxu0
      %v3557 = vadd.f32 0.0, %v3556
      %v3558 = vpop.f32.mrb[0].mxu0
      %3559 = vmatprep.mubr.f32.mxu0 0.0
      %3560 = vmatmul.mubr.f32.gmra.mrb[0].mxu0 %v1535
      %v3561 = vpop.f32.mrb[0].mxu0
      %v3562 = vadd.f32 0.0, %v3561
      %v3563 = vpop.f32.mrb[0].mxu0
      %3564 = vmatprep.mubr.f32.mxu0 0.0
      %3565 = vmatmul.mubr.f32.gmra.mrb[0].mxu0 %v1537
      %v3566 = vpop.f32.mrb[0].mxu0
      %v3567 = vadd.f32 0.0, %v3566
      %v3568 = vpop.f32.mrb[0].mxu0
      %3569 = vmatprep.mubr.f32.mxu0 0.0
      %3570 = vmatmul.mubr.f32.gmra.mrb[0].mxu0 %v1539
      %v3571 = vpop.f32.mrb[0].mxu0
      %v3572 = vadd.f32 0.0, %v3571
      %v3573 = vpop.f32.mrb[0].mxu0
      %3574 = vmatprep.mubr.f32.mxu0 0.0
      %3575 = vmatmul.mubr.f32.gmra.mrb[0].mxu0 %v1541
      %v3576 = vpop.f32.mrb[0].mxu0
      %v3577 = vadd.f32 0.0, %v3576
      %v3578 = vpop.f32.mrb[0].mxu0
      %3579 = vmatprep.mubr.f32.mxu0 0.0
      %3580 = vmatmul.mubr.f32.gmra.mrb[0].mxu0 %v1543
      %v3581 = vpop.f32.mrb[0].mxu0
      %v3582 = vadd.f32 0.0, %v3581
      %v3583 = vpop.f32.mrb[0].mxu0
      %3584 = vmatprep.mubr.f32.mxu0 0.0
      %3585 = vmatmul.mubr.f32.gmra.mrb[0].mxu0 %v1545
      %v3586 = vpop.f32.mrb[0].mxu0
      %v3587 = vadd.f32 0.0, %v3586
      %v3588 = vpop.f32.mrb[0].mxu0
      %3589 = vmatprep.mubr.f32.mxu0 0.0
      %3590 = vmatmul.mubr.f32.gmra.mrb[0].mxu0 %v1547
      %v3591 = vpop.f32.mrb[0].mxu0
      %v3592 = vadd.f32 0.0, %v3591
      %v3593 = vpop.f32.mrb[0].mxu0
      %3594 = vmatprep.mubr.f32.mxu0 0.0
      %3595 = vmatmul.mubr.f32.gmra.mrb[0].mxu0 %v1549
      %v3596 = vpop.f32.mrb[0].mxu0
      %v3597 = vadd.f32 0.0, %v3596
      %v3598 = vpop.f32.mrb[0].mxu0
      %3599 = vmatprep.mubr.f32.mxu0 0.0
      %3600 = vmatmul.mubr.f32.gmra.mrb[0].mxu0 %v1551
      %v3601 = vpop.f32.mrb[0].mxu0
      %v3602 = vadd.f32 0.0, %v3601
      %v3603 = vpop.f32.mrb[0].mxu0
      %3604 = vmatprep.mubr.f32.mxu0 0.0
      %3605 = vmatmul.mubr.f32.gmra.mrb[0].mxu0 %v1553
      %v3606 = vpop.f32.mrb[0].mxu0
      %v3607 = vadd.f32 0.0, %v3606
      %v3608 = vpop.f32.mrb[0].mxu0
      %3609 = vmatprep.mubr.f32.mxu0 0.0
      %3610 = vmatmul.mubr.f32.gmra.mrb[0].mxu0 %v1555
      %v3611 = vpop.f32.mrb[0].mxu0
      %v3612 = vadd.f32 0.0, %v3611
      %v3613 = vpop.f32.mrb[0].mxu0
      %3614 = vmatprep.mubr.f32.mxu0 0.0
      %3615 = vmatmul.mubr.f32.gmra.mrb[0].mxu0 %v3236
      %v3616 = vpop.f32.mrb[0].mxu0
      %v3617 = vadd.f32 0.0, %v3616
      %v3618 = vpop.f32.mrb[0].mxu0
      %3619 = vmatprep.mubr.f32.mxu0 0.0
      %3620 = vmatmul.mubr.f32.gmra.mrb[0].mxu0 %v3238
      %v3621 = vpop.f32.mrb[0].mxu0
      %v3622 = vadd.f32 0.0, %v3621
      %v3623 = vpop.f32.mrb[0].mxu0
      %3624 = vdwg.mxu0
      %v3625 = vadd.f32 %v3151, %v3307
      %v3626 = vadd.f32 %v3152, %v3312
      %v3627 = vadd.f32 %v3153, %v3317
      %v3628 = vadd.f32 %v3154, %v3322
      %v3629 = vadd.f32 %v3155, %v3327
      %v3630 = vadd.f32 %v3156, %v3332
      %v3631 = vadd.f32 %v3157, %v3337
      %v3632 = vadd.f32 %v3158, %v3342
      %v3633 = vadd.f32 %v3159, %v3347
      %v3634 = vadd.f32 %v3160, %v3352
      %v3635 = vadd.f32 %v3161, %v3357
      %v3636 = vadd.f32 %v3162, %v3362
      %v3637 = vadd.f32 %v3163, %v3367
      %v3638 = vadd.f32 %v3164, %v3372
      %v3639 = vadd.f32 %v3165, %v3377
      %v3640 = vadd.f32 %v3166, %v3382
      %v3641 = vadd.f32 %v3167, %v3387
      %v3642 = vadd.f32 %v3168, %v3392
      %v3643 = vadd.f32 %v3169, %v3397
      %v3644 = vadd.f32 %v3170, %v3402
      %v3645 = vadd.f32 %v3171, %v3407
      %v3646 = vadd.f32 %v3172, %v3412
      %v3647 = vadd.f32 %v3173, %v3417
      %v3648 = vadd.f32 %v3174, %v3422
      %v3649 = vadd.f32 %v3175, %v3427
      %v3650 = vadd.f32 %v3176, %v3432
      %v3651 = vadd.f32 %v3177, %v3437
      %v3652 = vadd.f32 %v3178, %v3442
      %v3653 = vadd.f32 %v3179, %v3447
      %v3654 = vadd.f32 %v3180, %v3452
      %v3655 = vadd.f32 %v3181, %v3457
      %v3656 = vadd.f32 %v3182, %v3462
      %v3657 = vadd.f32 %v3183, %v3467
      %v3658 = vadd.f32 %v3184, %v3472
      %v3659 = vadd.f32 %v3185, %v3477
      %v3660 = vadd.f32 %v3186, %v3482
      %v3661 = vadd.f32 %v3187, %v3487
      %v3662 = vadd.f32 %v3188, %v3492
      %v3663 = vadd.f32 %v3189, %v3497
      %v3664 = vadd.f32 %v3190, %v3502
      %v3665 = vadd.f32 %v3191, %v3507
      %v3666 = vadd.f32 %v3192, %v3512
      %v3667 = vadd.f32 %v3193, %v3517
      %v3668 = vadd.f32 %v3194, %v3522
      %v3669 = vadd.f32 %v3195, %v3527
      %v3670 = vadd.f32 %v3196, %v3532
      %v3671 = vadd.f32 %v3197, %v3537
      %v3672 = vadd.f32 %v3198, %v3542
      %v3673 = vadd.f32 %v3199, %v3547
      %v3674 = vadd.f32 %v3200, %v3552
      %v3675 = vadd.f32 %v3201, %v3557
      %v3676 = vadd.f32 %v3202, %v3562
      %v3677 = vadd.f32 %v3203, %v3567
      %v3678 = vadd.f32 %v3204, %v3572
      %v3679 = vadd.f32 %v3205, %v3577
      %v3680 = vadd.f32 %v3206, %v3582
      %v3681 = vadd.f32 %v3207, %v3587
      %v3682 = vadd.f32 %v3208, %v3592
      %v3683 = vadd.f32 %v3209, %v3597
      %v3684 = vadd.f32 %v3210, %v3602
      %v3685 = vadd.f32 %v3211, %v3607
      %v3686 = vadd.f32 %v3212, %v3612
      %v3687 = vadd.f32 %v3213, %v3617
      %v3688 = vadd.f32 %v3214, %v3622
      %v3689 = vrot.slane %v461, 2
      %v3690 = vrot.slane %v462, 2
      %v3691 = vsel %vm2006, %v3689, %v3690
      %v3692 = vrot.slane %v463, 2
      %v3693 = vsel %vm2006, %v3690, %v3692
      %v3694 = vrot.slane %v515, 2
      %v3695 = vrot.slane %v516, 2
      %v3696 = vsel %vm2006, %v3694, %v3695
      %v3697 = vrot.slane %v517, 2
      %v3698 = vsel %vm2006, %v3695, %v3697
      %s3699 = scalar_lea.vmem %s1, 160
      %v3700 = vld [vmem:[%s3699] sm:$0xff]
      %v3701 = vld [vmem:[%s3699 + $0x8] sm:$0xff]
      %v3702 = vld [vmem:[%s3699 + $0x10] sm:$0xff]
      %v3703 = vld [vmem:[%s3699 + $0x18] sm:$0xff]
      %v3704 = vsel %vm589, %v3691, 0
      %v3706 = vsel %vm589, %v3693, 0
      %v3708 = vsel %vm589, %v3696, 0
      %v3710 = vsel %vm589, %v3698, 0
      %3712 = vmatprep.subr.mxu0 0.0
      %3713 = vmatpush1.msra.mxu0 %v3700
      %3714 = vmatprep.subr.mxu0 0.0
      %3715 = vmatpush1.msra.mxu0 %v3701
      %3716 = vmatprep.subr.mxu0 0.0
      %3717 = vmatpush1.msra.mxu0 %v3702
      %3718 = vmatprep.subr.mxu0 0.0
      %3719 = vmatpush1.msra.mxu0 %v3703
      %3720 = vmatprep.subr.mxu0 0.0
      %3721 = vmatpush1.msra.mxu0 0.0
      %3722 = vmatprep.subr.mxu0 0.0
      %3723 = vmatpush1.msra.mxu0 0.0
      %3724 = vmatprep.subr.mxu0 0.0
      %3725 = vmatpush1.msra.mxu0 0.0
      %3726 = vmatprep.subr.mxu0 0.0
      %3727 = vmatpush1.msra.mxu0 0.0
      %3728 = vmatprep.subr.mxu0 0.0
      %3729 = vmatpush1.msra.mxu0 0.0
      %3730 = vmatprep.subr.mxu0 0.0
      %3731 = vmatpush1.msra.mxu0 0.0
      %3732 = vmatprep.subr.mxu0 0.0
      %3733 = vmatpush1.msra.mxu0 0.0
      %3734 = vmatprep.subr.mxu0 0.0
      %3735 = vmatpush1.msra.mxu0 0.0
      %3736 = vmatprep.subr.mxu0 0.0
      %3737 = vmatpush1.msra.mxu0 0.0
      %3738 = vmatprep.subr.mxu0 0.0
      %3739 = vmatpush1.msra.mxu0 0.0
      %3740 = vmatprep.subr.mxu0 0.0
      %3741 = vmatpush1.msra.mxu0 0.0
      %3742 = vmatprep.subr.mxu0 0.0
      %3743 = vmatpush1.msra.mxu0 0.0
      %3744 = vmatprep.subr.mxu0 0.0
      %3745 = vmatpush1.msra.mxu0 0.0
      %3746 = vmatprep.subr.mxu0 0.0
      %3747 = vmatpush1.msra.mxu0 0.0
      %3748 = vmatprep.subr.mxu0 0.0
      %3749 = vmatpush1.msra.mxu0 0.0
      %3750 = vmatprep.subr.mxu0 0.0
      %3751 = vmatpush1.msra.mxu0 0.0
      %3752 = vmatprep.subr.mxu0 0.0
      %3753 = vmatpush1.msra.mxu0 0.0
      %3754 = vmatprep.subr.mxu0 0.0
      %3755 = vmatpush1.msra.mxu0 0.0
      %3756 = vmatprep.subr.mxu0 0.0
      %3757 = vmatpush1.msra.mxu0 0.0
      %3758 = vmatprep.subr.mxu0 0.0
      %3759 = vmatpush1.msra.mxu0 0.0
      %3760 = vmatprep.subr.mxu0 0.0
      %3761 = vmatpush1.msra.mxu0 0.0
      %3762 = vmatprep.subr.mxu0 0.0
      %3763 = vmatpush1.msra.mxu0 0.0
      %3764 = vmatprep.subr.mxu0 0.0
      %3765 = vmatpush1.msra.mxu0 0.0
      %3766 = vmatprep.subr.mxu0 0.0
      %3767 = vmatpush1.msra.mxu0 0.0
      %3768 = vmatprep.subr.mxu0 0.0
      %3769 = vmatpush1.msra.mxu0 0.0
      %3770 = vmatprep.subr.mxu0 0.0
      %3771 = vmatpush1.msra.mxu0 0.0
      %3772 = vmatprep.subr.mxu0 0.0
      %3773 = vmatpush1.msra.mxu0 0.0
      %3774 = vmatprep.subr.mxu0 0.0
      %3775 = vmatpush1.msra.mxu0 0.0
      %3776 = vmatprep.mubr.f32.mxu0 0.0
      %3777 = vmatmul.mubr.f32.gmra.mrb[0].mxu0 %v2176
      %v3778 = vpop.f32.mrb[0].mxu0
      %v3779 = vadd.f32 0.0, %v3778
      %v3780 = vpop.f32.mrb[0].mxu0
      %3781 = vmatprep.mubr.f32.mxu0 0.0
      %3782 = vmatmul.mubr.f32.gmra.mrb[0].mxu0 %v2178
      %v3783 = vpop.f32.mrb[0].mxu0
      %v3784 = vadd.f32 0.0, %v3783
      %v3785 = vpop.f32.mrb[0].mxu0
      %3786 = vmatprep.mubr.f32.mxu0 0.0
      %3787 = vmatmul.mubr.f32.gmra.mrb[0].mxu0 %v2180
      %v3788 = vpop.f32.mrb[0].mxu0
      %v3789 = vadd.f32 0.0, %v3788
      %v3790 = vpop.f32.mrb[0].mxu0
      %3791 = vmatprep.mubr.f32.mxu0 0.0
      %3792 = vmatmul.mubr.f32.gmra.mrb[0].mxu0 %v2182
      %v3793 = vpop.f32.mrb[0].mxu0
      %v3794 = vadd.f32 0.0, %v3793
      %v3795 = vpop.f32.mrb[0].mxu0
      %3796 = vmatprep.mubr.f32.mxu0 0.0
      %3797 = vmatmul.mubr.f32.gmra.mrb[0].mxu0 %v2184
      %v3798 = vpop.f32.mrb[0].mxu0
      %v3799 = vadd.f32 0.0, %v3798
      %v3800 = vpop.f32.mrb[0].mxu0
      %3801 = vmatprep.mubr.f32.mxu0 0.0
      %3802 = vmatmul.mubr.f32.gmra.mrb[0].mxu0 %v2186
      %v3803 = vpop.f32.mrb[0].mxu0
      %v3804 = vadd.f32 0.0, %v3803
      %v3805 = vpop.f32.mrb[0].mxu0
      %3806 = vmatprep.mubr.f32.mxu0 0.0
      %3807 = vmatmul.mubr.f32.gmra.mrb[0].mxu0 %v2188
      %v3808 = vpop.f32.mrb[0].mxu0
      %v3809 = vadd.f32 0.0, %v3808
      %v3810 = vpop.f32.mrb[0].mxu0
      %3811 = vmatprep.mubr.f32.mxu0 0.0
      %3812 = vmatmul.mubr.f32.gmra.mrb[0].mxu0 %v2190
      %v3813 = vpop.f32.mrb[0].mxu0
      %v3814 = vadd.f32 0.0, %v3813
      %v3815 = vpop.f32.mrb[0].mxu0
      %3816 = vmatprep.mubr.f32.mxu0 0.0
      %3817 = vmatmul.mubr.f32.gmra.mrb[0].mxu0 %v2192
      %v3818 = vpop.f32.mrb[0].mxu0
      %v3819 = vadd.f32 0.0, %v3818
      %v3820 = vpop.f32.mrb[0].mxu0
      %3821 = vmatprep.mubr.f32.mxu0 0.0
      %3822 = vmatmul.mubr.f32.gmra.mrb[0].mxu0 %v2194
      %v3823 = vpop.f32.mrb[0].mxu0
      %v3824 = vadd.f32 0.0, %v3823
      %v3825 = vpop.f32.mrb[0].mxu0
      %3826 = vmatprep.mubr.f32.mxu0 0.0
      %3827 = vmatmul.mubr.f32.gmra.mrb[0].mxu0 %v2196
      %v3828 = vpop.f32.mrb[0].mxu0
      %v3829 = vadd.f32 0.0, %v3828
      %v3830 = vpop.f32.mrb[0].mxu0
      %3831 = vmatprep.mubr.f32.mxu0 0.0
      %3832 = vmatmul.mubr.f32.gmra.mrb[0].mxu0 %v2198
      %v3833 = vpop.f32.mrb[0].mxu0
      %v3834 = vadd.f32 0.0, %v3833
      %v3835 = vpop.f32.mrb[0].mxu0
      %3836 = vmatprep.mubr.f32.mxu0 0.0
      %3837 = vmatmul.mubr.f32.gmra.mrb[0].mxu0 %v2200
      %v3838 = vpop.f32.mrb[0].mxu0
      %v3839 = vadd.f32 0.0, %v3838
      %v3840 = vpop.f32.mrb[0].mxu0
      %3841 = vmatprep.mubr.f32.mxu0 0.0
      %3842 = vmatmul.mubr.f32.gmra.mrb[0].mxu0 %v2202
      %v3843 = vpop.f32.mrb[0].mxu0
      %v3844 = vadd.f32 0.0, %v3843
      %v3845 = vpop.f32.mrb[0].mxu0
      %3846 = vmatprep.mubr.f32.mxu0 0.0
      %3847 = vmatmul.mubr.f32.gmra.mrb[0].mxu0 %v2204
      %v3848 = vpop.f32.mrb[0].mxu0
      %v3849 = vadd.f32 0.0, %v3848
      %v3850 = vpop.f32.mrb[0].mxu0
      %3851 = vmatprep.mubr.f32.mxu0 0.0
      %3852 = vmatmul.mubr.f32.gmra.mrb[0].mxu0 %v2206
      %v3853 = vpop.f32.mrb[0].mxu0
      %v3854 = vadd.f32 0.0, %v3853
      %v3855 = vpop.f32.mrb[0].mxu0
      %3856 = vmatprep.mubr.f32.mxu0 0.0
      %3857 = vmatmul.mubr.f32.gmra.mrb[0].mxu0 %v2208
      %v3858 = vpop.f32.mrb[0].mxu0
      %v3859 = vadd.f32 0.0, %v3858
      %v3860 = vpop.f32.mrb[0].mxu0
      %3861 = vmatprep.mubr.f32.mxu0 0.0
      %3862 = vmatmul.mubr.f32.gmra.mrb[0].mxu0 %v2210
      %v3863 = vpop.f32.mrb[0].mxu0
      %v3864 = vadd.f32 0.0, %v3863
      %v3865 = vpop.f32.mrb[0].mxu0
      %3866 = vmatprep.mubr.f32.mxu0 0.0
      %3867 = vmatmul.mubr.f32.gmra.mrb[0].mxu0 %v2212
      %v3868 = vpop.f32.mrb[0].mxu0
      %v3869 = vadd.f32 0.0, %v3868
      %v3870 = vpop.f32.mrb[0].mxu0
      %3871 = vmatprep.mubr.f32.mxu0 0.0
      %3872 = vmatmul.mubr.f32.gmra.mrb[0].mxu0 %v2214
      %v3873 = vpop.f32.mrb[0].mxu0
      %v3874 = vadd.f32 0.0, %v3873
      %v3875 = vpop.f32.mrb[0].mxu0
      %3876 = vmatprep.mubr.f32.mxu0 0.0
      %3877 = vmatmul.mubr.f32.gmra.mrb[0].mxu0 %v2216
      %v3878 = vpop.f32.mrb[0].mxu0
      %v3879 = vadd.f32 0.0, %v3878
      %v3880 = vpop.f32.mrb[0].mxu0
      %3881 = vmatprep.mubr.f32.mxu0 0.0
      %3882 = vmatmul.mubr.f32.gmra.mrb[0].mxu0 %v2218
      %v3883 = vpop.f32.mrb[0].mxu0
      %v3884 = vadd.f32 0.0, %v3883
      %v3885 = vpop.f32.mrb[0].mxu0
      %3886 = vmatprep.mubr.f32.mxu0 0.0
      %3887 = vmatmul.mubr.f32.gmra.mrb[0].mxu0 %v2220
      %v3888 = vpop.f32.mrb[0].mxu0
      %v3889 = vadd.f32 0.0, %v3888
      %v3890 = vpop.f32.mrb[0].mxu0
      %3891 = vmatprep.mubr.f32.mxu0 0.0
      %3892 = vmatmul.mubr.f32.gmra.mrb[0].mxu0 %v2222
      %v3893 = vpop.f32.mrb[0].mxu0
      %v3894 = vadd.f32 0.0, %v3893
      %v3895 = vpop.f32.mrb[0].mxu0
      %3896 = vmatprep.mubr.f32.mxu0 0.0
      %3897 = vmatmul.mubr.f32.gmra.mrb[0].mxu0 %v2224
      %v3898 = vpop.f32.mrb[0].mxu0
      %v3899 = vadd.f32 0.0, %v3898
      %v3900 = vpop.f32.mrb[0].mxu0
      %3901 = vmatprep.mubr.f32.mxu0 0.0
      %3902 = vmatmul.mubr.f32.gmra.mrb[0].mxu0 %v2226
      %v3903 = vpop.f32.mrb[0].mxu0
      %v3904 = vadd.f32 0.0, %v3903
      %v3905 = vpop.f32.mrb[0].mxu0
      %3906 = vmatprep.mubr.f32.mxu0 0.0
      %3907 = vmatmul.mubr.f32.gmra.mrb[0].mxu0 %v2228
      %v3908 = vpop.f32.mrb[0].mxu0
      %v3909 = vadd.f32 0.0, %v3908
      %v3910 = vpop.f32.mrb[0].mxu0
      %3911 = vmatprep.mubr.f32.mxu0 0.0
      %3912 = vmatmul.mubr.f32.gmra.mrb[0].mxu0 %v2230
      %v3913 = vpop.f32.mrb[0].mxu0
      %v3914 = vadd.f32 0.0, %v3913
      %v3915 = vpop.f32.mrb[0].mxu0
      %3916 = vmatprep.mubr.f32.mxu0 0.0
      %3917 = vmatmul.mubr.f32.gmra.mrb[0].mxu0 %v2232
      %v3918 = vpop.f32.mrb[0].mxu0
      %v3919 = vadd.f32 0.0, %v3918
      %v3920 = vpop.f32.mrb[0].mxu0
      %3921 = vmatprep.mubr.f32.mxu0 0.0
      %3922 = vmatmul.mubr.f32.gmra.mrb[0].mxu0 %v2234
      %v3923 = vpop.f32.mrb[0].mxu0
      %v3924 = vadd.f32 0.0, %v3923
      %v3925 = vpop.f32.mrb[0].mxu0
      %3926 = vmatprep.mubr.f32.mxu0 0.0
      %3927 = vmatmul.mubr.f32.gmra.mrb[0].mxu0 %v3704
      %v3928 = vpop.f32.mrb[0].mxu0
      %v3929 = vadd.f32 0.0, %v3928
      %v3930 = vpop.f32.mrb[0].mxu0
      %3931 = vmatprep.mubr.f32.mxu0 0.0
      %3932 = vmatmul.mubr.f32.gmra.mrb[0].mxu0 %v3706
      %v3933 = vpop.f32.mrb[0].mxu0
      %v3934 = vadd.f32 0.0, %v3933
      %v3935 = vpop.f32.mrb[0].mxu0
      %3936 = vmatprep.mubr.f32.mxu0 0.0
      %3937 = vmatmul.mubr.f32.gmra.mrb[0].mxu0 %v2240
      %v3938 = vpop.f32.mrb[0].mxu0
      %v3939 = vadd.f32 0.0, %v3938
      %v3940 = vpop.f32.mrb[0].mxu0
      %3941 = vmatprep.mubr.f32.mxu0 0.0
      %3942 = vmatmul.mubr.f32.gmra.mrb[0].mxu0 %v2242
      %v3943 = vpop.f32.mrb[0].mxu0
      %v3944 = vadd.f32 0.0, %v3943
      %v3945 = vpop.f32.mrb[0].mxu0
      %3946 = vmatprep.mubr.f32.mxu0 0.0
      %3947 = vmatmul.mubr.f32.gmra.mrb[0].mxu0 %v2244
      %v3948 = vpop.f32.mrb[0].mxu0
      %v3949 = vadd.f32 0.0, %v3948
      %v3950 = vpop.f32.mrb[0].mxu0
      %3951 = vmatprep.mubr.f32.mxu0 0.0
      %3952 = vmatmul.mubr.f32.gmra.mrb[0].mxu0 %v2246
      %v3953 = vpop.f32.mrb[0].mxu0
      %v3954 = vadd.f32 0.0, %v3953
      %v3955 = vpop.f32.mrb[0].mxu0
      %3956 = vmatprep.mubr.f32.mxu0 0.0
      %3957 = vmatmul.mubr.f32.gmra.mrb[0].mxu0 %v2248
      %v3958 = vpop.f32.mrb[0].mxu0
      %v3959 = vadd.f32 0.0, %v3958
      %v3960 = vpop.f32.mrb[0].mxu0
      %3961 = vmatprep.mubr.f32.mxu0 0.0
      %3962 = vmatmul.mubr.f32.gmra.mrb[0].mxu0 %v2250
      %v3963 = vpop.f32.mrb[0].mxu0
      %v3964 = vadd.f32 0.0, %v3963
      %v3965 = vpop.f32.mrb[0].mxu0
      %3966 = vmatprep.mubr.f32.mxu0 0.0
      %3967 = vmatmul.mubr.f32.gmra.mrb[0].mxu0 %v2252
      %v3968 = vpop.f32.mrb[0].mxu0
      %v3969 = vadd.f32 0.0, %v3968
      %v3970 = vpop.f32.mrb[0].mxu0
      %3971 = vmatprep.mubr.f32.mxu0 0.0
      %3972 = vmatmul.mubr.f32.gmra.mrb[0].mxu0 %v2254
      %v3973 = vpop.f32.mrb[0].mxu0
      %v3974 = vadd.f32 0.0, %v3973
      %v3975 = vpop.f32.mrb[0].mxu0
      %3976 = vmatprep.mubr.f32.mxu0 0.0
      %3977 = vmatmul.mubr.f32.gmra.mrb[0].mxu0 %v2256
      %v3978 = vpop.f32.mrb[0].mxu0
      %v3979 = vadd.f32 0.0, %v3978
      %v3980 = vpop.f32.mrb[0].mxu0
      %3981 = vmatprep.mubr.f32.mxu0 0.0
      %3982 = vmatmul.mubr.f32.gmra.mrb[0].mxu0 %v2258
      %v3983 = vpop.f32.mrb[0].mxu0
      %v3984 = vadd.f32 0.0, %v3983
      %v3985 = vpop.f32.mrb[0].mxu0
      %3986 = vmatprep.mubr.f32.mxu0 0.0
      %3987 = vmatmul.mubr.f32.gmra.mrb[0].mxu0 %v2260
      %v3988 = vpop.f32.mrb[0].mxu0
      %v3989 = vadd.f32 0.0, %v3988
      %v3990 = vpop.f32.mrb[0].mxu0
      %3991 = vmatprep.mubr.f32.mxu0 0.0
      %3992 = vmatmul.mubr.f32.gmra.mrb[0].mxu0 %v2262
      %v3993 = vpop.f32.mrb[0].mxu0
      %v3994 = vadd.f32 0.0, %v3993
      %v3995 = vpop.f32.mrb[0].mxu0
      %3996 = vmatprep.mubr.f32.mxu0 0.0
      %3997 = vmatmul.mubr.f32.gmra.mrb[0].mxu0 %v2264
      %v3998 = vpop.f32.mrb[0].mxu0
      %v3999 = vadd.f32 0.0, %v3998
      %v4000 = vpop.f32.mrb[0].mxu0
      %4001 = vmatprep.mubr.f32.mxu0 0.0
      %4002 = vmatmul.mubr.f32.gmra.mrb[0].mxu0 %v2266
      %v4003 = vpop.f32.mrb[0].mxu0
      %v4004 = vadd.f32 0.0, %v4003
      %v4005 = vpop.f32.mrb[0].mxu0
      %4006 = vmatprep.mubr.f32.mxu0 0.0
      %4007 = vmatmul.mubr.f32.gmra.mrb[0].mxu0 %v2268
      %v4008 = vpop.f32.mrb[0].mxu0
      %v4009 = vadd.f32 0.0, %v4008
      %v4010 = vpop.f32.mrb[0].mxu0
      %4011 = vmatprep.mubr.f32.mxu0 0.0
      %4012 = vmatmul.mubr.f32.gmra.mrb[0].mxu0 %v2270
      %v4013 = vpop.f32.mrb[0].mxu0
      %v4014 = vadd.f32 0.0, %v4013
      %v4015 = vpop.f32.mrb[0].mxu0
      %4016 = vmatprep.mubr.f32.mxu0 0.0
      %4017 = vmatmul.mubr.f32.gmra.mrb[0].mxu0 %v2272
      %v4018 = vpop.f32.mrb[0].mxu0
      %v4019 = vadd.f32 0.0, %v4018
      %v4020 = vpop.f32.mrb[0].mxu0
      %4021 = vmatprep.mubr.f32.mxu0 0.0
      %4022 = vmatmul.mubr.f32.gmra.mrb[0].mxu0 %v2274
      %v4023 = vpop.f32.mrb[0].mxu0
      %v4024 = vadd.f32 0.0, %v4023
      %v4025 = vpop.f32.mrb[0].mxu0
      %4026 = vmatprep.mubr.f32.mxu0 0.0
      %4027 = vmatmul.mubr.f32.gmra.mrb[0].mxu0 %v2276
      %v4028 = vpop.f32.mrb[0].mxu0
      %v4029 = vadd.f32 0.0, %v4028
      %v4030 = vpop.f32.mrb[0].mxu0
      %4031 = vmatprep.mubr.f32.mxu0 0.0
      %4032 = vmatmul.mubr.f32.gmra.mrb[0].mxu0 %v2278
      %v4033 = vpop.f32.mrb[0].mxu0
      %v4034 = vadd.f32 0.0, %v4033
      %v4035 = vpop.f32.mrb[0].mxu0
      %4036 = vmatprep.mubr.f32.mxu0 0.0
      %4037 = vmatmul.mubr.f32.gmra.mrb[0].mxu0 %v2280
      %v4038 = vpop.f32.mrb[0].mxu0
      %v4039 = vadd.f32 0.0, %v4038
      %v4040 = vpop.f32.mrb[0].mxu0
      %4041 = vmatprep.mubr.f32.mxu0 0.0
      %4042 = vmatmul.mubr.f32.gmra.mrb[0].mxu0 %v2282
      %v4043 = vpop.f32.mrb[0].mxu0
      %v4044 = vadd.f32 0.0, %v4043
      %v4045 = vpop.f32.mrb[0].mxu0
      %4046 = vmatprep.mubr.f32.mxu0 0.0
      %4047 = vmatmul.mubr.f32.gmra.mrb[0].mxu0 %v2284
      %v4048 = vpop.f32.mrb[0].mxu0
      %v4049 = vadd.f32 0.0, %v4048
      %v4050 = vpop.f32.mrb[0].mxu0
      %4051 = vmatprep.mubr.f32.mxu0 0.0
      %4052 = vmatmul.mubr.f32.gmra.mrb[0].mxu0 %v2286
      %v4053 = vpop.f32.mrb[0].mxu0
      %v4054 = vadd.f32 0.0, %v4053
      %v4055 = vpop.f32.mrb[0].mxu0
      %4056 = vmatprep.mubr.f32.mxu0 0.0
      %4057 = vmatmul.mubr.f32.gmra.mrb[0].mxu0 %v2288
      %v4058 = vpop.f32.mrb[0].mxu0
      %v4059 = vadd.f32 0.0, %v4058
      %v4060 = vpop.f32.mrb[0].mxu0
      %4061 = vmatprep.mubr.f32.mxu0 0.0
      %4062 = vmatmul.mubr.f32.gmra.mrb[0].mxu0 %v2290
      %v4063 = vpop.f32.mrb[0].mxu0
      %v4064 = vadd.f32 0.0, %v4063
      %v4065 = vpop.f32.mrb[0].mxu0
      %4066 = vmatprep.mubr.f32.mxu0 0.0
      %4067 = vmatmul.mubr.f32.gmra.mrb[0].mxu0 %v2292
      %v4068 = vpop.f32.mrb[0].mxu0
      %v4069 = vadd.f32 0.0, %v4068
      %v4070 = vpop.f32.mrb[0].mxu0
      %4071 = vmatprep.mubr.f32.mxu0 0.0
      %4072 = vmatmul.mubr.f32.gmra.mrb[0].mxu0 %v2294
      %v4073 = vpop.f32.mrb[0].mxu0
      %v4074 = vadd.f32 0.0, %v4073
      %v4075 = vpop.f32.mrb[0].mxu0
      %4076 = vmatprep.mubr.f32.mxu0 0.0
      %4077 = vmatmul.mubr.f32.gmra.mrb[0].mxu0 %v2296
      %v4078 = vpop.f32.mrb[0].mxu0
      %v4079 = vadd.f32 0.0, %v4078
      %v4080 = vpop.f32.mrb[0].mxu0
      %4081 = vmatprep.mubr.f32.mxu0 0.0
      %4082 = vmatmul.mubr.f32.gmra.mrb[0].mxu0 %v2298
      %v4083 = vpop.f32.mrb[0].mxu0
      %v4084 = vadd.f32 0.0, %v4083
      %v4085 = vpop.f32.mrb[0].mxu0
      %4086 = vmatprep.mubr.f32.mxu0 0.0
      %4087 = vmatmul.mubr.f32.gmra.mrb[0].mxu0 %v3708
      %v4088 = vpop.f32.mrb[0].mxu0
      %v4089 = vadd.f32 0.0, %v4088
      %v4090 = vpop.f32.mrb[0].mxu0
      %4091 = vmatprep.mubr.f32.mxu0 0.0
      %4092 = vmatmul.mubr.f32.gmra.mrb[0].mxu0 %v3710
      %v4093 = vpop.f32.mrb[0].mxu0
      %v4094 = vadd.f32 0.0, %v4093
      %v4095 = vpop.f32.mrb[0].mxu0
      %4096 = vdwg.mxu0
      %v4097 = vadd.f32 %v3625, %v3779
      %v4098 = vadd.f32 %v3626, %v3784
      %v4099 = vadd.f32 %v3627, %v3789
      %v4100 = vadd.f32 %v3628, %v3794
      %v4101 = vadd.f32 %v3629, %v3799
      %v4102 = vadd.f32 %v3630, %v3804
      %v4103 = vadd.f32 %v3631, %v3809
      %v4104 = vadd.f32 %v3632, %v3814
      %v4105 = vadd.f32 %v3633, %v3819
      %v4106 = vadd.f32 %v3634, %v3824
      %v4107 = vadd.f32 %v3635, %v3829
      %v4108 = vadd.f32 %v3636, %v3834
      %v4109 = vadd.f32 %v3637, %v3839
      %v4110 = vadd.f32 %v3638, %v3844
      %v4111 = vadd.f32 %v3639, %v3849
      %v4112 = vadd.f32 %v3640, %v3854
      %v4113 = vadd.f32 %v3641, %v3859
      %v4114 = vadd.f32 %v3642, %v3864
      %v4115 = vadd.f32 %v3643, %v3869
      %v4116 = vadd.f32 %v3644, %v3874
      %v4117 = vadd.f32 %v3645, %v3879
      %v4118 = vadd.f32 %v3646, %v3884
      %v4119 = vadd.f32 %v3647, %v3889
      %v4120 = vadd.f32 %v3648, %v3894
      %v4121 = vadd.f32 %v3649, %v3899
      %v4122 = vadd.f32 %v3650, %v3904
      %v4123 = vadd.f32 %v3651, %v3909
      %v4124 = vadd.f32 %v3652, %v3914
      %v4125 = vadd.f32 %v3653, %v3919
      %v4126 = vadd.f32 %v3654, %v3924
      %v4127 = vadd.f32 %v3655, %v3929
      %v4128 = vadd.f32 %v3656, %v3934
      %v4129 = vadd.f32 %v3657, %v3939
      %v4130 = vadd.f32 %v3658, %v3944
      %v4131 = vadd.f32 %v3659, %v3949
      %v4132 = vadd.f32 %v3660, %v3954
      %v4133 = vadd.f32 %v3661, %v3959
      %v4134 = vadd.f32 %v3662, %v3964
      %v4135 = vadd.f32 %v3663, %v3969
      %v4136 = vadd.f32 %v3664, %v3974
      %v4137 = vadd.f32 %v3665, %v3979
      %v4138 = vadd.f32 %v3666, %v3984
      %v4139 = vadd.f32 %v3667, %v3989
      %v4140 = vadd.f32 %v3668, %v3994
      %v4141 = vadd.f32 %v3669, %v3999
      %v4142 = vadd.f32 %v3670, %v4004
      %v4143 = vadd.f32 %v3671, %v4009
      %v4144 = vadd.f32 %v3672, %v4014
      %v4145 = vadd.f32 %v3673, %v4019
      %v4146 = vadd.f32 %v3674, %v4024
      %v4147 = vadd.f32 %v3675, %v4029
      %v4148 = vadd.f32 %v3676, %v4034
      %v4149 = vadd.f32 %v3677, %v4039
      %v4150 = vadd.f32 %v3678, %v4044
      %v4151 = vadd.f32 %v3679, %v4049
      %v4152 = vadd.f32 %v3680, %v4054
      %v4153 = vadd.f32 %v3681, %v4059
      %v4154 = vadd.f32 %v3682, %v4064
      %v4155 = vadd.f32 %v3683, %v4069
      %v4156 = vadd.f32 %v3684, %v4074
      %v4157 = vadd.f32 %v3685, %v4079
      %v4158 = vadd.f32 %v3686, %v4084
      %v4159 = vadd.f32 %v3687, %v4089
      %v4160 = vadd.f32 %v3688, %v4094
      %s4161 = scalar_lea.vmem %s1, 192
      %v4162 = vld [vmem:[%s4161] sm:$0xff]
      %v4163 = vld [vmem:[%s4161 + $0x8] sm:$0xff]
      %v4164 = vld [vmem:[%s4161 + $0x10] sm:$0xff]
      %v4165 = vld [vmem:[%s4161 + $0x18] sm:$0xff]
      %v4167 = vsel %vm589, %v464, 0
      %v4170 = vsel %vm589, %v465, 0
      %v4173 = vsel %vm589, %v518, 0
      %v4176 = vsel %vm589, %v519, 0
      %4178 = vmatprep.subr.mxu0 0.0
      %4179 = vmatpush1.msra.mxu0 %v4162
      %4180 = vmatprep.subr.mxu0 0.0
      %4181 = vmatpush1.msra.mxu0 %v4163
      %4182 = vmatprep.subr.mxu0 0.0
      %4183 = vmatpush1.msra.mxu0 %v4164
      %4184 = vmatprep.subr.mxu0 0.0
      %4185 = vmatpush1.msra.mxu0 %v4165
      %4186 = vmatprep.subr.mxu0 0.0
      %4187 = vmatpush1.msra.mxu0 0.0
      %4188 = vmatprep.subr.mxu0 0.0
      %4189 = vmatpush1.msra.mxu0 0.0
      %4190 = vmatprep.subr.mxu0 0.0
      %4191 = vmatpush1.msra.mxu0 0.0
      %4192 = vmatprep.subr.mxu0 0.0
      %4193 = vmatpush1.msra.mxu0 0.0
      %4194 = vmatprep.subr.mxu0 0.0
      %4195 = vmatpush1.msra.mxu0 0.0
      %4196 = vmatprep.subr.mxu0 0.0
      %4197 = vmatpush1.msra.mxu0 0.0
      %4198 = vmatprep.subr.mxu0 0.0
      %4199 = vmatpush1.msra.mxu0 0.0
      %4200 = vmatprep.subr.mxu0 0.0
      %4201 = vmatpush1.msra.mxu0 0.0
      %4202 = vmatprep.subr.mxu0 0.0
      %4203 = vmatpush1.msra.mxu0 0.0
      %4204 = vmatprep.subr.mxu0 0.0
      %4205 = vmatpush1.msra.mxu0 0.0
      %4206 = vmatprep.subr.mxu0 0.0
      %4207 = vmatpush1.msra.mxu0 0.0
      %4208 = vmatprep.subr.mxu0 0.0
      %4209 = vmatpush1.msra.mxu0 0.0
      %4210 = vmatprep.subr.mxu0 0.0
      %4211 = vmatpush1.msra.mxu0 0.0
      %4212 = vmatprep.subr.mxu0 0.0
      %4213 = vmatpush1.msra.mxu0 0.0
      %4214 = vmatprep.subr.mxu0 0.0
      %4215 = vmatpush1.msra.mxu0 0.0
      %4216 = vmatprep.subr.mxu0 0.0
      %4217 = vmatpush1.msra.mxu0 0.0
      %4218 = vmatprep.subr.mxu0 0.0
      %4219 = vmatpush1.msra.mxu0 0.0
      %4220 = vmatprep.subr.mxu0 0.0
      %4221 = vmatpush1.msra.mxu0 0.0
      %4222 = vmatprep.subr.mxu0 0.0
      %4223 = vmatpush1.msra.mxu0 0.0
      %4224 = vmatprep.subr.mxu0 0.0
      %4225 = vmatpush1.msra.mxu0 0.0
      %4226 = vmatprep.subr.mxu0 0.0
      %4227 = vmatpush1.msra.mxu0 0.0
      %4228 = vmatprep.subr.mxu0 0.0
      %4229 = vmatpush1.msra.mxu0 0.0
      %4230 = vmatprep.subr.mxu0 0.0
      %4231 = vmatpush1.msra.mxu0 0.0
      %4232 = vmatprep.subr.mxu0 0.0
      %4233 = vmatpush1.msra.mxu0 0.0
      %4234 = vmatprep.subr.mxu0 0.0
      %4235 = vmatpush1.msra.mxu0 0.0
      %4236 = vmatprep.subr.mxu0 0.0
      %4237 = vmatpush1.msra.mxu0 0.0
      %4238 = vmatprep.subr.mxu0 0.0
      %4239 = vmatpush1.msra.mxu0 0.0
      %4240 = vmatprep.subr.mxu0 0.0
      %4241 = vmatpush1.msra.mxu0 0.0
      %4242 = vmatprep.mubr.f32.mxu0 0.0
      %4243 = vmatmul.mubr.f32.gmra.mrb[0].mxu0 %v603
      %v4244 = vpop.f32.mrb[0].mxu0
      %v4245 = vadd.f32 0.0, %v4244
      %v4246 = vpop.f32.mrb[0].mxu0
      %4247 = vmatprep.mubr.f32.mxu0 0.0
      %4248 = vmatmul.mubr.f32.gmra.mrb[0].mxu0 %v606
      %v4249 = vpop.f32.mrb[0].mxu0
      %v4250 = vadd.f32 0.0, %v4249
      %v4251 = vpop.f32.mrb[0].mxu0
      %4252 = vmatprep.mubr.f32.mxu0 0.0
      %4253 = vmatmul.mubr.f32.gmra.mrb[0].mxu0 %v609
      %v4254 = vpop.f32.mrb[0].mxu0
      %v4255 = vadd.f32 0.0, %v4254
      %v4256 = vpop.f32.mrb[0].mxu0
      %4257 = vmatprep.mubr.f32.mxu0 0.0
      %4258 = vmatmul.mubr.f32.gmra.mrb[0].mxu0 %v612
      %v4259 = vpop.f32.mrb[0].mxu0
      %v4260 = vadd.f32 0.0, %v4259
      %v4261 = vpop.f32.mrb[0].mxu0
      %4262 = vmatprep.mubr.f32.mxu0 0.0
      %4263 = vmatmul.mubr.f32.gmra.mrb[0].mxu0 %v615
      %v4264 = vpop.f32.mrb[0].mxu0
      %v4265 = vadd.f32 0.0, %v4264
      %v4266 = vpop.f32.mrb[0].mxu0
      %4267 = vmatprep.mubr.f32.mxu0 0.0
      %4268 = vmatmul.mubr.f32.gmra.mrb[0].mxu0 %v618
      %v4269 = vpop.f32.mrb[0].mxu0
      %v4270 = vadd.f32 0.0, %v4269
      %v4271 = vpop.f32.mrb[0].mxu0
      %4272 = vmatprep.mubr.f32.mxu0 0.0
      %4273 = vmatmul.mubr.f32.gmra.mrb[0].mxu0 %v621
      %v4274 = vpop.f32.mrb[0].mxu0
      %v4275 = vadd.f32 0.0, %v4274
      %v4276 = vpop.f32.mrb[0].mxu0
      %4277 = vmatprep.mubr.f32.mxu0 0.0
      %4278 = vmatmul.mubr.f32.gmra.mrb[0].mxu0 %v624
      %v4279 = vpop.f32.mrb[0].mxu0
      %v4280 = vadd.f32 0.0, %v4279
      %v4281 = vpop.f32.mrb[0].mxu0
      %4282 = vmatprep.mubr.f32.mxu0 0.0
      %4283 = vmatmul.mubr.f32.gmra.mrb[0].mxu0 %v627
      %v4284 = vpop.f32.mrb[0].mxu0
      %v4285 = vadd.f32 0.0, %v4284
      %v4286 = vpop.f32.mrb[0].mxu0
      %4287 = vmatprep.mubr.f32.mxu0 0.0
      %4288 = vmatmul.mubr.f32.gmra.mrb[0].mxu0 %v630
      %v4289 = vpop.f32.mrb[0].mxu0
      %v4290 = vadd.f32 0.0, %v4289
      %v4291 = vpop.f32.mrb[0].mxu0
      %4292 = vmatprep.mubr.f32.mxu0 0.0
      %4293 = vmatmul.mubr.f32.gmra.mrb[0].mxu0 %v633
      %v4294 = vpop.f32.mrb[0].mxu0
      %v4295 = vadd.f32 0.0, %v4294
      %v4296 = vpop.f32.mrb[0].mxu0
      %4297 = vmatprep.mubr.f32.mxu0 0.0
      %4298 = vmatmul.mubr.f32.gmra.mrb[0].mxu0 %v636
      %v4299 = vpop.f32.mrb[0].mxu0
      %v4300 = vadd.f32 0.0, %v4299
      %v4301 = vpop.f32.mrb[0].mxu0
      %4302 = vmatprep.mubr.f32.mxu0 0.0
      %4303 = vmatmul.mubr.f32.gmra.mrb[0].mxu0 %v639
      %v4304 = vpop.f32.mrb[0].mxu0
      %v4305 = vadd.f32 0.0, %v4304
      %v4306 = vpop.f32.mrb[0].mxu0
      %4307 = vmatprep.mubr.f32.mxu0 0.0
      %4308 = vmatmul.mubr.f32.gmra.mrb[0].mxu0 %v642
      %v4309 = vpop.f32.mrb[0].mxu0
      %v4310 = vadd.f32 0.0, %v4309
      %v4311 = vpop.f32.mrb[0].mxu0
      %4312 = vmatprep.mubr.f32.mxu0 0.0
      %4313 = vmatmul.mubr.f32.gmra.mrb[0].mxu0 %v645
      %v4314 = vpop.f32.mrb[0].mxu0
      %v4315 = vadd.f32 0.0, %v4314
      %v4316 = vpop.f32.mrb[0].mxu0
      %4317 = vmatprep.mubr.f32.mxu0 0.0
      %4318 = vmatmul.mubr.f32.gmra.mrb[0].mxu0 %v648
      %v4319 = vpop.f32.mrb[0].mxu0
      %v4320 = vadd.f32 0.0, %v4319
      %v4321 = vpop.f32.mrb[0].mxu0
      %4322 = vmatprep.mubr.f32.mxu0 0.0
      %4323 = vmatmul.mubr.f32.gmra.mrb[0].mxu0 %v651
      %v4324 = vpop.f32.mrb[0].mxu0
      %v4325 = vadd.f32 0.0, %v4324
      %v4326 = vpop.f32.mrb[0].mxu0
      %4327 = vmatprep.mubr.f32.mxu0 0.0
      %4328 = vmatmul.mubr.f32.gmra.mrb[0].mxu0 %v654
      %v4329 = vpop.f32.mrb[0].mxu0
      %v4330 = vadd.f32 0.0, %v4329
      %v4331 = vpop.f32.mrb[0].mxu0
      %4332 = vmatprep.mubr.f32.mxu0 0.0
      %4333 = vmatmul.mubr.f32.gmra.mrb[0].mxu0 %v657
      %v4334 = vpop.f32.mrb[0].mxu0
      %v4335 = vadd.f32 0.0, %v4334
      %v4336 = vpop.f32.mrb[0].mxu0
      %4337 = vmatprep.mubr.f32.mxu0 0.0
      %4338 = vmatmul.mubr.f32.gmra.mrb[0].mxu0 %v660
      %v4339 = vpop.f32.mrb[0].mxu0
      %v4340 = vadd.f32 0.0, %v4339
      %v4341 = vpop.f32.mrb[0].mxu0
      %4342 = vmatprep.mubr.f32.mxu0 0.0
      %4343 = vmatmul.mubr.f32.gmra.mrb[0].mxu0 %v663
      %v4344 = vpop.f32.mrb[0].mxu0
      %v4345 = vadd.f32 0.0, %v4344
      %v4346 = vpop.f32.mrb[0].mxu0
      %4347 = vmatprep.mubr.f32.mxu0 0.0
      %4348 = vmatmul.mubr.f32.gmra.mrb[0].mxu0 %v666
      %v4349 = vpop.f32.mrb[0].mxu0
      %v4350 = vadd.f32 0.0, %v4349
      %v4351 = vpop.f32.mrb[0].mxu0
      %4352 = vmatprep.mubr.f32.mxu0 0.0
      %4353 = vmatmul.mubr.f32.gmra.mrb[0].mxu0 %v669
      %v4354 = vpop.f32.mrb[0].mxu0
      %v4355 = vadd.f32 0.0, %v4354
      %v4356 = vpop.f32.mrb[0].mxu0
      %4357 = vmatprep.mubr.f32.mxu0 0.0
      %4358 = vmatmul.mubr.f32.gmra.mrb[0].mxu0 %v672
      %v4359 = vpop.f32.mrb[0].mxu0
      %v4360 = vadd.f32 0.0, %v4359
      %v4361 = vpop.f32.mrb[0].mxu0
      %4362 = vmatprep.mubr.f32.mxu0 0.0
      %4363 = vmatmul.mubr.f32.gmra.mrb[0].mxu0 %v675
      %v4364 = vpop.f32.mrb[0].mxu0
      %v4365 = vadd.f32 0.0, %v4364
      %v4366 = vpop.f32.mrb[0].mxu0
      %4367 = vmatprep.mubr.f32.mxu0 0.0
      %4368 = vmatmul.mubr.f32.gmra.mrb[0].mxu0 %v678
      %v4369 = vpop.f32.mrb[0].mxu0
      %v4370 = vadd.f32 0.0, %v4369
      %v4371 = vpop.f32.mrb[0].mxu0
      %4372 = vmatprep.mubr.f32.mxu0 0.0
      %4373 = vmatmul.mubr.f32.gmra.mrb[0].mxu0 %v681
      %v4374 = vpop.f32.mrb[0].mxu0
      %v4375 = vadd.f32 0.0, %v4374
      %v4376 = vpop.f32.mrb[0].mxu0
      %4377 = vmatprep.mubr.f32.mxu0 0.0
      %4378 = vmatmul.mubr.f32.gmra.mrb[0].mxu0 %v684
      %v4379 = vpop.f32.mrb[0].mxu0
      %v4380 = vadd.f32 0.0, %v4379
      %v4381 = vpop.f32.mrb[0].mxu0
      %4382 = vmatprep.mubr.f32.mxu0 0.0
      %4383 = vmatmul.mubr.f32.gmra.mrb[0].mxu0 %v2755
      %v4384 = vpop.f32.mrb[0].mxu0
      %v4385 = vadd.f32 0.0, %v4384
      %v4386 = vpop.f32.mrb[0].mxu0
      %4387 = vmatprep.mubr.f32.mxu0 0.0
      %4388 = vmatmul.mubr.f32.gmra.mrb[0].mxu0 %v2758
      %v4389 = vpop.f32.mrb[0].mxu0
      %v4390 = vadd.f32 0.0, %v4389
      %v4391 = vpop.f32.mrb[0].mxu0
      %4392 = vmatprep.mubr.f32.mxu0 0.0
      %4393 = vmatmul.mubr.f32.gmra.mrb[0].mxu0 %v4167
      %v4394 = vpop.f32.mrb[0].mxu0
      %v4395 = vadd.f32 0.0, %v4394
      %v4396 = vpop.f32.mrb[0].mxu0
      %4397 = vmatprep.mubr.f32.mxu0 0.0
      %4398 = vmatmul.mubr.f32.gmra.mrb[0].mxu0 %v4170
      %v4399 = vpop.f32.mrb[0].mxu0
      %v4400 = vadd.f32 0.0, %v4399
      %v4401 = vpop.f32.mrb[0].mxu0
      %4402 = vmatprep.mubr.f32.mxu0 0.0
      %4403 = vmatmul.mubr.f32.gmra.mrb[0].mxu0 %v699
      %v4404 = vpop.f32.mrb[0].mxu0
      %v4405 = vadd.f32 0.0, %v4404
      %v4406 = vpop.f32.mrb[0].mxu0
      %4407 = vmatprep.mubr.f32.mxu0 0.0
      %4408 = vmatmul.mubr.f32.gmra.mrb[0].mxu0 %v702
      %v4409 = vpop.f32.mrb[0].mxu0
      %v4410 = vadd.f32 0.0, %v4409
      %v4411 = vpop.f32.mrb[0].mxu0
      %4412 = vmatprep.mubr.f32.mxu0 0.0
      %4413 = vmatmul.mubr.f32.gmra.mrb[0].mxu0 %v705
      %v4414 = vpop.f32.mrb[0].mxu0
      %v4415 = vadd.f32 0.0, %v4414
      %v4416 = vpop.f32.mrb[0].mxu0
      %4417 = vmatprep.mubr.f32.mxu0 0.0
      %4418 = vmatmul.mubr.f32.gmra.mrb[0].mxu0 %v708
      %v4419 = vpop.f32.mrb[0].mxu0
      %v4420 = vadd.f32 0.0, %v4419
      %v4421 = vpop.f32.mrb[0].mxu0
      %4422 = vmatprep.mubr.f32.mxu0 0.0
      %4423 = vmatmul.mubr.f32.gmra.mrb[0].mxu0 %v711
      %v4424 = vpop.f32.mrb[0].mxu0
      %v4425 = vadd.f32 0.0, %v4424
      %v4426 = vpop.f32.mrb[0].mxu0
      %4427 = vmatprep.mubr.f32.mxu0 0.0
      %4428 = vmatmul.mubr.f32.gmra.mrb[0].mxu0 %v714
      %v4429 = vpop.f32.mrb[0].mxu0
      %v4430 = vadd.f32 0.0, %v4429
      %v4431 = vpop.f32.mrb[0].mxu0
      %4432 = vmatprep.mubr.f32.mxu0 0.0
      %4433 = vmatmul.mubr.f32.gmra.mrb[0].mxu0 %v717
      %v4434 = vpop.f32.mrb[0].mxu0
      %v4435 = vadd.f32 0.0, %v4434
      %v4436 = vpop.f32.mrb[0].mxu0
      %4437 = vmatprep.mubr.f32.mxu0 0.0
      %4438 = vmatmul.mubr.f32.gmra.mrb[0].mxu0 %v720
      %v4439 = vpop.f32.mrb[0].mxu0
      %v4440 = vadd.f32 0.0, %v4439
      %v4441 = vpop.f32.mrb[0].mxu0
      %4442 = vmatprep.mubr.f32.mxu0 0.0
      %4443 = vmatmul.mubr.f32.gmra.mrb[0].mxu0 %v723
      %v4444 = vpop.f32.mrb[0].mxu0
      %v4445 = vadd.f32 0.0, %v4444
      %v4446 = vpop.f32.mrb[0].mxu0
      %4447 = vmatprep.mubr.f32.mxu0 0.0
      %4448 = vmatmul.mubr.f32.gmra.mrb[0].mxu0 %v726
      %v4449 = vpop.f32.mrb[0].mxu0
      %v4450 = vadd.f32 0.0, %v4449
      %v4451 = vpop.f32.mrb[0].mxu0
      %4452 = vmatprep.mubr.f32.mxu0 0.0
      %4453 = vmatmul.mubr.f32.gmra.mrb[0].mxu0 %v729
      %v4454 = vpop.f32.mrb[0].mxu0
      %v4455 = vadd.f32 0.0, %v4454
      %v4456 = vpop.f32.mrb[0].mxu0
      %4457 = vmatprep.mubr.f32.mxu0 0.0
      %4458 = vmatmul.mubr.f32.gmra.mrb[0].mxu0 %v732
      %v4459 = vpop.f32.mrb[0].mxu0
      %v4460 = vadd.f32 0.0, %v4459
      %v4461 = vpop.f32.mrb[0].mxu0
      %4462 = vmatprep.mubr.f32.mxu0 0.0
      %4463 = vmatmul.mubr.f32.gmra.mrb[0].mxu0 %v735
      %v4464 = vpop.f32.mrb[0].mxu0
      %v4465 = vadd.f32 0.0, %v4464
      %v4466 = vpop.f32.mrb[0].mxu0
      %4467 = vmatprep.mubr.f32.mxu0 0.0
      %4468 = vmatmul.mubr.f32.gmra.mrb[0].mxu0 %v738
      %v4469 = vpop.f32.mrb[0].mxu0
      %v4470 = vadd.f32 0.0, %v4469
      %v4471 = vpop.f32.mrb[0].mxu0
      %4472 = vmatprep.mubr.f32.mxu0 0.0
      %4473 = vmatmul.mubr.f32.gmra.mrb[0].mxu0 %v741
      %v4474 = vpop.f32.mrb[0].mxu0
      %v4475 = vadd.f32 0.0, %v4474
      %v4476 = vpop.f32.mrb[0].mxu0
      %4477 = vmatprep.mubr.f32.mxu0 0.0
      %4478 = vmatmul.mubr.f32.gmra.mrb[0].mxu0 %v744
      %v4479 = vpop.f32.mrb[0].mxu0
      %v4480 = vadd.f32 0.0, %v4479
      %v4481 = vpop.f32.mrb[0].mxu0
      %4482 = vmatprep.mubr.f32.mxu0 0.0
      %4483 = vmatmul.mubr.f32.gmra.mrb[0].mxu0 %v747
      %v4484 = vpop.f32.mrb[0].mxu0
      %v4485 = vadd.f32 0.0, %v4484
      %v4486 = vpop.f32.mrb[0].mxu0
      %4487 = vmatprep.mubr.f32.mxu0 0.0
      %4488 = vmatmul.mubr.f32.gmra.mrb[0].mxu0 %v750
      %v4489 = vpop.f32.mrb[0].mxu0
      %v4490 = vadd.f32 0.0, %v4489
      %v4491 = vpop.f32.mrb[0].mxu0
      %4492 = vmatprep.mubr.f32.mxu0 0.0
      %4493 = vmatmul.mubr.f32.gmra.mrb[0].mxu0 %v753
      %v4494 = vpop.f32.mrb[0].mxu0
      %v4495 = vadd.f32 0.0, %v4494
      %v4496 = vpop.f32.mrb[0].mxu0
      %4497 = vmatprep.mubr.f32.mxu0 0.0
      %4498 = vmatmul.mubr.f32.gmra.mrb[0].mxu0 %v756
      %v4499 = vpop.f32.mrb[0].mxu0
      %v4500 = vadd.f32 0.0, %v4499
      %v4501 = vpop.f32.mrb[0].mxu0
      %4502 = vmatprep.mubr.f32.mxu0 0.0
      %4503 = vmatmul.mubr.f32.gmra.mrb[0].mxu0 %v759
      %v4504 = vpop.f32.mrb[0].mxu0
      %v4505 = vadd.f32 0.0, %v4504
      %v4506 = vpop.f32.mrb[0].mxu0
      %4507 = vmatprep.mubr.f32.mxu0 0.0
      %4508 = vmatmul.mubr.f32.gmra.mrb[0].mxu0 %v762
      %v4509 = vpop.f32.mrb[0].mxu0
      %v4510 = vadd.f32 0.0, %v4509
      %v4511 = vpop.f32.mrb[0].mxu0
      %4512 = vmatprep.mubr.f32.mxu0 0.0
      %4513 = vmatmul.mubr.f32.gmra.mrb[0].mxu0 %v765
      %v4514 = vpop.f32.mrb[0].mxu0
      %v4515 = vadd.f32 0.0, %v4514
      %v4516 = vpop.f32.mrb[0].mxu0
      %4517 = vmatprep.mubr.f32.mxu0 0.0
      %4518 = vmatmul.mubr.f32.gmra.mrb[0].mxu0 %v768
      %v4519 = vpop.f32.mrb[0].mxu0
      %v4520 = vadd.f32 0.0, %v4519
      %v4521 = vpop.f32.mrb[0].mxu0
      %4522 = vmatprep.mubr.f32.mxu0 0.0
      %4523 = vmatmul.mubr.f32.gmra.mrb[0].mxu0 %v771
      %v4524 = vpop.f32.mrb[0].mxu0
      %v4525 = vadd.f32 0.0, %v4524
      %v4526 = vpop.f32.mrb[0].mxu0
      %4527 = vmatprep.mubr.f32.mxu0 0.0
      %4528 = vmatmul.mubr.f32.gmra.mrb[0].mxu0 %v774
      %v4529 = vpop.f32.mrb[0].mxu0
      %v4530 = vadd.f32 0.0, %v4529
      %v4531 = vpop.f32.mrb[0].mxu0
      %4532 = vmatprep.mubr.f32.mxu0 0.0
      %4533 = vmatmul.mubr.f32.gmra.mrb[0].mxu0 %v777
      %v4534 = vpop.f32.mrb[0].mxu0
      %v4535 = vadd.f32 0.0, %v4534
      %v4536 = vpop.f32.mrb[0].mxu0
      %4537 = vmatprep.mubr.f32.mxu0 0.0
      %4538 = vmatmul.mubr.f32.gmra.mrb[0].mxu0 %v780
      %v4539 = vpop.f32.mrb[0].mxu0
      %v4540 = vadd.f32 0.0, %v4539
      %v4541 = vpop.f32.mrb[0].mxu0
      %4542 = vmatprep.mubr.f32.mxu0 0.0
      %4543 = vmatmul.mubr.f32.gmra.mrb[0].mxu0 %v2761
      %v4544 = vpop.f32.mrb[0].mxu0
      %v4545 = vadd.f32 0.0, %v4544
      %v4546 = vpop.f32.mrb[0].mxu0
      %4547 = vmatprep.mubr.f32.mxu0 0.0
      %4548 = vmatmul.mubr.f32.gmra.mrb[0].mxu0 %v2764
      %v4549 = vpop.f32.mrb[0].mxu0
      %v4550 = vadd.f32 0.0, %v4549
      %v4551 = vpop.f32.mrb[0].mxu0
      %4552 = vmatprep.mubr.f32.mxu0 0.0
      %4553 = vmatmul.mubr.f32.gmra.mrb[0].mxu0 %v4173
      %v4554 = vpop.f32.mrb[0].mxu0
      %v4555 = vadd.f32 0.0, %v4554
      %v4556 = vpop.f32.mrb[0].mxu0
      %4557 = vmatprep.mubr.f32.mxu0 0.0
      %4558 = vmatmul.mubr.f32.gmra.mrb[0].mxu0 %v4176
      %v4559 = vpop.f32.mrb[0].mxu0
      %v4560 = vadd.f32 0.0, %v4559
      %v4561 = vpop.f32.mrb[0].mxu0
      %4562 = vdwg.mxu0
      %v4563 = vadd.f32 %v4097, %v4245
      %v4564 = vadd.f32 %v4098, %v4250
      %v4565 = vadd.f32 %v4099, %v4255
      %v4566 = vadd.f32 %v4100, %v4260
      %v4567 = vadd.f32 %v4101, %v4265
      %v4568 = vadd.f32 %v4102, %v4270
      %v4569 = vadd.f32 %v4103, %v4275
      %v4570 = vadd.f32 %v4104, %v4280
      %v4571 = vadd.f32 %v4105, %v4285
      %v4572 = vadd.f32 %v4106, %v4290
      %v4573 = vadd.f32 %v4107, %v4295
      %v4574 = vadd.f32 %v4108, %v4300
      %v4575 = vadd.f32 %v4109, %v4305
      %v4576 = vadd.f32 %v4110, %v4310
      %v4577 = vadd.f32 %v4111, %v4315
      %v4578 = vadd.f32 %v4112, %v4320
      %v4579 = vadd.f32 %v4113, %v4325
      %v4580 = vadd.f32 %v4114, %v4330
      %v4581 = vadd.f32 %v4115, %v4335
      %v4582 = vadd.f32 %v4116, %v4340
      %v4583 = vadd.f32 %v4117, %v4345
      %v4584 = vadd.f32 %v4118, %v4350
      %v4585 = vadd.f32 %v4119, %v4355
      %v4586 = vadd.f32 %v4120, %v4360
      %v4587 = vadd.f32 %v4121, %v4365
      %v4588 = vadd.f32 %v4122, %v4370
      %v4589 = vadd.f32 %v4123, %v4375
      %v4590 = vadd.f32 %v4124, %v4380
      %v4591 = vadd.f32 %v4125, %v4385
      %v4592 = vadd.f32 %v4126, %v4390
      %v4593 = vadd.f32 %v4127, %v4395
      %v4594 = vadd.f32 %v4128, %v4400
      %v4595 = vadd.f32 %v4129, %v4405
      %v4596 = vadd.f32 %v4130, %v4410
      %v4597 = vadd.f32 %v4131, %v4415
      %v4598 = vadd.f32 %v4132, %v4420
      %v4599 = vadd.f32 %v4133, %v4425
      %v4600 = vadd.f32 %v4134, %v4430
      %v4601 = vadd.f32 %v4135, %v4435
      %v4602 = vadd.f32 %v4136, %v4440
      %v4603 = vadd.f32 %v4137, %v4445
      %v4604 = vadd.f32 %v4138, %v4450
      %v4605 = vadd.f32 %v4139, %v4455
      %v4606 = vadd.f32 %v4140, %v4460
      %v4607 = vadd.f32 %v4141, %v4465
      %v4608 = vadd.f32 %v4142, %v4470
      %v4609 = vadd.f32 %v4143, %v4475
      %v4610 = vadd.f32 %v4144, %v4480
      %v4611 = vadd.f32 %v4145, %v4485
      %v4612 = vadd.f32 %v4146, %v4490
      %v4613 = vadd.f32 %v4147, %v4495
      %v4614 = vadd.f32 %v4148, %v4500
      %v4615 = vadd.f32 %v4149, %v4505
      %v4616 = vadd.f32 %v4150, %v4510
      %v4617 = vadd.f32 %v4151, %v4515
      %v4618 = vadd.f32 %v4152, %v4520
      %v4619 = vadd.f32 %v4153, %v4525
      %v4620 = vadd.f32 %v4154, %v4530
      %v4621 = vadd.f32 %v4155, %v4535
      %v4622 = vadd.f32 %v4156, %v4540
      %v4623 = vadd.f32 %v4157, %v4545
      %v4624 = vadd.f32 %v4158, %v4550
      %v4625 = vadd.f32 %v4159, %v4555
      %v4626 = vadd.f32 %v4160, %v4560
      %v4629 = vrot.slane %v464, 1
      %v4630 = vrot.slane %v465, 1
      %v4631 = vsel %vm1263, %v4629, %v4630
      %v4632 = vrot.slane %v466, 1
      %v4633 = vsel %vm1263, %v4630, %v4632
      %v4634 = vrot.slane %v518, 1
      %v4635 = vrot.slane %v519, 1
      %v4636 = vsel %vm1263, %v4634, %v4635
      %v4637 = vrot.slane %v520, 1
      %v4638 = vsel %vm1263, %v4635, %v4637
      %s4639 = scalar_lea.vmem %s1, 224
      %v4640 = vld [vmem:[%s4639] sm:$0xff]
      %v4641 = vld [vmem:[%s4639 + $0x8] sm:$0xff]
      %v4642 = vld [vmem:[%s4639 + $0x10] sm:$0xff]
      %v4643 = vld [vmem:[%s4639 + $0x18] sm:$0xff]
      %v4644 = vsel %vm589, %v4631, 0
      %v4646 = vsel %vm589, %v4633, 0
      %v4648 = vsel %vm589, %v4636, 0
      %v4650 = vsel %vm589, %v4638, 0
      %4652 = vmatprep.subr.mxu0 0.0
      %4653 = vmatpush1.msra.mxu0 %v4640
      %4654 = vmatprep.subr.mxu0 0.0
      %4655 = vmatpush1.msra.mxu0 %v4641
      %4656 = vmatprep.subr.mxu0 0.0
      %4657 = vmatpush1.msra.mxu0 %v4642
      %4658 = vmatprep.subr.mxu0 0.0
      %4659 = vmatpush1.msra.mxu0 %v4643
      %4660 = vmatprep.subr.mxu0 0.0
      %4661 = vmatpush1.msra.mxu0 0.0
      %4662 = vmatprep.subr.mxu0 0.0
      %4663 = vmatpush1.msra.mxu0 0.0
      %4664 = vmatprep.subr.mxu0 0.0
      %4665 = vmatpush1.msra.mxu0 0.0
      %4666 = vmatprep.subr.mxu0 0.0
      %4667 = vmatpush1.msra.mxu0 0.0
      %4668 = vmatprep.subr.mxu0 0.0
      %4669 = vmatpush1.msra.mxu0 0.0
      %4670 = vmatprep.subr.mxu0 0.0
      %4671 = vmatpush1.msra.mxu0 0.0
      %4672 = vmatprep.subr.mxu0 0.0
      %4673 = vmatpush1.msra.mxu0 0.0
      %4674 = vmatprep.subr.mxu0 0.0
      %4675 = vmatpush1.msra.mxu0 0.0
      %4676 = vmatprep.subr.mxu0 0.0
      %4677 = vmatpush1.msra.mxu0 0.0
      %4678 = vmatprep.subr.mxu0 0.0
      %4679 = vmatpush1.msra.mxu0 0.0
      %4680 = vmatprep.subr.mxu0 0.0
      %4681 = vmatpush1.msra.mxu0 0.0
      %4682 = vmatprep.subr.mxu0 0.0
      %4683 = vmatpush1.msra.mxu0 0.0
      %4684 = vmatprep.subr.mxu0 0.0
      %4685 = vmatpush1.msra.mxu0 0.0
      %4686 = vmatprep.subr.mxu0 0.0
      %4687 = vmatpush1.msra.mxu0 0.0
      %4688 = vmatprep.subr.mxu0 0.0
      %4689 = vmatpush1.msra.mxu0 0.0
      %4690 = vmatprep.subr.mxu0 0.0
      %4691 = vmatpush1.msra.mxu0 0.0
      %4692 = vmatprep.subr.mxu0 0.0
      %4693 = vmatpush1.msra.mxu0 0.0
      %4694 = vmatprep.subr.mxu0 0.0
      %4695 = vmatpush1.msra.mxu0 0.0
      %4696 = vmatprep.subr.mxu0 0.0
      %4697 = vmatpush1.msra.mxu0 0.0
      %4698 = vmatprep.subr.mxu0 0.0
      %4699 = vmatpush1.msra.mxu0 0.0
      %4700 = vmatprep.subr.mxu0 0.0
      %4701 = vmatpush1.msra.mxu0 0.0
      %4702 = vmatprep.subr.mxu0 0.0
      %4703 = vmatpush1.msra.mxu0 0.0
      %4704 = vmatprep.subr.mxu0 0.0
      %4705 = vmatpush1.msra.mxu0 0.0
      %4706 = vmatprep.subr.mxu0 0.0
      %4707 = vmatpush1.msra.mxu0 0.0
      %4708 = vmatprep.subr.mxu0 0.0
      %4709 = vmatpush1.msra.mxu0 0.0
      %4710 = vmatprep.subr.mxu0 0.0
      %4711 = vmatpush1.msra.mxu0 0.0
      %4712 = vmatprep.subr.mxu0 0.0
      %4713 = vmatpush1.msra.mxu0 0.0
      %4714 = vmatprep.subr.mxu0 0.0
      %4715 = vmatpush1.msra.mxu0 0.0
      %4716 = vmatprep.mubr.f32.mxu0 0.0
      %4717 = vmatmul.mubr.f32.gmra.mrb[0].mxu0 %v1437
      %v4718 = vpop.f32.mrb[0].mxu0
      %v4719 = vadd.f32 0.0, %v4718
      %v4720 = vpop.f32.mrb[0].mxu0
      %4721 = vmatprep.mubr.f32.mxu0 0.0
      %4722 = vmatmul.mubr.f32.gmra.mrb[0].mxu0 %v1439
      %v4723 = vpop.f32.mrb[0].mxu0
      %v4724 = vadd.f32 0.0, %v4723
      %v4725 = vpop.f32.mrb[0].mxu0
      %4726 = vmatprep.mubr.f32.mxu0 0.0
      %4727 = vmatmul.mubr.f32.gmra.mrb[0].mxu0 %v1441
      %v4728 = vpop.f32.mrb[0].mxu0
      %v4729 = vadd.f32 0.0, %v4728
      %v4730 = vpop.f32.mrb[0].mxu0
      %4731 = vmatprep.mubr.f32.mxu0 0.0
      %4732 = vmatmul.mubr.f32.gmra.mrb[0].mxu0 %v1443
      %v4733 = vpop.f32.mrb[0].mxu0
      %v4734 = vadd.f32 0.0, %v4733
      %v4735 = vpop.f32.mrb[0].mxu0
      %4736 = vmatprep.mubr.f32.mxu0 0.0
      %4737 = vmatmul.mubr.f32.gmra.mrb[0].mxu0 %v1445
      %v4738 = vpop.f32.mrb[0].mxu0
      %v4739 = vadd.f32 0.0, %v4738
      %v4740 = vpop.f32.mrb[0].mxu0
      %4741 = vmatprep.mubr.f32.mxu0 0.0
      %4742 = vmatmul.mubr.f32.gmra.mrb[0].mxu0 %v1447
      %v4743 = vpop.f32.mrb[0].mxu0
      %v4744 = vadd.f32 0.0, %v4743
      %v4745 = vpop.f32.mrb[0].mxu0
      %4746 = vmatprep.mubr.f32.mxu0 0.0
      %4747 = vmatmul.mubr.f32.gmra.mrb[0].mxu0 %v1449
      %v4748 = vpop.f32.mrb[0].mxu0
      %v4749 = vadd.f32 0.0, %v4748
      %v4750 = vpop.f32.mrb[0].mxu0
      %4751 = vmatprep.mubr.f32.mxu0 0.0
      %4752 = vmatmul.mubr.f32.gmra.mrb[0].mxu0 %v1451
      %v4753 = vpop.f32.mrb[0].mxu0
      %v4754 = vadd.f32 0.0, %v4753
      %v4755 = vpop.f32.mrb[0].mxu0
      %4756 = vmatprep.mubr.f32.mxu0 0.0
      %4757 = vmatmul.mubr.f32.gmra.mrb[0].mxu0 %v1453
      %v4758 = vpop.f32.mrb[0].mxu0
      %v4759 = vadd.f32 0.0, %v4758
      %v4760 = vpop.f32.mrb[0].mxu0
      %4761 = vmatprep.mubr.f32.mxu0 0.0
      %4762 = vmatmul.mubr.f32.gmra.mrb[0].mxu0 %v1455
      %v4763 = vpop.f32.mrb[0].mxu0
      %v4764 = vadd.f32 0.0, %v4763
      %v4765 = vpop.f32.mrb[0].mxu0
      %4766 = vmatprep.mubr.f32.mxu0 0.0
      %4767 = vmatmul.mubr.f32.gmra.mrb[0].mxu0 %v1457
      %v4768 = vpop.f32.mrb[0].mxu0
      %v4769 = vadd.f32 0.0, %v4768
      %v4770 = vpop.f32.mrb[0].mxu0
      %4771 = vmatprep.mubr.f32.mxu0 0.0
      %4772 = vmatmul.mubr.f32.gmra.mrb[0].mxu0 %v1459
      %v4773 = vpop.f32.mrb[0].mxu0
      %v4774 = vadd.f32 0.0, %v4773
      %v4775 = vpop.f32.mrb[0].mxu0
      %4776 = vmatprep.mubr.f32.mxu0 0.0
      %4777 = vmatmul.mubr.f32.gmra.mrb[0].mxu0 %v1461
      %v4778 = vpop.f32.mrb[0].mxu0
      %v4779 = vadd.f32 0.0, %v4778
      %v4780 = vpop.f32.mrb[0].mxu0
      %4781 = vmatprep.mubr.f32.mxu0 0.0
      %4782 = vmatmul.mubr.f32.gmra.mrb[0].mxu0 %v1463
      %v4783 = vpop.f32.mrb[0].mxu0
      %v4784 = vadd.f32 0.0, %v4783
      %v4785 = vpop.f32.mrb[0].mxu0
      %4786 = vmatprep.mubr.f32.mxu0 0.0
      %4787 = vmatmul.mubr.f32.gmra.mrb[0].mxu0 %v1465
      %v4788 = vpop.f32.mrb[0].mxu0
      %v4789 = vadd.f32 0.0, %v4788
      %v4790 = vpop.f32.mrb[0].mxu0
      %4791 = vmatprep.mubr.f32.mxu0 0.0
      %4792 = vmatmul.mubr.f32.gmra.mrb[0].mxu0 %v1467
      %v4793 = vpop.f32.mrb[0].mxu0
      %v4794 = vadd.f32 0.0, %v4793
      %v4795 = vpop.f32.mrb[0].mxu0
      %4796 = vmatprep.mubr.f32.mxu0 0.0
      %4797 = vmatmul.mubr.f32.gmra.mrb[0].mxu0 %v1469
      %v4798 = vpop.f32.mrb[0].mxu0
      %v4799 = vadd.f32 0.0, %v4798
      %v4800 = vpop.f32.mrb[0].mxu0
      %4801 = vmatprep.mubr.f32.mxu0 0.0
      %4802 = vmatmul.mubr.f32.gmra.mrb[0].mxu0 %v1471
      %v4803 = vpop.f32.mrb[0].mxu0
      %v4804 = vadd.f32 0.0, %v4803
      %v4805 = vpop.f32.mrb[0].mxu0
      %4806 = vmatprep.mubr.f32.mxu0 0.0
      %4807 = vmatmul.mubr.f32.gmra.mrb[0].mxu0 %v1473
      %v4808 = vpop.f32.mrb[0].mxu0
      %v4809 = vadd.f32 0.0, %v4808
      %v4810 = vpop.f32.mrb[0].mxu0
      %4811 = vmatprep.mubr.f32.mxu0 0.0
      %4812 = vmatmul.mubr.f32.gmra.mrb[0].mxu0 %v1475
      %v4813 = vpop.f32.mrb[0].mxu0
      %v4814 = vadd.f32 0.0, %v4813
      %v4815 = vpop.f32.mrb[0].mxu0
      %4816 = vmatprep.mubr.f32.mxu0 0.0
      %4817 = vmatmul.mubr.f32.gmra.mrb[0].mxu0 %v1477
      %v4818 = vpop.f32.mrb[0].mxu0
      %v4819 = vadd.f32 0.0, %v4818
      %v4820 = vpop.f32.mrb[0].mxu0
      %4821 = vmatprep.mubr.f32.mxu0 0.0
      %4822 = vmatmul.mubr.f32.gmra.mrb[0].mxu0 %v1479
      %v4823 = vpop.f32.mrb[0].mxu0
      %v4824 = vadd.f32 0.0, %v4823
      %v4825 = vpop.f32.mrb[0].mxu0
      %4826 = vmatprep.mubr.f32.mxu0 0.0
      %4827 = vmatmul.mubr.f32.gmra.mrb[0].mxu0 %v1481
      %v4828 = vpop.f32.mrb[0].mxu0
      %v4829 = vadd.f32 0.0, %v4828
      %v4830 = vpop.f32.mrb[0].mxu0
      %4831 = vmatprep.mubr.f32.mxu0 0.0
      %4832 = vmatmul.mubr.f32.gmra.mrb[0].mxu0 %v1483
      %v4833 = vpop.f32.mrb[0].mxu0
      %v4834 = vadd.f32 0.0, %v4833
      %v4835 = vpop.f32.mrb[0].mxu0
      %4836 = vmatprep.mubr.f32.mxu0 0.0
      %4837 = vmatmul.mubr.f32.gmra.mrb[0].mxu0 %v1485
      %v4838 = vpop.f32.mrb[0].mxu0
      %v4839 = vadd.f32 0.0, %v4838
      %v4840 = vpop.f32.mrb[0].mxu0
      %4841 = vmatprep.mubr.f32.mxu0 0.0
      %4842 = vmatmul.mubr.f32.gmra.mrb[0].mxu0 %v1487
      %v4843 = vpop.f32.mrb[0].mxu0
      %v4844 = vadd.f32 0.0, %v4843
      %v4845 = vpop.f32.mrb[0].mxu0
      %4846 = vmatprep.mubr.f32.mxu0 0.0
      %4847 = vmatmul.mubr.f32.gmra.mrb[0].mxu0 %v1489
      %v4848 = vpop.f32.mrb[0].mxu0
      %v4849 = vadd.f32 0.0, %v4848
      %v4850 = vpop.f32.mrb[0].mxu0
      %4851 = vmatprep.mubr.f32.mxu0 0.0
      %4852 = vmatmul.mubr.f32.gmra.mrb[0].mxu0 %v1491
      %v4853 = vpop.f32.mrb[0].mxu0
      %v4854 = vadd.f32 0.0, %v4853
      %v4855 = vpop.f32.mrb[0].mxu0
      %4856 = vmatprep.mubr.f32.mxu0 0.0
      %4857 = vmatmul.mubr.f32.gmra.mrb[0].mxu0 %v3232
      %v4858 = vpop.f32.mrb[0].mxu0
      %v4859 = vadd.f32 0.0, %v4858
      %v4860 = vpop.f32.mrb[0].mxu0
      %4861 = vmatprep.mubr.f32.mxu0 0.0
      %4862 = vmatmul.mubr.f32.gmra.mrb[0].mxu0 %v3234
      %v4863 = vpop.f32.mrb[0].mxu0
      %v4864 = vadd.f32 0.0, %v4863
      %v4865 = vpop.f32.mrb[0].mxu0
      %4866 = vmatprep.mubr.f32.mxu0 0.0
      %4867 = vmatmul.mubr.f32.gmra.mrb[0].mxu0 %v4644
      %v4868 = vpop.f32.mrb[0].mxu0
      %v4869 = vadd.f32 0.0, %v4868
      %v4870 = vpop.f32.mrb[0].mxu0
      %4871 = vmatprep.mubr.f32.mxu0 0.0
      %4872 = vmatmul.mubr.f32.gmra.mrb[0].mxu0 %v4646
      %v4873 = vpop.f32.mrb[0].mxu0
      %v4874 = vadd.f32 0.0, %v4873
      %v4875 = vpop.f32.mrb[0].mxu0
      %4876 = vmatprep.mubr.f32.mxu0 0.0
      %4877 = vmatmul.mubr.f32.gmra.mrb[0].mxu0 %v1501
      %v4878 = vpop.f32.mrb[0].mxu0
      %v4879 = vadd.f32 0.0, %v4878
      %v4880 = vpop.f32.mrb[0].mxu0
      %4881 = vmatprep.mubr.f32.mxu0 0.0
      %4882 = vmatmul.mubr.f32.gmra.mrb[0].mxu0 %v1503
      %v4883 = vpop.f32.mrb[0].mxu0
      %v4884 = vadd.f32 0.0, %v4883
      %v4885 = vpop.f32.mrb[0].mxu0
      %4886 = vmatprep.mubr.f32.mxu0 0.0
      %4887 = vmatmul.mubr.f32.gmra.mrb[0].mxu0 %v1505
      %v4888 = vpop.f32.mrb[0].mxu0
      %v4889 = vadd.f32 0.0, %v4888
      %v4890 = vpop.f32.mrb[0].mxu0
      %4891 = vmatprep.mubr.f32.mxu0 0.0
      %4892 = vmatmul.mubr.f32.gmra.mrb[0].mxu0 %v1507
      %v4893 = vpop.f32.mrb[0].mxu0
      %v4894 = vadd.f32 0.0, %v4893
      %v4895 = vpop.f32.mrb[0].mxu0
      %4896 = vmatprep.mubr.f32.mxu0 0.0
      %4897 = vmatmul.mubr.f32.gmra.mrb[0].mxu0 %v1509
      %v4898 = vpop.f32.mrb[0].mxu0
      %v4899 = vadd.f32 0.0, %v4898
      %v4900 = vpop.f32.mrb[0].mxu0
      %4901 = vmatprep.mubr.f32.mxu0 0.0
      %4902 = vmatmul.mubr.f32.gmra.mrb[0].mxu0 %v1511
      %v4903 = vpop.f32.mrb[0].mxu0
      %v4904 = vadd.f32 0.0, %v4903
      %v4905 = vpop.f32.mrb[0].mxu0
      %4906 = vmatprep.mubr.f32.mxu0 0.0
      %4907 = vmatmul.mubr.f32.gmra.mrb[0].mxu0 %v1513
      %v4908 = vpop.f32.mrb[0].mxu0
      %v4909 = vadd.f32 0.0, %v4908
      %v4910 = vpop.f32.mrb[0].mxu0
      %4911 = vmatprep.mubr.f32.mxu0 0.0
      %4912 = vmatmul.mubr.f32.gmra.mrb[0].mxu0 %v1515
      %v4913 = vpop.f32.mrb[0].mxu0
      %v4914 = vadd.f32 0.0, %v4913
      %v4915 = vpop.f32.mrb[0].mxu0
      %4916 = vmatprep.mubr.f32.mxu0 0.0
      %4917 = vmatmul.mubr.f32.gmra.mrb[0].mxu0 %v1517
      %v4918 = vpop.f32.mrb[0].mxu0
      %v4919 = vadd.f32 0.0, %v4918
      %v4920 = vpop.f32.mrb[0].mxu0
      %4921 = vmatprep.mubr.f32.mxu0 0.0
      %4922 = vmatmul.mubr.f32.gmra.mrb[0].mxu0 %v1519
      %v4923 = vpop.f32.mrb[0].mxu0
      %v4924 = vadd.f32 0.0, %v4923
      %v4925 = vpop.f32.mrb[0].mxu0
      %4926 = vmatprep.mubr.f32.mxu0 0.0
      %4927 = vmatmul.mubr.f32.gmra.mrb[0].mxu0 %v1521
      %v4928 = vpop.f32.mrb[0].mxu0
      %v4929 = vadd.f32 0.0, %v4928
      %v4930 = vpop.f32.mrb[0].mxu0
      %4931 = vmatprep.mubr.f32.mxu0 0.0
      %4932 = vmatmul.mubr.f32.gmra.mrb[0].mxu0 %v1523
      %v4933 = vpop.f32.mrb[0].mxu0
      %v4934 = vadd.f32 0.0, %v4933
      %v4935 = vpop.f32.mrb[0].mxu0
      %4936 = vmatprep.mubr.f32.mxu0 0.0
      %4937 = vmatmul.mubr.f32.gmra.mrb[0].mxu0 %v1525
      %v4938 = vpop.f32.mrb[0].mxu0
      %v4939 = vadd.f32 0.0, %v4938
      %v4940 = vpop.f32.mrb[0].mxu0
      %4941 = vmatprep.mubr.f32.mxu0 0.0
      %4942 = vmatmul.mubr.f32.gmra.mrb[0].mxu0 %v1527
      %v4943 = vpop.f32.mrb[0].mxu0
      %v4944 = vadd.f32 0.0, %v4943
      %v4945 = vpop.f32.mrb[0].mxu0
      %4946 = vmatprep.mubr.f32.mxu0 0.0
      %4947 = vmatmul.mubr.f32.gmra.mrb[0].mxu0 %v1529
      %v4948 = vpop.f32.mrb[0].mxu0
      %v4949 = vadd.f32 0.0, %v4948
      %v4950 = vpop.f32.mrb[0].mxu0
      %4951 = vmatprep.mubr.f32.mxu0 0.0
      %4952 = vmatmul.mubr.f32.gmra.mrb[0].mxu0 %v1531
      %v4953 = vpop.f32.mrb[0].mxu0
      %v4954 = vadd.f32 0.0, %v4953
      %v4955 = vpop.f32.mrb[0].mxu0
      %4956 = vmatprep.mubr.f32.mxu0 0.0
      %4957 = vmatmul.mubr.f32.gmra.mrb[0].mxu0 %v1533
      %v4958 = vpop.f32.mrb[0].mxu0
      %v4959 = vadd.f32 0.0, %v4958
      %v4960 = vpop.f32.mrb[0].mxu0
      %4961 = vmatprep.mubr.f32.mxu0 0.0
      %4962 = vmatmul.mubr.f32.gmra.mrb[0].mxu0 %v1535
      %v4963 = vpop.f32.mrb[0].mxu0
      %v4964 = vadd.f32 0.0, %v4963
      %v4965 = vpop.f32.mrb[0].mxu0
      %4966 = vmatprep.mubr.f32.mxu0 0.0
      %4967 = vmatmul.mubr.f32.gmra.mrb[0].mxu0 %v1537
      %v4968 = vpop.f32.mrb[0].mxu0
      %v4969 = vadd.f32 0.0, %v4968
      %v4970 = vpop.f32.mrb[0].mxu0
      %4971 = vmatprep.mubr.f32.mxu0 0.0
      %4972 = vmatmul.mubr.f32.gmra.mrb[0].mxu0 %v1539
      %v4973 = vpop.f32.mrb[0].mxu0
      %v4974 = vadd.f32 0.0, %v4973
      %v4975 = vpop.f32.mrb[0].mxu0
      %4976 = vmatprep.mubr.f32.mxu0 0.0
      %4977 = vmatmul.mubr.f32.gmra.mrb[0].mxu0 %v1541
      %v4978 = vpop.f32.mrb[0].mxu0
      %v4979 = vadd.f32 0.0, %v4978
      %v4980 = vpop.f32.mrb[0].mxu0
      %4981 = vmatprep.mubr.f32.mxu0 0.0
      %4982 = vmatmul.mubr.f32.gmra.mrb[0].mxu0 %v1543
      %v4983 = vpop.f32.mrb[0].mxu0
      %v4984 = vadd.f32 0.0, %v4983
      %v4985 = vpop.f32.mrb[0].mxu0
      %4986 = vmatprep.mubr.f32.mxu0 0.0
      %4987 = vmatmul.mubr.f32.gmra.mrb[0].mxu0 %v1545
      %v4988 = vpop.f32.mrb[0].mxu0
      %v4989 = vadd.f32 0.0, %v4988
      %v4990 = vpop.f32.mrb[0].mxu0
      %4991 = vmatprep.mubr.f32.mxu0 0.0
      %4992 = vmatmul.mubr.f32.gmra.mrb[0].mxu0 %v1547
      %v4993 = vpop.f32.mrb[0].mxu0
      %v4994 = vadd.f32 0.0, %v4993
      %v4995 = vpop.f32.mrb[0].mxu0
      %4996 = vmatprep.mubr.f32.mxu0 0.0
      %4997 = vmatmul.mubr.f32.gmra.mrb[0].mxu0 %v1549
      %v4998 = vpop.f32.mrb[0].mxu0
      %v4999 = vadd.f32 0.0, %v4998
      %v5000 = vpop.f32.mrb[0].mxu0
      %5001 = vmatprep.mubr.f32.mxu0 0.0
      %5002 = vmatmul.mubr.f32.gmra.mrb[0].mxu0 %v1551
      %v5003 = vpop.f32.mrb[0].mxu0
      %v5004 = vadd.f32 0.0, %v5003
      %v5005 = vpop.f32.mrb[0].mxu0
      %5006 = vmatprep.mubr.f32.mxu0 0.0
      %5007 = vmatmul.mubr.f32.gmra.mrb[0].mxu0 %v1553
      %v5008 = vpop.f32.mrb[0].mxu0
      %v5009 = vadd.f32 0.0, %v5008
      %v5010 = vpop.f32.mrb[0].mxu0
      %5011 = vmatprep.mubr.f32.mxu0 0.0
      %5012 = vmatmul.mubr.f32.gmra.mrb[0].mxu0 %v1555
      %v5013 = vpop.f32.mrb[0].mxu0
      %v5014 = vadd.f32 0.0, %v5013
      %v5015 = vpop.f32.mrb[0].mxu0
      %5016 = vmatprep.mubr.f32.mxu0 0.0
      %5017 = vmatmul.mubr.f32.gmra.mrb[0].mxu0 %v3236
      %v5018 = vpop.f32.mrb[0].mxu0
      %v5019 = vadd.f32 0.0, %v5018
      %v5020 = vpop.f32.mrb[0].mxu0
      %5021 = vmatprep.mubr.f32.mxu0 0.0
      %5022 = vmatmul.mubr.f32.gmra.mrb[0].mxu0 %v3238
      %v5023 = vpop.f32.mrb[0].mxu0
      %v5024 = vadd.f32 0.0, %v5023
      %v5025 = vpop.f32.mrb[0].mxu0
      %5026 = vmatprep.mubr.f32.mxu0 0.0
      %5027 = vmatmul.mubr.f32.gmra.mrb[0].mxu0 %v4648
      %v5028 = vpop.f32.mrb[0].mxu0
      %v5029 = vadd.f32 0.0, %v5028
      %v5030 = vpop.f32.mrb[0].mxu0
      %5031 = vmatprep.mubr.f32.mxu0 0.0
      %5032 = vmatmul.mubr.f32.gmra.mrb[0].mxu0 %v4650
      %v5033 = vpop.f32.mrb[0].mxu0
      %v5034 = vadd.f32 0.0, %v5033
      %v5035 = vpop.f32.mrb[0].mxu0
      %5036 = vdwg.mxu0
      %v5037 = vadd.f32 %v4563, %v4719
      %v5038 = vadd.f32 %v4564, %v4724
      %v5039 = vadd.f32 %v4565, %v4729
      %v5040 = vadd.f32 %v4566, %v4734
      %v5041 = vadd.f32 %v4567, %v4739
      %v5042 = vadd.f32 %v4568, %v4744
      %v5043 = vadd.f32 %v4569, %v4749
      %v5044 = vadd.f32 %v4570, %v4754
      %v5045 = vadd.f32 %v4571, %v4759
      %v5046 = vadd.f32 %v4572, %v4764
      %v5047 = vadd.f32 %v4573, %v4769
      %v5048 = vadd.f32 %v4574, %v4774
      %v5049 = vadd.f32 %v4575, %v4779
      %v5050 = vadd.f32 %v4576, %v4784
      %v5051 = vadd.f32 %v4577, %v4789
      %v5052 = vadd.f32 %v4578, %v4794
      %v5053 = vadd.f32 %v4579, %v4799
      %v5054 = vadd.f32 %v4580, %v4804
      %v5055 = vadd.f32 %v4581, %v4809
      %v5056 = vadd.f32 %v4582, %v4814
      %v5057 = vadd.f32 %v4583, %v4819
      %v5058 = vadd.f32 %v4584, %v4824
      %v5059 = vadd.f32 %v4585, %v4829
      %v5060 = vadd.f32 %v4586, %v4834
      %v5061 = vadd.f32 %v4587, %v4839
      %v5062 = vadd.f32 %v4588, %v4844
      %v5063 = vadd.f32 %v4589, %v4849
      %v5064 = vadd.f32 %v4590, %v4854
      %v5065 = vadd.f32 %v4591, %v4859
      %v5066 = vadd.f32 %v4592, %v4864
      %v5067 = vadd.f32 %v4593, %v4869
      %v5068 = vadd.f32 %v4594, %v4874
      %v5069 = vadd.f32 %v4595, %v4879
      %v5070 = vadd.f32 %v4596, %v4884
      %v5071 = vadd.f32 %v4597, %v4889
      %v5072 = vadd.f32 %v4598, %v4894
      %v5073 = vadd.f32 %v4599, %v4899
      %v5074 = vadd.f32 %v4600, %v4904
      %v5075 = vadd.f32 %v4601, %v4909
      %v5076 = vadd.f32 %v4602, %v4914
      %v5077 = vadd.f32 %v4603, %v4919
      %v5078 = vadd.f32 %v4604, %v4924
      %v5079 = vadd.f32 %v4605, %v4929
      %v5080 = vadd.f32 %v4606, %v4934
      %v5081 = vadd.f32 %v4607, %v4939
      %v5082 = vadd.f32 %v4608, %v4944
      %v5083 = vadd.f32 %v4609, %v4949
      %v5084 = vadd.f32 %v4610, %v4954
      %v5085 = vadd.f32 %v4611, %v4959
      %v5086 = vadd.f32 %v4612, %v4964
      %v5087 = vadd.f32 %v4613, %v4969
      %v5088 = vadd.f32 %v4614, %v4974
      %v5089 = vadd.f32 %v4615, %v4979
      %v5090 = vadd.f32 %v4616, %v4984
      %v5091 = vadd.f32 %v4617, %v4989
      %v5092 = vadd.f32 %v4618, %v4994
      %v5093 = vadd.f32 %v4619, %v4999
      %v5094 = vadd.f32 %v4620, %v5004
      %v5095 = vadd.f32 %v4621, %v5009
      %v5096 = vadd.f32 %v4622, %v5014
      %v5097 = vadd.f32 %v4623, %v5019
      %v5098 = vadd.f32 %v4624, %v5024
      %v5099 = vadd.f32 %v4625, %v5029
      %v5100 = vadd.f32 %v4626, %v5034
      %v5101 = vrot.slane %v464, 2
      %v5102 = vrot.slane %v465, 2
      %v5103 = vsel %vm2006, %v5101, %v5102
      %v5104 = vrot.slane %v466, 2
      %v5105 = vsel %vm2006, %v5102, %v5104
      %v5106 = vrot.slane %v518, 2
      %v5107 = vrot.slane %v519, 2
      %v5108 = vsel %vm2006, %v5106, %v5107
      %v5109 = vrot.slane %v520, 2
      %v5110 = vsel %vm2006, %v5107, %v5109
      %s5111 = scalar_lea.vmem %s1, 256
      %v5112 = vld [vmem:[%s5111] sm:$0xff]
      %v5113 = vld [vmem:[%s5111 + $0x8] sm:$0xff]
      %v5114 = vld [vmem:[%s5111 + $0x10] sm:$0xff]
      %v5115 = vld [vmem:[%s5111 + $0x18] sm:$0xff]
      %v5116 = vsel %vm589, %v5103, 0
      %v5118 = vsel %vm589, %v5105, 0
      %v5120 = vsel %vm589, %v5108, 0
      %v5122 = vsel %vm589, %v5110, 0
      %5124 = vmatprep.subr.mxu0 0.0
      %5125 = vmatpush1.msra.mxu0 %v5112
      %5126 = vmatprep.subr.mxu0 0.0
      %5127 = vmatpush1.msra.mxu0 %v5113
      %5128 = vmatprep.subr.mxu0 0.0
      %5129 = vmatpush1.msra.mxu0 %v5114
      %5130 = vmatprep.subr.mxu0 0.0
      %5131 = vmatpush1.msra.mxu0 %v5115
      %5132 = vmatprep.subr.mxu0 0.0
      %5133 = vmatpush1.msra.mxu0 0.0
      %5134 = vmatprep.subr.mxu0 0.0
      %5135 = vmatpush1.msra.mxu0 0.0
      %5136 = vmatprep.subr.mxu0 0.0
      %5137 = vmatpush1.msra.mxu0 0.0
      %5138 = vmatprep.subr.mxu0 0.0
      %5139 = vmatpush1.msra.mxu0 0.0
      %5140 = vmatprep.subr.mxu0 0.0
      %5141 = vmatpush1.msra.mxu0 0.0
      %5142 = vmatprep.subr.mxu0 0.0
      %5143 = vmatpush1.msra.mxu0 0.0
      %5144 = vmatprep.subr.mxu0 0.0
      %5145 = vmatpush1.msra.mxu0 0.0
      %5146 = vmatprep.subr.mxu0 0.0
      %5147 = vmatpush1.msra.mxu0 0.0
      %5148 = vmatprep.subr.mxu0 0.0
      %5149 = vmatpush1.msra.mxu0 0.0
      %5150 = vmatprep.subr.mxu0 0.0
      %5151 = vmatpush1.msra.mxu0 0.0
      %5152 = vmatprep.subr.mxu0 0.0
      %5153 = vmatpush1.msra.mxu0 0.0
      %5154 = vmatprep.subr.mxu0 0.0
      %5155 = vmatpush1.msra.mxu0 0.0
      %5156 = vmatprep.subr.mxu0 0.0
      %5157 = vmatpush1.msra.mxu0 0.0
      %5158 = vmatprep.subr.mxu0 0.0
      %5159 = vmatpush1.msra.mxu0 0.0
      %5160 = vmatprep.subr.mxu0 0.0
      %5161 = vmatpush1.msra.mxu0 0.0
      %5162 = vmatprep.subr.mxu0 0.0
      %5163 = vmatpush1.msra.mxu0 0.0
      %5164 = vmatprep.subr.mxu0 0.0
      %5165 = vmatpush1.msra.mxu0 0.0
      %5166 = vmatprep.subr.mxu0 0.0
      %5167 = vmatpush1.msra.mxu0 0.0
      %5168 = vmatprep.subr.mxu0 0.0
      %5169 = vmatpush1.msra.mxu0 0.0
      %5170 = vmatprep.subr.mxu0 0.0
      %5171 = vmatpush1.msra.mxu0 0.0
      %5172 = vmatprep.subr.mxu0 0.0
      %5173 = vmatpush1.msra.mxu0 0.0
      %5174 = vmatprep.subr.mxu0 0.0
      %5175 = vmatpush1.msra.mxu0 0.0
      %5176 = vmatprep.subr.mxu0 0.0
      %5177 = vmatpush1.msra.mxu0 0.0
      %5178 = vmatprep.subr.mxu0 0.0
      %5179 = vmatpush1.msra.mxu0 0.0
      %5180 = vmatprep.subr.mxu0 0.0
      %5181 = vmatpush1.msra.mxu0 0.0
      %5182 = vmatprep.subr.mxu0 0.0
      %5183 = vmatpush1.msra.mxu0 0.0
      %5184 = vmatprep.subr.mxu0 0.0
      %5185 = vmatpush1.msra.mxu0 0.0
      %5186 = vmatprep.subr.mxu0 0.0
      %5187 = vmatpush1.msra.mxu0 0.0
      %5188 = vmatprep.mubr.f32.mxu0 0.0
      %5189 = vmatmul.mubr.f32.gmra.mrb[0].mxu0 %v2180
      %v5190 = vpop.f32.mrb[0].mxu0
      %v5191 = vadd.f32 0.0, %v5190
      %v5192 = vpop.f32.mrb[0].mxu0
      %5193 = vmatprep.mubr.f32.mxu0 0.0
      %5194 = vmatmul.mubr.f32.gmra.mrb[0].mxu0 %v2182
      %v5195 = vpop.f32.mrb[0].mxu0
      %v5196 = vadd.f32 0.0, %v5195
      %v5197 = vpop.f32.mrb[0].mxu0
      %5198 = vmatprep.mubr.f32.mxu0 0.0
      %5199 = vmatmul.mubr.f32.gmra.mrb[0].mxu0 %v2184
      %v5200 = vpop.f32.mrb[0].mxu0
      %v5201 = vadd.f32 0.0, %v5200
      %v5202 = vpop.f32.mrb[0].mxu0
      %5203 = vmatprep.mubr.f32.mxu0 0.0
      %5204 = vmatmul.mubr.f32.gmra.mrb[0].mxu0 %v2186
      %v5205 = vpop.f32.mrb[0].mxu0
      %v5206 = vadd.f32 0.0, %v5205
      %v5207 = vpop.f32.mrb[0].mxu0
      %5208 = vmatprep.mubr.f32.mxu0 0.0
      %5209 = vmatmul.mubr.f32.gmra.mrb[0].mxu0 %v2188
      %v5210 = vpop.f32.mrb[0].mxu0
      %v5211 = vadd.f32 0.0, %v5210
      %v5212 = vpop.f32.mrb[0].mxu0
      %5213 = vmatprep.mubr.f32.mxu0 0.0
      %5214 = vmatmul.mubr.f32.gmra.mrb[0].mxu0 %v2190
      %v5215 = vpop.f32.mrb[0].mxu0
      %v5216 = vadd.f32 0.0, %v5215
      %v5217 = vpop.f32.mrb[0].mxu0
      %5218 = vmatprep.mubr.f32.mxu0 0.0
      %5219 = vmatmul.mubr.f32.gmra.mrb[0].mxu0 %v2192
      %v5220 = vpop.f32.mrb[0].mxu0
      %v5221 = vadd.f32 0.0, %v5220
      %v5222 = vpop.f32.mrb[0].mxu0
      %5223 = vmatprep.mubr.f32.mxu0 0.0
      %5224 = vmatmul.mubr.f32.gmra.mrb[0].mxu0 %v2194
      %v5225 = vpop.f32.mrb[0].mxu0
      %v5226 = vadd.f32 0.0, %v5225
      %v5227 = vpop.f32.mrb[0].mxu0
      %5228 = vmatprep.mubr.f32.mxu0 0.0
      %5229 = vmatmul.mubr.f32.gmra.mrb[0].mxu0 %v2196
      %v5230 = vpop.f32.mrb[0].mxu0
      %v5231 = vadd.f32 0.0, %v5230
      %v5232 = vpop.f32.mrb[0].mxu0
      %5233 = vmatprep.mubr.f32.mxu0 0.0
      %5234 = vmatmul.mubr.f32.gmra.mrb[0].mxu0 %v2198
      %v5235 = vpop.f32.mrb[0].mxu0
      %v5236 = vadd.f32 0.0, %v5235
      %v5237 = vpop.f32.mrb[0].mxu0
      %5238 = vmatprep.mubr.f32.mxu0 0.0
      %5239 = vmatmul.mubr.f32.gmra.mrb[0].mxu0 %v2200
      %v5240 = vpop.f32.mrb[0].mxu0
      %v5241 = vadd.f32 0.0, %v5240
      %v5242 = vpop.f32.mrb[0].mxu0
      %5243 = vmatprep.mubr.f32.mxu0 0.0
      %5244 = vmatmul.mubr.f32.gmra.mrb[0].mxu0 %v2202
      %v5245 = vpop.f32.mrb[0].mxu0
      %v5246 = vadd.f32 0.0, %v5245
      %v5247 = vpop.f32.mrb[0].mxu0
      %5248 = vmatprep.mubr.f32.mxu0 0.0
      %5249 = vmatmul.mubr.f32.gmra.mrb[0].mxu0 %v2204
      %v5250 = vpop.f32.mrb[0].mxu0
      %v5251 = vadd.f32 0.0, %v5250
      %v5252 = vpop.f32.mrb[0].mxu0
      %5253 = vmatprep.mubr.f32.mxu0 0.0
      %5254 = vmatmul.mubr.f32.gmra.mrb[0].mxu0 %v2206
      %v5255 = vpop.f32.mrb[0].mxu0
      %v5256 = vadd.f32 0.0, %v5255
      %v5257 = vpop.f32.mrb[0].mxu0
      %5258 = vmatprep.mubr.f32.mxu0 0.0
      %5259 = vmatmul.mubr.f32.gmra.mrb[0].mxu0 %v2208
      %v5260 = vpop.f32.mrb[0].mxu0
      %v5261 = vadd.f32 0.0, %v5260
      %v5262 = vpop.f32.mrb[0].mxu0
      %5263 = vmatprep.mubr.f32.mxu0 0.0
      %5264 = vmatmul.mubr.f32.gmra.mrb[0].mxu0 %v2210
      %v5265 = vpop.f32.mrb[0].mxu0
      %v5266 = vadd.f32 0.0, %v5265
      %v5267 = vpop.f32.mrb[0].mxu0
      %5268 = vmatprep.mubr.f32.mxu0 0.0
      %5269 = vmatmul.mubr.f32.gmra.mrb[0].mxu0 %v2212
      %v5270 = vpop.f32.mrb[0].mxu0
      %v5271 = vadd.f32 0.0, %v5270
      %v5272 = vpop.f32.mrb[0].mxu0
      %5273 = vmatprep.mubr.f32.mxu0 0.0
      %5274 = vmatmul.mubr.f32.gmra.mrb[0].mxu0 %v2214
      %v5275 = vpop.f32.mrb[0].mxu0
      %v5276 = vadd.f32 0.0, %v5275
      %v5277 = vpop.f32.mrb[0].mxu0
      %5278 = vmatprep.mubr.f32.mxu0 0.0
      %5279 = vmatmul.mubr.f32.gmra.mrb[0].mxu0 %v2216
      %v5280 = vpop.f32.mrb[0].mxu0
      %v5281 = vadd.f32 0.0, %v5280
      %v5282 = vpop.f32.mrb[0].mxu0
      %5283 = vmatprep.mubr.f32.mxu0 0.0
      %5284 = vmatmul.mubr.f32.gmra.mrb[0].mxu0 %v2218
      %v5285 = vpop.f32.mrb[0].mxu0
      %v5286 = vadd.f32 0.0, %v5285
      %v5287 = vpop.f32.mrb[0].mxu0
      %5288 = vmatprep.mubr.f32.mxu0 0.0
      %5289 = vmatmul.mubr.f32.gmra.mrb[0].mxu0 %v2220
      %v5290 = vpop.f32.mrb[0].mxu0
      %v5291 = vadd.f32 0.0, %v5290
      %v5292 = vpop.f32.mrb[0].mxu0
      %5293 = vmatprep.mubr.f32.mxu0 0.0
      %5294 = vmatmul.mubr.f32.gmra.mrb[0].mxu0 %v2222
      %v5295 = vpop.f32.mrb[0].mxu0
      %v5296 = vadd.f32 0.0, %v5295
      %v5297 = vpop.f32.mrb[0].mxu0
      %5298 = vmatprep.mubr.f32.mxu0 0.0
      %5299 = vmatmul.mubr.f32.gmra.mrb[0].mxu0 %v2224
      %v5300 = vpop.f32.mrb[0].mxu0
      %v5301 = vadd.f32 0.0, %v5300
      %v5302 = vpop.f32.mrb[0].mxu0
      %5303 = vmatprep.mubr.f32.mxu0 0.0
      %5304 = vmatmul.mubr.f32.gmra.mrb[0].mxu0 %v2226
      %v5305 = vpop.f32.mrb[0].mxu0
      %v5306 = vadd.f32 0.0, %v5305
      %v5307 = vpop.f32.mrb[0].mxu0
      %5308 = vmatprep.mubr.f32.mxu0 0.0
      %5309 = vmatmul.mubr.f32.gmra.mrb[0].mxu0 %v2228
      %v5310 = vpop.f32.mrb[0].mxu0
      %v5311 = vadd.f32 0.0, %v5310
      %v5312 = vpop.f32.mrb[0].mxu0
      %5313 = vmatprep.mubr.f32.mxu0 0.0
      %5314 = vmatmul.mubr.f32.gmra.mrb[0].mxu0 %v2230
      %v5315 = vpop.f32.mrb[0].mxu0
      %v5316 = vadd.f32 0.0, %v5315
      %v5317 = vpop.f32.mrb[0].mxu0
      %5318 = vmatprep.mubr.f32.mxu0 0.0
      %5319 = vmatmul.mubr.f32.gmra.mrb[0].mxu0 %v2232
      %v5320 = vpop.f32.mrb[0].mxu0
      %v5321 = vadd.f32 0.0, %v5320
      %v5322 = vpop.f32.mrb[0].mxu0
      %5323 = vmatprep.mubr.f32.mxu0 0.0
      %5324 = vmatmul.mubr.f32.gmra.mrb[0].mxu0 %v2234
      %v5325 = vpop.f32.mrb[0].mxu0
      %v5326 = vadd.f32 0.0, %v5325
      %v5327 = vpop.f32.mrb[0].mxu0
      %5328 = vmatprep.mubr.f32.mxu0 0.0
      %5329 = vmatmul.mubr.f32.gmra.mrb[0].mxu0 %v3704
      %v5330 = vpop.f32.mrb[0].mxu0
      %v5331 = vadd.f32 0.0, %v5330
      %v5332 = vpop.f32.mrb[0].mxu0
      %5333 = vmatprep.mubr.f32.mxu0 0.0
      %5334 = vmatmul.mubr.f32.gmra.mrb[0].mxu0 %v3706
      %v5335 = vpop.f32.mrb[0].mxu0
      %v5336 = vadd.f32 0.0, %v5335
      %v5337 = vpop.f32.mrb[0].mxu0
      %5338 = vmatprep.mubr.f32.mxu0 0.0
      %5339 = vmatmul.mubr.f32.gmra.mrb[0].mxu0 %v5116
      %v5340 = vpop.f32.mrb[0].mxu0
      %v5341 = vadd.f32 0.0, %v5340
      %v5342 = vpop.f32.mrb[0].mxu0
      %5343 = vmatprep.mubr.f32.mxu0 0.0
      %5344 = vmatmul.mubr.f32.gmra.mrb[0].mxu0 %v5118
      %v5345 = vpop.f32.mrb[0].mxu0
      %v5346 = vadd.f32 0.0, %v5345
      %v5347 = vpop.f32.mrb[0].mxu0
      %5348 = vmatprep.mubr.f32.mxu0 0.0
      %5349 = vmatmul.mubr.f32.gmra.mrb[0].mxu0 %v2244
      %v5350 = vpop.f32.mrb[0].mxu0
      %v5351 = vadd.f32 0.0, %v5350
      %v5352 = vpop.f32.mrb[0].mxu0
      %5353 = vmatprep.mubr.f32.mxu0 0.0
      %5354 = vmatmul.mubr.f32.gmra.mrb[0].mxu0 %v2246
      %v5355 = vpop.f32.mrb[0].mxu0
      %v5356 = vadd.f32 0.0, %v5355
      %v5357 = vpop.f32.mrb[0].mxu0
      %5358 = vmatprep.mubr.f32.mxu0 0.0
      %5359 = vmatmul.mubr.f32.gmra.mrb[0].mxu0 %v2248
      %v5360 = vpop.f32.mrb[0].mxu0
      %v5361 = vadd.f32 0.0, %v5360
      %v5362 = vpop.f32.mrb[0].mxu0
      %5363 = vmatprep.mubr.f32.mxu0 0.0
      %5364 = vmatmul.mubr.f32.gmra.mrb[0].mxu0 %v2250
      %v5365 = vpop.f32.mrb[0].mxu0
      %v5366 = vadd.f32 0.0, %v5365
      %v5367 = vpop.f32.mrb[0].mxu0
      %5368 = vmatprep.mubr.f32.mxu0 0.0
      %5369 = vmatmul.mubr.f32.gmra.mrb[0].mxu0 %v2252
      %v5370 = vpop.f32.mrb[0].mxu0
      %v5371 = vadd.f32 0.0, %v5370
      %v5372 = vpop.f32.mrb[0].mxu0
      %5373 = vmatprep.mubr.f32.mxu0 0.0
      %5374 = vmatmul.mubr.f32.gmra.mrb[0].mxu0 %v2254
      %v5375 = vpop.f32.mrb[0].mxu0
      %v5376 = vadd.f32 0.0, %v5375
      %v5377 = vpop.f32.mrb[0].mxu0
      %5378 = vmatprep.mubr.f32.mxu0 0.0
      %5379 = vmatmul.mubr.f32.gmra.mrb[0].mxu0 %v2256
      %v5380 = vpop.f32.mrb[0].mxu0
      %v5381 = vadd.f32 0.0, %v5380
      %v5382 = vpop.f32.mrb[0].mxu0
      %5383 = vmatprep.mubr.f32.mxu0 0.0
      %5384 = vmatmul.mubr.f32.gmra.mrb[0].mxu0 %v2258
      %v5385 = vpop.f32.mrb[0].mxu0
      %v5386 = vadd.f32 0.0, %v5385
      %v5387 = vpop.f32.mrb[0].mxu0
      %5388 = vmatprep.mubr.f32.mxu0 0.0
      %5389 = vmatmul.mubr.f32.gmra.mrb[0].mxu0 %v2260
      %v5390 = vpop.f32.mrb[0].mxu0
      %v5391 = vadd.f32 0.0, %v5390
      %v5392 = vpop.f32.mrb[0].mxu0
      %5393 = vmatprep.mubr.f32.mxu0 0.0
      %5394 = vmatmul.mubr.f32.gmra.mrb[0].mxu0 %v2262
      %v5395 = vpop.f32.mrb[0].mxu0
      %v5396 = vadd.f32 0.0, %v5395
      %v5397 = vpop.f32.mrb[0].mxu0
      %5398 = vmatprep.mubr.f32.mxu0 0.0
      %5399 = vmatmul.mubr.f32.gmra.mrb[0].mxu0 %v2264
      %v5400 = vpop.f32.mrb[0].mxu0
      %v5401 = vadd.f32 0.0, %v5400
      %v5402 = vpop.f32.mrb[0].mxu0
      %5403 = vmatprep.mubr.f32.mxu0 0.0
      %5404 = vmatmul.mubr.f32.gmra.mrb[0].mxu0 %v2266
      %v5405 = vpop.f32.mrb[0].mxu0
      %v5406 = vadd.f32 0.0, %v5405
      %v5407 = vpop.f32.mrb[0].mxu0
      %5408 = vmatprep.mubr.f32.mxu0 0.0
      %5409 = vmatmul.mubr.f32.gmra.mrb[0].mxu0 %v2268
      %v5410 = vpop.f32.mrb[0].mxu0
      %v5411 = vadd.f32 0.0, %v5410
      %v5412 = vpop.f32.mrb[0].mxu0
      %5413 = vmatprep.mubr.f32.mxu0 0.0
      %5414 = vmatmul.mubr.f32.gmra.mrb[0].mxu0 %v2270
      %v5415 = vpop.f32.mrb[0].mxu0
      %v5416 = vadd.f32 0.0, %v5415
      %v5417 = vpop.f32.mrb[0].mxu0
      %5418 = vmatprep.mubr.f32.mxu0 0.0
      %5419 = vmatmul.mubr.f32.gmra.mrb[0].mxu0 %v2272
      %v5420 = vpop.f32.mrb[0].mxu0
      %v5421 = vadd.f32 0.0, %v5420
      %v5422 = vpop.f32.mrb[0].mxu0
      %5423 = vmatprep.mubr.f32.mxu0 0.0
      %5424 = vmatmul.mubr.f32.gmra.mrb[0].mxu0 %v2274
      %v5425 = vpop.f32.mrb[0].mxu0
      %v5426 = vadd.f32 0.0, %v5425
      %v5427 = vpop.f32.mrb[0].mxu0
      %5428 = vmatprep.mubr.f32.mxu0 0.0
      %5429 = vmatmul.mubr.f32.gmra.mrb[0].mxu0 %v2276
      %v5430 = vpop.f32.mrb[0].mxu0
      %v5431 = vadd.f32 0.0, %v5430
      %v5432 = vpop.f32.mrb[0].mxu0
      %5433 = vmatprep.mubr.f32.mxu0 0.0
      %5434 = vmatmul.mubr.f32.gmra.mrb[0].mxu0 %v2278
      %v5435 = vpop.f32.mrb[0].mxu0
      %v5436 = vadd.f32 0.0, %v5435
      %v5437 = vpop.f32.mrb[0].mxu0
      %5438 = vmatprep.mubr.f32.mxu0 0.0
      %5439 = vmatmul.mubr.f32.gmra.mrb[0].mxu0 %v2280
      %v5440 = vpop.f32.mrb[0].mxu0
      %v5441 = vadd.f32 0.0, %v5440
      %v5442 = vpop.f32.mrb[0].mxu0
      %5443 = vmatprep.mubr.f32.mxu0 0.0
      %5444 = vmatmul.mubr.f32.gmra.mrb[0].mxu0 %v2282
      %v5445 = vpop.f32.mrb[0].mxu0
      %v5446 = vadd.f32 0.0, %v5445
      %v5447 = vpop.f32.mrb[0].mxu0
      %5448 = vmatprep.mubr.f32.mxu0 0.0
      %5449 = vmatmul.mubr.f32.gmra.mrb[0].mxu0 %v2284
      %v5450 = vpop.f32.mrb[0].mxu0
      %v5451 = vadd.f32 0.0, %v5450
      %v5452 = vpop.f32.mrb[0].mxu0
      %5453 = vmatprep.mubr.f32.mxu0 0.0
      %5454 = vmatmul.mubr.f32.gmra.mrb[0].mxu0 %v2286
      %v5455 = vpop.f32.mrb[0].mxu0
      %v5456 = vadd.f32 0.0, %v5455
      %v5457 = vpop.f32.mrb[0].mxu0
      %5458 = vmatprep.mubr.f32.mxu0 0.0
      %5459 = vmatmul.mubr.f32.gmra.mrb[0].mxu0 %v2288
      %v5460 = vpop.f32.mrb[0].mxu0
      %v5461 = vadd.f32 0.0, %v5460
      %v5462 = vpop.f32.mrb[0].mxu0
      %5463 = vmatprep.mubr.f32.mxu0 0.0
      %5464 = vmatmul.mubr.f32.gmra.mrb[0].mxu0 %v2290
      %v5465 = vpop.f32.mrb[0].mxu0
      %v5466 = vadd.f32 0.0, %v5465
      %v5467 = vpop.f32.mrb[0].mxu0
      %5468 = vmatprep.mubr.f32.mxu0 0.0
      %5469 = vmatmul.mubr.f32.gmra.mrb[0].mxu0 %v2292
      %v5470 = vpop.f32.mrb[0].mxu0
      %v5471 = vadd.f32 0.0, %v5470
      %v5472 = vpop.f32.mrb[0].mxu0
      %5473 = vmatprep.mubr.f32.mxu0 0.0
      %5474 = vmatmul.mubr.f32.gmra.mrb[0].mxu0 %v2294
      %v5475 = vpop.f32.mrb[0].mxu0
      %v5476 = vadd.f32 0.0, %v5475
      %v5477 = vpop.f32.mrb[0].mxu0
      %5478 = vmatprep.mubr.f32.mxu0 0.0
      %5479 = vmatmul.mubr.f32.gmra.mrb[0].mxu0 %v2296
      %v5480 = vpop.f32.mrb[0].mxu0
      %v5481 = vadd.f32 0.0, %v5480
      %v5482 = vpop.f32.mrb[0].mxu0
      %5483 = vmatprep.mubr.f32.mxu0 0.0
      %5484 = vmatmul.mubr.f32.gmra.mrb[0].mxu0 %v2298
      %v5485 = vpop.f32.mrb[0].mxu0
      %v5486 = vadd.f32 0.0, %v5485
      %v5487 = vpop.f32.mrb[0].mxu0
      %5488 = vmatprep.mubr.f32.mxu0 0.0
      %5489 = vmatmul.mubr.f32.gmra.mrb[0].mxu0 %v3708
      %v5490 = vpop.f32.mrb[0].mxu0
      %v5491 = vadd.f32 0.0, %v5490
      %v5492 = vpop.f32.mrb[0].mxu0
      %5493 = vmatprep.mubr.f32.mxu0 0.0
      %5494 = vmatmul.mubr.f32.gmra.mrb[0].mxu0 %v3710
      %v5495 = vpop.f32.mrb[0].mxu0
      %v5496 = vadd.f32 0.0, %v5495
      %v5497 = vpop.f32.mrb[0].mxu0
      %5498 = vmatprep.mubr.f32.mxu0 0.0
      %5499 = vmatmul.mubr.f32.gmra.mrb[0].mxu0 %v5120
      %v5500 = vpop.f32.mrb[0].mxu0
      %v5501 = vadd.f32 0.0, %v5500
      %v5502 = vpop.f32.mrb[0].mxu0
      %5503 = vmatprep.mubr.f32.mxu0 0.0
      %5504 = vmatmul.mubr.f32.gmra.mrb[0].mxu0 %v5122
      %v5505 = vpop.f32.mrb[0].mxu0
      %v5506 = vadd.f32 0.0, %v5505
      %v5507 = vpop.f32.mrb[0].mxu0
      %5508 = vdwg.mxu0
      %v5509 = vadd.f32 %v5037, %v5191
      %v5510 = vadd.f32 %v5038, %v5196
      %v5511 = vadd.f32 %v5039, %v5201
      %v5512 = vadd.f32 %v5040, %v5206
      %v5513 = vadd.f32 %v5041, %v5211
      %v5514 = vadd.f32 %v5042, %v5216
      %v5515 = vadd.f32 %v5043, %v5221
      %v5516 = vadd.f32 %v5044, %v5226
      %v5517 = vadd.f32 %v5045, %v5231
      %v5518 = vadd.f32 %v5046, %v5236
      %v5519 = vadd.f32 %v5047, %v5241
      %v5520 = vadd.f32 %v5048, %v5246
      %v5521 = vadd.f32 %v5049, %v5251
      %v5522 = vadd.f32 %v5050, %v5256
      %v5523 = vadd.f32 %v5051, %v5261
      %v5524 = vadd.f32 %v5052, %v5266
      %v5525 = vadd.f32 %v5053, %v5271
      %v5526 = vadd.f32 %v5054, %v5276
      %v5527 = vadd.f32 %v5055, %v5281
      %v5528 = vadd.f32 %v5056, %v5286
      %v5529 = vadd.f32 %v5057, %v5291
      %v5530 = vadd.f32 %v5058, %v5296
      %v5531 = vadd.f32 %v5059, %v5301
      %v5532 = vadd.f32 %v5060, %v5306
      %v5533 = vadd.f32 %v5061, %v5311
      %v5534 = vadd.f32 %v5062, %v5316
      %v5535 = vadd.f32 %v5063, %v5321
      %v5536 = vadd.f32 %v5064, %v5326
      %v5537 = vadd.f32 %v5065, %v5331
      %v5538 = vadd.f32 %v5066, %v5336
      %v5539 = vadd.f32 %v5067, %v5341
      %v5540 = vadd.f32 %v5068, %v5346
      %v5541 = vadd.f32 %v5069, %v5351
      %v5542 = vadd.f32 %v5070, %v5356
      %v5543 = vadd.f32 %v5071, %v5361
      %v5544 = vadd.f32 %v5072, %v5366
      %v5545 = vadd.f32 %v5073, %v5371
      %v5546 = vadd.f32 %v5074, %v5376
      %v5547 = vadd.f32 %v5075, %v5381
      %v5548 = vadd.f32 %v5076, %v5386
      %v5549 = vadd.f32 %v5077, %v5391
      %v5550 = vadd.f32 %v5078, %v5396
      %v5551 = vadd.f32 %v5079, %v5401
      %v5552 = vadd.f32 %v5080, %v5406
      %v5553 = vadd.f32 %v5081, %v5411
      %v5554 = vadd.f32 %v5082, %v5416
      %v5555 = vadd.f32 %v5083, %v5421
      %v5556 = vadd.f32 %v5084, %v5426
      %v5557 = vadd.f32 %v5085, %v5431
      %v5558 = vadd.f32 %v5086, %v5436
      %v5559 = vadd.f32 %v5087, %v5441
      %v5560 = vadd.f32 %v5088, %v5446
      %v5561 = vadd.f32 %v5089, %v5451
      %v5562 = vadd.f32 %v5090, %v5456
      %v5563 = vadd.f32 %v5091, %v5461
      %v5564 = vadd.f32 %v5092, %v5466
      %v5565 = vadd.f32 %v5093, %v5471
      %v5566 = vadd.f32 %v5094, %v5476
      %v5567 = vadd.f32 %v5095, %v5481
      %v5568 = vadd.f32 %v5096, %v5486
      %v5569 = vadd.f32 %v5097, %v5491
      %v5570 = vadd.f32 %v5098, %v5496
      %v5571 = vadd.f32 %v5099, %v5501
      %v5572 = vadd.f32 %v5100, %v5506
      %v5573 = vld [vmem:[#allocation3] sm:$0xff]
      %v5574 = vld [vmem:[#allocation3 + $0x8] sm:$0xff]
      %v5575 = vld [vmem:[#allocation3 + $0x10] sm:$0xff]
      %v5576 = vld [vmem:[#allocation3 + $0x18] sm:$0xff]
      %v5577 = vld [vmem:[#allocation3 + $0x20] sm:$0xff]
      %v5578 = vld [vmem:[#allocation3 + $0x28] sm:$0xff]
      %v5579 = vld [vmem:[#allocation3 + $0x30] sm:$0xff]
      %v5580 = vld [vmem:[#allocation3 + $0x38] sm:$0xff]
      %v5581 = vld [vmem:[#allocation3 + $0x40] sm:$0xff]
      %v5582 = vld [vmem:[#allocation3 + $0x48] sm:$0xff]
      %v5583 = vld [vmem:[#allocation3 + $0x50] sm:$0xff]
      %v5584 = vld [vmem:[#allocation3 + $0x58] sm:$0xff]
      %v5585 = vld [vmem:[#allocation3 + $0x60] sm:$0xff]
      %v5586 = vld [vmem:[#allocation3 + $0x68] sm:$0xff]
      %v5587 = vld [vmem:[#allocation3 + $0x70] sm:$0xff]
      %v5588 = vld [vmem:[#allocation3 + $0x78] sm:$0xff]
      %v5589 = vld [vmem:[#allocation3 + $0x80] sm:$0xff]
      %v5590 = vld [vmem:[#allocation3 + $0x88] sm:$0xff]
      %v5591 = vld [vmem:[#allocation3 + $0x90] sm:$0xff]
      %v5592 = vld [vmem:[#allocation3 + $0x98] sm:$0xff]
      %v5593 = vld [vmem:[#allocation3 + $0xa0] sm:$0xff]
      %v5594 = vld [vmem:[#allocation3 + $0xa8] sm:$0xff]
      %v5595 = vld [vmem:[#allocation3 + $0xb0] sm:$0xff]
      %v5596 = vld [vmem:[#allocation3 + $0xb8] sm:$0xff]
      %v5597 = vld [vmem:[#allocation3 + $0xc0] sm:$0xff]
      %v5598 = vld [vmem:[#allocation3 + $0xc8] sm:$0xff]
      %v5599 = vld [vmem:[#allocation3 + $0xd0] sm:$0xff]
      %v5600 = vld [vmem:[#allocation3 + $0xd8] sm:$0xff]
      %v5601 = vld [vmem:[#allocation3 + $0xe0] sm:$0xff]
      %v5602 = vld [vmem:[#allocation3 + $0xe8] sm:$0xff]
      %v5603 = vld [vmem:[#allocation3 + $0xf0] sm:$0xff]
      %v5604 = vld [vmem:[#allocation3 + $0xf8] sm:$0xff]
      %v5605 = vld [vmem:[#allocation3 + $0x100] sm:$0xff]
      %v5606 = vld [vmem:[#allocation3 + $0x108] sm:$0xff]
      %v5607 = vld [vmem:[#allocation3 + $0x110] sm:$0xff]
      %v5608 = vld [vmem:[#allocation3 + $0x118] sm:$0xff]
      %v5609 = vld [vmem:[#allocation3 + $0x120] sm:$0xff]
      %v5610 = vld [vmem:[#allocation3 + $0x128] sm:$0xff]
      %v5611 = vld [vmem:[#allocation3 + $0x130] sm:$0xff]
      %v5612 = vld [vmem:[#allocation3 + $0x138] sm:$0xff]
      %v5613 = vld [vmem:[#allocation3 + $0x140] sm:$0xff]
      %v5614 = vld [vmem:[#allocation3 + $0x148] sm:$0xff]
      %v5615 = vld [vmem:[#allocation3 + $0x150] sm:$0xff]
      %v5616 = vld [vmem:[#allocation3 + $0x158] sm:$0xff]
      %v5617 = vld [vmem:[#allocation3 + $0x160] sm:$0xff]
      %v5618 = vld [vmem:[#allocation3 + $0x168] sm:$0xff]
      %v5619 = vld [vmem:[#allocation3 + $0x170] sm:$0xff]
      %v5620 = vld [vmem:[#allocation3 + $0x178] sm:$0xff]
      %v5621 = vld [vmem:[#allocation3 + $0x180] sm:$0xff]
      %v5622 = vld [vmem:[#allocation3 + $0x188] sm:$0xff]
      %v5623 = vld [vmem:[#allocation3 + $0x190] sm:$0xff]
      %v5624 = vld [vmem:[#allocation3 + $0x198] sm:$0xff]
      %v5625 = vld [vmem:[#allocation3 + $0x1a0] sm:$0xff]
      %v5626 = vld [vmem:[#allocation3 + $0x1a8] sm:$0xff]
      %v5627 = vld [vmem:[#allocation3 + $0x1b0] sm:$0xff]
      %v5628 = vld [vmem:[#allocation3 + $0x1b8] sm:$0xff]
      %v5629 = vld [vmem:[#allocation3 + $0x1c0] sm:$0xff]
      %v5630 = vld [vmem:[#allocation3 + $0x1c8] sm:$0xff]
      %v5631 = vld [vmem:[#allocation3 + $0x1d0] sm:$0xff]
      %v5632 = vld [vmem:[#allocation3 + $0x1d8] sm:$0xff]
      %v5633 = vld [vmem:[#allocation3 + $0x1e0] sm:$0xff]
      %v5634 = vld [vmem:[#allocation3 + $0x1e8] sm:$0xff]
      %v5635 = vld [vmem:[#allocation3 + $0x1f0] sm:$0xff]
      %v5636 = vld [vmem:[#allocation3 + $0x1f8] sm:$0xff]
      %v5637 = vld [vmem:[%s2] sm:$0xff]
      %v5638 = vld [vmem:[%s2 + $0x8] sm:$0xff]
      %v5639 = vld [vmem:[%s2 + $0x10] sm:$0xff]
      %v5640 = vld [vmem:[%s2 + $0x18] sm:$0xff]
      %v5641 = vld [vmem:[%s2 + $0x20] sm:$0xff]
      %v5642 = vld [vmem:[%s2 + $0x28] sm:$0xff]
      %v5643 = vld [vmem:[%s2 + $0x30] sm:$0xff]
      %v5644 = vld [vmem:[%s2 + $0x38] sm:$0xff]
      %v5645 = vld [vmem:[%s2 + $0x40] sm:$0xff]
      %v5646 = vld [vmem:[%s2 + $0x48] sm:$0xff]
      %v5647 = vld [vmem:[%s2 + $0x50] sm:$0xff]
      %v5648 = vld [vmem:[%s2 + $0x58] sm:$0xff]
      %v5649 = vld [vmem:[%s2 + $0x60] sm:$0xff]
      %v5650 = vld [vmem:[%s2 + $0x68] sm:$0xff]
      %v5651 = vld [vmem:[%s2 + $0x70] sm:$0xff]
      %v5652 = vld [vmem:[%s2 + $0x78] sm:$0xff]
      %v5653 = vld [vmem:[%s2 + $0x80] sm:$0xff]
      %v5654 = vld [vmem:[%s2 + $0x88] sm:$0xff]
      %v5655 = vld [vmem:[%s2 + $0x90] sm:$0xff]
      %v5656 = vld [vmem:[%s2 + $0x98] sm:$0xff]
      %v5657 = vld [vmem:[%s2 + $0xa0] sm:$0xff]
      %v5658 = vld [vmem:[%s2 + $0xa8] sm:$0xff]
      %v5659 = vld [vmem:[%s2 + $0xb0] sm:$0xff]
      %v5660 = vld [vmem:[%s2 + $0xb8] sm:$0xff]
      %v5661 = vld [vmem:[%s2 + $0xc0] sm:$0xff]
      %v5662 = vld [vmem:[%s2 + $0xc8] sm:$0xff]
      %v5663 = vld [vmem:[%s2 + $0xd0] sm:$0xff]
      %v5664 = vld [vmem:[%s2 + $0xd8] sm:$0xff]
      %v5665 = vld [vmem:[%s2 + $0xe0] sm:$0xff]
      %v5666 = vld [vmem:[%s2 + $0xe8] sm:$0xff]
      %v5667 = vld [vmem:[%s2 + $0xf0] sm:$0xff]
      %v5668 = vld [vmem:[%s2 + $0xf8] sm:$0xff]
      %v5669 = vmul.f32 %v5637, %v5573
      %v5670 = vmul.f32 %v5638, %v5574
      %v5671 = vmul.f32 %v5639, %v5575
      %v5672 = vmul.f32 %v5640, %v5576
      %v5673 = vmul.f32 %v5641, %v5577
      %v5674 = vmul.f32 %v5642, %v5578
      %v5675 = vmul.f32 %v5643, %v5579
      %v5676 = vmul.f32 %v5644, %v5580
      %v5677 = vmul.f32 %v5645, %v5581
      %v5678 = vmul.f32 %v5646, %v5582
      %v5679 = vmul.f32 %v5647, %v5583
      %v5680 = vmul.f32 %v5648, %v5584
      %v5681 = vmul.f32 %v5649, %v5585
      %v5682 = vmul.f32 %v5650, %v5586
      %v5683 = vmul.f32 %v5651, %v5587
      %v5684 = vmul.f32 %v5652, %v5588
      %v5685 = vmul.f32 %v5653, %v5589
      %v5686 = vmul.f32 %v5654, %v5590
      %v5687 = vmul.f32 %v5655, %v5591
      %v5688 = vmul.f32 %v5656, %v5592
      %v5689 = vmul.f32 %v5657, %v5593
      %v5690 = vmul.f32 %v5658, %v5594
      %v5691 = vmul.f32 %v5659, %v5595
      %v5692 = vmul.f32 %v5660, %v5596
      %v5693 = vmul.f32 %v5661, %v5597
      %v5694 = vmul.f32 %v5662, %v5598
      %v5695 = vmul.f32 %v5663, %v5599
      %v5696 = vmul.f32 %v5664, %v5600
      %v5697 = vmul.f32 %v5665, %v5601
      %v5698 = vmul.f32 %v5666, %v5602
      %v5699 = vmul.f32 %v5667, %v5603
      %v5700 = vmul.f32 %v5668, %v5604
      %v5701 = vmul.f32 %v5637, %v5605
      %v5702 = vmul.f32 %v5638, %v5606
      %v5703 = vmul.f32 %v5639, %v5607
      %v5704 = vmul.f32 %v5640, %v5608
      %v5705 = vmul.f32 %v5641, %v5609
      %v5706 = vmul.f32 %v5642, %v5610
      %v5707 = vmul.f32 %v5643, %v5611
      %v5708 = vmul.f32 %v5644, %v5612
      %v5709 = vmul.f32 %v5645, %v5613
      %v5710 = vmul.f32 %v5646, %v5614
      %v5711 = vmul.f32 %v5647, %v5615
      %v5712 = vmul.f32 %v5648, %v5616
      %v5713 = vmul.f32 %v5649, %v5617
      %v5714 = vmul.f32 %v5650, %v5618
      %v5715 = vmul.f32 %v5651, %v5619
      %v5716 = vmul.f32 %v5652, %v5620
      %v5717 = vmul.f32 %v5653, %v5621
      %v5718 = vmul.f32 %v5654, %v5622
      %v5719 = vmul.f32 %v5655, %v5623
      %v5720 = vmul.f32 %v5656, %v5624
      %v5721 = vmul.f32 %v5657, %v5625
      %v5722 = vmul.f32 %v5658, %v5626
      %v5723 = vmul.f32 %v5659, %v5627
      %v5724 = vmul.f32 %v5660, %v5628
      %v5725 = vmul.f32 %v5661, %v5629
      %v5726 = vmul.f32 %v5662, %v5630
      %v5727 = vmul.f32 %v5663, %v5631
      %v5728 = vmul.f32 %v5664, %v5632
      %v5729 = vmul.f32 %v5665, %v5633
      %v5730 = vmul.f32 %v5666, %v5634
      %v5731 = vmul.f32 %v5667, %v5635
      %v5732 = vmul.f32 %v5668, %v5636
      %v5733 = vadd.f32 %v5509, %v5669
      %v5734 = vadd.f32 %v5510, %v5670
      %v5735 = vadd.f32 %v5511, %v5671
      %v5736 = vadd.f32 %v5512, %v5672
      %v5737 = vadd.f32 %v5513, %v5673
      %v5738 = vadd.f32 %v5514, %v5674
      %v5739 = vadd.f32 %v5515, %v5675
      %v5740 = vadd.f32 %v5516, %v5676
      %v5741 = vadd.f32 %v5517, %v5677
      %v5742 = vadd.f32 %v5518, %v5678
      %v5743 = vadd.f32 %v5519, %v5679
      %v5744 = vadd.f32 %v5520, %v5680
      %v5745 = vadd.f32 %v5521, %v5681
      %v5746 = vadd.f32 %v5522, %v5682
      %v5747 = vadd.f32 %v5523, %v5683
      %v5748 = vadd.f32 %v5524, %v5684
      %v5749 = vadd.f32 %v5525, %v5685
      %v5750 = vadd.f32 %v5526, %v5686
      %v5751 = vadd.f32 %v5527, %v5687
      %v5752 = vadd.f32 %v5528, %v5688
      %v5753 = vadd.f32 %v5529, %v5689
      %v5754 = vadd.f32 %v5530, %v5690
      %v5755 = vadd.f32 %v5531, %v5691
      %v5756 = vadd.f32 %v5532, %v5692
      %v5757 = vadd.f32 %v5533, %v5693
      %v5758 = vadd.f32 %v5534, %v5694
      %v5759 = vadd.f32 %v5535, %v5695
      %v5760 = vadd.f32 %v5536, %v5696
      %v5761 = vadd.f32 %v5537, %v5697
      %v5762 = vadd.f32 %v5538, %v5698
      %v5763 = vadd.f32 %v5539, %v5699
      %v5764 = vadd.f32 %v5540, %v5700
      %v5765 = vadd.f32 %v5541, %v5701
      %v5766 = vadd.f32 %v5542, %v5702
      %v5767 = vadd.f32 %v5543, %v5703
      %v5768 = vadd.f32 %v5544, %v5704
      %v5769 = vadd.f32 %v5545, %v5705
      %v5770 = vadd.f32 %v5546, %v5706
      %v5771 = vadd.f32 %v5547, %v5707
      %v5772 = vadd.f32 %v5548, %v5708
      %v5773 = vadd.f32 %v5549, %v5709
      %v5774 = vadd.f32 %v5550, %v5710
      %v5775 = vadd.f32 %v5551, %v5711
      %v5776 = vadd.f32 %v5552, %v5712
      %v5777 = vadd.f32 %v5553, %v5713
      %v5778 = vadd.f32 %v5554, %v5714
      %v5779 = vadd.f32 %v5555, %v5715
      %v5780 = vadd.f32 %v5556, %v5716
      %v5781 = vadd.f32 %v5557, %v5717
      %v5782 = vadd.f32 %v5558, %v5718
      %v5783 = vadd.f32 %v5559, %v5719
      %v5784 = vadd.f32 %v5560, %v5720
      %v5785 = vadd.f32 %v5561, %v5721
      %v5786 = vadd.f32 %v5562, %v5722
      %v5787 = vadd.f32 %v5563, %v5723
      %v5788 = vadd.f32 %v5564, %v5724
      %v5789 = vadd.f32 %v5565, %v5725
      %v5790 = vadd.f32 %v5566, %v5726
      %v5791 = vadd.f32 %v5567, %v5727
      %v5792 = vadd.f32 %v5568, %v5728
      %v5793 = vadd.f32 %v5569, %v5729
      %v5794 = vadd.f32 %v5570, %v5730
      %v5795 = vadd.f32 %v5571, %v5731
      %v5796 = vadd.f32 %v5572, %v5732
      %v5797 = vmul.f32 %v5733, 0.5
      %v5798 = vmul.f32 %v5734, 0.5
      %v5799 = vmul.f32 %v5735, 0.5
      %v5800 = vmul.f32 %v5736, 0.5
      %v5801 = vmul.f32 %v5737, 0.5
      %v5802 = vmul.f32 %v5738, 0.5
      %v5803 = vmul.f32 %v5739, 0.5
      %v5804 = vmul.f32 %v5740, 0.5
      %v5805 = vmul.f32 %v5741, 0.5
      %v5806 = vmul.f32 %v5742, 0.5
      %v5807 = vmul.f32 %v5743, 0.5
      %v5808 = vmul.f32 %v5744, 0.5
      %v5809 = vmul.f32 %v5745, 0.5
      %v5810 = vmul.f32 %v5746, 0.5
      %v5811 = vmul.f32 %v5747, 0.5
      %v5812 = vmul.f32 %v5748, 0.5
      %v5813 = vmul.f32 %v5749, 0.5
      %v5814 = vmul.f32 %v5750, 0.5
      %v5815 = vmul.f32 %v5751, 0.5
      %v5816 = vmul.f32 %v5752, 0.5
      %v5817 = vmul.f32 %v5753, 0.5
      %v5818 = vmul.f32 %v5754, 0.5
      %v5819 = vmul.f32 %v5755, 0.5
      %v5820 = vmul.f32 %v5756, 0.5
      %v5821 = vmul.f32 %v5757, 0.5
      %v5822 = vmul.f32 %v5758, 0.5
      %v5823 = vmul.f32 %v5759, 0.5
      %v5824 = vmul.f32 %v5760, 0.5
      %v5825 = vmul.f32 %v5761, 0.5
      %v5826 = vmul.f32 %v5762, 0.5
      %v5827 = vmul.f32 %v5763, 0.5
      %v5828 = vmul.f32 %v5764, 0.5
      %v5829 = vmul.f32 %v5765, 0.5
      %v5830 = vmul.f32 %v5766, 0.5
      %v5831 = vmul.f32 %v5767, 0.5
      %v5832 = vmul.f32 %v5768, 0.5
      %v5833 = vmul.f32 %v5769, 0.5
      %v5834 = vmul.f32 %v5770, 0.5
      %v5835 = vmul.f32 %v5771, 0.5
      %v5836 = vmul.f32 %v5772, 0.5
      %v5837 = vmul.f32 %v5773, 0.5
      %v5838 = vmul.f32 %v5774, 0.5
      %v5839 = vmul.f32 %v5775, 0.5
      %v5840 = vmul.f32 %v5776, 0.5
      %v5841 = vmul.f32 %v5777, 0.5
      %v5842 = vmul.f32 %v5778, 0.5
      %v5843 = vmul.f32 %v5779, 0.5
      %v5844 = vmul.f32 %v5780, 0.5
      %v5845 = vmul.f32 %v5781, 0.5
      %v5846 = vmul.f32 %v5782, 0.5
      %v5847 = vmul.f32 %v5783, 0.5
      %v5848 = vmul.f32 %v5784, 0.5
      %v5849 = vmul.f32 %v5785, 0.5
      %v5850 = vmul.f32 %v5786, 0.5
      %v5851 = vmul.f32 %v5787, 0.5
      %v5852 = vmul.f32 %v5788, 0.5
      %v5853 = vmul.f32 %v5789, 0.5
      %v5854 = vmul.f32 %v5790, 0.5
      %v5855 = vmul.f32 %v5791, 0.5
      %v5856 = vmul.f32 %v5792, 0.5
      %v5857 = vmul.f32 %v5793, 0.5
      %v5858 = vmul.f32 %v5794, 0.5
      %v5859 = vmul.f32 %v5795, 0.5
      %v5860 = vmul.f32 %v5796, 0.5
      %v5861 = vtanh.pop %v5797
      %v5862 = vtanh.pop %v5798
      %v5863 = vtanh.pop %v5799
      %v5864 = vtanh.pop %v5800
      %v5865 = vtanh.pop %v5801
      %v5866 = vtanh.pop %v5802
      %v5867 = vtanh.pop %v5803
      %v5868 = vtanh.pop %v5804
      %v5869 = vtanh.pop %v5805
      %v5870 = vtanh.pop %v5806
      %v5871 = vtanh.pop %v5807
      %v5872 = vtanh.pop %v5808
      %v5873 = vtanh.pop %v5809
      %v5874 = vtanh.pop %v5810
      %v5875 = vtanh.pop %v5811
      %v5876 = vtanh.pop %v5812
      %v5877 = vtanh.pop %v5813
      %v5878 = vtanh.pop %v5814
      %v5879 = vtanh.pop %v5815
      %v5880 = vtanh.pop %v5816
      %v5881 = vtanh.pop %v5817
      %v5882 = vtanh.pop %v5818
      %v5883 = vtanh.pop %v5819
      %v5884 = vtanh.pop %v5820
      %v5885 = vtanh.pop %v5821
      %v5886 = vtanh.pop %v5822
      %v5887 = vtanh.pop %v5823
      %v5888 = vtanh.pop %v5824
      %v5889 = vtanh.pop %v5825
      %v5890 = vtanh.pop %v5826
      %v5891 = vtanh.pop %v5827
      %v5892 = vtanh.pop %v5828
      %v5893 = vtanh.pop %v5829
      %v5894 = vtanh.pop %v5830
      %v5895 = vtanh.pop %v5831
      %v5896 = vtanh.pop %v5832
      %v5897 = vtanh.pop %v5833
      %v5898 = vtanh.pop %v5834
      %v5899 = vtanh.pop %v5835
      %v5900 = vtanh.pop %v5836
      %v5901 = vtanh.pop %v5837
      %v5902 = vtanh.pop %v5838
      %v5903 = vtanh.pop %v5839
      %v5904 = vtanh.pop %v5840
      %v5905 = vtanh.pop %v5841
      %v5906 = vtanh.pop %v5842
      %v5907 = vtanh.pop %v5843
      %v5908 = vtanh.pop %v5844
      %v5909 = vtanh.pop %v5845
      %v5910 = vtanh.pop %v5846
      %v5911 = vtanh.pop %v5847
      %v5912 = vtanh.pop %v5848
      %v5913 = vtanh.pop %v5849
      %v5914 = vtanh.pop %v5850
      %v5915 = vtanh.pop %v5851
      %v5916 = vtanh.pop %v5852
      %v5917 = vtanh.pop %v5853
      %v5918 = vtanh.pop %v5854
      %v5919 = vtanh.pop %v5855
      %v5920 = vtanh.pop %v5856
      %v5921 = vtanh.pop %v5857
      %v5922 = vtanh.pop %v5858
      %v5923 = vtanh.pop %v5859
      %v5924 = vtanh.pop %v5860
      %v5925 = vadd.f32 %v5861, 1.0
      %v5926 = vadd.f32 %v5862, 1.0
      %v5927 = vadd.f32 %v5863, 1.0
      %v5928 = vadd.f32 %v5864, 1.0
      %v5929 = vadd.f32 %v5865, 1.0
      %v5930 = vadd.f32 %v5866, 1.0
      %v5931 = vadd.f32 %v5867, 1.0
      %v5932 = vadd.f32 %v5868, 1.0
      %v5933 = vadd.f32 %v5869, 1.0
      %v5934 = vadd.f32 %v5870, 1.0
      %v5935 = vadd.f32 %v5871, 1.0
      %v5936 = vadd.f32 %v5872, 1.0
      %v5937 = vadd.f32 %v5873, 1.0
      %v5938 = vadd.f32 %v5874, 1.0
      %v5939 = vadd.f32 %v5875, 1.0
      %v5940 = vadd.f32 %v5876, 1.0
      %v5941 = vadd.f32 %v5877, 1.0
      %v5942 = vadd.f32 %v5878, 1.0
      %v5943 = vadd.f32 %v5879, 1.0
      %v5944 = vadd.f32 %v5880, 1.0
      %v5945 = vadd.f32 %v5881, 1.0
      %v5946 = vadd.f32 %v5882, 1.0
      %v5947 = vadd.f32 %v5883, 1.0
      %v5948 = vadd.f32 %v5884, 1.0
      %v5949 = vadd.f32 %v5885, 1.0
      %v5950 = vadd.f32 %v5886, 1.0
      %v5951 = vadd.f32 %v5887, 1.0
      %v5952 = vadd.f32 %v5888, 1.0
      %v5953 = vadd.f32 %v5889, 1.0
      %v5954 = vadd.f32 %v5890, 1.0
      %v5955 = vadd.f32 %v5891, 1.0
      %v5956 = vadd.f32 %v5892, 1.0
      %v5957 = vadd.f32 %v5893, 1.0
      %v5958 = vadd.f32 %v5894, 1.0
      %v5959 = vadd.f32 %v5895, 1.0
      %v5960 = vadd.f32 %v5896, 1.0
      %v5961 = vadd.f32 %v5897, 1.0
      %v5962 = vadd.f32 %v5898, 1.0
      %v5963 = vadd.f32 %v5899, 1.0
      %v5964 = vadd.f32 %v5900, 1.0
      %v5965 = vadd.f32 %v5901, 1.0
      %v5966 = vadd.f32 %v5902, 1.0
      %v5967 = vadd.f32 %v5903, 1.0
      %v5968 = vadd.f32 %v5904, 1.0
      %v5969 = vadd.f32 %v5905, 1.0
      %v5970 = vadd.f32 %v5906, 1.0
      %v5971 = vadd.f32 %v5907, 1.0
      %v5972 = vadd.f32 %v5908, 1.0
      %v5973 = vadd.f32 %v5909, 1.0
      %v5974 = vadd.f32 %v5910, 1.0
      %v5975 = vadd.f32 %v5911, 1.0
      %v5976 = vadd.f32 %v5912, 1.0
      %v5977 = vadd.f32 %v5913, 1.0
      %v5978 = vadd.f32 %v5914, 1.0
      %v5979 = vadd.f32 %v5915, 1.0
      %v5980 = vadd.f32 %v5916, 1.0
      %v5981 = vadd.f32 %v5917, 1.0
      %v5982 = vadd.f32 %v5918, 1.0
      %v5983 = vadd.f32 %v5919, 1.0
      %v5984 = vadd.f32 %v5920, 1.0
      %v5985 = vadd.f32 %v5921, 1.0
      %v5986 = vadd.f32 %v5922, 1.0
      %v5987 = vadd.f32 %v5923, 1.0
      %v5988 = vadd.f32 %v5924, 1.0
      %v5989 = vmul.f32 %v5925, 0.5
      %v5990 = vmul.f32 %v5926, 0.5
      %v5991 = vmul.f32 %v5927, 0.5
      %v5992 = vmul.f32 %v5928, 0.5
      %v5993 = vmul.f32 %v5929, 0.5
      %v5994 = vmul.f32 %v5930, 0.5
      %v5995 = vmul.f32 %v5931, 0.5
      %v5996 = vmul.f32 %v5932, 0.5
      %v5997 = vmul.f32 %v5933, 0.5
      %v5998 = vmul.f32 %v5934, 0.5
      %v5999 = vmul.f32 %v5935, 0.5
      %v6000 = vmul.f32 %v5936, 0.5
      %v6001 = vmul.f32 %v5937, 0.5
      %v6002 = vmul.f32 %v5938, 0.5
      %v6003 = vmul.f32 %v5939, 0.5
      %v6004 = vmul.f32 %v5940, 0.5
      %v6005 = vmul.f32 %v5941, 0.5
      %v6006 = vmul.f32 %v5942, 0.5
      %v6007 = vmul.f32 %v5943, 0.5
      %v6008 = vmul.f32 %v5944, 0.5
      %v6009 = vmul.f32 %v5945, 0.5
      %v6010 = vmul.f32 %v5946, 0.5
      %v6011 = vmul.f32 %v5947, 0.5
      %v6012 = vmul.f32 %v5948, 0.5
      %v6013 = vmul.f32 %v5949, 0.5
      %v6014 = vmul.f32 %v5950, 0.5
      %v6015 = vmul.f32 %v5951, 0.5
      %v6016 = vmul.f32 %v5952, 0.5
      %v6017 = vmul.f32 %v5953, 0.5
      %v6018 = vmul.f32 %v5954, 0.5
      %v6019 = vmul.f32 %v5955, 0.5
      %v6020 = vmul.f32 %v5956, 0.5
      %v6021 = vmul.f32 %v5957, 0.5
      %v6022 = vmul.f32 %v5958, 0.5
      %v6023 = vmul.f32 %v5959, 0.5
      %v6024 = vmul.f32 %v5960, 0.5
      %v6025 = vmul.f32 %v5961, 0.5
      %v6026 = vmul.f32 %v5962, 0.5
      %v6027 = vmul.f32 %v5963, 0.5
      %v6028 = vmul.f32 %v5964, 0.5
      %v6029 = vmul.f32 %v5965, 0.5
      %v6030 = vmul.f32 %v5966, 0.5
      %v6031 = vmul.f32 %v5967, 0.5
      %v6032 = vmul.f32 %v5968, 0.5
      %v6033 = vmul.f32 %v5969, 0.5
      %v6034 = vmul.f32 %v5970, 0.5
      %v6035 = vmul.f32 %v5971, 0.5
      %v6036 = vmul.f32 %v5972, 0.5
      %v6037 = vmul.f32 %v5973, 0.5
      %v6038 = vmul.f32 %v5974, 0.5
      %v6039 = vmul.f32 %v5975, 0.5
      %v6040 = vmul.f32 %v5976, 0.5
      %v6041 = vmul.f32 %v5977, 0.5
      %v6042 = vmul.f32 %v5978, 0.5
      %v6043 = vmul.f32 %v5979, 0.5
      %v6044 = vmul.f32 %v5980, 0.5
      %v6045 = vmul.f32 %v5981, 0.5
      %v6046 = vmul.f32 %v5982, 0.5
      %v6047 = vmul.f32 %v5983, 0.5
      %v6048 = vmul.f32 %v5984, 0.5
      %v6049 = vmul.f32 %v5985, 0.5
      %v6050 = vmul.f32 %v5986, 0.5
      %v6051 = vmul.f32 %v5987, 0.5
      %v6052 = vmul.f32 %v5988, 0.5
      %v6053 = vld [vmem:[%s3] sm:$0xff]
      %v6054 = vld [vmem:[%s3 + $0x8] sm:$0xff]
      %v6055 = vld [vmem:[%s3 + $0x10] sm:$0xff]
      %v6056 = vld [vmem:[%s3 + $0x18] sm:$0xff]
      %v6057 = vld [vmem:[%s3 + $0x20] sm:$0xff]
      %v6058 = vld [vmem:[%s3 + $0x28] sm:$0xff]
      %v6059 = vld [vmem:[%s3 + $0x30] sm:$0xff]
      %v6060 = vld [vmem:[%s3 + $0x38] sm:$0xff]
      %v6061 = vld [vmem:[%s3 + $0x40] sm:$0xff]
      %v6062 = vld [vmem:[%s3 + $0x48] sm:$0xff]
      %v6063 = vld [vmem:[%s3 + $0x50] sm:$0xff]
      %v6064 = vld [vmem:[%s3 + $0x58] sm:$0xff]
      %v6065 = vld [vmem:[%s3 + $0x60] sm:$0xff]
      %v6066 = vld [vmem:[%s3 + $0x68] sm:$0xff]
      %v6067 = vld [vmem:[%s3 + $0x70] sm:$0xff]
      %v6068 = vld [vmem:[%s3 + $0x78] sm:$0xff]
      %v6069 = vld [vmem:[%s3 + $0x80] sm:$0xff]
      %v6070 = vld [vmem:[%s3 + $0x88] sm:$0xff]
      %v6071 = vld [vmem:[%s3 + $0x90] sm:$0xff]
      %v6072 = vld [vmem:[%s3 + $0x98] sm:$0xff]
      %v6073 = vld [vmem:[%s3 + $0xa0] sm:$0xff]
      %v6074 = vld [vmem:[%s3 + $0xa8] sm:$0xff]
      %v6075 = vld [vmem:[%s3 + $0xb0] sm:$0xff]
      %v6076 = vld [vmem:[%s3 + $0xb8] sm:$0xff]
      %v6077 = vld [vmem:[%s3 + $0xc0] sm:$0xff]
      %v6078 = vld [vmem:[%s3 + $0xc8] sm:$0xff]
      %v6079 = vld [vmem:[%s3 + $0xd0] sm:$0xff]
      %v6080 = vld [vmem:[%s3 + $0xd8] sm:$0xff]
      %v6081 = vld [vmem:[%s3 + $0xe0] sm:$0xff]
      %v6082 = vld [vmem:[%s3 + $0xe8] sm:$0xff]
      %v6083 = vld [vmem:[%s3 + $0xf0] sm:$0xff]
      %v6084 = vld [vmem:[%s3 + $0xf8] sm:$0xff]
      %v6085 = vmul.f32 %v6053, %v5573
      %v6086 = vmul.f32 %v6054, %v5574
      %v6087 = vmul.f32 %v6055, %v5575
      %v6088 = vmul.f32 %v6056, %v5576
      %v6089 = vmul.f32 %v6057, %v5577
      %v6090 = vmul.f32 %v6058, %v5578
      %v6091 = vmul.f32 %v6059, %v5579
      %v6092 = vmul.f32 %v6060, %v5580
      %v6093 = vmul.f32 %v6061, %v5581
      %v6094 = vmul.f32 %v6062, %v5582
      %v6095 = vmul.f32 %v6063, %v5583
      %v6096 = vmul.f32 %v6064, %v5584
      %v6097 = vmul.f32 %v6065, %v5585
      %v6098 = vmul.f32 %v6066, %v5586
      %v6099 = vmul.f32 %v6067, %v5587
      %v6100 = vmul.f32 %v6068, %v5588
      %v6101 = vmul.f32 %v6069, %v5589
      %v6102 = vmul.f32 %v6070, %v5590
      %v6103 = vmul.f32 %v6071, %v5591
      %v6104 = vmul.f32 %v6072, %v5592
      %v6105 = vmul.f32 %v6073, %v5593
      %v6106 = vmul.f32 %v6074, %v5594
      %v6107 = vmul.f32 %v6075, %v5595
      %v6108 = vmul.f32 %v6076, %v5596
      %v6109 = vmul.f32 %v6077, %v5597
      %v6110 = vmul.f32 %v6078, %v5598
      %v6111 = vmul.f32 %v6079, %v5599
      %v6112 = vmul.f32 %v6080, %v5600
      %v6113 = vmul.f32 %v6081, %v5601
      %v6114 = vmul.f32 %v6082, %v5602
      %v6115 = vmul.f32 %v6083, %v5603
      %v6116 = vmul.f32 %v6084, %v5604
      %v6117 = vmul.f32 %v6053, %v5605
      %v6118 = vmul.f32 %v6054, %v5606
      %v6119 = vmul.f32 %v6055, %v5607
      %v6120 = vmul.f32 %v6056, %v5608
      %v6121 = vmul.f32 %v6057, %v5609
      %v6122 = vmul.f32 %v6058, %v5610
      %v6123 = vmul.f32 %v6059, %v5611
      %v6124 = vmul.f32 %v6060, %v5612
      %v6125 = vmul.f32 %v6061, %v5613
      %v6126 = vmul.f32 %v6062, %v5614
      %v6127 = vmul.f32 %v6063, %v5615
      %v6128 = vmul.f32 %v6064, %v5616
      %v6129 = vmul.f32 %v6065, %v5617
      %v6130 = vmul.f32 %v6066, %v5618
      %v6131 = vmul.f32 %v6067, %v5619
      %v6132 = vmul.f32 %v6068, %v5620
      %v6133 = vmul.f32 %v6069, %v5621
      %v6134 = vmul.f32 %v6070, %v5622
      %v6135 = vmul.f32 %v6071, %v5623
      %v6136 = vmul.f32 %v6072, %v5624
      %v6137 = vmul.f32 %v6073, %v5625
      %v6138 = vmul.f32 %v6074, %v5626
      %v6139 = vmul.f32 %v6075, %v5627
      %v6140 = vmul.f32 %v6076, %v5628
      %v6141 = vmul.f32 %v6077, %v5629
      %v6142 = vmul.f32 %v6078, %v5630
      %v6143 = vmul.f32 %v6079, %v5631
      %v6144 = vmul.f32 %v6080, %v5632
      %v6145 = vmul.f32 %v6081, %v5633
      %v6146 = vmul.f32 %v6082, %v5634
      %v6147 = vmul.f32 %v6083, %v5635
      %v6148 = vmul.f32 %v6084, %v5636
      %6213 = vrot.lane.b32.xlu0 %v6085, 32
      %v6214 = vpop.permute.xlu0 %6213
      %6215 = vrot.lane.b32.xlu0 %v6086, 32
      %v6216 = vpop.permute.xlu0 %6215
      %6217 = vrot.lane.b32.xlu0 %v6087, 32
      %v6218 = vpop.permute.xlu0 %6217
      %6219 = vrot.lane.b32.xlu0 %v6088, 32
      %v6220 = vpop.permute.xlu0 %6219
      %6221 = vrot.lane.b32.xlu0 %v6089, 32
      %v6222 = vpop.permute.xlu0 %6221
      %6223 = vrot.lane.b32.xlu0 %v6090, 32
      %v6224 = vpop.permute.xlu0 %6223
      %6225 = vrot.lane.b32.xlu0 %v6091, 32
      %v6226 = vpop.permute.xlu0 %6225
      %6227 = vrot.lane.b32.xlu0 %v6092, 32
      %v6228 = vpop.permute.xlu0 %6227
      %6229 = vrot.lane.b32.xlu0 %v6093, 32
      %v6230 = vpop.permute.xlu0 %6229
      %6231 = vrot.lane.b32.xlu0 %v6094, 32
      %v6232 = vpop.permute.xlu0 %6231
      %6233 = vrot.lane.b32.xlu0 %v6095, 32
      %v6234 = vpop.permute.xlu0 %6233
      %6235 = vrot.lane.b32.xlu0 %v6096, 32
      %v6236 = vpop.permute.xlu0 %6235
      %6237 = vrot.lane.b32.xlu0 %v6097, 32
      %v6238 = vpop.permute.xlu0 %6237
      %6239 = vrot.lane.b32.xlu0 %v6098, 32
      %v6240 = vpop.permute.xlu0 %6239
      %6241 = vrot.lane.b32.xlu0 %v6099, 32
      %v6242 = vpop.permute.xlu0 %6241
      %6243 = vrot.lane.b32.xlu0 %v6100, 32
      %v6244 = vpop.permute.xlu0 %6243
      %6245 = vrot.lane.b32.xlu0 %v6101, 32
      %v6246 = vpop.permute.xlu0 %6245
      %6247 = vrot.lane.b32.xlu0 %v6102, 32
      %v6248 = vpop.permute.xlu0 %6247
      %6249 = vrot.lane.b32.xlu0 %v6103, 32
      %v6250 = vpop.permute.xlu0 %6249
      %6251 = vrot.lane.b32.xlu0 %v6104, 32
      %v6252 = vpop.permute.xlu0 %6251
      %6253 = vrot.lane.b32.xlu0 %v6105, 32
      %v6254 = vpop.permute.xlu0 %6253
      %6255 = vrot.lane.b32.xlu0 %v6106, 32
      %v6256 = vpop.permute.xlu0 %6255
      %6257 = vrot.lane.b32.xlu0 %v6107, 32
      %v6258 = vpop.permute.xlu0 %6257
      %6259 = vrot.lane.b32.xlu0 %v6108, 32
      %v6260 = vpop.permute.xlu0 %6259
      %6261 = vrot.lane.b32.xlu0 %v6109, 32
      %v6262 = vpop.permute.xlu0 %6261
      %6263 = vrot.lane.b32.xlu0 %v6110, 32
      %v6264 = vpop.permute.xlu0 %6263
      %6265 = vrot.lane.b32.xlu0 %v6111, 32
      %v6266 = vpop.permute.xlu0 %6265
      %6267 = vrot.lane.b32.xlu0 %v6112, 32
      %v6268 = vpop.permute.xlu0 %6267
      %6269 = vrot.lane.b32.xlu0 %v6113, 32
      %v6270 = vpop.permute.xlu0 %6269
      %6271 = vrot.lane.b32.xlu0 %v6114, 32
      %v6272 = vpop.permute.xlu0 %6271
      %6273 = vrot.lane.b32.xlu0 %v6115, 32
      %v6274 = vpop.permute.xlu0 %6273
      %6275 = vrot.lane.b32.xlu0 %v6116, 32
      %v6276 = vpop.permute.xlu0 %6275
      %6277 = vrot.lane.b32.xlu0 %v6117, 32
      %v6278 = vpop.permute.xlu0 %6277
      %6279 = vrot.lane.b32.xlu0 %v6118, 32
      %v6280 = vpop.permute.xlu0 %6279
      %6281 = vrot.lane.b32.xlu0 %v6119, 32
      %v6282 = vpop.permute.xlu0 %6281
      %6283 = vrot.lane.b32.xlu0 %v6120, 32
      %v6284 = vpop.permute.xlu0 %6283
      %6285 = vrot.lane.b32.xlu0 %v6121, 32
      %v6286 = vpop.permute.xlu0 %6285
      %6287 = vrot.lane.b32.xlu0 %v6122, 32
      %v6288 = vpop.permute.xlu0 %6287
      %6289 = vrot.lane.b32.xlu0 %v6123, 32
      %v6290 = vpop.permute.xlu0 %6289
      %6291 = vrot.lane.b32.xlu0 %v6124, 32
      %v6292 = vpop.permute.xlu0 %6291
      %6293 = vrot.lane.b32.xlu0 %v6125, 32
      %v6294 = vpop.permute.xlu0 %6293
      %6295 = vrot.lane.b32.xlu0 %v6126, 32
      %v6296 = vpop.permute.xlu0 %6295
      %6297 = vrot.lane.b32.xlu0 %v6127, 32
      %v6298 = vpop.permute.xlu0 %6297
      %6299 = vrot.lane.b32.xlu0 %v6128, 32
      %v6300 = vpop.permute.xlu0 %6299
      %6301 = vrot.lane.b32.xlu0 %v6129, 32
      %v6302 = vpop.permute.xlu0 %6301
      %6303 = vrot.lane.b32.xlu0 %v6130, 32
      %v6304 = vpop.permute.xlu0 %6303
      %6305 = vrot.lane.b32.xlu0 %v6131, 32
      %v6306 = vpop.permute.xlu0 %6305
      %6307 = vrot.lane.b32.xlu0 %v6132, 32
      %v6308 = vpop.permute.xlu0 %6307
      %6309 = vrot.lane.b32.xlu0 %v6133, 32
      %v6310 = vpop.permute.xlu0 %6309
      %6311 = vrot.lane.b32.xlu0 %v6134, 32
      %v6312 = vpop.permute.xlu0 %6311
      %6313 = vrot.lane.b32.xlu0 %v6135, 32
      %v6314 = vpop.permute.xlu0 %6313
      %6315 = vrot.lane.b32.xlu0 %v6136, 32
      %v6316 = vpop.permute.xlu0 %6315
      %6317 = vrot.lane.b32.xlu0 %v6137, 32
      %v6318 = vpop.permute.xlu0 %6317
      %6319 = vrot.lane.b32.xlu0 %v6138, 32
      %v6320 = vpop.permute.xlu0 %6319
      %6321 = vrot.lane.b32.xlu0 %v6139, 32
      %v6322 = vpop.permute.xlu0 %6321
      %6323 = vrot.lane.b32.xlu0 %v6140, 32
      %v6324 = vpop.permute.xlu0 %6323
      %6325 = vrot.lane.b32.xlu0 %v6141, 32
      %v6326 = vpop.permute.xlu0 %6325
      %6327 = vrot.lane.b32.xlu0 %v6142, 32
      %v6328 = vpop.permute.xlu0 %6327
      %6329 = vrot.lane.b32.xlu0 %v6143, 32
      %v6330 = vpop.permute.xlu0 %6329
      %6331 = vrot.lane.b32.xlu0 %v6144, 32
      %v6332 = vpop.permute.xlu0 %6331
      %6333 = vrot.lane.b32.xlu0 %v6145, 32
      %v6334 = vpop.permute.xlu0 %6333
      %6335 = vrot.lane.b32.xlu0 %v6146, 32
      %v6336 = vpop.permute.xlu0 %6335
      %6337 = vrot.lane.b32.xlu0 %v6147, 32
      %v6338 = vpop.permute.xlu0 %6337
      %6339 = vrot.lane.b32.xlu0 %v6148, 32
      %v6340 = vpop.permute.xlu0 %6339
      %v6405 = vadd.f32 %v5509, %v6214
      %v6406 = vadd.f32 %v5510, %v6216
      %v6407 = vadd.f32 %v5511, %v6218
      %v6408 = vadd.f32 %v5512, %v6220
      %v6409 = vadd.f32 %v5513, %v6222
      %v6410 = vadd.f32 %v5514, %v6224
      %v6411 = vadd.f32 %v5515, %v6226
      %v6412 = vadd.f32 %v5516, %v6228
      %v6413 = vadd.f32 %v5517, %v6230
      %v6414 = vadd.f32 %v5518, %v6232
      %v6415 = vadd.f32 %v5519, %v6234
      %v6416 = vadd.f32 %v5520, %v6236
      %v6417 = vadd.f32 %v5521, %v6238
      %v6418 = vadd.f32 %v5522, %v6240
      %v6419 = vadd.f32 %v5523, %v6242
      %v6420 = vadd.f32 %v5524, %v6244
      %v6421 = vadd.f32 %v5525, %v6246
      %v6422 = vadd.f32 %v5526, %v6248
      %v6423 = vadd.f32 %v5527, %v6250
      %v6424 = vadd.f32 %v5528, %v6252
      %v6425 = vadd.f32 %v5529, %v6254
      %v6426 = vadd.f32 %v5530, %v6256
      %v6427 = vadd.f32 %v5531, %v6258
      %v6428 = vadd.f32 %v5532, %v6260
      %v6429 = vadd.f32 %v5533, %v6262
      %v6430 = vadd.f32 %v5534, %v6264
      %v6431 = vadd.f32 %v5535, %v6266
      %v6432 = vadd.f32 %v5536, %v6268
      %v6433 = vadd.f32 %v5537, %v6270
      %v6434 = vadd.f32 %v5538, %v6272
      %v6435 = vadd.f32 %v5539, %v6274
      %v6436 = vadd.f32 %v5540, %v6276
      %v6437 = vadd.f32 %v5541, %v6278
      %v6438 = vadd.f32 %v5542, %v6280
      %v6439 = vadd.f32 %v5543, %v6282
      %v6440 = vadd.f32 %v5544, %v6284
      %v6441 = vadd.f32 %v5545, %v6286
      %v6442 = vadd.f32 %v5546, %v6288
      %v6443 = vadd.f32 %v5547, %v6290
      %v6444 = vadd.f32 %v5548, %v6292
      %v6445 = vadd.f32 %v5549, %v6294
      %v6446 = vadd.f32 %v5550, %v6296
      %v6447 = vadd.f32 %v5551, %v6298
      %v6448 = vadd.f32 %v5552, %v6300
      %v6449 = vadd.f32 %v5553, %v6302
      %v6450 = vadd.f32 %v5554, %v6304
      %v6451 = vadd.f32 %v5555, %v6306
      %v6452 = vadd.f32 %v5556, %v6308
      %v6453 = vadd.f32 %v5557, %v6310
      %v6454 = vadd.f32 %v5558, %v6312
      %v6455 = vadd.f32 %v5559, %v6314
      %v6456 = vadd.f32 %v5560, %v6316
      %v6457 = vadd.f32 %v5561, %v6318
      %v6458 = vadd.f32 %v5562, %v6320
      %v6459 = vadd.f32 %v5563, %v6322
      %v6460 = vadd.f32 %v5564, %v6324
      %v6461 = vadd.f32 %v5565, %v6326
      %v6462 = vadd.f32 %v5566, %v6328
      %v6463 = vadd.f32 %v5567, %v6330
      %v6464 = vadd.f32 %v5568, %v6332
      %v6465 = vadd.f32 %v5569, %v6334
      %v6466 = vadd.f32 %v5570, %v6336
      %v6467 = vadd.f32 %v5571, %v6338
      %v6468 = vadd.f32 %v5572, %v6340
      %v6469 = vmul.f32 %v6405, 0.5
      %v6470 = vmul.f32 %v6406, 0.5
      %v6471 = vmul.f32 %v6407, 0.5
      %v6472 = vmul.f32 %v6408, 0.5
      %v6473 = vmul.f32 %v6409, 0.5
      %v6474 = vmul.f32 %v6410, 0.5
      %v6475 = vmul.f32 %v6411, 0.5
      %v6476 = vmul.f32 %v6412, 0.5
      %v6477 = vmul.f32 %v6413, 0.5
      %v6478 = vmul.f32 %v6414, 0.5
      %v6479 = vmul.f32 %v6415, 0.5
      %v6480 = vmul.f32 %v6416, 0.5
      %v6481 = vmul.f32 %v6417, 0.5
      %v6482 = vmul.f32 %v6418, 0.5
      %v6483 = vmul.f32 %v6419, 0.5
      %v6484 = vmul.f32 %v6420, 0.5
      %v6485 = vmul.f32 %v6421, 0.5
      %v6486 = vmul.f32 %v6422, 0.5
      %v6487 = vmul.f32 %v6423, 0.5
      %v6488 = vmul.f32 %v6424, 0.5
      %v6489 = vmul.f32 %v6425, 0.5
      %v6490 = vmul.f32 %v6426, 0.5
      %v6491 = vmul.f32 %v6427, 0.5
      %v6492 = vmul.f32 %v6428, 0.5
      %v6493 = vmul.f32 %v6429, 0.5
      %v6494 = vmul.f32 %v6430, 0.5
      %v6495 = vmul.f32 %v6431, 0.5
      %v6496 = vmul.f32 %v6432, 0.5
      %v6497 = vmul.f32 %v6433, 0.5
      %v6498 = vmul.f32 %v6434, 0.5
      %v6499 = vmul.f32 %v6435, 0.5
      %v6500 = vmul.f32 %v6436, 0.5
      %v6501 = vmul.f32 %v6437, 0.5
      %v6502 = vmul.f32 %v6438, 0.5
      %v6503 = vmul.f32 %v6439, 0.5
      %v6504 = vmul.f32 %v6440, 0.5
      %v6505 = vmul.f32 %v6441, 0.5
      %v6506 = vmul.f32 %v6442, 0.5
      %v6507 = vmul.f32 %v6443, 0.5
      %v6508 = vmul.f32 %v6444, 0.5
      %v6509 = vmul.f32 %v6445, 0.5
      %v6510 = vmul.f32 %v6446, 0.5
      %v6511 = vmul.f32 %v6447, 0.5
      %v6512 = vmul.f32 %v6448, 0.5
      %v6513 = vmul.f32 %v6449, 0.5
      %v6514 = vmul.f32 %v6450, 0.5
      %v6515 = vmul.f32 %v6451, 0.5
      %v6516 = vmul.f32 %v6452, 0.5
      %v6517 = vmul.f32 %v6453, 0.5
      %v6518 = vmul.f32 %v6454, 0.5
      %v6519 = vmul.f32 %v6455, 0.5
      %v6520 = vmul.f32 %v6456, 0.5
      %v6521 = vmul.f32 %v6457, 0.5
      %v6522 = vmul.f32 %v6458, 0.5
      %v6523 = vmul.f32 %v6459, 0.5
      %v6524 = vmul.f32 %v6460, 0.5
      %v6525 = vmul.f32 %v6461, 0.5
      %v6526 = vmul.f32 %v6462, 0.5
      %v6527 = vmul.f32 %v6463, 0.5
      %v6528 = vmul.f32 %v6464, 0.5
      %v6529 = vmul.f32 %v6465, 0.5
      %v6530 = vmul.f32 %v6466, 0.5
      %v6531 = vmul.f32 %v6467, 0.5
      %v6532 = vmul.f32 %v6468, 0.5
      %v6533 = vtanh.pop %v6469
      %v6534 = vtanh.pop %v6470
      %v6535 = vtanh.pop %v6471
      %v6536 = vtanh.pop %v6472
      %v6537 = vtanh.pop %v6473
      %v6538 = vtanh.pop %v6474
      %v6539 = vtanh.pop %v6475
      %v6540 = vtanh.pop %v6476
      %v6541 = vtanh.pop %v6477
      %v6542 = vtanh.pop %v6478
      %v6543 = vtanh.pop %v6479
      %v6544 = vtanh.pop %v6480
      %v6545 = vtanh.pop %v6481
      %v6546 = vtanh.pop %v6482
      %v6547 = vtanh.pop %v6483
      %v6548 = vtanh.pop %v6484
      %v6549 = vtanh.pop %v6485
      %v6550 = vtanh.pop %v6486
      %v6551 = vtanh.pop %v6487
      %v6552 = vtanh.pop %v6488
      %v6553 = vtanh.pop %v6489
      %v6554 = vtanh.pop %v6490
      %v6555 = vtanh.pop %v6491
      %v6556 = vtanh.pop %v6492
      %v6557 = vtanh.pop %v6493
      %v6558 = vtanh.pop %v6494
      %v6559 = vtanh.pop %v6495
      %v6560 = vtanh.pop %v6496
      %v6561 = vtanh.pop %v6497
      %v6562 = vtanh.pop %v6498
      %v6563 = vtanh.pop %v6499
      %v6564 = vtanh.pop %v6500
      %v6565 = vtanh.pop %v6501
      %v6566 = vtanh.pop %v6502
      %v6567 = vtanh.pop %v6503
      %v6568 = vtanh.pop %v6504
      %v6569 = vtanh.pop %v6505
      %v6570 = vtanh.pop %v6506
      %v6571 = vtanh.pop %v6507
      %v6572 = vtanh.pop %v6508
      %v6573 = vtanh.pop %v6509
      %v6574 = vtanh.pop %v6510
      %v6575 = vtanh.pop %v6511
      %v6576 = vtanh.pop %v6512
      %v6577 = vtanh.pop %v6513
      %v6578 = vtanh.pop %v6514
      %v6579 = vtanh.pop %v6515
      %v6580 = vtanh.pop %v6516
      %v6581 = vtanh.pop %v6517
      %v6582 = vtanh.pop %v6518
      %v6583 = vtanh.pop %v6519
      %v6584 = vtanh.pop %v6520
      %v6585 = vtanh.pop %v6521
      %v6586 = vtanh.pop %v6522
      %v6587 = vtanh.pop %v6523
      %v6588 = vtanh.pop %v6524
      %v6589 = vtanh.pop %v6525
      %v6590 = vtanh.pop %v6526
      %v6591 = vtanh.pop %v6527
      %v6592 = vtanh.pop %v6528
      %v6593 = vtanh.pop %v6529
      %v6594 = vtanh.pop %v6530
      %v6595 = vtanh.pop %v6531
      %v6596 = vtanh.pop %v6532
      %v6597 = vadd.f32 %v6533, 1.0
      %v6598 = vadd.f32 %v6534, 1.0
      %v6599 = vadd.f32 %v6535, 1.0
      %v6600 = vadd.f32 %v6536, 1.0
      %v6601 = vadd.f32 %v6537, 1.0
      %v6602 = vadd.f32 %v6538, 1.0
      %v6603 = vadd.f32 %v6539, 1.0
      %v6604 = vadd.f32 %v6540, 1.0
      %v6605 = vadd.f32 %v6541, 1.0
      %v6606 = vadd.f32 %v6542, 1.0
      %v6607 = vadd.f32 %v6543, 1.0
      %v6608 = vadd.f32 %v6544, 1.0
      %v6609 = vadd.f32 %v6545, 1.0
      %v6610 = vadd.f32 %v6546, 1.0
      %v6611 = vadd.f32 %v6547, 1.0
      %v6612 = vadd.f32 %v6548, 1.0
      %v6613 = vadd.f32 %v6549, 1.0
      %v6614 = vadd.f32 %v6550, 1.0
      %v6615 = vadd.f32 %v6551, 1.0
      %v6616 = vadd.f32 %v6552, 1.0
      %v6617 = vadd.f32 %v6553, 1.0
      %v6618 = vadd.f32 %v6554, 1.0
      %v6619 = vadd.f32 %v6555, 1.0
      %v6620 = vadd.f32 %v6556, 1.0
      %v6621 = vadd.f32 %v6557, 1.0
      %v6622 = vadd.f32 %v6558, 1.0
      %v6623 = vadd.f32 %v6559, 1.0
      %v6624 = vadd.f32 %v6560, 1.0
      %v6625 = vadd.f32 %v6561, 1.0
      %v6626 = vadd.f32 %v6562, 1.0
      %v6627 = vadd.f32 %v6563, 1.0
      %v6628 = vadd.f32 %v6564, 1.0
      %v6629 = vadd.f32 %v6565, 1.0
      %v6630 = vadd.f32 %v6566, 1.0
      %v6631 = vadd.f32 %v6567, 1.0
      %v6632 = vadd.f32 %v6568, 1.0
      %v6633 = vadd.f32 %v6569, 1.0
      %v6634 = vadd.f32 %v6570, 1.0
      %v6635 = vadd.f32 %v6571, 1.0
      %v6636 = vadd.f32 %v6572, 1.0
      %v6637 = vadd.f32 %v6573, 1.0
      %v6638 = vadd.f32 %v6574, 1.0
      %v6639 = vadd.f32 %v6575, 1.0
      %v6640 = vadd.f32 %v6576, 1.0
      %v6641 = vadd.f32 %v6577, 1.0
      %v6642 = vadd.f32 %v6578, 1.0
      %v6643 = vadd.f32 %v6579, 1.0
      %v6644 = vadd.f32 %v6580, 1.0
      %v6645 = vadd.f32 %v6581, 1.0
      %v6646 = vadd.f32 %v6582, 1.0
      %v6647 = vadd.f32 %v6583, 1.0
      %v6648 = vadd.f32 %v6584, 1.0
      %v6649 = vadd.f32 %v6585, 1.0
      %v6650 = vadd.f32 %v6586, 1.0
      %v6651 = vadd.f32 %v6587, 1.0
      %v6652 = vadd.f32 %v6588, 1.0
      %v6653 = vadd.f32 %v6589, 1.0
      %v6654 = vadd.f32 %v6590, 1.0
      %v6655 = vadd.f32 %v6591, 1.0
      %v6656 = vadd.f32 %v6592, 1.0
      %v6657 = vadd.f32 %v6593, 1.0
      %v6658 = vadd.f32 %v6594, 1.0
      %v6659 = vadd.f32 %v6595, 1.0
      %v6660 = vadd.f32 %v6596, 1.0
      %v6661 = vmul.f32 %v6597, 0.5
      %v6662 = vmul.f32 %v6598, 0.5
      %v6663 = vmul.f32 %v6599, 0.5
      %v6664 = vmul.f32 %v6600, 0.5
      %v6665 = vmul.f32 %v6601, 0.5
      %v6666 = vmul.f32 %v6602, 0.5
      %v6667 = vmul.f32 %v6603, 0.5
      %v6668 = vmul.f32 %v6604, 0.5
      %v6669 = vmul.f32 %v6605, 0.5
      %v6670 = vmul.f32 %v6606, 0.5
      %v6671 = vmul.f32 %v6607, 0.5
      %v6672 = vmul.f32 %v6608, 0.5
      %v6673 = vmul.f32 %v6609, 0.5
      %v6674 = vmul.f32 %v6610, 0.5
      %v6675 = vmul.f32 %v6611, 0.5
      %v6676 = vmul.f32 %v6612, 0.5
      %v6677 = vmul.f32 %v6613, 0.5
      %v6678 = vmul.f32 %v6614, 0.5
      %v6679 = vmul.f32 %v6615, 0.5
      %v6680 = vmul.f32 %v6616, 0.5
      %v6681 = vmul.f32 %v6617, 0.5
      %v6682 = vmul.f32 %v6618, 0.5
      %v6683 = vmul.f32 %v6619, 0.5
      %v6684 = vmul.f32 %v6620, 0.5
      %v6685 = vmul.f32 %v6621, 0.5
      %v6686 = vmul.f32 %v6622, 0.5
      %v6687 = vmul.f32 %v6623, 0.5
      %v6688 = vmul.f32 %v6624, 0.5
      %v6689 = vmul.f32 %v6625, 0.5
      %v6690 = vmul.f32 %v6626, 0.5
      %v6691 = vmul.f32 %v6627, 0.5
      %v6692 = vmul.f32 %v6628, 0.5
      %v6693 = vmul.f32 %v6629, 0.5
      %v6694 = vmul.f32 %v6630, 0.5
      %v6695 = vmul.f32 %v6631, 0.5
      %v6696 = vmul.f32 %v6632, 0.5
      %v6697 = vmul.f32 %v6633, 0.5
      %v6698 = vmul.f32 %v6634, 0.5
      %v6699 = vmul.f32 %v6635, 0.5
      %v6700 = vmul.f32 %v6636, 0.5
      %v6701 = vmul.f32 %v6637, 0.5
      %v6702 = vmul.f32 %v6638, 0.5
      %v6703 = vmul.f32 %v6639, 0.5
      %v6704 = vmul.f32 %v6640, 0.5
      %v6705 = vmul.f32 %v6641, 0.5
      %v6706 = vmul.f32 %v6642, 0.5
      %v6707 = vmul.f32 %v6643, 0.5
      %v6708 = vmul.f32 %v6644, 0.5
      %v6709 = vmul.f32 %v6645, 0.5
      %v6710 = vmul.f32 %v6646, 0.5
      %v6711 = vmul.f32 %v6647, 0.5
      %v6712 = vmul.f32 %v6648, 0.5
      %v6713 = vmul.f32 %v6649, 0.5
      %v6714 = vmul.f32 %v6650, 0.5
      %v6715 = vmul.f32 %v6651, 0.5
      %v6716 = vmul.f32 %v6652, 0.5
      %v6717 = vmul.f32 %v6653, 0.5
      %v6718 = vmul.f32 %v6654, 0.5
      %v6719 = vmul.f32 %v6655, 0.5
      %v6720 = vmul.f32 %v6656, 0.5
      %v6721 = vmul.f32 %v6657, 0.5
      %v6722 = vmul.f32 %v6658, 0.5
      %v6723 = vmul.f32 %v6659, 0.5
      %v6724 = vmul.f32 %v6660, 0.5
      %6789 = vrot.lane.b32.xlu0 %v5573, 32
      %v6790 = vpop.permute.xlu0 %6789
      %6791 = vrot.lane.b32.xlu0 %v5574, 32
      %v6792 = vpop.permute.xlu0 %6791
      %6793 = vrot.lane.b32.xlu0 %v5575, 32
      %v6794 = vpop.permute.xlu0 %6793
      %6795 = vrot.lane.b32.xlu0 %v5576, 32
      %v6796 = vpop.permute.xlu0 %6795
      %6797 = vrot.lane.b32.xlu0 %v5577, 32
      %v6798 = vpop.permute.xlu0 %6797
      %6799 = vrot.lane.b32.xlu0 %v5578, 32
      %v6800 = vpop.permute.xlu0 %6799
      %6801 = vrot.lane.b32.xlu0 %v5579, 32
      %v6802 = vpop.permute.xlu0 %6801
      %6803 = vrot.lane.b32.xlu0 %v5580, 32
      %v6804 = vpop.permute.xlu0 %6803
      %6805 = vrot.lane.b32.xlu0 %v5581, 32
      %v6806 = vpop.permute.xlu0 %6805
      %6807 = vrot.lane.b32.xlu0 %v5582, 32
      %v6808 = vpop.permute.xlu0 %6807
      %6809 = vrot.lane.b32.xlu0 %v5583, 32
      %v6810 = vpop.permute.xlu0 %6809
      %6811 = vrot.lane.b32.xlu0 %v5584, 32
      %v6812 = vpop.permute.xlu0 %6811
      %6813 = vrot.lane.b32.xlu0 %v5585, 32
      %v6814 = vpop.permute.xlu0 %6813
      %6815 = vrot.lane.b32.xlu0 %v5586, 32
      %v6816 = vpop.permute.xlu0 %6815
      %6817 = vrot.lane.b32.xlu0 %v5587, 32
      %v6818 = vpop.permute.xlu0 %6817
      %6819 = vrot.lane.b32.xlu0 %v5588, 32
      %v6820 = vpop.permute.xlu0 %6819
      %6821 = vrot.lane.b32.xlu0 %v5589, 32
      %v6822 = vpop.permute.xlu0 %6821
      %6823 = vrot.lane.b32.xlu0 %v5590, 32
      %v6824 = vpop.permute.xlu0 %6823
      %6825 = vrot.lane.b32.xlu0 %v5591, 32
      %v6826 = vpop.permute.xlu0 %6825
      %6827 = vrot.lane.b32.xlu0 %v5592, 32
      %v6828 = vpop.permute.xlu0 %6827
      %6829 = vrot.lane.b32.xlu0 %v5593, 32
      %v6830 = vpop.permute.xlu0 %6829
      %6831 = vrot.lane.b32.xlu0 %v5594, 32
      %v6832 = vpop.permute.xlu0 %6831
      %6833 = vrot.lane.b32.xlu0 %v5595, 32
      %v6834 = vpop.permute.xlu0 %6833
      %6835 = vrot.lane.b32.xlu0 %v5596, 32
      %v6836 = vpop.permute.xlu0 %6835
      %6837 = vrot.lane.b32.xlu0 %v5597, 32
      %v6838 = vpop.permute.xlu0 %6837
      %6839 = vrot.lane.b32.xlu0 %v5598, 32
      %v6840 = vpop.permute.xlu0 %6839
      %6841 = vrot.lane.b32.xlu0 %v5599, 32
      %v6842 = vpop.permute.xlu0 %6841
      %6843 = vrot.lane.b32.xlu0 %v5600, 32
      %v6844 = vpop.permute.xlu0 %6843
      %6845 = vrot.lane.b32.xlu0 %v5601, 32
      %v6846 = vpop.permute.xlu0 %6845
      %6847 = vrot.lane.b32.xlu0 %v5602, 32
      %v6848 = vpop.permute.xlu0 %6847
      %6849 = vrot.lane.b32.xlu0 %v5603, 32
      %v6850 = vpop.permute.xlu0 %6849
      %6851 = vrot.lane.b32.xlu0 %v5604, 32
      %v6852 = vpop.permute.xlu0 %6851
      %6853 = vrot.lane.b32.xlu0 %v5605, 32
      %v6854 = vpop.permute.xlu0 %6853
      %6855 = vrot.lane.b32.xlu0 %v5606, 32
      %v6856 = vpop.permute.xlu0 %6855
      %6857 = vrot.lane.b32.xlu0 %v5607, 32
      %v6858 = vpop.permute.xlu0 %6857
      %6859 = vrot.lane.b32.xlu0 %v5608, 32
      %v6860 = vpop.permute.xlu0 %6859
      %6861 = vrot.lane.b32.xlu0 %v5609, 32
      %v6862 = vpop.permute.xlu0 %6861
      %6863 = vrot.lane.b32.xlu0 %v5610, 32
      %v6864 = vpop.permute.xlu0 %6863
      %6865 = vrot.lane.b32.xlu0 %v5611, 32
      %v6866 = vpop.permute.xlu0 %6865
      %6867 = vrot.lane.b32.xlu0 %v5612, 32
      %v6868 = vpop.permute.xlu0 %6867
      %6869 = vrot.lane.b32.xlu0 %v5613, 32
      %v6870 = vpop.permute.xlu0 %6869
      %6871 = vrot.lane.b32.xlu0 %v5614, 32
      %v6872 = vpop.permute.xlu0 %6871
      %6873 = vrot.lane.b32.xlu0 %v5615, 32
      %v6874 = vpop.permute.xlu0 %6873
      %6875 = vrot.lane.b32.xlu0 %v5616, 32
      %v6876 = vpop.permute.xlu0 %6875
      %6877 = vrot.lane.b32.xlu0 %v5617, 32
      %v6878 = vpop.permute.xlu0 %6877
      %6879 = vrot.lane.b32.xlu0 %v5618, 32
      %v6880 = vpop.permute.xlu0 %6879
      %6881 = vrot.lane.b32.xlu0 %v5619, 32
      %v6882 = vpop.permute.xlu0 %6881
      %6883 = vrot.lane.b32.xlu0 %v5620, 32
      %v6884 = vpop.permute.xlu0 %6883
      %6885 = vrot.lane.b32.xlu0 %v5621, 32
      %v6886 = vpop.permute.xlu0 %6885
      %6887 = vrot.lane.b32.xlu0 %v5622, 32
      %v6888 = vpop.permute.xlu0 %6887
      %6889 = vrot.lane.b32.xlu0 %v5623, 32
      %v6890 = vpop.permute.xlu0 %6889
      %6891 = vrot.lane.b32.xlu0 %v5624, 32
      %v6892 = vpop.permute.xlu0 %6891
      %6893 = vrot.lane.b32.xlu0 %v5625, 32
      %v6894 = vpop.permute.xlu0 %6893
      %6895 = vrot.lane.b32.xlu0 %v5626, 32
      %v6896 = vpop.permute.xlu0 %6895
      %6897 = vrot.lane.b32.xlu0 %v5627, 32
      %v6898 = vpop.permute.xlu0 %6897
      %6899 = vrot.lane.b32.xlu0 %v5628, 32
      %v6900 = vpop.permute.xlu0 %6899
      %6901 = vrot.lane.b32.xlu0 %v5629, 32
      %v6902 = vpop.permute.xlu0 %6901
      %6903 = vrot.lane.b32.xlu0 %v5630, 32
      %v6904 = vpop.permute.xlu0 %6903
      %6905 = vrot.lane.b32.xlu0 %v5631, 32
      %v6906 = vpop.permute.xlu0 %6905
      %6907 = vrot.lane.b32.xlu0 %v5632, 32
      %v6908 = vpop.permute.xlu0 %6907
      %6909 = vrot.lane.b32.xlu0 %v5633, 32
      %v6910 = vpop.permute.xlu0 %6909
      %6911 = vrot.lane.b32.xlu0 %v5634, 32
      %v6912 = vpop.permute.xlu0 %6911
      %6913 = vrot.lane.b32.xlu0 %v5635, 32
      %v6914 = vpop.permute.xlu0 %6913
      %6915 = vrot.lane.b32.xlu0 %v5636, 32
      %v6916 = vpop.permute.xlu0 %6915
      %v6981 = vmul.f32 %v6661, %v6790
      %v6982 = vmul.f32 %v6662, %v6792
      %v6983 = vmul.f32 %v6663, %v6794
      %v6984 = vmul.f32 %v6664, %v6796
      %v6985 = vmul.f32 %v6665, %v6798
      %v6986 = vmul.f32 %v6666, %v6800
      %v6987 = vmul.f32 %v6667, %v6802
      %v6988 = vmul.f32 %v6668, %v6804
      %v6989 = vmul.f32 %v6669, %v6806
      %v6990 = vmul.f32 %v6670, %v6808
      %v6991 = vmul.f32 %v6671, %v6810
      %v6992 = vmul.f32 %v6672, %v6812
      %v6993 = vmul.f32 %v6673, %v6814
      %v6994 = vmul.f32 %v6674, %v6816
      %v6995 = vmul.f32 %v6675, %v6818
      %v6996 = vmul.f32 %v6676, %v6820
      %v6997 = vmul.f32 %v6677, %v6822
      %v6998 = vmul.f32 %v6678, %v6824
      %v6999 = vmul.f32 %v6679, %v6826
      %v7000 = vmul.f32 %v6680, %v6828
      %v7001 = vmul.f32 %v6681, %v6830
      %v7002 = vmul.f32 %v6682, %v6832
      %v7003 = vmul.f32 %v6683, %v6834
      %v7004 = vmul.f32 %v6684, %v6836
      %v7005 = vmul.f32 %v6685, %v6838
      %v7006 = vmul.f32 %v6686, %v6840
      %v7007 = vmul.f32 %v6687, %v6842
      %v7008 = vmul.f32 %v6688, %v6844
      %v7009 = vmul.f32 %v6689, %v6846
      %v7010 = vmul.f32 %v6690, %v6848
      %v7011 = vmul.f32 %v6691, %v6850
      %v7012 = vmul.f32 %v6692, %v6852
      %v7013 = vmul.f32 %v6693, %v6854
      %v7014 = vmul.f32 %v6694, %v6856
      %v7015 = vmul.f32 %v6695, %v6858
      %v7016 = vmul.f32 %v6696, %v6860
      %v7017 = vmul.f32 %v6697, %v6862
      %v7018 = vmul.f32 %v6698, %v6864
      %v7019 = vmul.f32 %v6699, %v6866
      %v7020 = vmul.f32 %v6700, %v6868
      %v7021 = vmul.f32 %v6701, %v6870
      %v7022 = vmul.f32 %v6702, %v6872
      %v7023 = vmul.f32 %v6703, %v6874
      %v7024 = vmul.f32 %v6704, %v6876
      %v7025 = vmul.f32 %v6705, %v6878
      %v7026 = vmul.f32 %v6706, %v6880
      %v7027 = vmul.f32 %v6707, %v6882
      %v7028 = vmul.f32 %v6708, %v6884
      %v7029 = vmul.f32 %v6709, %v6886
      %v7030 = vmul.f32 %v6710, %v6888
      %v7031 = vmul.f32 %v6711, %v6890
      %v7032 = vmul.f32 %v6712, %v6892
      %v7033 = vmul.f32 %v6713, %v6894
      %v7034 = vmul.f32 %v6714, %v6896
      %v7035 = vmul.f32 %v6715, %v6898
      %v7036 = vmul.f32 %v6716, %v6900
      %v7037 = vmul.f32 %v6717, %v6902
      %v7038 = vmul.f32 %v6718, %v6904
      %v7039 = vmul.f32 %v6719, %v6906
      %v7040 = vmul.f32 %v6720, %v6908
      %v7041 = vmul.f32 %v6721, %v6910
      %v7042 = vmul.f32 %v6722, %v6912
      %v7043 = vmul.f32 %v6723, %v6914
      %v7044 = vmul.f32 %v6724, %v6916
      %v7045 = vtanh.pop %v5509
      %v7046 = vtanh.pop %v5510
      %v7047 = vtanh.pop %v5511
      %v7048 = vtanh.pop %v5512
      %v7049 = vtanh.pop %v5513
      %v7050 = vtanh.pop %v5514
      %v7051 = vtanh.pop %v5515
      %v7052 = vtanh.pop %v5516
      %v7053 = vtanh.pop %v5517
      %v7054 = vtanh.pop %v5518
      %v7055 = vtanh.pop %v5519
      %v7056 = vtanh.pop %v5520
      %v7057 = vtanh.pop %v5521
      %v7058 = vtanh.pop %v5522
      %v7059 = vtanh.pop %v5523
      %v7060 = vtanh.pop %v5524
      %v7061 = vtanh.pop %v5525
      %v7062 = vtanh.pop %v5526
      %v7063 = vtanh.pop %v5527
      %v7064 = vtanh.pop %v5528
      %v7065 = vtanh.pop %v5529
      %v7066 = vtanh.pop %v5530
      %v7067 = vtanh.pop %v5531
      %v7068 = vtanh.pop %v5532
      %v7069 = vtanh.pop %v5533
      %v7070 = vtanh.pop %v5534
      %v7071 = vtanh.pop %v5535
      %v7072 = vtanh.pop %v5536
      %v7073 = vtanh.pop %v5537
      %v7074 = vtanh.pop %v5538
      %v7075 = vtanh.pop %v5539
      %v7076 = vtanh.pop %v5540
      %v7077 = vtanh.pop %v5541
      %v7078 = vtanh.pop %v5542
      %v7079 = vtanh.pop %v5543
      %v7080 = vtanh.pop %v5544
      %v7081 = vtanh.pop %v5545
      %v7082 = vtanh.pop %v5546
      %v7083 = vtanh.pop %v5547
      %v7084 = vtanh.pop %v5548
      %v7085 = vtanh.pop %v5549
      %v7086 = vtanh.pop %v5550
      %v7087 = vtanh.pop %v5551
      %v7088 = vtanh.pop %v5552
      %v7089 = vtanh.pop %v5553
      %v7090 = vtanh.pop %v5554
      %v7091 = vtanh.pop %v5555
      %v7092 = vtanh.pop %v5556
      %v7093 = vtanh.pop %v5557
      %v7094 = vtanh.pop %v5558
      %v7095 = vtanh.pop %v5559
      %v7096 = vtanh.pop %v5560
      %v7097 = vtanh.pop %v5561
      %v7098 = vtanh.pop %v5562
      %v7099 = vtanh.pop %v5563
      %v7100 = vtanh.pop %v5564
      %v7101 = vtanh.pop %v5565
      %v7102 = vtanh.pop %v5566
      %v7103 = vtanh.pop %v5567
      %v7104 = vtanh.pop %v5568
      %v7105 = vtanh.pop %v5569
      %v7106 = vtanh.pop %v5570
      %v7107 = vtanh.pop %v5571
      %v7108 = vtanh.pop %v5572
      %7173 = vrot.lane.b32.xlu0 %v7045, 64
      %v7174 = vpop.permute.xlu0 %7173
      %7175 = vrot.lane.b32.xlu0 %v7046, 64
      %v7176 = vpop.permute.xlu0 %7175
      %7177 = vrot.lane.b32.xlu0 %v7047, 64
      %v7178 = vpop.permute.xlu0 %7177
      %7179 = vrot.lane.b32.xlu0 %v7048, 64
      %v7180 = vpop.permute.xlu0 %7179
      %7181 = vrot.lane.b32.xlu0 %v7049, 64
      %v7182 = vpop.permute.xlu0 %7181
      %7183 = vrot.lane.b32.xlu0 %v7050, 64
      %v7184 = vpop.permute.xlu0 %7183
      %7185 = vrot.lane.b32.xlu0 %v7051, 64
      %v7186 = vpop.permute.xlu0 %7185
      %7187 = vrot.lane.b32.xlu0 %v7052, 64
      %v7188 = vpop.permute.xlu0 %7187
      %7189 = vrot.lane.b32.xlu0 %v7053, 64
      %v7190 = vpop.permute.xlu0 %7189
      %7191 = vrot.lane.b32.xlu0 %v7054, 64
      %v7192 = vpop.permute.xlu0 %7191
      %7193 = vrot.lane.b32.xlu0 %v7055, 64
      %v7194 = vpop.permute.xlu0 %7193
      %7195 = vrot.lane.b32.xlu0 %v7056, 64
      %v7196 = vpop.permute.xlu0 %7195
      %7197 = vrot.lane.b32.xlu0 %v7057, 64
      %v7198 = vpop.permute.xlu0 %7197
      %7199 = vrot.lane.b32.xlu0 %v7058, 64
      %v7200 = vpop.permute.xlu0 %7199
      %7201 = vrot.lane.b32.xlu0 %v7059, 64
      %v7202 = vpop.permute.xlu0 %7201
      %7203 = vrot.lane.b32.xlu0 %v7060, 64
      %v7204 = vpop.permute.xlu0 %7203
      %7205 = vrot.lane.b32.xlu0 %v7061, 64
      %v7206 = vpop.permute.xlu0 %7205
      %7207 = vrot.lane.b32.xlu0 %v7062, 64
      %v7208 = vpop.permute.xlu0 %7207
      %7209 = vrot.lane.b32.xlu0 %v7063, 64
      %v7210 = vpop.permute.xlu0 %7209
      %7211 = vrot.lane.b32.xlu0 %v7064, 64
      %v7212 = vpop.permute.xlu0 %7211
      %7213 = vrot.lane.b32.xlu0 %v7065, 64
      %v7214 = vpop.permute.xlu0 %7213
      %7215 = vrot.lane.b32.xlu0 %v7066, 64
      %v7216 = vpop.permute.xlu0 %7215
      %7217 = vrot.lane.b32.xlu0 %v7067, 64
      %v7218 = vpop.permute.xlu0 %7217
      %7219 = vrot.lane.b32.xlu0 %v7068, 64
      %v7220 = vpop.permute.xlu0 %7219
      %7221 = vrot.lane.b32.xlu0 %v7069, 64
      %v7222 = vpop.permute.xlu0 %7221
      %7223 = vrot.lane.b32.xlu0 %v7070, 64
      %v7224 = vpop.permute.xlu0 %7223
      %7225 = vrot.lane.b32.xlu0 %v7071, 64
      %v7226 = vpop.permute.xlu0 %7225
      %7227 = vrot.lane.b32.xlu0 %v7072, 64
      %v7228 = vpop.permute.xlu0 %7227
      %7229 = vrot.lane.b32.xlu0 %v7073, 64
      %v7230 = vpop.permute.xlu0 %7229
      %7231 = vrot.lane.b32.xlu0 %v7074, 64
      %v7232 = vpop.permute.xlu0 %7231
      %7233 = vrot.lane.b32.xlu0 %v7075, 64
      %v7234 = vpop.permute.xlu0 %7233
      %7235 = vrot.lane.b32.xlu0 %v7076, 64
      %v7236 = vpop.permute.xlu0 %7235
      %7237 = vrot.lane.b32.xlu0 %v7077, 64
      %v7238 = vpop.permute.xlu0 %7237
      %7239 = vrot.lane.b32.xlu0 %v7078, 64
      %v7240 = vpop.permute.xlu0 %7239
      %7241 = vrot.lane.b32.xlu0 %v7079, 64
      %v7242 = vpop.permute.xlu0 %7241
      %7243 = vrot.lane.b32.xlu0 %v7080, 64
      %v7244 = vpop.permute.xlu0 %7243
      %7245 = vrot.lane.b32.xlu0 %v7081, 64
      %v7246 = vpop.permute.xlu0 %7245
      %7247 = vrot.lane.b32.xlu0 %v7082, 64
      %v7248 = vpop.permute.xlu0 %7247
      %7249 = vrot.lane.b32.xlu0 %v7083, 64
      %v7250 = vpop.permute.xlu0 %7249
      %7251 = vrot.lane.b32.xlu0 %v7084, 64
      %v7252 = vpop.permute.xlu0 %7251
      %7253 = vrot.lane.b32.xlu0 %v7085, 64
      %v7254 = vpop.permute.xlu0 %7253
      %7255 = vrot.lane.b32.xlu0 %v7086, 64
      %v7256 = vpop.permute.xlu0 %7255
      %7257 = vrot.lane.b32.xlu0 %v7087, 64
      %v7258 = vpop.permute.xlu0 %7257
      %7259 = vrot.lane.b32.xlu0 %v7088, 64
      %v7260 = vpop.permute.xlu0 %7259
      %7261 = vrot.lane.b32.xlu0 %v7089, 64
      %v7262 = vpop.permute.xlu0 %7261
      %7263 = vrot.lane.b32.xlu0 %v7090, 64
      %v7264 = vpop.permute.xlu0 %7263
      %7265 = vrot.lane.b32.xlu0 %v7091, 64
      %v7266 = vpop.permute.xlu0 %7265
      %7267 = vrot.lane.b32.xlu0 %v7092, 64
      %v7268 = vpop.permute.xlu0 %7267
      %7269 = vrot.lane.b32.xlu0 %v7093, 64
      %v7270 = vpop.permute.xlu0 %7269
      %7271 = vrot.lane.b32.xlu0 %v7094, 64
      %v7272 = vpop.permute.xlu0 %7271
      %7273 = vrot.lane.b32.xlu0 %v7095, 64
      %v7274 = vpop.permute.xlu0 %7273
      %7275 = vrot.lane.b32.xlu0 %v7096, 64
      %v7276 = vpop.permute.xlu0 %7275
      %7277 = vrot.lane.b32.xlu0 %v7097, 64
      %v7278 = vpop.permute.xlu0 %7277
      %7279 = vrot.lane.b32.xlu0 %v7098, 64
      %v7280 = vpop.permute.xlu0 %7279
      %7281 = vrot.lane.b32.xlu0 %v7099, 64
      %v7282 = vpop.permute.xlu0 %7281
      %7283 = vrot.lane.b32.xlu0 %v7100, 64
      %v7284 = vpop.permute.xlu0 %7283
      %7285 = vrot.lane.b32.xlu0 %v7101, 64
      %v7286 = vpop.permute.xlu0 %7285
      %7287 = vrot.lane.b32.xlu0 %v7102, 64
      %v7288 = vpop.permute.xlu0 %7287
      %7289 = vrot.lane.b32.xlu0 %v7103, 64
      %v7290 = vpop.permute.xlu0 %7289
      %7291 = vrot.lane.b32.xlu0 %v7104, 64
      %v7292 = vpop.permute.xlu0 %7291
      %7293 = vrot.lane.b32.xlu0 %v7105, 64
      %v7294 = vpop.permute.xlu0 %7293
      %7295 = vrot.lane.b32.xlu0 %v7106, 64
      %v7296 = vpop.permute.xlu0 %7295
      %7297 = vrot.lane.b32.xlu0 %v7107, 64
      %v7298 = vpop.permute.xlu0 %7297
      %7299 = vrot.lane.b32.xlu0 %v7108, 64
      %v7300 = vpop.permute.xlu0 %7299
      %v7365 = vmul.f32 %v5989, %v7174
      %v7366 = vmul.f32 %v5990, %v7176
      %v7367 = vmul.f32 %v5991, %v7178
      %v7368 = vmul.f32 %v5992, %v7180
      %v7369 = vmul.f32 %v5993, %v7182
      %v7370 = vmul.f32 %v5994, %v7184
      %v7371 = vmul.f32 %v5995, %v7186
      %v7372 = vmul.f32 %v5996, %v7188
      %v7373 = vmul.f32 %v5997, %v7190
      %v7374 = vmul.f32 %v5998, %v7192
      %v7375 = vmul.f32 %v5999, %v7194
      %v7376 = vmul.f32 %v6000, %v7196
      %v7377 = vmul.f32 %v6001, %v7198
      %v7378 = vmul.f32 %v6002, %v7200
      %v7379 = vmul.f32 %v6003, %v7202
      %v7380 = vmul.f32 %v6004, %v7204
      %v7381 = vmul.f32 %v6005, %v7206
      %v7382 = vmul.f32 %v6006, %v7208
      %v7383 = vmul.f32 %v6007, %v7210
      %v7384 = vmul.f32 %v6008, %v7212
      %v7385 = vmul.f32 %v6009, %v7214
      %v7386 = vmul.f32 %v6010, %v7216
      %v7387 = vmul.f32 %v6011, %v7218
      %v7388 = vmul.f32 %v6012, %v7220
      %v7389 = vmul.f32 %v6013, %v7222
      %v7390 = vmul.f32 %v6014, %v7224
      %v7391 = vmul.f32 %v6015, %v7226
      %v7392 = vmul.f32 %v6016, %v7228
      %v7393 = vmul.f32 %v6017, %v7230
      %v7394 = vmul.f32 %v6018, %v7232
      %v7395 = vmul.f32 %v6019, %v7234
      %v7396 = vmul.f32 %v6020, %v7236
      %v7397 = vmul.f32 %v6021, %v7238
      %v7398 = vmul.f32 %v6022, %v7240
      %v7399 = vmul.f32 %v6023, %v7242
      %v7400 = vmul.f32 %v6024, %v7244
      %v7401 = vmul.f32 %v6025, %v7246
      %v7402 = vmul.f32 %v6026, %v7248
      %v7403 = vmul.f32 %v6027, %v7250
      %v7404 = vmul.f32 %v6028, %v7252
      %v7405 = vmul.f32 %v6029, %v7254
      %v7406 = vmul.f32 %v6030, %v7256
      %v7407 = vmul.f32 %v6031, %v7258
      %v7408 = vmul.f32 %v6032, %v7260
      %v7409 = vmul.f32 %v6033, %v7262
      %v7410 = vmul.f32 %v6034, %v7264
      %v7411 = vmul.f32 %v6035, %v7266
      %v7412 = vmul.f32 %v6036, %v7268
      %v7413 = vmul.f32 %v6037, %v7270
      %v7414 = vmul.f32 %v6038, %v7272
      %v7415 = vmul.f32 %v6039, %v7274
      %v7416 = vmul.f32 %v6040, %v7276
      %v7417 = vmul.f32 %v6041, %v7278
      %v7418 = vmul.f32 %v6042, %v7280
      %v7419 = vmul.f32 %v6043, %v7282
      %v7420 = vmul.f32 %v6044, %v7284
      %v7421 = vmul.f32 %v6045, %v7286
      %v7422 = vmul.f32 %v6046, %v7288
      %v7423 = vmul.f32 %v6047, %v7290
      %v7424 = vmul.f32 %v6048, %v7292
      %v7425 = vmul.f32 %v6049, %v7294
      %v7426 = vmul.f32 %v6050, %v7296
      %v7427 = vmul.f32 %v6051, %v7298
      %v7428 = vmul.f32 %v6052, %v7300
      %7493 = vrot.lane.b32.xlu0 %v7365, 32
      %v7494 = vpop.permute.xlu0 %7493
      %7495 = vrot.lane.b32.xlu0 %v7366, 32
      %v7496 = vpop.permute.xlu0 %7495
      %7497 = vrot.lane.b32.xlu0 %v7367, 32
      %v7498 = vpop.permute.xlu0 %7497
      %7499 = vrot.lane.b32.xlu0 %v7368, 32
      %v7500 = vpop.permute.xlu0 %7499
      %7501 = vrot.lane.b32.xlu0 %v7369, 32
      %v7502 = vpop.permute.xlu0 %7501
      %7503 = vrot.lane.b32.xlu0 %v7370, 32
      %v7504 = vpop.permute.xlu0 %7503
      %7505 = vrot.lane.b32.xlu0 %v7371, 32
      %v7506 = vpop.permute.xlu0 %7505
      %7507 = vrot.lane.b32.xlu0 %v7372, 32
      %v7508 = vpop.permute.xlu0 %7507
      %7509 = vrot.lane.b32.xlu0 %v7373, 32
      %v7510 = vpop.permute.xlu0 %7509
      %7511 = vrot.lane.b32.xlu0 %v7374, 32
      %v7512 = vpop.permute.xlu0 %7511
      %7513 = vrot.lane.b32.xlu0 %v7375, 32
      %v7514 = vpop.permute.xlu0 %7513
      %7515 = vrot.lane.b32.xlu0 %v7376, 32
      %v7516 = vpop.permute.xlu0 %7515
      %7517 = vrot.lane.b32.xlu0 %v7377, 32
      %v7518 = vpop.permute.xlu0 %7517
      %7519 = vrot.lane.b32.xlu0 %v7378, 32
      %v7520 = vpop.permute.xlu0 %7519
      %7521 = vrot.lane.b32.xlu0 %v7379, 32
      %v7522 = vpop.permute.xlu0 %7521
      %7523 = vrot.lane.b32.xlu0 %v7380, 32
      %v7524 = vpop.permute.xlu0 %7523
      %7525 = vrot.lane.b32.xlu0 %v7381, 32
      %v7526 = vpop.permute.xlu0 %7525
      %7527 = vrot.lane.b32.xlu0 %v7382, 32
      %v7528 = vpop.permute.xlu0 %7527
      %7529 = vrot.lane.b32.xlu0 %v7383, 32
      %v7530 = vpop.permute.xlu0 %7529
      %7531 = vrot.lane.b32.xlu0 %v7384, 32
      %v7532 = vpop.permute.xlu0 %7531
      %7533 = vrot.lane.b32.xlu0 %v7385, 32
      %v7534 = vpop.permute.xlu0 %7533
      %7535 = vrot.lane.b32.xlu0 %v7386, 32
      %v7536 = vpop.permute.xlu0 %7535
      %7537 = vrot.lane.b32.xlu0 %v7387, 32
      %v7538 = vpop.permute.xlu0 %7537
      %7539 = vrot.lane.b32.xlu0 %v7388, 32
      %v7540 = vpop.permute.xlu0 %7539
      %7541 = vrot.lane.b32.xlu0 %v7389, 32
      %v7542 = vpop.permute.xlu0 %7541
      %7543 = vrot.lane.b32.xlu0 %v7390, 32
      %v7544 = vpop.permute.xlu0 %7543
      %7545 = vrot.lane.b32.xlu0 %v7391, 32
      %v7546 = vpop.permute.xlu0 %7545
      %7547 = vrot.lane.b32.xlu0 %v7392, 32
      %v7548 = vpop.permute.xlu0 %7547
      %7549 = vrot.lane.b32.xlu0 %v7393, 32
      %v7550 = vpop.permute.xlu0 %7549
      %7551 = vrot.lane.b32.xlu0 %v7394, 32
      %v7552 = vpop.permute.xlu0 %7551
      %7553 = vrot.lane.b32.xlu0 %v7395, 32
      %v7554 = vpop.permute.xlu0 %7553
      %7555 = vrot.lane.b32.xlu0 %v7396, 32
      %v7556 = vpop.permute.xlu0 %7555
      %7557 = vrot.lane.b32.xlu0 %v7397, 32
      %v7558 = vpop.permute.xlu0 %7557
      %7559 = vrot.lane.b32.xlu0 %v7398, 32
      %v7560 = vpop.permute.xlu0 %7559
      %7561 = vrot.lane.b32.xlu0 %v7399, 32
      %v7562 = vpop.permute.xlu0 %7561
      %7563 = vrot.lane.b32.xlu0 %v7400, 32
      %v7564 = vpop.permute.xlu0 %7563
      %7565 = vrot.lane.b32.xlu0 %v7401, 32
      %v7566 = vpop.permute.xlu0 %7565
      %7567 = vrot.lane.b32.xlu0 %v7402, 32
      %v7568 = vpop.permute.xlu0 %7567
      %7569 = vrot.lane.b32.xlu0 %v7403, 32
      %v7570 = vpop.permute.xlu0 %7569
      %7571 = vrot.lane.b32.xlu0 %v7404, 32
      %v7572 = vpop.permute.xlu0 %7571
      %7573 = vrot.lane.b32.xlu0 %v7405, 32
      %v7574 = vpop.permute.xlu0 %7573
      %7575 = vrot.lane.b32.xlu0 %v7406, 32
      %v7576 = vpop.permute.xlu0 %7575
      %7577 = vrot.lane.b32.xlu0 %v7407, 32
      %v7578 = vpop.permute.xlu0 %7577
      %7579 = vrot.lane.b32.xlu0 %v7408, 32
      %v7580 = vpop.permute.xlu0 %7579
      %7581 = vrot.lane.b32.xlu0 %v7409, 32
      %v7582 = vpop.permute.xlu0 %7581
      %7583 = vrot.lane.b32.xlu0 %v7410, 32
      %v7584 = vpop.permute.xlu0 %7583
      %7585 = vrot.lane.b32.xlu0 %v7411, 32
      %v7586 = vpop.permute.xlu0 %7585
      %7587 = vrot.lane.b32.xlu0 %v7412, 32
      %v7588 = vpop.permute.xlu0 %7587
      %7589 = vrot.lane.b32.xlu0 %v7413, 32
      %v7590 = vpop.permute.xlu0 %7589
      %7591 = vrot.lane.b32.xlu0 %v7414, 32
      %v7592 = vpop.permute.xlu0 %7591
      %7593 = vrot.lane.b32.xlu0 %v7415, 32
      %v7594 = vpop.permute.xlu0 %7593
      %7595 = vrot.lane.b32.xlu0 %v7416, 32
      %v7596 = vpop.permute.xlu0 %7595
      %7597 = vrot.lane.b32.xlu0 %v7417, 32
      %v7598 = vpop.permute.xlu0 %7597
      %7599 = vrot.lane.b32.xlu0 %v7418, 32
      %v7600 = vpop.permute.xlu0 %7599
      %7601 = vrot.lane.b32.xlu0 %v7419, 32
      %v7602 = vpop.permute.xlu0 %7601
      %7603 = vrot.lane.b32.xlu0 %v7420, 32
      %v7604 = vpop.permute.xlu0 %7603
      %7605 = vrot.lane.b32.xlu0 %v7421, 32
      %v7606 = vpop.permute.xlu0 %7605
      %7607 = vrot.lane.b32.xlu0 %v7422, 32
      %v7608 = vpop.permute.xlu0 %7607
      %7609 = vrot.lane.b32.xlu0 %v7423, 32
      %v7610 = vpop.permute.xlu0 %7609
      %7611 = vrot.lane.b32.xlu0 %v7424, 32
      %v7612 = vpop.permute.xlu0 %7611
      %7613 = vrot.lane.b32.xlu0 %v7425, 32
      %v7614 = vpop.permute.xlu0 %7613
      %7615 = vrot.lane.b32.xlu0 %v7426, 32
      %v7616 = vpop.permute.xlu0 %7615
      %7617 = vrot.lane.b32.xlu0 %v7427, 32
      %v7618 = vpop.permute.xlu0 %7617
      %7619 = vrot.lane.b32.xlu0 %v7428, 32
      %v7620 = vpop.permute.xlu0 %7619
      %v7685 = vadd.f32 %v6981, %v7494
      %v7686 = vadd.f32 %v6982, %v7496
      %v7687 = vadd.f32 %v6983, %v7498
      %v7688 = vadd.f32 %v6984, %v7500
      %v7689 = vadd.f32 %v6985, %v7502
      %v7690 = vadd.f32 %v6986, %v7504
      %v7691 = vadd.f32 %v6987, %v7506
      %v7692 = vadd.f32 %v6988, %v7508
      %v7693 = vadd.f32 %v6989, %v7510
      %v7694 = vadd.f32 %v6990, %v7512
      %v7695 = vadd.f32 %v6991, %v7514
      %v7696 = vadd.f32 %v6992, %v7516
      %v7697 = vadd.f32 %v6993, %v7518
      %v7698 = vadd.f32 %v6994, %v7520
      %v7699 = vadd.f32 %v6995, %v7522
      %v7700 = vadd.f32 %v6996, %v7524
      %v7701 = vadd.f32 %v6997, %v7526
      %v7702 = vadd.f32 %v6998, %v7528
      %v7703 = vadd.f32 %v6999, %v7530
      %v7704 = vadd.f32 %v7000, %v7532
      %v7705 = vadd.f32 %v7001, %v7534
      %v7706 = vadd.f32 %v7002, %v7536
      %v7707 = vadd.f32 %v7003, %v7538
      %v7708 = vadd.f32 %v7004, %v7540
      %v7709 = vadd.f32 %v7005, %v7542
      %v7710 = vadd.f32 %v7006, %v7544
      %v7711 = vadd.f32 %v7007, %v7546
      %v7712 = vadd.f32 %v7008, %v7548
      %v7713 = vadd.f32 %v7009, %v7550
      %v7714 = vadd.f32 %v7010, %v7552
      %v7715 = vadd.f32 %v7011, %v7554
      %v7716 = vadd.f32 %v7012, %v7556
      %v7717 = vadd.f32 %v7013, %v7558
      %v7718 = vadd.f32 %v7014, %v7560
      %v7719 = vadd.f32 %v7015, %v7562
      %v7720 = vadd.f32 %v7016, %v7564
      %v7721 = vadd.f32 %v7017, %v7566
      %v7722 = vadd.f32 %v7018, %v7568
      %v7723 = vadd.f32 %v7019, %v7570
      %v7724 = vadd.f32 %v7020, %v7572
      %v7725 = vadd.f32 %v7021, %v7574
      %v7726 = vadd.f32 %v7022, %v7576
      %v7727 = vadd.f32 %v7023, %v7578
      %v7728 = vadd.f32 %v7024, %v7580
      %v7729 = vadd.f32 %v7025, %v7582
      %v7730 = vadd.f32 %v7026, %v7584
      %v7731 = vadd.f32 %v7027, %v7586
      %v7732 = vadd.f32 %v7028, %v7588
      %v7733 = vadd.f32 %v7029, %v7590
      %v7734 = vadd.f32 %v7030, %v7592
      %v7735 = vadd.f32 %v7031, %v7594
      %v7736 = vadd.f32 %v7032, %v7596
      %v7737 = vadd.f32 %v7033, %v7598
      %v7738 = vadd.f32 %v7034, %v7600
      %v7739 = vadd.f32 %v7035, %v7602
      %v7740 = vadd.f32 %v7036, %v7604
      %v7741 = vadd.f32 %v7037, %v7606
      %v7742 = vadd.f32 %v7038, %v7608
      %v7743 = vadd.f32 %v7039, %v7610
      %v7744 = vadd.f32 %v7040, %v7612
      %v7745 = vadd.f32 %v7041, %v7614
      %v7746 = vadd.f32 %v7042, %v7616
      %v7747 = vadd.f32 %v7043, %v7618
      %v7748 = vadd.f32 %v7044, %v7620
      %v7749 = vld [vmem:[%s4] sm:$0xff]
      %v7750 = vld [vmem:[%s4 + $0x8] sm:$0xff]
      %v7751 = vld [vmem:[%s4 + $0x10] sm:$0xff]
      %v7752 = vld [vmem:[%s4 + $0x18] sm:$0xff]
      %v7753 = vld [vmem:[%s4 + $0x20] sm:$0xff]
      %v7754 = vld [vmem:[%s4 + $0x28] sm:$0xff]
      %v7755 = vld [vmem:[%s4 + $0x30] sm:$0xff]
      %v7756 = vld [vmem:[%s4 + $0x38] sm:$0xff]
      %v7757 = vld [vmem:[%s4 + $0x40] sm:$0xff]
      %v7758 = vld [vmem:[%s4 + $0x48] sm:$0xff]
      %v7759 = vld [vmem:[%s4 + $0x50] sm:$0xff]
      %v7760 = vld [vmem:[%s4 + $0x58] sm:$0xff]
      %v7761 = vld [vmem:[%s4 + $0x60] sm:$0xff]
      %v7762 = vld [vmem:[%s4 + $0x68] sm:$0xff]
      %v7763 = vld [vmem:[%s4 + $0x70] sm:$0xff]
      %v7764 = vld [vmem:[%s4 + $0x78] sm:$0xff]
      %v7765 = vld [vmem:[%s4 + $0x80] sm:$0xff]
      %v7766 = vld [vmem:[%s4 + $0x88] sm:$0xff]
      %v7767 = vld [vmem:[%s4 + $0x90] sm:$0xff]
      %v7768 = vld [vmem:[%s4 + $0x98] sm:$0xff]
      %v7769 = vld [vmem:[%s4 + $0xa0] sm:$0xff]
      %v7770 = vld [vmem:[%s4 + $0xa8] sm:$0xff]
      %v7771 = vld [vmem:[%s4 + $0xb0] sm:$0xff]
      %v7772 = vld [vmem:[%s4 + $0xb8] sm:$0xff]
      %v7773 = vld [vmem:[%s4 + $0xc0] sm:$0xff]
      %v7774 = vld [vmem:[%s4 + $0xc8] sm:$0xff]
      %v7775 = vld [vmem:[%s4 + $0xd0] sm:$0xff]
      %v7776 = vld [vmem:[%s4 + $0xd8] sm:$0xff]
      %v7777 = vld [vmem:[%s4 + $0xe0] sm:$0xff]
      %v7778 = vld [vmem:[%s4 + $0xe8] sm:$0xff]
      %v7779 = vld [vmem:[%s4 + $0xf0] sm:$0xff]
      %v7780 = vld [vmem:[%s4 + $0xf8] sm:$0xff]
      %7845 = vrot.lane.b32.xlu0 %v7685, 96
      %v7846 = vpop.permute.xlu0 %7845
      %7847 = vrot.lane.b32.xlu0 %v7686, 96
      %v7848 = vpop.permute.xlu0 %7847
      %7849 = vrot.lane.b32.xlu0 %v7687, 96
      %v7850 = vpop.permute.xlu0 %7849
      %7851 = vrot.lane.b32.xlu0 %v7688, 96
      %v7852 = vpop.permute.xlu0 %7851
      %7853 = vrot.lane.b32.xlu0 %v7689, 96
      %v7854 = vpop.permute.xlu0 %7853
      %7855 = vrot.lane.b32.xlu0 %v7690, 96
      %v7856 = vpop.permute.xlu0 %7855
      %7857 = vrot.lane.b32.xlu0 %v7691, 96
      %v7858 = vpop.permute.xlu0 %7857
      %7859 = vrot.lane.b32.xlu0 %v7692, 96
      %v7860 = vpop.permute.xlu0 %7859
      %7861 = vrot.lane.b32.xlu0 %v7693, 96
      %v7862 = vpop.permute.xlu0 %7861
      %7863 = vrot.lane.b32.xlu0 %v7694, 96
      %v7864 = vpop.permute.xlu0 %7863
      %7865 = vrot.lane.b32.xlu0 %v7695, 96
      %v7866 = vpop.permute.xlu0 %7865
      %7867 = vrot.lane.b32.xlu0 %v7696, 96
      %v7868 = vpop.permute.xlu0 %7867
      %7869 = vrot.lane.b32.xlu0 %v7697, 96
      %v7870 = vpop.permute.xlu0 %7869
      %7871 = vrot.lane.b32.xlu0 %v7698, 96
      %v7872 = vpop.permute.xlu0 %7871
      %7873 = vrot.lane.b32.xlu0 %v7699, 96
      %v7874 = vpop.permute.xlu0 %7873
      %7875 = vrot.lane.b32.xlu0 %v7700, 96
      %v7876 = vpop.permute.xlu0 %7875
      %7877 = vrot.lane.b32.xlu0 %v7701, 96
      %v7878 = vpop.permute.xlu0 %7877
      %7879 = vrot.lane.b32.xlu0 %v7702, 96
      %v7880 = vpop.permute.xlu0 %7879
      %7881 = vrot.lane.b32.xlu0 %v7703, 96
      %v7882 = vpop.permute.xlu0 %7881
      %7883 = vrot.lane.b32.xlu0 %v7704, 96
      %v7884 = vpop.permute.xlu0 %7883
      %7885 = vrot.lane.b32.xlu0 %v7705, 96
      %v7886 = vpop.permute.xlu0 %7885
      %7887 = vrot.lane.b32.xlu0 %v7706, 96
      %v7888 = vpop.permute.xlu0 %7887
      %7889 = vrot.lane.b32.xlu0 %v7707, 96
      %v7890 = vpop.permute.xlu0 %7889
      %7891 = vrot.lane.b32.xlu0 %v7708, 96
      %v7892 = vpop.permute.xlu0 %7891
      %7893 = vrot.lane.b32.xlu0 %v7709, 96
      %v7894 = vpop.permute.xlu0 %7893
      %7895 = vrot.lane.b32.xlu0 %v7710, 96
      %v7896 = vpop.permute.xlu0 %7895
      %7897 = vrot.lane.b32.xlu0 %v7711, 96
      %v7898 = vpop.permute.xlu0 %7897
      %7899 = vrot.lane.b32.xlu0 %v7712, 96
      %v7900 = vpop.permute.xlu0 %7899
      %7901 = vrot.lane.b32.xlu0 %v7713, 96
      %v7902 = vpop.permute.xlu0 %7901
      %7903 = vrot.lane.b32.xlu0 %v7714, 96
      %v7904 = vpop.permute.xlu0 %7903
      %7905 = vrot.lane.b32.xlu0 %v7715, 96
      %v7906 = vpop.permute.xlu0 %7905
      %7907 = vrot.lane.b32.xlu0 %v7716, 96
      %v7908 = vpop.permute.xlu0 %7907
      %7909 = vrot.lane.b32.xlu0 %v7717, 96
      %v7910 = vpop.permute.xlu0 %7909
      %7911 = vrot.lane.b32.xlu0 %v7718, 96
      %v7912 = vpop.permute.xlu0 %7911
      %7913 = vrot.lane.b32.xlu0 %v7719, 96
      %v7914 = vpop.permute.xlu0 %7913
      %7915 = vrot.lane.b32.xlu0 %v7720, 96
      %v7916 = vpop.permute.xlu0 %7915
      %7917 = vrot.lane.b32.xlu0 %v7721, 96
      %v7918 = vpop.permute.xlu0 %7917
      %7919 = vrot.lane.b32.xlu0 %v7722, 96
      %v7920 = vpop.permute.xlu0 %7919
      %7921 = vrot.lane.b32.xlu0 %v7723, 96
      %v7922 = vpop.permute.xlu0 %7921
      %7923 = vrot.lane.b32.xlu0 %v7724, 96
      %v7924 = vpop.permute.xlu0 %7923
      %7925 = vrot.lane.b32.xlu0 %v7725, 96
      %v7926 = vpop.permute.xlu0 %7925
      %7927 = vrot.lane.b32.xlu0 %v7726, 96
      %v7928 = vpop.permute.xlu0 %7927
      %7929 = vrot.lane.b32.xlu0 %v7727, 96
      %v7930 = vpop.permute.xlu0 %7929
      %7931 = vrot.lane.b32.xlu0 %v7728, 96
      %v7932 = vpop.permute.xlu0 %7931
      %7933 = vrot.lane.b32.xlu0 %v7729, 96
      %v7934 = vpop.permute.xlu0 %7933
      %7935 = vrot.lane.b32.xlu0 %v7730, 96
      %v7936 = vpop.permute.xlu0 %7935
      %7937 = vrot.lane.b32.xlu0 %v7731, 96
      %v7938 = vpop.permute.xlu0 %7937
      %7939 = vrot.lane.b32.xlu0 %v7732, 96
      %v7940 = vpop.permute.xlu0 %7939
      %7941 = vrot.lane.b32.xlu0 %v7733, 96
      %v7942 = vpop.permute.xlu0 %7941
      %7943 = vrot.lane.b32.xlu0 %v7734, 96
      %v7944 = vpop.permute.xlu0 %7943
      %7945 = vrot.lane.b32.xlu0 %v7735, 96
      %v7946 = vpop.permute.xlu0 %7945
      %7947 = vrot.lane.b32.xlu0 %v7736, 96
      %v7948 = vpop.permute.xlu0 %7947
      %7949 = vrot.lane.b32.xlu0 %v7737, 96
      %v7950 = vpop.permute.xlu0 %7949
      %7951 = vrot.lane.b32.xlu0 %v7738, 96
      %v7952 = vpop.permute.xlu0 %7951
      %7953 = vrot.lane.b32.xlu0 %v7739, 96
      %v7954 = vpop.permute.xlu0 %7953
      %7955 = vrot.lane.b32.xlu0 %v7740, 96
      %v7956 = vpop.permute.xlu0 %7955
      %7957 = vrot.lane.b32.xlu0 %v7741, 96
      %v7958 = vpop.permute.xlu0 %7957
      %7959 = vrot.lane.b32.xlu0 %v7742, 96
      %v7960 = vpop.permute.xlu0 %7959
      %7961 = vrot.lane.b32.xlu0 %v7743, 96
      %v7962 = vpop.permute.xlu0 %7961
      %7963 = vrot.lane.b32.xlu0 %v7744, 96
      %v7964 = vpop.permute.xlu0 %7963
      %7965 = vrot.lane.b32.xlu0 %v7745, 96
      %v7966 = vpop.permute.xlu0 %7965
      %7967 = vrot.lane.b32.xlu0 %v7746, 96
      %v7968 = vpop.permute.xlu0 %7967
      %7969 = vrot.lane.b32.xlu0 %v7747, 96
      %v7970 = vpop.permute.xlu0 %7969
      %7971 = vrot.lane.b32.xlu0 %v7748, 96
      %v7972 = vpop.permute.xlu0 %7971
      %v8037 = vmul.f32 %v7749, %v7846
      %v8038 = vmul.f32 %v7750, %v7848
      %v8039 = vmul.f32 %v7751, %v7850
      %v8040 = vmul.f32 %v7752, %v7852
      %v8041 = vmul.f32 %v7753, %v7854
      %v8042 = vmul.f32 %v7754, %v7856
      %v8043 = vmul.f32 %v7755, %v7858
      %v8044 = vmul.f32 %v7756, %v7860
      %v8045 = vmul.f32 %v7757, %v7862
      %v8046 = vmul.f32 %v7758, %v7864
      %v8047 = vmul.f32 %v7759, %v7866
      %v8048 = vmul.f32 %v7760, %v7868
      %v8049 = vmul.f32 %v7761, %v7870
      %v8050 = vmul.f32 %v7762, %v7872
      %v8051 = vmul.f32 %v7763, %v7874
      %v8052 = vmul.f32 %v7764, %v7876
      %v8053 = vmul.f32 %v7765, %v7878
      %v8054 = vmul.f32 %v7766, %v7880
      %v8055 = vmul.f32 %v7767, %v7882
      %v8056 = vmul.f32 %v7768, %v7884
      %v8057 = vmul.f32 %v7769, %v7886
      %v8058 = vmul.f32 %v7770, %v7888
      %v8059 = vmul.f32 %v7771, %v7890
      %v8060 = vmul.f32 %v7772, %v7892
      %v8061 = vmul.f32 %v7773, %v7894
      %v8062 = vmul.f32 %v7774, %v7896
      %v8063 = vmul.f32 %v7775, %v7898
      %v8064 = vmul.f32 %v7776, %v7900
      %v8065 = vmul.f32 %v7777, %v7902
      %v8066 = vmul.f32 %v7778, %v7904
      %v8067 = vmul.f32 %v7779, %v7906
      %v8068 = vmul.f32 %v7780, %v7908
      %v8069 = vmul.f32 %v7749, %v7910
      %v8070 = vmul.f32 %v7750, %v7912
      %v8071 = vmul.f32 %v7751, %v7914
      %v8072 = vmul.f32 %v7752, %v7916
      %v8073 = vmul.f32 %v7753, %v7918
      %v8074 = vmul.f32 %v7754, %v7920
      %v8075 = vmul.f32 %v7755, %v7922
      %v8076 = vmul.f32 %v7756, %v7924
      %v8077 = vmul.f32 %v7757, %v7926
      %v8078 = vmul.f32 %v7758, %v7928
      %v8079 = vmul.f32 %v7759, %v7930
      %v8080 = vmul.f32 %v7760, %v7932
      %v8081 = vmul.f32 %v7761, %v7934
      %v8082 = vmul.f32 %v7762, %v7936
      %v8083 = vmul.f32 %v7763, %v7938
      %v8084 = vmul.f32 %v7764, %v7940
      %v8085 = vmul.f32 %v7765, %v7942
      %v8086 = vmul.f32 %v7766, %v7944
      %v8087 = vmul.f32 %v7767, %v7946
      %v8088 = vmul.f32 %v7768, %v7948
      %v8089 = vmul.f32 %v7769, %v7950
      %v8090 = vmul.f32 %v7770, %v7952
      %v8091 = vmul.f32 %v7771, %v7954
      %v8092 = vmul.f32 %v7772, %v7956
      %v8093 = vmul.f32 %v7773, %v7958
      %v8094 = vmul.f32 %v7774, %v7960
      %v8095 = vmul.f32 %v7775, %v7962
      %v8096 = vmul.f32 %v7776, %v7964
      %v8097 = vmul.f32 %v7777, %v7966
      %v8098 = vmul.f32 %v7778, %v7968
      %v8099 = vmul.f32 %v7779, %v7970
      %v8100 = vmul.f32 %v7780, %v7972
      %8165 = vrot.lane.b32.xlu0 %v8037, 96
      %v8166 = vpop.permute.xlu0 %8165
      %8167 = vrot.lane.b32.xlu0 %v8038, 96
      %v8168 = vpop.permute.xlu0 %8167
      %8169 = vrot.lane.b32.xlu0 %v8039, 96
      %v8170 = vpop.permute.xlu0 %8169
      %8171 = vrot.lane.b32.xlu0 %v8040, 96
      %v8172 = vpop.permute.xlu0 %8171
      %8173 = vrot.lane.b32.xlu0 %v8041, 96
      %v8174 = vpop.permute.xlu0 %8173
      %8175 = vrot.lane.b32.xlu0 %v8042, 96
      %v8176 = vpop.permute.xlu0 %8175
      %8177 = vrot.lane.b32.xlu0 %v8043, 96
      %v8178 = vpop.permute.xlu0 %8177
      %8179 = vrot.lane.b32.xlu0 %v8044, 96
      %v8180 = vpop.permute.xlu0 %8179
      %8181 = vrot.lane.b32.xlu0 %v8045, 96
      %v8182 = vpop.permute.xlu0 %8181
      %8183 = vrot.lane.b32.xlu0 %v8046, 96
      %v8184 = vpop.permute.xlu0 %8183
      %8185 = vrot.lane.b32.xlu0 %v8047, 96
      %v8186 = vpop.permute.xlu0 %8185
      %8187 = vrot.lane.b32.xlu0 %v8048, 96
      %v8188 = vpop.permute.xlu0 %8187
      %8189 = vrot.lane.b32.xlu0 %v8049, 96
      %v8190 = vpop.permute.xlu0 %8189
      %8191 = vrot.lane.b32.xlu0 %v8050, 96
      %v8192 = vpop.permute.xlu0 %8191
      %8193 = vrot.lane.b32.xlu0 %v8051, 96
      %v8194 = vpop.permute.xlu0 %8193
      %8195 = vrot.lane.b32.xlu0 %v8052, 96
      %v8196 = vpop.permute.xlu0 %8195
      %8197 = vrot.lane.b32.xlu0 %v8053, 96
      %v8198 = vpop.permute.xlu0 %8197
      %8199 = vrot.lane.b32.xlu0 %v8054, 96
      %v8200 = vpop.permute.xlu0 %8199
      %8201 = vrot.lane.b32.xlu0 %v8055, 96
      %v8202 = vpop.permute.xlu0 %8201
      %8203 = vrot.lane.b32.xlu0 %v8056, 96
      %v8204 = vpop.permute.xlu0 %8203
      %8205 = vrot.lane.b32.xlu0 %v8057, 96
      %v8206 = vpop.permute.xlu0 %8205
      %8207 = vrot.lane.b32.xlu0 %v8058, 96
      %v8208 = vpop.permute.xlu0 %8207
      %8209 = vrot.lane.b32.xlu0 %v8059, 96
      %v8210 = vpop.permute.xlu0 %8209
      %8211 = vrot.lane.b32.xlu0 %v8060, 96
      %v8212 = vpop.permute.xlu0 %8211
      %8213 = vrot.lane.b32.xlu0 %v8061, 96
      %v8214 = vpop.permute.xlu0 %8213
      %8215 = vrot.lane.b32.xlu0 %v8062, 96
      %v8216 = vpop.permute.xlu0 %8215
      %8217 = vrot.lane.b32.xlu0 %v8063, 96
      %v8218 = vpop.permute.xlu0 %8217
      %8219 = vrot.lane.b32.xlu0 %v8064, 96
      %v8220 = vpop.permute.xlu0 %8219
      %8221 = vrot.lane.b32.xlu0 %v8065, 96
      %v8222 = vpop.permute.xlu0 %8221
      %8223 = vrot.lane.b32.xlu0 %v8066, 96
      %v8224 = vpop.permute.xlu0 %8223
      %8225 = vrot.lane.b32.xlu0 %v8067, 96
      %v8226 = vpop.permute.xlu0 %8225
      %8227 = vrot.lane.b32.xlu0 %v8068, 96
      %v8228 = vpop.permute.xlu0 %8227
      %8229 = vrot.lane.b32.xlu0 %v8069, 96
      %v8230 = vpop.permute.xlu0 %8229
      %8231 = vrot.lane.b32.xlu0 %v8070, 96
      %v8232 = vpop.permute.xlu0 %8231
      %8233 = vrot.lane.b32.xlu0 %v8071, 96
      %v8234 = vpop.permute.xlu0 %8233
      %8235 = vrot.lane.b32.xlu0 %v8072, 96
      %v8236 = vpop.permute.xlu0 %8235
      %8237 = vrot.lane.b32.xlu0 %v8073, 96
      %v8238 = vpop.permute.xlu0 %8237
      %8239 = vrot.lane.b32.xlu0 %v8074, 96
      %v8240 = vpop.permute.xlu0 %8239
      %8241 = vrot.lane.b32.xlu0 %v8075, 96
      %v8242 = vpop.permute.xlu0 %8241
      %8243 = vrot.lane.b32.xlu0 %v8076, 96
      %v8244 = vpop.permute.xlu0 %8243
      %8245 = vrot.lane.b32.xlu0 %v8077, 96
      %v8246 = vpop.permute.xlu0 %8245
      %8247 = vrot.lane.b32.xlu0 %v8078, 96
      %v8248 = vpop.permute.xlu0 %8247
      %8249 = vrot.lane.b32.xlu0 %v8079, 96
      %v8250 = vpop.permute.xlu0 %8249
      %8251 = vrot.lane.b32.xlu0 %v8080, 96
      %v8252 = vpop.permute.xlu0 %8251
      %8253 = vrot.lane.b32.xlu0 %v8081, 96
      %v8254 = vpop.permute.xlu0 %8253
      %8255 = vrot.lane.b32.xlu0 %v8082, 96
      %v8256 = vpop.permute.xlu0 %8255
      %8257 = vrot.lane.b32.xlu0 %v8083, 96
      %v8258 = vpop.permute.xlu0 %8257
      %8259 = vrot.lane.b32.xlu0 %v8084, 96
      %v8260 = vpop.permute.xlu0 %8259
      %8261 = vrot.lane.b32.xlu0 %v8085, 96
      %v8262 = vpop.permute.xlu0 %8261
      %8263 = vrot.lane.b32.xlu0 %v8086, 96
      %v8264 = vpop.permute.xlu0 %8263
      %8265 = vrot.lane.b32.xlu0 %v8087, 96
      %v8266 = vpop.permute.xlu0 %8265
      %8267 = vrot.lane.b32.xlu0 %v8088, 96
      %v8268 = vpop.permute.xlu0 %8267
      %8269 = vrot.lane.b32.xlu0 %v8089, 96
      %v8270 = vpop.permute.xlu0 %8269
      %8271 = vrot.lane.b32.xlu0 %v8090, 96
      %v8272 = vpop.permute.xlu0 %8271
      %8273 = vrot.lane.b32.xlu0 %v8091, 96
      %v8274 = vpop.permute.xlu0 %8273
      %8275 = vrot.lane.b32.xlu0 %v8092, 96
      %v8276 = vpop.permute.xlu0 %8275
      %8277 = vrot.lane.b32.xlu0 %v8093, 96
      %v8278 = vpop.permute.xlu0 %8277
      %8279 = vrot.lane.b32.xlu0 %v8094, 96
      %v8280 = vpop.permute.xlu0 %8279
      %8281 = vrot.lane.b32.xlu0 %v8095, 96
      %v8282 = vpop.permute.xlu0 %8281
      %8283 = vrot.lane.b32.xlu0 %v8096, 96
      %v8284 = vpop.permute.xlu0 %8283
      %8285 = vrot.lane.b32.xlu0 %v8097, 96
      %v8286 = vpop.permute.xlu0 %8285
      %8287 = vrot.lane.b32.xlu0 %v8098, 96
      %v8288 = vpop.permute.xlu0 %8287
      %8289 = vrot.lane.b32.xlu0 %v8099, 96
      %v8290 = vpop.permute.xlu0 %8289
      %8291 = vrot.lane.b32.xlu0 %v8100, 96
      %v8292 = vpop.permute.xlu0 %8291
      %v8357 = vadd.f32 %v5509, %v8166
      %v8358 = vadd.f32 %v5510, %v8168
      %v8359 = vadd.f32 %v5511, %v8170
      %v8360 = vadd.f32 %v5512, %v8172
      %v8361 = vadd.f32 %v5513, %v8174
      %v8362 = vadd.f32 %v5514, %v8176
      %v8363 = vadd.f32 %v5515, %v8178
      %v8364 = vadd.f32 %v5516, %v8180
      %v8365 = vadd.f32 %v5517, %v8182
      %v8366 = vadd.f32 %v5518, %v8184
      %v8367 = vadd.f32 %v5519, %v8186
      %v8368 = vadd.f32 %v5520, %v8188
      %v8369 = vadd.f32 %v5521, %v8190
      %v8370 = vadd.f32 %v5522, %v8192
      %v8371 = vadd.f32 %v5523, %v8194
      %v8372 = vadd.f32 %v5524, %v8196
      %v8373 = vadd.f32 %v5525, %v8198
      %v8374 = vadd.f32 %v5526, %v8200
      %v8375 = vadd.f32 %v5527, %v8202
      %v8376 = vadd.f32 %v5528, %v8204
      %v8377 = vadd.f32 %v5529, %v8206
      %v8378 = vadd.f32 %v5530, %v8208
      %v8379 = vadd.f32 %v5531, %v8210
      %v8380 = vadd.f32 %v5532, %v8212
      %v8381 = vadd.f32 %v5533, %v8214
      %v8382 = vadd.f32 %v5534, %v8216
      %v8383 = vadd.f32 %v5535, %v8218
      %v8384 = vadd.f32 %v5536, %v8220
      %v8385 = vadd.f32 %v5537, %v8222
      %v8386 = vadd.f32 %v5538, %v8224
      %v8387 = vadd.f32 %v5539, %v8226
      %v8388 = vadd.f32 %v5540, %v8228
      %v8389 = vadd.f32 %v5541, %v8230
      %v8390 = vadd.f32 %v5542, %v8232
      %v8391 = vadd.f32 %v5543, %v8234
      %v8392 = vadd.f32 %v5544, %v8236
      %v8393 = vadd.f32 %v5545, %v8238
      %v8394 = vadd.f32 %v5546, %v8240
      %v8395 = vadd.f32 %v5547, %v8242
      %v8396 = vadd.f32 %v5548, %v8244
      %v8397 = vadd.f32 %v5549, %v8246
      %v8398 = vadd.f32 %v5550, %v8248
      %v8399 = vadd.f32 %v5551, %v8250
      %v8400 = vadd.f32 %v5552, %v8252
      %v8401 = vadd.f32 %v5553, %v8254
      %v8402 = vadd.f32 %v5554, %v8256
      %v8403 = vadd.f32 %v5555, %v8258
      %v8404 = vadd.f32 %v5556, %v8260
      %v8405 = vadd.f32 %v5557, %v8262
      %v8406 = vadd.f32 %v5558, %v8264
      %v8407 = vadd.f32 %v5559, %v8266
      %v8408 = vadd.f32 %v5560, %v8268
      %v8409 = vadd.f32 %v5561, %v8270
      %v8410 = vadd.f32 %v5562, %v8272
      %v8411 = vadd.f32 %v5563, %v8274
      %v8412 = vadd.f32 %v5564, %v8276
      %v8413 = vadd.f32 %v5565, %v8278
      %v8414 = vadd.f32 %v5566, %v8280
      %v8415 = vadd.f32 %v5567, %v8282
      %v8416 = vadd.f32 %v5568, %v8284
      %v8417 = vadd.f32 %v5569, %v8286
      %v8418 = vadd.f32 %v5570, %v8288
      %v8419 = vadd.f32 %v5571, %v8290
      %v8420 = vadd.f32 %v5572, %v8292
      %v8421 = vmul.f32 %v8357, 0.5
      %v8422 = vmul.f32 %v8358, 0.5
      %v8423 = vmul.f32 %v8359, 0.5
      %v8424 = vmul.f32 %v8360, 0.5
      %v8425 = vmul.f32 %v8361, 0.5
      %v8426 = vmul.f32 %v8362, 0.5
      %v8427 = vmul.f32 %v8363, 0.5
      %v8428 = vmul.f32 %v8364, 0.5
      %v8429 = vmul.f32 %v8365, 0.5
      %v8430 = vmul.f32 %v8366, 0.5
      %v8431 = vmul.f32 %v8367, 0.5
      %v8432 = vmul.f32 %v8368, 0.5
      %v8433 = vmul.f32 %v8369, 0.5
      %v8434 = vmul.f32 %v8370, 0.5
      %v8435 = vmul.f32 %v8371, 0.5
      %v8436 = vmul.f32 %v8372, 0.5
      %v8437 = vmul.f32 %v8373, 0.5
      %v8438 = vmul.f32 %v8374, 0.5
      %v8439 = vmul.f32 %v8375, 0.5
      %v8440 = vmul.f32 %v8376, 0.5
      %v8441 = vmul.f32 %v8377, 0.5
      %v8442 = vmul.f32 %v8378, 0.5
      %v8443 = vmul.f32 %v8379, 0.5
      %v8444 = vmul.f32 %v8380, 0.5
      %v8445 = vmul.f32 %v8381, 0.5
      %v8446 = vmul.f32 %v8382, 0.5
      %v8447 = vmul.f32 %v8383, 0.5
      %v8448 = vmul.f32 %v8384, 0.5
      %v8449 = vmul.f32 %v8385, 0.5
      %v8450 = vmul.f32 %v8386, 0.5
      %v8451 = vmul.f32 %v8387, 0.5
      %v8452 = vmul.f32 %v8388, 0.5
      %v8453 = vmul.f32 %v8389, 0.5
      %v8454 = vmul.f32 %v8390, 0.5
      %v8455 = vmul.f32 %v8391, 0.5
      %v8456 = vmul.f32 %v8392, 0.5
      %v8457 = vmul.f32 %v8393, 0.5
      %v8458 = vmul.f32 %v8394, 0.5
      %v8459 = vmul.f32 %v8395, 0.5
      %v8460 = vmul.f32 %v8396, 0.5
      %v8461 = vmul.f32 %v8397, 0.5
      %v8462 = vmul.f32 %v8398, 0.5
      %v8463 = vmul.f32 %v8399, 0.5
      %v8464 = vmul.f32 %v8400, 0.5
      %v8465 = vmul.f32 %v8401, 0.5
      %v8466 = vmul.f32 %v8402, 0.5
      %v8467 = vmul.f32 %v8403, 0.5
      %v8468 = vmul.f32 %v8404, 0.5
      %v8469 = vmul.f32 %v8405, 0.5
      %v8470 = vmul.f32 %v8406, 0.5
      %v8471 = vmul.f32 %v8407, 0.5
      %v8472 = vmul.f32 %v8408, 0.5
      %v8473 = vmul.f32 %v8409, 0.5
      %v8474 = vmul.f32 %v8410, 0.5
      %v8475 = vmul.f32 %v8411, 0.5
      %v8476 = vmul.f32 %v8412, 0.5
      %v8477 = vmul.f32 %v8413, 0.5
      %v8478 = vmul.f32 %v8414, 0.5
      %v8479 = vmul.f32 %v8415, 0.5
      %v8480 = vmul.f32 %v8416, 0.5
      %v8481 = vmul.f32 %v8417, 0.5
      %v8482 = vmul.f32 %v8418, 0.5
      %v8483 = vmul.f32 %v8419, 0.5
      %v8484 = vmul.f32 %v8420, 0.5
      %v8485 = vtanh.pop %v8421
      %v8486 = vtanh.pop %v8422
      %v8487 = vtanh.pop %v8423
      %v8488 = vtanh.pop %v8424
      %v8489 = vtanh.pop %v8425
      %v8490 = vtanh.pop %v8426
      %v8491 = vtanh.pop %v8427
      %v8492 = vtanh.pop %v8428
      %v8493 = vtanh.pop %v8429
      %v8494 = vtanh.pop %v8430
      %v8495 = vtanh.pop %v8431
      %v8496 = vtanh.pop %v8432
      %v8497 = vtanh.pop %v8433
      %v8498 = vtanh.pop %v8434
      %v8499 = vtanh.pop %v8435
      %v8500 = vtanh.pop %v8436
      %v8501 = vtanh.pop %v8437
      %v8502 = vtanh.pop %v8438
      %v8503 = vtanh.pop %v8439
      %v8504 = vtanh.pop %v8440
      %v8505 = vtanh.pop %v8441
      %v8506 = vtanh.pop %v8442
      %v8507 = vtanh.pop %v8443
      %v8508 = vtanh.pop %v8444
      %v8509 = vtanh.pop %v8445
      %v8510 = vtanh.pop %v8446
      %v8511 = vtanh.pop %v8447
      %v8512 = vtanh.pop %v8448
      %v8513 = vtanh.pop %v8449
      %v8514 = vtanh.pop %v8450
      %v8515 = vtanh.pop %v8451
      %v8516 = vtanh.pop %v8452
      %v8517 = vtanh.pop %v8453
      %v8518 = vtanh.pop %v8454
      %v8519 = vtanh.pop %v8455
      %v8520 = vtanh.pop %v8456
      %v8521 = vtanh.pop %v8457
      %v8522 = vtanh.pop %v8458
      %v8523 = vtanh.pop %v8459
      %v8524 = vtanh.pop %v8460
      %v8525 = vtanh.pop %v8461
      %v8526 = vtanh.pop %v8462
      %v8527 = vtanh.pop %v8463
      %v8528 = vtanh.pop %v8464
      %v8529 = vtanh.pop %v8465
      %v8530 = vtanh.pop %v8466
      %v8531 = vtanh.pop %v8467
      %v8532 = vtanh.pop %v8468
      %v8533 = vtanh.pop %v8469
      %v8534 = vtanh.pop %v8470
      %v8535 = vtanh.pop %v8471
      %v8536 = vtanh.pop %v8472
      %v8537 = vtanh.pop %v8473
      %v8538 = vtanh.pop %v8474
      %v8539 = vtanh.pop %v8475
      %v8540 = vtanh.pop %v8476
      %v8541 = vtanh.pop %v8477
      %v8542 = vtanh.pop %v8478
      %v8543 = vtanh.pop %v8479
      %v8544 = vtanh.pop %v8480
      %v8545 = vtanh.pop %v8481
      %v8546 = vtanh.pop %v8482
      %v8547 = vtanh.pop %v8483
      %v8548 = vtanh.pop %v8484
      %v8549 = vadd.f32 %v8485, 1.0
      %v8550 = vadd.f32 %v8486, 1.0
      %v8551 = vadd.f32 %v8487, 1.0
      %v8552 = vadd.f32 %v8488, 1.0
      %v8553 = vadd.f32 %v8489, 1.0
      %v8554 = vadd.f32 %v8490, 1.0
      %v8555 = vadd.f32 %v8491, 1.0
      %v8556 = vadd.f32 %v8492, 1.0
      %v8557 = vadd.f32 %v8493, 1.0
      %v8558 = vadd.f32 %v8494, 1.0
      %v8559 = vadd.f32 %v8495, 1.0
      %v8560 = vadd.f32 %v8496, 1.0
      %v8561 = vadd.f32 %v8497, 1.0
      %v8562 = vadd.f32 %v8498, 1.0
      %v8563 = vadd.f32 %v8499, 1.0
      %v8564 = vadd.f32 %v8500, 1.0
      %v8565 = vadd.f32 %v8501, 1.0
      %v8566 = vadd.f32 %v8502, 1.0
      %v8567 = vadd.f32 %v8503, 1.0
      %v8568 = vadd.f32 %v8504, 1.0
      %v8569 = vadd.f32 %v8505, 1.0
      %v8570 = vadd.f32 %v8506, 1.0
      %v8571 = vadd.f32 %v8507, 1.0
      %v8572 = vadd.f32 %v8508, 1.0
      %v8573 = vadd.f32 %v8509, 1.0
      %v8574 = vadd.f32 %v8510, 1.0
      %v8575 = vadd.f32 %v8511, 1.0
      %v8576 = vadd.f32 %v8512, 1.0
      %v8577 = vadd.f32 %v8513, 1.0
      %v8578 = vadd.f32 %v8514, 1.0
      %v8579 = vadd.f32 %v8515, 1.0
      %v8580 = vadd.f32 %v8516, 1.0
      %v8581 = vadd.f32 %v8517, 1.0
      %v8582 = vadd.f32 %v8518, 1.0
      %v8583 = vadd.f32 %v8519, 1.0
      %v8584 = vadd.f32 %v8520, 1.0
      %v8585 = vadd.f32 %v8521, 1.0
      %v8586 = vadd.f32 %v8522, 1.0
      %v8587 = vadd.f32 %v8523, 1.0
      %v8588 = vadd.f32 %v8524, 1.0
      %v8589 = vadd.f32 %v8525, 1.0
      %v8590 = vadd.f32 %v8526, 1.0
      %v8591 = vadd.f32 %v8527, 1.0
      %v8592 = vadd.f32 %v8528, 1.0
      %v8593 = vadd.f32 %v8529, 1.0
      %v8594 = vadd.f32 %v8530, 1.0
      %v8595 = vadd.f32 %v8531, 1.0
      %v8596 = vadd.f32 %v8532, 1.0
      %v8597 = vadd.f32 %v8533, 1.0
      %v8598 = vadd.f32 %v8534, 1.0
      %v8599 = vadd.f32 %v8535, 1.0
      %v8600 = vadd.f32 %v8536, 1.0
      %v8601 = vadd.f32 %v8537, 1.0
      %v8602 = vadd.f32 %v8538, 1.0
      %v8603 = vadd.f32 %v8539, 1.0
      %v8604 = vadd.f32 %v8540, 1.0
      %v8605 = vadd.f32 %v8541, 1.0
      %v8606 = vadd.f32 %v8542, 1.0
      %v8607 = vadd.f32 %v8543, 1.0
      %v8608 = vadd.f32 %v8544, 1.0
      %v8609 = vadd.f32 %v8545, 1.0
      %v8610 = vadd.f32 %v8546, 1.0
      %v8611 = vadd.f32 %v8547, 1.0
      %v8612 = vadd.f32 %v8548, 1.0
      %v8613 = vmul.f32 %v8549, 0.5
      %v8614 = vmul.f32 %v8550, 0.5
      %v8615 = vmul.f32 %v8551, 0.5
      %v8616 = vmul.f32 %v8552, 0.5
      %v8617 = vmul.f32 %v8553, 0.5
      %v8618 = vmul.f32 %v8554, 0.5
      %v8619 = vmul.f32 %v8555, 0.5
      %v8620 = vmul.f32 %v8556, 0.5
      %v8621 = vmul.f32 %v8557, 0.5
      %v8622 = vmul.f32 %v8558, 0.5
      %v8623 = vmul.f32 %v8559, 0.5
      %v8624 = vmul.f32 %v8560, 0.5
      %v8625 = vmul.f32 %v8561, 0.5
      %v8626 = vmul.f32 %v8562, 0.5
      %v8627 = vmul.f32 %v8563, 0.5
      %v8628 = vmul.f32 %v8564, 0.5
      %v8629 = vmul.f32 %v8565, 0.5
      %v8630 = vmul.f32 %v8566, 0.5
      %v8631 = vmul.f32 %v8567, 0.5
      %v8632 = vmul.f32 %v8568, 0.5
      %v8633 = vmul.f32 %v8569, 0.5
      %v8634 = vmul.f32 %v8570, 0.5
      %v8635 = vmul.f32 %v8571, 0.5
      %v8636 = vmul.f32 %v8572, 0.5
      %v8637 = vmul.f32 %v8573, 0.5
      %v8638 = vmul.f32 %v8574, 0.5
      %v8639 = vmul.f32 %v8575, 0.5
      %v8640 = vmul.f32 %v8576, 0.5
      %v8641 = vmul.f32 %v8577, 0.5
      %v8642 = vmul.f32 %v8578, 0.5
      %v8643 = vmul.f32 %v8579, 0.5
      %v8644 = vmul.f32 %v8580, 0.5
      %v8645 = vmul.f32 %v8581, 0.5
      %v8646 = vmul.f32 %v8582, 0.5
      %v8647 = vmul.f32 %v8583, 0.5
      %v8648 = vmul.f32 %v8584, 0.5
      %v8649 = vmul.f32 %v8585, 0.5
      %v8650 = vmul.f32 %v8586, 0.5
      %v8651 = vmul.f32 %v8587, 0.5
      %v8652 = vmul.f32 %v8588, 0.5
      %v8653 = vmul.f32 %v8589, 0.5
      %v8654 = vmul.f32 %v8590, 0.5
      %v8655 = vmul.f32 %v8591, 0.5
      %v8656 = vmul.f32 %v8592, 0.5
      %v8657 = vmul.f32 %v8593, 0.5
      %v8658 = vmul.f32 %v8594, 0.5
      %v8659 = vmul.f32 %v8595, 0.5
      %v8660 = vmul.f32 %v8596, 0.5
      %v8661 = vmul.f32 %v8597, 0.5
      %v8662 = vmul.f32 %v8598, 0.5
      %v8663 = vmul.f32 %v8599, 0.5
      %v8664 = vmul.f32 %v8600, 0.5
      %v8665 = vmul.f32 %v8601, 0.5
      %v8666 = vmul.f32 %v8602, 0.5
      %v8667 = vmul.f32 %v8603, 0.5
      %v8668 = vmul.f32 %v8604, 0.5
      %v8669 = vmul.f32 %v8605, 0.5
      %v8670 = vmul.f32 %v8606, 0.5
      %v8671 = vmul.f32 %v8607, 0.5
      %v8672 = vmul.f32 %v8608, 0.5
      %v8673 = vmul.f32 %v8609, 0.5
      %v8674 = vmul.f32 %v8610, 0.5
      %v8675 = vmul.f32 %v8611, 0.5
      %v8676 = vmul.f32 %v8612, 0.5
      %v8677 = vtanh.pop %v7685
      %v8678 = vtanh.pop %v7686
      %v8679 = vtanh.pop %v7687
      %v8680 = vtanh.pop %v7688
      %v8681 = vtanh.pop %v7689
      %v8682 = vtanh.pop %v7690
      %v8683 = vtanh.pop %v7691
      %v8684 = vtanh.pop %v7692
      %v8685 = vtanh.pop %v7693
      %v8686 = vtanh.pop %v7694
      %v8687 = vtanh.pop %v7695
      %v8688 = vtanh.pop %v7696
      %v8689 = vtanh.pop %v7697
      %v8690 = vtanh.pop %v7698
      %v8691 = vtanh.pop %v7699
      %v8692 = vtanh.pop %v7700
      %v8693 = vtanh.pop %v7701
      %v8694 = vtanh.pop %v7702
      %v8695 = vtanh.pop %v7703
      %v8696 = vtanh.pop %v7704
      %v8697 = vtanh.pop %v7705
      %v8698 = vtanh.pop %v7706
      %v8699 = vtanh.pop %v7707
      %v8700 = vtanh.pop %v7708
      %v8701 = vtanh.pop %v7709
      %v8702 = vtanh.pop %v7710
      %v8703 = vtanh.pop %v7711
      %v8704 = vtanh.pop %v7712
      %v8705 = vtanh.pop %v7713
      %v8706 = vtanh.pop %v7714
      %v8707 = vtanh.pop %v7715
      %v8708 = vtanh.pop %v7716
      %v8709 = vtanh.pop %v7717
      %v8710 = vtanh.pop %v7718
      %v8711 = vtanh.pop %v7719
      %v8712 = vtanh.pop %v7720
      %v8713 = vtanh.pop %v7721
      %v8714 = vtanh.pop %v7722
      %v8715 = vtanh.pop %v7723
      %v8716 = vtanh.pop %v7724
      %v8717 = vtanh.pop %v7725
      %v8718 = vtanh.pop %v7726
      %v8719 = vtanh.pop %v7727
      %v8720 = vtanh.pop %v7728
      %v8721 = vtanh.pop %v7729
      %v8722 = vtanh.pop %v7730
      %v8723 = vtanh.pop %v7731
      %v8724 = vtanh.pop %v7732
      %v8725 = vtanh.pop %v7733
      %v8726 = vtanh.pop %v7734
      %v8727 = vtanh.pop %v7735
      %v8728 = vtanh.pop %v7736
      %v8729 = vtanh.pop %v7737
      %v8730 = vtanh.pop %v7738
      %v8731 = vtanh.pop %v7739
      %v8732 = vtanh.pop %v7740
      %v8733 = vtanh.pop %v7741
      %v8734 = vtanh.pop %v7742
      %v8735 = vtanh.pop %v7743
      %v8736 = vtanh.pop %v7744
      %v8737 = vtanh.pop %v7745
      %v8738 = vtanh.pop %v7746
      %v8739 = vtanh.pop %v7747
      %v8740 = vtanh.pop %v7748
      %8805 = vrot.lane.b32.xlu0 %v8677, 64
      %v8806 = vpop.permute.xlu0 %8805
      %8807 = vrot.lane.b32.xlu0 %v8678, 64
      %v8808 = vpop.permute.xlu0 %8807
      %8809 = vrot.lane.b32.xlu0 %v8679, 64
      %v8810 = vpop.permute.xlu0 %8809
      %8811 = vrot.lane.b32.xlu0 %v8680, 64
      %v8812 = vpop.permute.xlu0 %8811
      %8813 = vrot.lane.b32.xlu0 %v8681, 64
      %v8814 = vpop.permute.xlu0 %8813
      %8815 = vrot.lane.b32.xlu0 %v8682, 64
      %v8816 = vpop.permute.xlu0 %8815
      %8817 = vrot.lane.b32.xlu0 %v8683, 64
      %v8818 = vpop.permute.xlu0 %8817
      %8819 = vrot.lane.b32.xlu0 %v8684, 64
      %v8820 = vpop.permute.xlu0 %8819
      %8821 = vrot.lane.b32.xlu0 %v8685, 64
      %v8822 = vpop.permute.xlu0 %8821
      %8823 = vrot.lane.b32.xlu0 %v8686, 64
      %v8824 = vpop.permute.xlu0 %8823
      %8825 = vrot.lane.b32.xlu0 %v8687, 64
      %v8826 = vpop.permute.xlu0 %8825
      %8827 = vrot.lane.b32.xlu0 %v8688, 64
      %v8828 = vpop.permute.xlu0 %8827
      %8829 = vrot.lane.b32.xlu0 %v8689, 64
      %v8830 = vpop.permute.xlu0 %8829
      %8831 = vrot.lane.b32.xlu0 %v8690, 64
      %v8832 = vpop.permute.xlu0 %8831
      %8833 = vrot.lane.b32.xlu0 %v8691, 64
      %v8834 = vpop.permute.xlu0 %8833
      %8835 = vrot.lane.b32.xlu0 %v8692, 64
      %v8836 = vpop.permute.xlu0 %8835
      %8837 = vrot.lane.b32.xlu0 %v8693, 64
      %v8838 = vpop.permute.xlu0 %8837
      %8839 = vrot.lane.b32.xlu0 %v8694, 64
      %v8840 = vpop.permute.xlu0 %8839
      %8841 = vrot.lane.b32.xlu0 %v8695, 64
      %v8842 = vpop.permute.xlu0 %8841
      %8843 = vrot.lane.b32.xlu0 %v8696, 64
      %v8844 = vpop.permute.xlu0 %8843
      %8845 = vrot.lane.b32.xlu0 %v8697, 64
      %v8846 = vpop.permute.xlu0 %8845
      %8847 = vrot.lane.b32.xlu0 %v8698, 64
      %v8848 = vpop.permute.xlu0 %8847
      %8849 = vrot.lane.b32.xlu0 %v8699, 64
      %v8850 = vpop.permute.xlu0 %8849
      %8851 = vrot.lane.b32.xlu0 %v8700, 64
      %v8852 = vpop.permute.xlu0 %8851
      %8853 = vrot.lane.b32.xlu0 %v8701, 64
      %v8854 = vpop.permute.xlu0 %8853
      %8855 = vrot.lane.b32.xlu0 %v8702, 64
      %v8856 = vpop.permute.xlu0 %8855
      %8857 = vrot.lane.b32.xlu0 %v8703, 64
      %v8858 = vpop.permute.xlu0 %8857
      %8859 = vrot.lane.b32.xlu0 %v8704, 64
      %v8860 = vpop.permute.xlu0 %8859
      %8861 = vrot.lane.b32.xlu0 %v8705, 64
      %v8862 = vpop.permute.xlu0 %8861
      %8863 = vrot.lane.b32.xlu0 %v8706, 64
      %v8864 = vpop.permute.xlu0 %8863
      %8865 = vrot.lane.b32.xlu0 %v8707, 64
      %v8866 = vpop.permute.xlu0 %8865
      %8867 = vrot.lane.b32.xlu0 %v8708, 64
      %v8868 = vpop.permute.xlu0 %8867
      %8869 = vrot.lane.b32.xlu0 %v8709, 64
      %v8870 = vpop.permute.xlu0 %8869
      %8871 = vrot.lane.b32.xlu0 %v8710, 64
      %v8872 = vpop.permute.xlu0 %8871
      %8873 = vrot.lane.b32.xlu0 %v8711, 64
      %v8874 = vpop.permute.xlu0 %8873
      %8875 = vrot.lane.b32.xlu0 %v8712, 64
      %v8876 = vpop.permute.xlu0 %8875
      %8877 = vrot.lane.b32.xlu0 %v8713, 64
      %v8878 = vpop.permute.xlu0 %8877
      %8879 = vrot.lane.b32.xlu0 %v8714, 64
      %v8880 = vpop.permute.xlu0 %8879
      %8881 = vrot.lane.b32.xlu0 %v8715, 64
      %v8882 = vpop.permute.xlu0 %8881
      %8883 = vrot.lane.b32.xlu0 %v8716, 64
      %v8884 = vpop.permute.xlu0 %8883
      %8885 = vrot.lane.b32.xlu0 %v8717, 64
      %v8886 = vpop.permute.xlu0 %8885
      %8887 = vrot.lane.b32.xlu0 %v8718, 64
      %v8888 = vpop.permute.xlu0 %8887
      %8889 = vrot.lane.b32.xlu0 %v8719, 64
      %v8890 = vpop.permute.xlu0 %8889
      %8891 = vrot.lane.b32.xlu0 %v8720, 64
      %v8892 = vpop.permute.xlu0 %8891
      %8893 = vrot.lane.b32.xlu0 %v8721, 64
      %v8894 = vpop.permute.xlu0 %8893
      %8895 = vrot.lane.b32.xlu0 %v8722, 64
      %v8896 = vpop.permute.xlu0 %8895
      %8897 = vrot.lane.b32.xlu0 %v8723, 64
      %v8898 = vpop.permute.xlu0 %8897
      %8899 = vrot.lane.b32.xlu0 %v8724, 64
      %v8900 = vpop.permute.xlu0 %8899
      %8901 = vrot.lane.b32.xlu0 %v8725, 64
      %v8902 = vpop.permute.xlu0 %8901
      %8903 = vrot.lane.b32.xlu0 %v8726, 64
      %v8904 = vpop.permute.xlu0 %8903
      %8905 = vrot.lane.b32.xlu0 %v8727, 64
      %v8906 = vpop.permute.xlu0 %8905
      %8907 = vrot.lane.b32.xlu0 %v8728, 64
      %v8908 = vpop.permute.xlu0 %8907
      %8909 = vrot.lane.b32.xlu0 %v8729, 64
      %v8910 = vpop.permute.xlu0 %8909
      %8911 = vrot.lane.b32.xlu0 %v8730, 64
      %v8912 = vpop.permute.xlu0 %8911
      %8913 = vrot.lane.b32.xlu0 %v8731, 64
      %v8914 = vpop.permute.xlu0 %8913
      %8915 = vrot.lane.b32.xlu0 %v8732, 64
      %v8916 = vpop.permute.xlu0 %8915
      %8917 = vrot.lane.b32.xlu0 %v8733, 64
      %v8918 = vpop.permute.xlu0 %8917
      %8919 = vrot.lane.b32.xlu0 %v8734, 64
      %v8920 = vpop.permute.xlu0 %8919
      %8921 = vrot.lane.b32.xlu0 %v8735, 64
      %v8922 = vpop.permute.xlu0 %8921
      %8923 = vrot.lane.b32.xlu0 %v8736, 64
      %v8924 = vpop.permute.xlu0 %8923
      %8925 = vrot.lane.b32.xlu0 %v8737, 64
      %v8926 = vpop.permute.xlu0 %8925
      %8927 = vrot.lane.b32.xlu0 %v8738, 64
      %v8928 = vpop.permute.xlu0 %8927
      %8929 = vrot.lane.b32.xlu0 %v8739, 64
      %v8930 = vpop.permute.xlu0 %8929
      %8931 = vrot.lane.b32.xlu0 %v8740, 64
      %v8932 = vpop.permute.xlu0 %8931
      %v8997 = vmul.f32 %v8613, %v8806
      %v8998 = vmul.f32 %v8614, %v8808
      %v8999 = vmul.f32 %v8615, %v8810
      %v9000 = vmul.f32 %v8616, %v8812
      %v9001 = vmul.f32 %v8617, %v8814
      %v9002 = vmul.f32 %v8618, %v8816
      %v9003 = vmul.f32 %v8619, %v8818
      %v9004 = vmul.f32 %v8620, %v8820
      %v9005 = vmul.f32 %v8621, %v8822
      %v9006 = vmul.f32 %v8622, %v8824
      %v9007 = vmul.f32 %v8623, %v8826
      %v9008 = vmul.f32 %v8624, %v8828
      %v9009 = vmul.f32 %v8625, %v8830
      %v9010 = vmul.f32 %v8626, %v8832
      %v9011 = vmul.f32 %v8627, %v8834
      %v9012 = vmul.f32 %v8628, %v8836
      %v9013 = vmul.f32 %v8629, %v8838
      %v9014 = vmul.f32 %v8630, %v8840
      %v9015 = vmul.f32 %v8631, %v8842
      %v9016 = vmul.f32 %v8632, %v8844
      %v9017 = vmul.f32 %v8633, %v8846
      %v9018 = vmul.f32 %v8634, %v8848
      %v9019 = vmul.f32 %v8635, %v8850
      %v9020 = vmul.f32 %v8636, %v8852
      %v9021 = vmul.f32 %v8637, %v8854
      %v9022 = vmul.f32 %v8638, %v8856
      %v9023 = vmul.f32 %v8639, %v8858
      %v9024 = vmul.f32 %v8640, %v8860
      %v9025 = vmul.f32 %v8641, %v8862
      %v9026 = vmul.f32 %v8642, %v8864
      %v9027 = vmul.f32 %v8643, %v8866
      %v9028 = vmul.f32 %v8644, %v8868
      %v9029 = vmul.f32 %v8645, %v8870
      %v9030 = vmul.f32 %v8646, %v8872
      %v9031 = vmul.f32 %v8647, %v8874
      %v9032 = vmul.f32 %v8648, %v8876
      %v9033 = vmul.f32 %v8649, %v8878
      %v9034 = vmul.f32 %v8650, %v8880
      %v9035 = vmul.f32 %v8651, %v8882
      %v9036 = vmul.f32 %v8652, %v8884
      %v9037 = vmul.f32 %v8653, %v8886
      %v9038 = vmul.f32 %v8654, %v8888
      %v9039 = vmul.f32 %v8655, %v8890
      %v9040 = vmul.f32 %v8656, %v8892
      %v9041 = vmul.f32 %v8657, %v8894
      %v9042 = vmul.f32 %v8658, %v8896
      %v9043 = vmul.f32 %v8659, %v8898
      %v9044 = vmul.f32 %v8660, %v8900
      %v9045 = vmul.f32 %v8661, %v8902
      %v9046 = vmul.f32 %v8662, %v8904
      %v9047 = vmul.f32 %v8663, %v8906
      %v9048 = vmul.f32 %v8664, %v8908
      %v9049 = vmul.f32 %v8665, %v8910
      %v9050 = vmul.f32 %v8666, %v8912
      %v9051 = vmul.f32 %v8667, %v8914
      %v9052 = vmul.f32 %v8668, %v8916
      %v9053 = vmul.f32 %v8669, %v8918
      %v9054 = vmul.f32 %v8670, %v8920
      %v9055 = vmul.f32 %v8671, %v8922
      %v9056 = vmul.f32 %v8672, %v8924
      %v9057 = vmul.f32 %v8673, %v8926
      %v9058 = vmul.f32 %v8674, %v8928
      %v9059 = vmul.f32 %v8675, %v8930
      %v9060 = vmul.f32 %v8676, %v8932
      %9061 = vst.msk [vmem:[#allocation3] sm:$0xff] %vm589, %v7846
      %9062 = vst.msk [vmem:[#allocation3 + $0x8] sm:$0xff] %vm589, %v7848
      %9063 = vst.msk [vmem:[#allocation3 + $0x10] sm:$0xff] %vm589, %v7850
      %9064 = vst.msk [vmem:[#allocation3 + $0x18] sm:$0xff] %vm589, %v7852
      %9065 = vst.msk [vmem:[#allocation3 + $0x20] sm:$0xff] %vm589, %v7854
      %9066 = vst.msk [vmem:[#allocation3 + $0x28] sm:$0xff] %vm589, %v7856
      %9067 = vst.msk [vmem:[#allocation3 + $0x30] sm:$0xff] %vm589, %v7858
      %9068 = vst.msk [vmem:[#allocation3 + $0x38] sm:$0xff] %vm589, %v7860
      %9069 = vst.msk [vmem:[#allocation3 + $0x40] sm:$0xff] %vm589, %v7862
      %9070 = vst.msk [vmem:[#allocation3 + $0x48] sm:$0xff] %vm589, %v7864
      %9071 = vst.msk [vmem:[#allocation3 + $0x50] sm:$0xff] %vm589, %v7866
      %9072 = vst.msk [vmem:[#allocation3 + $0x58] sm:$0xff] %vm589, %v7868
      %9073 = vst.msk [vmem:[#allocation3 + $0x60] sm:$0xff] %vm589, %v7870
      %9074 = vst.msk [vmem:[#allocation3 + $0x68] sm:$0xff] %vm589, %v7872
      %9075 = vst.msk [vmem:[#allocation3 + $0x70] sm:$0xff] %vm589, %v7874
      %9076 = vst.msk [vmem:[#allocation3 + $0x78] sm:$0xff] %vm589, %v7876
      %9077 = vst.msk [vmem:[#allocation3 + $0x80] sm:$0xff] %vm589, %v7878
      %9078 = vst.msk [vmem:[#allocation3 + $0x88] sm:$0xff] %vm589, %v7880
      %9079 = vst.msk [vmem:[#allocation3 + $0x90] sm:$0xff] %vm589, %v7882
      %9080 = vst.msk [vmem:[#allocation3 + $0x98] sm:$0xff] %vm589, %v7884
      %9081 = vst.msk [vmem:[#allocation3 + $0xa0] sm:$0xff] %vm589, %v7886
      %9082 = vst.msk [vmem:[#allocation3 + $0xa8] sm:$0xff] %vm589, %v7888
      %9083 = vst.msk [vmem:[#allocation3 + $0xb0] sm:$0xff] %vm589, %v7890
      %9084 = vst.msk [vmem:[#allocation3 + $0xb8] sm:$0xff] %vm589, %v7892
      %9085 = vst.msk [vmem:[#allocation3 + $0xc0] sm:$0xff] %vm589, %v7894
      %9086 = vst.msk [vmem:[#allocation3 + $0xc8] sm:$0xff] %vm589, %v7896
      %9087 = vst.msk [vmem:[#allocation3 + $0xd0] sm:$0xff] %vm589, %v7898
      %9088 = vst.msk [vmem:[#allocation3 + $0xd8] sm:$0xff] %vm589, %v7900
      %9089 = vst.msk [vmem:[#allocation3 + $0xe0] sm:$0xff] %vm589, %v7902
      %9090 = vst.msk [vmem:[#allocation3 + $0xe8] sm:$0xff] %vm589, %v7904
      %9091 = vst.msk [vmem:[#allocation3 + $0xf0] sm:$0xff] %vm589, %v7906
      %9092 = vst.msk [vmem:[#allocation3 + $0xf8] sm:$0xff] %vm589, %v7908
      %9093 = vst.msk [vmem:[#allocation3 + $0x100] sm:$0xff] %vm589, %v7910
      %9094 = vst.msk [vmem:[#allocation3 + $0x108] sm:$0xff] %vm589, %v7912
      %9095 = vst.msk [vmem:[#allocation3 + $0x110] sm:$0xff] %vm589, %v7914
      %9096 = vst.msk [vmem:[#allocation3 + $0x118] sm:$0xff] %vm589, %v7916
      %9097 = vst.msk [vmem:[#allocation3 + $0x120] sm:$0xff] %vm589, %v7918
      %9098 = vst.msk [vmem:[#allocation3 + $0x128] sm:$0xff] %vm589, %v7920
      %9099 = vst.msk [vmem:[#allocation3 + $0x130] sm:$0xff] %vm589, %v7922
      %9100 = vst.msk [vmem:[#allocation3 + $0x138] sm:$0xff] %vm589, %v7924
      %9101 = vst.msk [vmem:[#allocation3 + $0x140] sm:$0xff] %vm589, %v7926
      %9102 = vst.msk [vmem:[#allocation3 + $0x148] sm:$0xff] %vm589, %v7928
      %9103 = vst.msk [vmem:[#allocation3 + $0x150] sm:$0xff] %vm589, %v7930
      %9104 = vst.msk [vmem:[#allocation3 + $0x158] sm:$0xff] %vm589, %v7932
      %9105 = vst.msk [vmem:[#allocation3 + $0x160] sm:$0xff] %vm589, %v7934
      %9106 = vst.msk [vmem:[#allocation3 + $0x168] sm:$0xff] %vm589, %v7936
      %9107 = vst.msk [vmem:[#allocation3 + $0x170] sm:$0xff] %vm589, %v7938
      %9108 = vst.msk [vmem:[#allocation3 + $0x178] sm:$0xff] %vm589, %v7940
      %9109 = vst.msk [vmem:[#allocation3 + $0x180] sm:$0xff] %vm589, %v7942
      %9110 = vst.msk [vmem:[#allocation3 + $0x188] sm:$0xff] %vm589, %v7944
      %9111 = vst.msk [vmem:[#allocation3 + $0x190] sm:$0xff] %vm589, %v7946
      %9112 = vst.msk [vmem:[#allocation3 + $0x198] sm:$0xff] %vm589, %v7948
      %9113 = vst.msk [vmem:[#allocation3 + $0x1a0] sm:$0xff] %vm589, %v7950
      %9114 = vst.msk [vmem:[#allocation3 + $0x1a8] sm:$0xff] %vm589, %v7952
      %9115 = vst.msk [vmem:[#allocation3 + $0x1b0] sm:$0xff] %vm589, %v7954
      %9116 = vst.msk [vmem:[#allocation3 + $0x1b8] sm:$0xff] %vm589, %v7956
      %9117 = vst.msk [vmem:[#allocation3 + $0x1c0] sm:$0xff] %vm589, %v7958
      %9118 = vst.msk [vmem:[#allocation3 + $0x1c8] sm:$0xff] %vm589, %v7960
      %9119 = vst.msk [vmem:[#allocation3 + $0x1d0] sm:$0xff] %vm589, %v7962
      %9120 = vst.msk [vmem:[#allocation3 + $0x1d8] sm:$0xff] %vm589, %v7964
      %9121 = vst.msk [vmem:[#allocation3 + $0x1e0] sm:$0xff] %vm589, %v7966
      %9122 = vst.msk [vmem:[#allocation3 + $0x1e8] sm:$0xff] %vm589, %v7968
      %9123 = vst.msk [vmem:[#allocation3 + $0x1f0] sm:$0xff] %vm589, %v7970
      %9124 = vst.msk [vmem:[#allocation3 + $0x1f8] sm:$0xff] %vm589, %v7972
      %9189 = vrot.lane.b32.xlu0 %v8997, 32
      %v9190 = vpop.permute.xlu0 %9189
      %9191 = vrot.lane.b32.xlu0 %v8998, 32
      %v9192 = vpop.permute.xlu0 %9191
      %9193 = vrot.lane.b32.xlu0 %v8999, 32
      %v9194 = vpop.permute.xlu0 %9193
      %9195 = vrot.lane.b32.xlu0 %v9000, 32
      %v9196 = vpop.permute.xlu0 %9195
      %9197 = vrot.lane.b32.xlu0 %v9001, 32
      %v9198 = vpop.permute.xlu0 %9197
      %9199 = vrot.lane.b32.xlu0 %v9002, 32
      %v9200 = vpop.permute.xlu0 %9199
      %9201 = vrot.lane.b32.xlu0 %v9003, 32
      %v9202 = vpop.permute.xlu0 %9201
      %9203 = vrot.lane.b32.xlu0 %v9004, 32
      %v9204 = vpop.permute.xlu0 %9203
      %9205 = vrot.lane.b32.xlu0 %v9005, 32
      %v9206 = vpop.permute.xlu0 %9205
      %9207 = vrot.lane.b32.xlu0 %v9006, 32
      %v9208 = vpop.permute.xlu0 %9207
      %9209 = vrot.lane.b32.xlu0 %v9007, 32
      %v9210 = vpop.permute.xlu0 %9209
      %9211 = vrot.lane.b32.xlu0 %v9008, 32
      %v9212 = vpop.permute.xlu0 %9211
      %9213 = vrot.lane.b32.xlu0 %v9009, 32
      %v9214 = vpop.permute.xlu0 %9213
      %9215 = vrot.lane.b32.xlu0 %v9010, 32
      %v9216 = vpop.permute.xlu0 %9215
      %9217 = vrot.lane.b32.xlu0 %v9011, 32
      %v9218 = vpop.permute.xlu0 %9217
      %9219 = vrot.lane.b32.xlu0 %v9012, 32
      %v9220 = vpop.permute.xlu0 %9219
      %9221 = vrot.lane.b32.xlu0 %v9013, 32
      %v9222 = vpop.permute.xlu0 %9221
      %9223 = vrot.lane.b32.xlu0 %v9014, 32
      %v9224 = vpop.permute.xlu0 %9223
      %9225 = vrot.lane.b32.xlu0 %v9015, 32
      %v9226 = vpop.permute.xlu0 %9225
      %9227 = vrot.lane.b32.xlu0 %v9016, 32
      %v9228 = vpop.permute.xlu0 %9227
      %9229 = vrot.lane.b32.xlu0 %v9017, 32
      %v9230 = vpop.permute.xlu0 %9229
      %9231 = vrot.lane.b32.xlu0 %v9018, 32
      %v9232 = vpop.permute.xlu0 %9231
      %9233 = vrot.lane.b32.xlu0 %v9019, 32
      %v9234 = vpop.permute.xlu0 %9233
      %9235 = vrot.lane.b32.xlu0 %v9020, 32
      %v9236 = vpop.permute.xlu0 %9235
      %9237 = vrot.lane.b32.xlu0 %v9021, 32
      %v9238 = vpop.permute.xlu0 %9237
      %9239 = vrot.lane.b32.xlu0 %v9022, 32
      %v9240 = vpop.permute.xlu0 %9239
      %9241 = vrot.lane.b32.xlu0 %v9023, 32
      %v9242 = vpop.permute.xlu0 %9241
      %9243 = vrot.lane.b32.xlu0 %v9024, 32
      %v9244 = vpop.permute.xlu0 %9243
      %9245 = vrot.lane.b32.xlu0 %v9025, 32
      %v9246 = vpop.permute.xlu0 %9245
      %9247 = vrot.lane.b32.xlu0 %v9026, 32
      %v9248 = vpop.permute.xlu0 %9247
      %9249 = vrot.lane.b32.xlu0 %v9027, 32
      %v9250 = vpop.permute.xlu0 %9249
      %9251 = vrot.lane.b32.xlu0 %v9028, 32
      %v9252 = vpop.permute.xlu0 %9251
      %9253 = vrot.lane.b32.xlu0 %v9029, 32
      %v9254 = vpop.permute.xlu0 %9253
      %9255 = vrot.lane.b32.xlu0 %v9030, 32
      %v9256 = vpop.permute.xlu0 %9255
      %9257 = vrot.lane.b32.xlu0 %v9031, 32
      %v9258 = vpop.permute.xlu0 %9257
      %9259 = vrot.lane.b32.xlu0 %v9032, 32
      %v9260 = vpop.permute.xlu0 %9259
      %9261 = vrot.lane.b32.xlu0 %v9033, 32
      %v9262 = vpop.permute.xlu0 %9261
      %9263 = vrot.lane.b32.xlu0 %v9034, 32
      %v9264 = vpop.permute.xlu0 %9263
      %9265 = vrot.lane.b32.xlu0 %v9035, 32
      %v9266 = vpop.permute.xlu0 %9265
      %9267 = vrot.lane.b32.xlu0 %v9036, 32
      %v9268 = vpop.permute.xlu0 %9267
      %9269 = vrot.lane.b32.xlu0 %v9037, 32
      %v9270 = vpop.permute.xlu0 %9269
      %9271 = vrot.lane.b32.xlu0 %v9038, 32
      %v9272 = vpop.permute.xlu0 %9271
      %9273 = vrot.lane.b32.xlu0 %v9039, 32
      %v9274 = vpop.permute.xlu0 %9273
      %9275 = vrot.lane.b32.xlu0 %v9040, 32
      %v9276 = vpop.permute.xlu0 %9275
      %9277 = vrot.lane.b32.xlu0 %v9041, 32
      %v9278 = vpop.permute.xlu0 %9277
      %9279 = vrot.lane.b32.xlu0 %v9042, 32
      %v9280 = vpop.permute.xlu0 %9279
      %9281 = vrot.lane.b32.xlu0 %v9043, 32
      %v9282 = vpop.permute.xlu0 %9281
      %9283 = vrot.lane.b32.xlu0 %v9044, 32
      %v9284 = vpop.permute.xlu0 %9283
      %9285 = vrot.lane.b32.xlu0 %v9045, 32
      %v9286 = vpop.permute.xlu0 %9285
      %9287 = vrot.lane.b32.xlu0 %v9046, 32
      %v9288 = vpop.permute.xlu0 %9287
      %9289 = vrot.lane.b32.xlu0 %v9047, 32
      %v9290 = vpop.permute.xlu0 %9289
      %9291 = vrot.lane.b32.xlu0 %v9048, 32
      %v9292 = vpop.permute.xlu0 %9291
      %9293 = vrot.lane.b32.xlu0 %v9049, 32
      %v9294 = vpop.permute.xlu0 %9293
      %9295 = vrot.lane.b32.xlu0 %v9050, 32
      %v9296 = vpop.permute.xlu0 %9295
      %9297 = vrot.lane.b32.xlu0 %v9051, 32
      %v9298 = vpop.permute.xlu0 %9297
      %9299 = vrot.lane.b32.xlu0 %v9052, 32
      %v9300 = vpop.permute.xlu0 %9299
      %9301 = vrot.lane.b32.xlu0 %v9053, 32
      %v9302 = vpop.permute.xlu0 %9301
      %9303 = vrot.lane.b32.xlu0 %v9054, 32
      %v9304 = vpop.permute.xlu0 %9303
      %9305 = vrot.lane.b32.xlu0 %v9055, 32
      %v9306 = vpop.permute.xlu0 %9305
      %9307 = vrot.lane.b32.xlu0 %v9056, 32
      %v9308 = vpop.permute.xlu0 %9307
      %9309 = vrot.lane.b32.xlu0 %v9057, 32
      %v9310 = vpop.permute.xlu0 %9309
      %9311 = vrot.lane.b32.xlu0 %v9058, 32
      %v9312 = vpop.permute.xlu0 %9311
      %9313 = vrot.lane.b32.xlu0 %v9059, 32
      %v9314 = vpop.permute.xlu0 %9313
      %9315 = vrot.lane.b32.xlu0 %v9060, 32
      %v9316 = vpop.permute.xlu0 %9315
      %s9381 = scalar_lea.vmem [#allocation2], 24
      %9382 = vst.msk [vmem:[%s9381 + $0x1] sm:$0xff] %vm589, %v9190
      %9383 = vst.msk [vmem:[%s9381 + $0x9] sm:$0xff] %vm589, %v9192
      %9384 = vst.msk [vmem:[%s9381 + $0x19] sm:$0xff] %vm589, %v9194
      %9385 = vst.msk [vmem:[%s9381 + $0x21] sm:$0xff] %vm589, %v9196
      %9386 = vst.msk [vmem:[%s9381 + $0x31] sm:$0xff] %vm589, %v9198
      %9387 = vst.msk [vmem:[%s9381 + $0x39] sm:$0xff] %vm589, %v9200
      %9388 = vst.msk [vmem:[%s9381 + $0x49] sm:$0xff] %vm589, %v9202
      %9389 = vst.msk [vmem:[%s9381 + $0x51] sm:$0xff] %vm589, %v9204
      %9390 = vst.msk [vmem:[%s9381 + $0x61] sm:$0xff] %vm589, %v9206
      %9391 = vst.msk [vmem:[%s9381 + $0x69] sm:$0xff] %vm589, %v9208
      %9392 = vst.msk [vmem:[%s9381 + $0x79] sm:$0xff] %vm589, %v9210
      %9393 = vst.msk [vmem:[%s9381 + $0x81] sm:$0xff] %vm589, %v9212
      %9394 = vst.msk [vmem:[%s9381 + $0x91] sm:$0xff] %vm589, %v9214
      %9395 = vst.msk [vmem:[%s9381 + $0x99] sm:$0xff] %vm589, %v9216
      %9396 = vst.msk [vmem:[%s9381 + $0xa9] sm:$0xff] %vm589, %v9218
      %9397 = vst.msk [vmem:[%s9381 + $0xb1] sm:$0xff] %vm589, %v9220
      %9398 = vst.msk [vmem:[%s9381 + $0xc1] sm:$0xff] %vm589, %v9222
      %9399 = vst.msk [vmem:[%s9381 + $0xc9] sm:$0xff] %vm589, %v9224
      %9400 = vst.msk [vmem:[%s9381 + $0xd9] sm:$0xff] %vm589, %v9226
      %9401 = vst.msk [vmem:[%s9381 + $0xe1] sm:$0xff] %vm589, %v9228
      %9402 = vst.msk [vmem:[%s9381 + $0xf1] sm:$0xff] %vm589, %v9230
      %9403 = vst.msk [vmem:[%s9381 + $0xf9] sm:$0xff] %vm589, %v9232
      %9404 = vst.msk [vmem:[%s9381 + $0x109] sm:$0xff] %vm589, %v9234
      %9405 = vst.msk [vmem:[%s9381 + $0x111] sm:$0xff] %vm589, %v9236
      %9406 = vst.msk [vmem:[%s9381 + $0x121] sm:$0xff] %vm589, %v9238
      %9407 = vst.msk [vmem:[%s9381 + $0x129] sm:$0xff] %vm589, %v9240
      %9408 = vst.msk [vmem:[%s9381 + $0x139] sm:$0xff] %vm589, %v9242
      %9409 = vst.msk [vmem:[%s9381 + $0x141] sm:$0xff] %vm589, %v9244
      %9410 = vst.msk [vmem:[%s9381 + $0x151] sm:$0xff] %vm589, %v9246
      %9411 = vst.msk [vmem:[%s9381 + $0x159] sm:$0xff] %vm589, %v9248
      %9412 = vst.msk [vmem:[%s9381 + $0x169] sm:$0xff] %vm589, %v9250
      %9413 = vst.msk [vmem:[%s9381 + $0x171] sm:$0xff] %vm589, %v9252
      %9414 = vst.msk [vmem:[%s9381 + $0x1b1] sm:$0xff] %vm589, %v9254
      %9415 = vst.msk [vmem:[%s9381 + $0x1b9] sm:$0xff] %vm589, %v9256
      %9416 = vst.msk [vmem:[%s9381 + $0x1c9] sm:$0xff] %vm589, %v9258
      %9417 = vst.msk [vmem:[%s9381 + $0x1d1] sm:$0xff] %vm589, %v9260
      %9418 = vst.msk [vmem:[%s9381 + $0x1e1] sm:$0xff] %vm589, %v9262
      %9419 = vst.msk [vmem:[%s9381 + $0x1e9] sm:$0xff] %vm589, %v9264
      %9420 = vst.msk [vmem:[%s9381 + $0x1f9] sm:$0xff] %vm589, %v9266
      %9421 = vst.msk [vmem:[%s9381 + $0x201] sm:$0xff] %vm589, %v9268
      %9422 = vst.msk [vmem:[%s9381 + $0x211] sm:$0xff] %vm589, %v9270
      %9423 = vst.msk [vmem:[%s9381 + $0x219] sm:$0xff] %vm589, %v9272
      %9424 = vst.msk [vmem:[%s9381 + $0x229] sm:$0xff] %vm589, %v9274
      %9425 = vst.msk [vmem:[%s9381 + $0x231] sm:$0xff] %vm589, %v9276
      %9426 = vst.msk [vmem:[%s9381 + $0x241] sm:$0xff] %vm589, %v9278
      %9427 = vst.msk [vmem:[%s9381 + $0x249] sm:$0xff] %vm589, %v9280
      %9428 = vst.msk [vmem:[%s9381 + $0x259] sm:$0xff] %vm589, %v9282
      %9429 = vst.msk [vmem:[%s9381 + $0x261] sm:$0xff] %vm589, %v9284
      %9430 = vst.msk [vmem:[%s9381 + $0x271] sm:$0xff] %vm589, %v9286
      %9431 = vst.msk [vmem:[%s9381 + $0x279] sm:$0xff] %vm589, %v9288
      %9432 = vst.msk [vmem:[%s9381 + $0x289] sm:$0xff] %vm589, %v9290
      %9433 = vst.msk [vmem:[%s9381 + $0x291] sm:$0xff] %vm589, %v9292
      %9434 = vst.msk [vmem:[%s9381 + $0x2a1] sm:$0xff] %vm589, %v9294
      %9435 = vst.msk [vmem:[%s9381 + $0x2a9] sm:$0xff] %vm589, %v9296
      %9436 = vst.msk [vmem:[%s9381 + $0x2b9] sm:$0xff] %vm589, %v9298
      %9437 = vst.msk [vmem:[%s9381 + $0x2c1] sm:$0xff] %vm589, %v9300
      %9438 = vst.msk [vmem:[%s9381 + $0x2d1] sm:$0xff] %vm589, %v9302
      %9439 = vst.msk [vmem:[%s9381 + $0x2d9] sm:$0xff] %vm589, %v9304
      %9440 = vst.msk [vmem:[%s9381 + $0x2e9] sm:$0xff] %vm589, %v9306
      %9441 = vst.msk [vmem:[%s9381 + $0x2f1] sm:$0xff] %vm589, %v9308
      %9442 = vst.msk [vmem:[%s9381 + $0x301] sm:$0xff] %vm589, %v9310
      %9443 = vst.msk [vmem:[%s9381 + $0x309] sm:$0xff] %vm589, %v9312
      %9444 = vst.msk [vmem:[%s9381 + $0x319] sm:$0xff] %vm589, %v9314
      %9445 = vst.msk [vmem:[%s9381 + $0x321] sm:$0xff] %vm589, %v9316
      // Predicated region
      $region45: #{conv_blstm.1} parent=39 // pred_check
        %p9446 = pneg %p235
      $region46: #{conv_blstm.1} parent=39 // pred_check_branch
        %9448 = sbr.rel (%p9446) target = $region48
      $region47: #{conv_blstm.1} parent=39 // pred_region
        %9449 = vrot.lane.b32.xlu0 %v8997, 16
        %v9450 = vpop.permute.xlu0 %9449
        %9451 = vrot.lane.b32.xlu0 %v8998, 16
        %v9452 = vpop.permute.xlu0 %9451
        %9453 = vrot.lane.b32.xlu0 %v8999, 16
        %v9454 = vpop.permute.xlu0 %9453
        %9455 = vrot.lane.b32.xlu0 %v9000, 16
        %v9456 = vpop.permute.xlu0 %9455
        %9457 = vrot.lane.b32.xlu0 %v9001, 16
        %v9458 = vpop.permute.xlu0 %9457
        %9459 = vrot.lane.b32.xlu0 %v9002, 16
        %v9460 = vpop.permute.xlu0 %9459
        %9461 = vrot.lane.b32.xlu0 %v9003, 16
        %v9462 = vpop.permute.xlu0 %9461
        %9463 = vrot.lane.b32.xlu0 %v9004, 16
        %v9464 = vpop.permute.xlu0 %9463
        %9465 = vrot.lane.b32.xlu0 %v9005, 16
        %v9466 = vpop.permute.xlu0 %9465
        %9467 = vrot.lane.b32.xlu0 %v9006, 16
        %v9468 = vpop.permute.xlu0 %9467
        %9469 = vrot.lane.b32.xlu0 %v9007, 16
        %v9470 = vpop.permute.xlu0 %9469
        %9471 = vrot.lane.b32.xlu0 %v9008, 16
        %v9472 = vpop.permute.xlu0 %9471
        %9473 = vrot.lane.b32.xlu0 %v9009, 16
        %v9474 = vpop.permute.xlu0 %9473
        %9475 = vrot.lane.b32.xlu0 %v9010, 16
        %v9476 = vpop.permute.xlu0 %9475
        %9477 = vrot.lane.b32.xlu0 %v9011, 16
        %v9478 = vpop.permute.xlu0 %9477
        %9479 = vrot.lane.b32.xlu0 %v9012, 16
        %v9480 = vpop.permute.xlu0 %9479
        %9481 = vrot.lane.b32.xlu0 %v9013, 16
        %v9482 = vpop.permute.xlu0 %9481
        %9483 = vrot.lane.b32.xlu0 %v9014, 16
        %v9484 = vpop.permute.xlu0 %9483
        %9485 = vrot.lane.b32.xlu0 %v9015, 16
        %v9486 = vpop.permute.xlu0 %9485
        %9487 = vrot.lane.b32.xlu0 %v9016, 16
        %v9488 = vpop.permute.xlu0 %9487
        %9489 = vrot.lane.b32.xlu0 %v9017, 16
        %v9490 = vpop.permute.xlu0 %9489
        %9491 = vrot.lane.b32.xlu0 %v9018, 16
        %v9492 = vpop.permute.xlu0 %9491
        %9493 = vrot.lane.b32.xlu0 %v9019, 16
        %v9494 = vpop.permute.xlu0 %9493
        %9495 = vrot.lane.b32.xlu0 %v9020, 16
        %v9496 = vpop.permute.xlu0 %9495
        %9497 = vrot.lane.b32.xlu0 %v9021, 16
        %v9498 = vpop.permute.xlu0 %9497
        %9499 = vrot.lane.b32.xlu0 %v9022, 16
        %v9500 = vpop.permute.xlu0 %9499
        %9501 = vrot.lane.b32.xlu0 %v9023, 16
        %v9502 = vpop.permute.xlu0 %9501
        %9503 = vrot.lane.b32.xlu0 %v9024, 16
        %v9504 = vpop.permute.xlu0 %9503
        %9505 = vrot.lane.b32.xlu0 %v9025, 16
        %v9506 = vpop.permute.xlu0 %9505
        %9507 = vrot.lane.b32.xlu0 %v9026, 16
        %v9508 = vpop.permute.xlu0 %9507
        %9509 = vrot.lane.b32.xlu0 %v9027, 16
        %v9510 = vpop.permute.xlu0 %9509
        %9511 = vrot.lane.b32.xlu0 %v9028, 16
        %v9512 = vpop.permute.xlu0 %9511
        %9513 = vrot.lane.b32.xlu0 %v9029, 16
        %v9514 = vpop.permute.xlu0 %9513
        %9515 = vrot.lane.b32.xlu0 %v9030, 16
        %v9516 = vpop.permute.xlu0 %9515
        %9517 = vrot.lane.b32.xlu0 %v9031, 16
        %v9518 = vpop.permute.xlu0 %9517
        %9519 = vrot.lane.b32.xlu0 %v9032, 16
        %v9520 = vpop.permute.xlu0 %9519
        %9521 = vrot.lane.b32.xlu0 %v9033, 16
        %v9522 = vpop.permute.xlu0 %9521
        %9523 = vrot.lane.b32.xlu0 %v9034, 16
        %v9524 = vpop.permute.xlu0 %9523
        %9525 = vrot.lane.b32.xlu0 %v9035, 16
        %v9526 = vpop.permute.xlu0 %9525
        %9527 = vrot.lane.b32.xlu0 %v9036, 16
        %v9528 = vpop.permute.xlu0 %9527
        %9529 = vrot.lane.b32.xlu0 %v9037, 16
        %v9530 = vpop.permute.xlu0 %9529
        %9531 = vrot.lane.b32.xlu0 %v9038, 16
        %v9532 = vpop.permute.xlu0 %9531
        %9533 = vrot.lane.b32.xlu0 %v9039, 16
        %v9534 = vpop.permute.xlu0 %9533
        %9535 = vrot.lane.b32.xlu0 %v9040, 16
        %v9536 = vpop.permute.xlu0 %9535
        %9537 = vrot.lane.b32.xlu0 %v9041, 16
        %v9538 = vpop.permute.xlu0 %9537
        %9539 = vrot.lane.b32.xlu0 %v9042, 16
        %v9540 = vpop.permute.xlu0 %9539
        %9541 = vrot.lane.b32.xlu0 %v9043, 16
        %v9542 = vpop.permute.xlu0 %9541
        %9543 = vrot.lane.b32.xlu0 %v9044, 16
        %v9544 = vpop.permute.xlu0 %9543
        %9545 = vrot.lane.b32.xlu0 %v9045, 16
        %v9546 = vpop.permute.xlu0 %9545
        %9547 = vrot.lane.b32.xlu0 %v9046, 16
        %v9548 = vpop.permute.xlu0 %9547
        %9549 = vrot.lane.b32.xlu0 %v9047, 16
        %v9550 = vpop.permute.xlu0 %9549
        %9551 = vrot.lane.b32.xlu0 %v9048, 16
        %v9552 = vpop.permute.xlu0 %9551
        %9553 = vrot.lane.b32.xlu0 %v9049, 16
        %v9554 = vpop.permute.xlu0 %9553
        %9555 = vrot.lane.b32.xlu0 %v9050, 16
        %v9556 = vpop.permute.xlu0 %9555
        %9557 = vrot.lane.b32.xlu0 %v9051, 16
        %v9558 = vpop.permute.xlu0 %9557
        %9559 = vrot.lane.b32.xlu0 %v9052, 16
        %v9560 = vpop.permute.xlu0 %9559
        %9561 = vrot.lane.b32.xlu0 %v9053, 16
        %v9562 = vpop.permute.xlu0 %9561
        %9563 = vrot.lane.b32.xlu0 %v9054, 16
        %v9564 = vpop.permute.xlu0 %9563
        %9565 = vrot.lane.b32.xlu0 %v9055, 16
        %v9566 = vpop.permute.xlu0 %9565
        %9567 = vrot.lane.b32.xlu0 %v9056, 16
        %v9568 = vpop.permute.xlu0 %9567
        %9569 = vrot.lane.b32.xlu0 %v9057, 16
        %v9570 = vpop.permute.xlu0 %9569
        %9571 = vrot.lane.b32.xlu0 %v9058, 16
        %v9572 = vpop.permute.xlu0 %9571
        %9573 = vrot.lane.b32.xlu0 %v9059, 16
        %v9574 = vpop.permute.xlu0 %9573
        %9575 = vrot.lane.b32.xlu0 %v9060, 16
        %v9576 = vpop.permute.xlu0 %9575
        %vm9641 = vcmask 130048
        %9642 = vst.msk [vmem:[%s6] sm:$0xff] %vm9641, %v9450
        %9643 = vst.msk [vmem:[%s6 + $0x8] sm:$0xff] %vm9641, %v9452
        %9644 = vst.msk [vmem:[%s6 + $0x10] sm:$0xff] %vm9641, %v9454
        %9645 = vst.msk [vmem:[%s6 + $0x18] sm:$0xff] %vm9641, %v9456
        %9646 = vst.msk [vmem:[%s6 + $0x20] sm:$0xff] %vm9641, %v9458
        %9647 = vst.msk [vmem:[%s6 + $0x28] sm:$0xff] %vm9641, %v9460
        %9648 = vst.msk [vmem:[%s6 + $0x30] sm:$0xff] %vm9641, %v9462
        %9649 = vst.msk [vmem:[%s6 + $0x38] sm:$0xff] %vm9641, %v9464
        %9650 = vst.msk [vmem:[%s6 + $0x40] sm:$0xff] %vm9641, %v9466
        %9651 = vst.msk [vmem:[%s6 + $0x48] sm:$0xff] %vm9641, %v9468
        %9652 = vst.msk [vmem:[%s6 + $0x50] sm:$0xff] %vm9641, %v9470
        %9653 = vst.msk [vmem:[%s6 + $0x58] sm:$0xff] %vm9641, %v9472
        %9654 = vst.msk [vmem:[%s6 + $0x60] sm:$0xff] %vm9641, %v9474
        %9655 = vst.msk [vmem:[%s6 + $0x68] sm:$0xff] %vm9641, %v9476
        %9656 = vst.msk [vmem:[%s6 + $0x70] sm:$0xff] %vm9641, %v9478
        %9657 = vst.msk [vmem:[%s6 + $0x78] sm:$0xff] %vm9641, %v9480
        %9658 = vst.msk [vmem:[%s6 + $0x80] sm:$0xff] %vm9641, %v9482
        %9659 = vst.msk [vmem:[%s6 + $0x88] sm:$0xff] %vm9641, %v9484
        %9660 = vst.msk [vmem:[%s6 + $0x90] sm:$0xff] %vm9641, %v9486
        %9661 = vst.msk [vmem:[%s6 + $0x98] sm:$0xff] %vm9641, %v9488
        %9662 = vst.msk [vmem:[%s6 + $0xa0] sm:$0xff] %vm9641, %v9490
        %9663 = vst.msk [vmem:[%s6 + $0xa8] sm:$0xff] %vm9641, %v9492
        %9664 = vst.msk [vmem:[%s6 + $0xb0] sm:$0xff] %vm9641, %v9494
        %9665 = vst.msk [vmem:[%s6 + $0xb8] sm:$0xff] %vm9641, %v9496
        %9666 = vst.msk [vmem:[%s6 + $0xc0] sm:$0xff] %vm9641, %v9498
        %9667 = vst.msk [vmem:[%s6 + $0xc8] sm:$0xff] %vm9641, %v9500
        %9668 = vst.msk [vmem:[%s6 + $0xd0] sm:$0xff] %vm9641, %v9502
        %9669 = vst.msk [vmem:[%s6 + $0xd8] sm:$0xff] %vm9641, %v9504
        %9670 = vst.msk [vmem:[%s6 + $0xe0] sm:$0xff] %vm9641, %v9506
        %9671 = vst.msk [vmem:[%s6 + $0xe8] sm:$0xff] %vm9641, %v9508
        %9672 = vst.msk [vmem:[%s6 + $0xf0] sm:$0xff] %vm9641, %v9510
        %9673 = vst.msk [vmem:[%s6 + $0xf8] sm:$0xff] %vm9641, %v9512
        %9674 = vst.msk [vmem:[%s6 + $0x100] sm:$0xff] %vm9641, %v9514
        %9675 = vst.msk [vmem:[%s6 + $0x108] sm:$0xff] %vm9641, %v9516
        %9676 = vst.msk [vmem:[%s6 + $0x110] sm:$0xff] %vm9641, %v9518
        %9677 = vst.msk [vmem:[%s6 + $0x118] sm:$0xff] %vm9641, %v9520
        %9678 = vst.msk [vmem:[%s6 + $0x120] sm:$0xff] %vm9641, %v9522
        %9679 = vst.msk [vmem:[%s6 + $0x128] sm:$0xff] %vm9641, %v9524
        %9680 = vst.msk [vmem:[%s6 + $0x130] sm:$0xff] %vm9641, %v9526
        %9681 = vst.msk [vmem:[%s6 + $0x138] sm:$0xff] %vm9641, %v9528
        %9682 = vst.msk [vmem:[%s6 + $0x140] sm:$0xff] %vm9641, %v9530
        %9683 = vst.msk [vmem:[%s6 + $0x148] sm:$0xff] %vm9641, %v9532
        %9684 = vst.msk [vmem:[%s6 + $0x150] sm:$0xff] %vm9641, %v9534
        %9685 = vst.msk [vmem:[%s6 + $0x158] sm:$0xff] %vm9641, %v9536
        %9686 = vst.msk [vmem:[%s6 + $0x160] sm:$0xff] %vm9641, %v9538
        %9687 = vst.msk [vmem:[%s6 + $0x168] sm:$0xff] %vm9641, %v9540
        %9688 = vst.msk [vmem:[%s6 + $0x170] sm:$0xff] %vm9641, %v9542
        %9689 = vst.msk [vmem:[%s6 + $0x178] sm:$0xff] %vm9641, %v9544
        %9690 = vst.msk [vmem:[%s6 + $0x180] sm:$0xff] %vm9641, %v9546
        %9691 = vst.msk [vmem:[%s6 + $0x188] sm:$0xff] %vm9641, %v9548
        %9692 = vst.msk [vmem:[%s6 + $0x190] sm:$0xff] %vm9641, %v9550
        %9693 = vst.msk [vmem:[%s6 + $0x198] sm:$0xff] %vm9641, %v9552
        %9694 = vst.msk [vmem:[%s6 + $0x1a0] sm:$0xff] %vm9641, %v9554
        %9695 = vst.msk [vmem:[%s6 + $0x1a8] sm:$0xff] %vm9641, %v9556
        %9696 = vst.msk [vmem:[%s6 + $0x1b0] sm:$0xff] %vm9641, %v9558
        %9697 = vst.msk [vmem:[%s6 + $0x1b8] sm:$0xff] %vm9641, %v9560
        %9698 = vst.msk [vmem:[%s6 + $0x1c0] sm:$0xff] %vm9641, %v9562
        %9699 = vst.msk [vmem:[%s6 + $0x1c8] sm:$0xff] %vm9641, %v9564
        %9700 = vst.msk [vmem:[%s6 + $0x1d0] sm:$0xff] %vm9641, %v9566
        %9701 = vst.msk [vmem:[%s6 + $0x1d8] sm:$0xff] %vm9641, %v9568
        %9702 = vst.msk [vmem:[%s6 + $0x1e0] sm:$0xff] %vm9641, %v9570
        %9703 = vst.msk [vmem:[%s6 + $0x1e8] sm:$0xff] %vm9641, %v9572
        %9704 = vst.msk [vmem:[%s6 + $0x1f0] sm:$0xff] %vm9641, %v9574
        %9705 = vst.msk [vmem:[%s6 + $0x1f8] sm:$0xff] %vm9641, %v9576
      $region48: #{conv_blstm.1} parent=39 // pred_fallthru
        _
      %p9706 = scmp.eq.s32.totalorder %s18, 7
      // Predicated region
      $region49: #{conv_blstm.1} parent=39 // pred_check
        %p9707 = pneg %p9706
      $region50: #{conv_blstm.1} parent=39 // pred_check_branch
        %9709 = sbr.rel (%p9707) target = $region52
      $region51: #{conv_blstm.1} parent=39 // pred_region
        %vm9710 = vcmask 130048
        %9711 = vst.msk [vmem:[%s5] sm:$0xff] %vm9710, %v9190
        %9712 = vst.msk [vmem:[%s5 + $0x8] sm:$0xff] %vm9710, %v9192
        %9713 = vst.msk [vmem:[%s5 + $0x10] sm:$0xff] %vm9710, %v9194
        %9714 = vst.msk [vmem:[%s5 + $0x18] sm:$0xff] %vm9710, %v9196
        %9715 = vst.msk [vmem:[%s5 + $0x20] sm:$0xff] %vm9710, %v9198
        %9716 = vst.msk [vmem:[%s5 + $0x28] sm:$0xff] %vm9710, %v9200
        %9717 = vst.msk [vmem:[%s5 + $0x30] sm:$0xff] %vm9710, %v9202
        %9718 = vst.msk [vmem:[%s5 + $0x38] sm:$0xff] %vm9710, %v9204
        %9719 = vst.msk [vmem:[%s5 + $0x40] sm:$0xff] %vm9710, %v9206
        %9720 = vst.msk [vmem:[%s5 + $0x48] sm:$0xff] %vm9710, %v9208
        %9721 = vst.msk [vmem:[%s5 + $0x50] sm:$0xff] %vm9710, %v9210
        %9722 = vst.msk [vmem:[%s5 + $0x58] sm:$0xff] %vm9710, %v9212
        %9723 = vst.msk [vmem:[%s5 + $0x60] sm:$0xff] %vm9710, %v9214
        %9724 = vst.msk [vmem:[%s5 + $0x68] sm:$0xff] %vm9710, %v9216
        %9725 = vst.msk [vmem:[%s5 + $0x70] sm:$0xff] %vm9710, %v9218
        %9726 = vst.msk [vmem:[%s5 + $0x78] sm:$0xff] %vm9710, %v9220
        %9727 = vst.msk [vmem:[%s5 + $0x80] sm:$0xff] %vm9710, %v9222
        %9728 = vst.msk [vmem:[%s5 + $0x88] sm:$0xff] %vm9710, %v9224
        %9729 = vst.msk [vmem:[%s5 + $0x90] sm:$0xff] %vm9710, %v9226
        %9730 = vst.msk [vmem:[%s5 + $0x98] sm:$0xff] %vm9710, %v9228
        %9731 = vst.msk [vmem:[%s5 + $0xa0] sm:$0xff] %vm9710, %v9230
        %9732 = vst.msk [vmem:[%s5 + $0xa8] sm:$0xff] %vm9710, %v9232
        %9733 = vst.msk [vmem:[%s5 + $0xb0] sm:$0xff] %vm9710, %v9234
        %9734 = vst.msk [vmem:[%s5 + $0xb8] sm:$0xff] %vm9710, %v9236
        %9735 = vst.msk [vmem:[%s5 + $0xc0] sm:$0xff] %vm9710, %v9238
        %9736 = vst.msk [vmem:[%s5 + $0xc8] sm:$0xff] %vm9710, %v9240
        %9737 = vst.msk [vmem:[%s5 + $0xd0] sm:$0xff] %vm9710, %v9242
        %9738 = vst.msk [vmem:[%s5 + $0xd8] sm:$0xff] %vm9710, %v9244
        %9739 = vst.msk [vmem:[%s5 + $0xe0] sm:$0xff] %vm9710, %v9246
        %9740 = vst.msk [vmem:[%s5 + $0xe8] sm:$0xff] %vm9710, %v9248
        %9741 = vst.msk [vmem:[%s5 + $0xf0] sm:$0xff] %vm9710, %v9250
        %9742 = vst.msk [vmem:[%s5 + $0xf8] sm:$0xff] %vm9710, %v9252
        %9743 = vst.msk [vmem:[%s5 + $0x100] sm:$0xff] %vm9710, %v9254
        %9744 = vst.msk [vmem:[%s5 + $0x108] sm:$0xff] %vm9710, %v9256
        %9745 = vst.msk [vmem:[%s5 + $0x110] sm:$0xff] %vm9710, %v9258
        %9746 = vst.msk [vmem:[%s5 + $0x118] sm:$0xff] %vm9710, %v9260
        %9747 = vst.msk [vmem:[%s5 + $0x120] sm:$0xff] %vm9710, %v9262
        %9748 = vst.msk [vmem:[%s5 + $0x128] sm:$0xff] %vm9710, %v9264
        %9749 = vst.msk [vmem:[%s5 + $0x130] sm:$0xff] %vm9710, %v9266
        %9750 = vst.msk [vmem:[%s5 + $0x138] sm:$0xff] %vm9710, %v9268
        %9751 = vst.msk [vmem:[%s5 + $0x140] sm:$0xff] %vm9710, %v9270
        %9752 = vst.msk [vmem:[%s5 + $0x148] sm:$0xff] %vm9710, %v9272
        %9753 = vst.msk [vmem:[%s5 + $0x150] sm:$0xff] %vm9710, %v9274
        %9754 = vst.msk [vmem:[%s5 + $0x158] sm:$0xff] %vm9710, %v9276
        %9755 = vst.msk [vmem:[%s5 + $0x160] sm:$0xff] %vm9710, %v9278
        %9756 = vst.msk [vmem:[%s5 + $0x168] sm:$0xff] %vm9710, %v9280
        %9757 = vst.msk [vmem:[%s5 + $0x170] sm:$0xff] %vm9710, %v9282
        %9758 = vst.msk [vmem:[%s5 + $0x178] sm:$0xff] %vm9710, %v9284
        %9759 = vst.msk [vmem:[%s5 + $0x180] sm:$0xff] %vm9710, %v9286
        %9760 = vst.msk [vmem:[%s5 + $0x188] sm:$0xff] %vm9710, %v9288
        %9761 = vst.msk [vmem:[%s5 + $0x190] sm:$0xff] %vm9710, %v9290
        %9762 = vst.msk [vmem:[%s5 + $0x198] sm:$0xff] %vm9710, %v9292
        %9763 = vst.msk [vmem:[%s5 + $0x1a0] sm:$0xff] %vm9710, %v9294
        %9764 = vst.msk [vmem:[%s5 + $0x1a8] sm:$0xff] %vm9710, %v9296
        %9765 = vst.msk [vmem:[%s5 + $0x1b0] sm:$0xff] %vm9710, %v9298
        %9766 = vst.msk [vmem:[%s5 + $0x1b8] sm:$0xff] %vm9710, %v9300
        %9767 = vst.msk [vmem:[%s5 + $0x1c0] sm:$0xff] %vm9710, %v9302
        %9768 = vst.msk [vmem:[%s5 + $0x1c8] sm:$0xff] %vm9710, %v9304
        %9769 = vst.msk [vmem:[%s5 + $0x1d0] sm:$0xff] %vm9710, %v9306
        %9770 = vst.msk [vmem:[%s5 + $0x1d8] sm:$0xff] %vm9710, %v9308
        %9771 = vst.msk [vmem:[%s5 + $0x1e0] sm:$0xff] %vm9710, %v9310
        %9772 = vst.msk [vmem:[%s5 + $0x1e8] sm:$0xff] %vm9710, %v9312
        %9773 = vst.msk [vmem:[%s5 + $0x1f0] sm:$0xff] %vm9710, %v9314
        %9774 = vst.msk [vmem:[%s5 + $0x1f8] sm:$0xff] %vm9710, %v9316
      $region52: #{conv_blstm.1} parent=39 // pred_fallthru
        _
      // Predicated region
      $region53: #{conv_blstm.1} parent=39 // pred_check
        %p9775 = pneg %p141
      $region54: #{conv_blstm.1} parent=39 // pred_check_branch
        %9777 = sbr.rel (%p9775) target = $region56
      $region55: #{conv_blstm.1} parent=39 // pred_region
        _
      $region56: #{conv_blstm.1} parent=39 // pred_fallthru
        _
      // Predicated region
      $region57: #{conv_blstm.1} parent=39 // pred_check
        %p9778 = pneg %p162
      $region58: #{conv_blstm.1} parent=39 // pred_check_branch
        %9780 = sbr.rel (%p9778) target = $region60
      $region59: #{conv_blstm.1} parent=39 // pred_region
        _
      $region60: #{conv_blstm.1} parent=39 // pred_fallthru
        _
      // Predicated region
      $region61: #{conv_blstm.1} parent=39 // pred_check
        %p9781 = pneg %p141
      $region62: #{conv_blstm.1} parent=39 // pred_check_branch
        %9783 = sbr.rel (%p9781) target = $region64
      $region63: #{conv_blstm.1} parent=39 // pred_region
        _
      $region64: #{conv_blstm.1} parent=39 // pred_fallthru
        _
      // Predicated region
      $region65: #{conv_blstm.1} parent=39 // pred_check
        %p9784 = pneg %p162
      $region66: #{conv_blstm.1} parent=39 // pred_check_branch
        %9786 = sbr.rel (%p9784) target = $region68
      $region67: #{conv_blstm.1} parent=39 // pred_region
        _
      $region68: #{conv_blstm.1} parent=39 // pred_fallthru
        _
    $region40: #{conv_blstm.1} parent=5 // pred_fallthru
      _
    %p9787 = scmp.le.s32.totalorder 2, %s13
    // Predicated region
    $region69: #{conv_blstm.1} parent=5 // pred_check
      %p9788 = pneg %p9787
    $region70: #{conv_blstm.1} parent=5 // pred_check_branch
      %9790 = sbr.rel (%p9788) target = $region72
    $region71: #{conv_blstm.1} parent=5 // pred_region
      %s9791 = ssub.s32 %s13, 2
    $region72: #{conv_blstm.1} parent=5 // pred_fallthru
      _
  $region6: #{conv_blstm.1} parent=0 // loop_footer
    %s17 = sadd.s32 1, %s13
  $region7: #{conv_blstm.1} parent=0 // loop_footer_branch
    %12 = sbr.rel target = $region3
  $region8: #{conv_blstm.1} parent=0 // loop_exit
    _

</llo_original>
